<compile_context>
chip_gen: v5e
topology: v5e:2x2
jax: 0.10.0
libtpu: 0.0.40
codegen_flags: <defaults>
</compile_context>

<pallas_src>
import functools
import math

import jax
import jax.numpy as jnp
from jax.experimental import pallas as pl
from jax.experimental.pallas import tpu as pltpu

_LANE = 128


def _round_up(v, m):
    return (v + m - 1) // m * m


def _pick_row_tile(hp, cap=8):
    """Largest divisor of hp that is <= cap (pooled rows per grid step)."""
    for cand in range(min(hp, cap), 0, -1):
        if hp % cand == 0:
            return cand
    return 1


# ----------------------------------------------------------------------------
# Pallas kernels
# ----------------------------------------------------------------------------
def _conv3x3_relu_pool_kernel(p00_ref, p01_ref, p10_ref, p11_ref, w_ref, b_ref,
                              o_ref, *, trp, wh, whk):
    """Fused Conv2d(3x3, pad=1) + bias + ReLU + MaxPool2d(2,2).

    Inputs are the four parity planes of the spatially-padded NHWC input
    (plane[ra][rb][i, j, :] == x_pad[2i+ra, 2j+rb, :]), windowed over rows so
    each grid step covers `trp` pooled output rows.  The 2x2/stride-2 max-pool
    becomes an elementwise max over the four output-parity accumulators, so no
    strided selection / awkward reshapes are needed inside the kernel.
    """
    planes = ((p00_ref[0, 0], p01_ref[0, 0]),
              (p10_ref[0, 0], p11_ref[0, 0]))          # [row parity][col parity]
    cin = planes[0][0].shape[-1]
    cp = o_ref.shape[-1]
    m = trp * whk

    def parity_sum(a, b_par):
        acc = None
        for dy in range(3):
            ra, qa = (a + dy) % 2, (a + dy) // 2
            for dx in range(3):
                rb, qb = (b_par + dx) % 2, (b_par + dx) // 2
                lhs = planes[ra][rb][qa:qa + trp, qb:qb + whk, :].reshape(m, cin)
                d = jnp.dot(lhs, w_ref[dy, dx],
                            preferred_element_type=jnp.float32)
                acc = d if acc is None else acc + d
        return acc

    pooled = parity_sum(0, 0)
    pooled = jnp.maximum(pooled, parity_sum(0, 1))
    pooled = jnp.maximum(pooled, parity_sum(1, 0))
    pooled = jnp.maximum(pooled, parity_sum(1, 1))
    # bias add + ReLU commute with max-pool -> apply on the pooled tile.
    y = jnp.maximum(pooled + b_ref[...], 0.0)          # (m, cp)
    y = y.reshape(trp, whk, cp)[:, :wh, :]             # drop width padding
    o_ref[0] = y.astype(o_ref.dtype)


def _adaptive_avgpool_kernel(*refs, fh, fw):
    """Uniform-bin AdaptiveAvgPool2d((7,7)).

    Inputs are the fw column-parity slices of the NHWC map (each (H, 7, C)),
    so width bins reduce to elementwise adds; row bins via a leading-dim split.
    """
    o_ref = refs[-1]
    acc = None
    for r in refs[:-1]:
        xv = r[0]                                      # (fh*7, 7, C)
        xr = xv.reshape(7, fh, 7, xv.shape[-1])
        for i in range(fh):
            t = xr[:, i].astype(jnp.float32)
            acc = t if acc is None else acc + t
    o_ref[0] = (acc * (1.0 / (fh * fw))).astype(o_ref.dtype)


def _mlp_head_kernel(x_ref, w1_ref, b1_ref, w2_ref, b2_ref, w3_ref, b3_ref,
                     o_ref):
    """Fused classifier: Linear -> ReLU -> Linear -> ReLU -> Linear."""
    h = jnp.dot(x_ref[...], w1_ref[...],
                preferred_element_type=jnp.float32) + b1_ref[...]
    h = jnp.maximum(h, 0.0)
    # TODO(synk): nn.Dropout applied as identity (eval-mode semantics).
    h = jnp.dot(h, w2_ref[...],
                preferred_element_type=jnp.float32) + b2_ref[...]
    h = jnp.maximum(h, 0.0)
    h = jnp.dot(h, w3_ref[...],
                preferred_element_type=jnp.float32) + b3_ref[...]
    o_ref[...] = h.astype(o_ref.dtype)


# ----------------------------------------------------------------------------
# Pallas wrappers
# ----------------------------------------------------------------------------
def conv3x3_relu_maxpool2x2(x, w, b):
    """x: (N, H, W, Cx) NHWC (Cx may exceed the weight's real Cin; extra input
    channels are matched by zero weight rows).  w: (3, 3, cin, cout) HWIO.
    Returns (N, H//2, W//2, Cp) with Cp = round_up(cout, 128); channels beyond
    cout are zero."""
    N, H, W, Cx = x.shape
    kh, kw, cin_w, cout = w.shape
    assert (kh, kw) == (3, 3) and H % 2 == 0 and W % 2 == 0 and cin_w <= Cx
    cp = _round_up(max(cout, _LANE), _LANE)            # lane-dense output channels
    hp, wh = H // 2, W // 2
    whk = _round_up(wh, 8)                             # aligned in-kernel width
    trp = _pick_row_tile(hp)                           # pooled rows per grid step
    T = hp // trp

    # Zero-pad weights / bias to the kernel channel dims.
    wp = jnp.zeros((3, 3, Cx, cp), jnp.float32).at[:, :, :cin_w, :cout].set(w)
    bp = jnp.zeros((1, cp), jnp.float32).at[0, :cout].set(b)

    # Spatial zero border (pad=1), parity decomposition, row windows.
    xpad = jnp.pad(x, ((0, 0), (1, 1), (1, 1), (0, 0)))
    planes = []
    for ra in range(2):
        for rb in range(2):
            p = xpad[:, ra::2, rb::2, :]                              # (N, hp+1, wh+1, Cx)
            p = jnp.pad(p, ((0, 0), (0, 0), (0, whk - wh), (0, 0)))   # width -> whk+1
            p = jnp.stack([p[:, t * trp:t * trp + trp + 1]
                           for t in range(T)], axis=1)                # (N, T, trp+1, whk+1, Cx)
            planes.append(p)

    kernel = functools.partial(_conv3x3_relu_pool_kernel,
                               trp=trp, wh=wh, whk=whk)
    plane_spec = pl.BlockSpec((1, 1, trp + 1, whk + 1, Cx),
                              lambda n, t: (n, t, 0, 0, 0))
    flops = 2 * N * T * 36 * (trp * whk) * Cx * cp
    bytes_accessed = 4 * (sum(int(p.size) for p in planes)
                          + int(wp.size) + int(bp.size) + N * hp * wh * cp)
    return pl.pallas_call(
        kernel,
        grid=(N, T),
        in_specs=[plane_spec, plane_spec, plane_spec, plane_spec,
                  # Constant index maps: weights / bias stay resident in VMEM.
                  pl.BlockSpec((3, 3, Cx, cp), lambda n, t: (0, 0, 0, 0)),
                  pl.BlockSpec((1, cp), lambda n, t: (0, 0))],
        out_specs=pl.BlockSpec((1, trp, wh, cp), lambda n, t: (n, t, 0, 0)),
        out_shape=jax.ShapeDtypeStruct((N, hp, wh, cp), jnp.float32),
        compiler_params=pltpu.CompilerParams(
            dimension_semantics=("parallel", "parallel"),
            vmem_limit_bytes=32 * 1024 * 1024),
        cost_estimate=pl.CostEstimate(flops=flops, transcendentals=0,
                                      bytes_accessed=bytes_accessed),
    )(*planes, wp, bp)


def adaptive_avgpool_7x7(x):
    """nn.AdaptiveAvgPool2d((7, 7)) for spatial sizes divisible by 7."""
    N, H, W, C = x.shape
    # TODO(synk): general AdaptiveAvgPool2d with non-uniform (non-divisible)
    #             bins is not implemented; uniform-bin case only.
    assert H % 7 == 0 and W % 7 == 0
    fh, fw = H // 7, W // 7
    cols = [x[:, :, b::fw, :] for b in range(fw)]      # each (N, H, 7, C)
    kernel = functools.partial(_adaptive_avgpool_kernel, fh=fh, fw=fw)
    in_spec = pl.BlockSpec((1, H, 7, C), lambda n: (n, 0, 0, 0))
    return pl.pallas_call(
        kernel,
        grid=(N,),
        in_specs=[in_spec] * fw,
        out_specs=pl.BlockSpec((1, 7, 7, C), lambda n: (n, 0, 0, 0)),
        out_shape=jax.ShapeDtypeStruct((N, 7, 7, C), jnp.float32),
        compiler_params=pltpu.CompilerParams(dimension_semantics=("parallel",)),
    )(*cols)


def mlp_head(x, fc_params, num_classes):
    """Fused Linear->ReLU->Dropout(id)->Linear->ReLU->Dropout(id)->Linear."""
    (w1, b1), (w2, b2), (w3, b3) = fc_params
    N, din = x.shape
    d1, d2 = w1.shape[1], w2.shape[1]
    kp = _round_up(din, _LANE)
    d1p = _round_up(max(d1, _LANE), _LANE)
    d2p = _round_up(max(d2, _LANE), _LANE)
    d3p = _round_up(max(num_classes, _LANE), _LANE)
    xpad = jnp.pad(x, ((0, 0), (0, kp - din)))
    w1p = jnp.zeros((kp, d1p), jnp.float32).at[:din, :d1].set(w1)
    b1p = jnp.zeros((1, d1p), jnp.float32).at[0, :d1].set(b1)
    w2p = jnp.zeros((d1p, d2p), jnp.float32).at[:d1, :d2].set(w2)
    b2p = jnp.zeros((1, d2p), jnp.float32).at[0, :d2].set(b2)
    w3p = jnp.zeros((d2p, d3p), jnp.float32).at[:d2, :num_classes].set(w3)
    b3p = jnp.zeros((1, d3p), jnp.float32).at[0, :num_classes].set(b3)
    out = pl.pallas_call(
        _mlp_head_kernel,
        out_shape=jax.ShapeDtypeStruct((N, d3p), jnp.float32),
    )(xpad, w1p, b1p, w2p, b2p, w3p, b3p)
    return out[:, :num_classes]


# ----------------------------------------------------------------------------
# Model: parameters + forward
# ----------------------------------------------------------------------------
def init_params(key, in_ch, conv_channels, fc_dims):
    """Xavier-normal convs (zero bias), N(0, 0.01) linears (zero bias)."""
    keys = jax.random.split(key, len(conv_channels) + len(fc_dims))
    convs = []
    cin = in_ch
    for i, cout in enumerate(conv_channels):
        fan_in, fan_out = cin * 9, cout * 9
        std = math.sqrt(2.0 / (fan_in + fan_out))
        w = std * jax.random.normal(keys[i], (3, 3, cin, cout), jnp.float32)
        convs.append((w, jnp.zeros((cout,), jnp.float32)))
        cin = cout
    fcs = []
    for j, (din, dout) in enumerate(fc_dims):
        w = 0.01 * jax.random.normal(keys[len(conv_channels) + j],
                                     (din, dout), jnp.float32)
        fcs.append((w, jnp.zeros((dout,), jnp.float32)))
    return {"convs": convs, "fc": fcs}


def vgg_forward(x_nchw, params):
    # conv_maps: [Conv3x3 -> ReLU -> MaxPool2x2] fused chunks (NHWC, 128-padded C)
    x = jnp.transpose(x_nchw, (0, 2, 3, 1))            # NCHW -> NHWC
    cout_real = x.shape[-1]
    for w_hwio, b in params["convs"]:
        x = conv3x3_relu_maxpool2x2(x, w_hwio, b)
        cout_real = w_hwio.shape[-1]
    # aa_pooling (channels still lane-padded to 128)
    x = adaptive_avgpool_7x7(x)
    x = x[:, :, :, :cout_real]                         # drop channel padding
    # torch.flatten(x, 1) on NCHW ordering
    N = x.shape[0]
    x = jnp.transpose(x, (0, 3, 1, 2)).reshape(N, -1)
    # classifier (fused kernel)
    num_classes = params["fc"][-1][0].shape[1]
    return mlp_head(x, params["fc"], num_classes)


# ----------------------------------------------------------------------------
# Pure-JAX reference (for correctness check)
# ----------------------------------------------------------------------------
def vgg_forward_reference(x_nchw, params):
    x = jnp.transpose(x_nchw, (0, 2, 3, 1))
    for w_hwio, b in params["convs"]:
        x = jax.lax.conv_general_dilated(
            x, w_hwio, window_strides=(1, 1), padding="SAME",
            dimension_numbers=("NHWC", "HWIO", "NHWC"))
        x = jnp.maximum(x + b, 0.0)
        N, H, W, C = x.shape
        x = x.reshape(N, H // 2, 2, W // 2, 2, C).max(axis=(2, 4))
    N, H, W, C = x.shape
    x = x.reshape(N, 7, H // 7, 7, W // 7, C).mean(axis=(2, 4))
    x = jnp.transpose(x, (0, 3, 1, 2)).reshape(N, -1)
    for i, (w, b) in enumerate(params["fc"]):
        x = x @ w + b
        if i < 2:
            x = jnp.maximum(x, 0.0)
    return x


# ----------------------------------------------------------------------------
# Main
# ----------------------------------------------------------------------------
if __name__ == "__main__":
    key = jax.random.PRNGKey(0)
    k_x, k_p = jax.random.split(key)

    # Small shapes: batch=2, RGB input 56x56. Two conv chunks: 3->8->16.
    # 56 -> pool -> 28 -> pool -> 14 -> adaptive avg pool -> 7x7.
    batch, in_ch, hw = 2, 3, 56
    conv_channels = [8, 16]
    num_classes = 10
    fc_hidden = 64
    flat_dim = 7 * 7 * conv_channels[-1]
    fc_dims = [(flat_dim, fc_hidden), (fc_hidden, fc_hidden),
               (fc_hidden, num_classes)]

    x = jax.random.normal(k_x, (batch, in_ch, hw, hw), jnp.float32)  # NCHW
    params = init_params(k_p, in_ch, conv_channels, fc_dims)

    out = jax.jit(vgg_forward)(x, params)
    out = jax.block_until_ready(out)

    ref = vgg_forward_reference(x, params)
    assert out.shape == (batch, num_classes), out.shape
    assert bool(jnp.all(jnp.isfinite(out)))
    assert bool(jnp.allclose(out, ref, rtol=1e-3, atol=1e-4)), (
        float(jnp.max(jnp.abs(out - ref))))

    print("KERNEL_OK")
</pallas_src>

<mosaic_0001>
module attributes {stable_mosaic.version = 11 : i64} {
  func.func @_conv3x3_relu_pool_kernel(%arg0: i32, %arg1: i32, %arg2: memref<1x1x8x33x3xf32, #tpu.memory_space<vmem>>, %arg3: memref<1x1x8x33x3xf32, #tpu.memory_space<vmem>>, %arg4: memref<1x1x8x33x3xf32, #tpu.memory_space<vmem>>, %arg5: memref<1x1x8x33x3xf32, #tpu.memory_space<vmem>>, %arg6: memref<3x3x3x128xf32, #tpu.memory_space<vmem>>, %arg7: memref<1x128xf32, #tpu.memory_space<vmem>>, %arg8: memref<1x7x28x128xf32, #tpu.memory_space<vmem>>) attributes {dimension_semantics = [#tpu.dimension_semantics<parallel>, #tpu.dimension_semantics<parallel>], iteration_bounds = array<i64: 2, 4>, scalar_prefetch = 0 : i64, scratch_operands = 0 : i64, tpu.core_type = #tpu.core_type<tc>, window_params = [{transform_indices = @transform_0, window_bounds = array<i64: 1, 1, 8, 33, 3>}, {transform_indices = @transform_1, window_bounds = array<i64: 1, 1, 8, 33, 3>}, {transform_indices = @transform_2, window_bounds = array<i64: 1, 1, 8, 33, 3>}, {transform_indices = @transform_3, window_bounds = array<i64: 1, 1, 8, 33, 3>}, {pipeline_mode = #tpu.pipeline_mode<synchronous>, transform_indices = @transform_4, window_bounds = array<i64: 3, 3, 3, 128>}, {pipeline_mode = #tpu.pipeline_mode<synchronous>, transform_indices = @transform_5, window_bounds = array<i64: 1, 128>}, {transform_indices = @transform_6, window_bounds = array<i64: 1, 7, 28, 128>}]} {
    %c0 = arith.constant 0 : index
    %c0_0 = arith.constant 0 : index
    %c0_1 = arith.constant 0 : index
    %c0_2 = arith.constant 0 : index
    %c0_3 = arith.constant 0 : index
    %0 = vector.load %arg2[%c0, %c0_0, %c0_1, %c0_2, %c0_3] : memref<1x1x8x33x3xf32, #tpu.memory_space<vmem>>, vector<1x1x8x33x3xf32>
    %1 = vector.shape_cast %0 : vector<1x1x8x33x3xf32> to vector<8x33x3xf32>
    %c0_4 = arith.constant 0 : index
    %c0_5 = arith.constant 0 : index
    %c0_6 = arith.constant 0 : index
    %c0_7 = arith.constant 0 : index
    %c0_8 = arith.constant 0 : index
    %2 = vector.load %arg3[%c0_4, %c0_5, %c0_6, %c0_7, %c0_8] : memref<1x1x8x33x3xf32, #tpu.memory_space<vmem>>, vector<1x1x8x33x3xf32>
    %3 = vector.shape_cast %2 : vector<1x1x8x33x3xf32> to vector<8x33x3xf32>
    %c0_9 = arith.constant 0 : index
    %c0_10 = arith.constant 0 : index
    %c0_11 = arith.constant 0 : index
    %c0_12 = arith.constant 0 : index
    %c0_13 = arith.constant 0 : index
    %4 = vector.load %arg4[%c0_9, %c0_10, %c0_11, %c0_12, %c0_13] : memref<1x1x8x33x3xf32, #tpu.memory_space<vmem>>, vector<1x1x8x33x3xf32>
    %5 = vector.shape_cast %4 : vector<1x1x8x33x3xf32> to vector<8x33x3xf32>
    %c0_14 = arith.constant 0 : index
    %c0_15 = arith.constant 0 : index
    %c0_16 = arith.constant 0 : index
    %c0_17 = arith.constant 0 : index
    %c0_18 = arith.constant 0 : index
    %6 = vector.load %arg5[%c0_14, %c0_15, %c0_16, %c0_17, %c0_18] : memref<1x1x8x33x3xf32, #tpu.memory_space<vmem>>, vector<1x1x8x33x3xf32>
    %7 = vector.shape_cast %6 : vector<1x1x8x33x3xf32> to vector<8x33x3xf32>
    %8 = vector.extract_strided_slice %1 {offsets = [0, 0, 0], sizes = [7, 32, 3], strides = [1, 1, 1]} : vector<8x33x3xf32> to vector<7x32x3xf32>
    %9 = vector.shape_cast %8 : vector<7x32x3xf32> to vector<224x3xf32>
    %c0_19 = arith.constant 0 : index
    %c0_20 = arith.constant 0 : index
    %c0_21 = arith.constant 0 : index
    %c0_22 = arith.constant 0 : index
    %10 = vector.load %arg6[%c0_19, %c0_20, %c0_21, %c0_22] : memref<3x3x3x128xf32, #tpu.memory_space<vmem>>, vector<1x1x3x128xf32>
    %11 = vector.shape_cast %10 : vector<1x1x3x128xf32> to vector<3x128xf32>
    %cst = arith.constant dense<0.000000e+00> : vector<224x128xf32>
    %12 = tpu.matmul %9, %11, %cst {dimension_numbers = #tpu.dot_dimension_numbers<[1], [0], [0], [1], [0, 0, 1, 1], [], []>} : vector<224x3xf32>, vector<3x128xf32>, vector<224x128xf32> -> vector<224x128xf32>
    %13 = vector.extract_strided_slice %3 {offsets = [0, 0, 0], sizes = [7, 32, 3], strides = [1, 1, 1]} : vector<8x33x3xf32> to vector<7x32x3xf32>
    %14 = vector.shape_cast %13 : vector<7x32x3xf32> to vector<224x3xf32>
    %c0_23 = arith.constant 0 : index
    %c1 = arith.constant 1 : index
    %c0_24 = arith.constant 0 : index
    %c0_25 = arith.constant 0 : index
    %15 = vector.load %arg6[%c0_23, %c1, %c0_24, %c0_25] : memref<3x3x3x128xf32, #tpu.memory_space<vmem>>, vector<1x1x3x128xf32>
    %16 = vector.shape_cast %15 : vector<1x1x3x128xf32> to vector<3x128xf32>
    %cst_26 = arith.constant dense<0.000000e+00> : vector<224x128xf32>
    %17 = tpu.matmul %14, %16, %cst_26 {dimension_numbers = #tpu.dot_dimension_numbers<[1], [0], [0], [1], [0, 0, 1, 1], [], []>} : vector<224x3xf32>, vector<3x128xf32>, vector<224x128xf32> -> vector<224x128xf32>
    %18 = arith.addf %12, %17 : vector<224x128xf32>
    %19 = vector.extract_strided_slice %1 {offsets = [0, 1, 0], sizes = [7, 32, 3], strides = [1, 1, 1]} : vector<8x33x3xf32> to vector<7x32x3xf32>
    %20 = vector.shape_cast %19 : vector<7x32x3xf32> to vector<224x3xf32>
    %c0_27 = arith.constant 0 : index
    %c2 = arith.constant 2 : index
    %c0_28 = arith.constant 0 : index
    %c0_29 = arith.constant 0 : index
    %21 = vector.load %arg6[%c0_27, %c2, %c0_28, %c0_29] : memref<3x3x3x128xf32, #tpu.memory_space<vmem>>, vector<1x1x3x128xf32>
    %22 = vector.shape_cast %21 : vector<1x1x3x128xf32> to vector<3x128xf32>
    %cst_30 = arith.constant dense<0.000000e+00> : vector<224x128xf32>
    %23 = tpu.matmul %20, %22, %cst_30 {dimension_numbers = #tpu.dot_dimension_numbers<[1], [0], [0], [1], [0, 0, 1, 1], [], []>} : vector<224x3xf32>, vector<3x128xf32>, vector<224x128xf32> -> vector<224x128xf32>
    %24 = arith.addf %18, %23 : vector<224x128xf32>
    %25 = vector.extract_strided_slice %5 {offsets = [0, 0, 0], sizes = [7, 32, 3], strides = [1, 1, 1]} : vector<8x33x3xf32> to vector<7x32x3xf32>
    %26 = vector.shape_cast %25 : vector<7x32x3xf32> to vector<224x3xf32>
    %c1_31 = arith.constant 1 : index
    %c0_32 = arith.constant 0 : index
    %c0_33 = arith.constant 0 : index
    %c0_34 = arith.constant 0 : index
    %27 = vector.load %arg6[%c1_31, %c0_32, %c0_33, %c0_34] : memref<3x3x3x128xf32, #tpu.memory_space<vmem>>, vector<1x1x3x128xf32>
    %28 = vector.shape_cast %27 : vector<1x1x3x128xf32> to vector<3x128xf32>
    %cst_35 = arith.constant dense<0.000000e+00> : vector<224x128xf32>
    %29 = tpu.matmul %26, %28, %cst_35 {dimension_numbers = #tpu.dot_dimension_numbers<[1], [0], [0], [1], [0, 0, 1, 1], [], []>} : vector<224x3xf32>, vector<3x128xf32>, vector<224x128xf32> -> vector<224x128xf32>
    %30 = arith.addf %24, %29 : vector<224x128xf32>
    %31 = vector.extract_strided_slice %7 {offsets = [0, 0, 0], sizes = [7, 32, 3], strides = [1, 1, 1]} : vector<8x33x3xf32> to vector<7x32x3xf32>
    %32 = vector.shape_cast %31 : vector<7x32x3xf32> to vector<224x3xf32>
    %c1_36 = arith.constant 1 : index
    %c1_37 = arith.constant 1 : index
    %c0_38 = arith.constant 0 : index
    %c0_39 = arith.constant 0 : index
    %33 = vector.load %arg6[%c1_36, %c1_37, %c0_38, %c0_39] : memref<3x3x3x128xf32, #tpu.memory_space<vmem>>, vector<1x1x3x128xf32>
    %34 = vector.shape_cast %33 : vector<1x1x3x128xf32> to vector<3x128xf32>
    %cst_40 = arith.constant dense<0.000000e+00> : vector<224x128xf32>
    %35 = tpu.matmul %32, %34, %cst_40 {dimension_numbers = #tpu.dot_dimension_numbers<[1], [0], [0], [1], [0, 0, 1, 1], [], []>} : vector<224x3xf32>, vector<3x128xf32>, vector<224x128xf32> -> vector<224x128xf32>
    %36 = arith.addf %30, %35 : vector<224x128xf32>
    %37 = vector.extract_strided_slice %5 {offsets = [0, 1, 0], sizes = [7, 32, 3], strides = [1, 1, 1]} : vector<8x33x3xf32> to vector<7x32x3xf32>
    %38 = vector.shape_cast %37 : vector<7x32x3xf32> to vector<224x3xf32>
    %c1_41 = arith.constant 1 : index
    %c2_42 = arith.constant 2 : index
    %c0_43 = arith.constant 0 : index
    %c0_44 = arith.constant 0 : index
    %39 = vector.load %arg6[%c1_41, %c2_42, %c0_43, %c0_44] : memref<3x3x3x128xf32, #tpu.memory_space<vmem>>, vector<1x1x3x128xf32>
    %40 = vector.shape_cast %39 : vector<1x1x3x128xf32> to vector<3x128xf32>
    %cst_45 = arith.constant dense<0.000000e+00> : vector<224x128xf32>
    %41 = tpu.matmul %38, %40, %cst_45 {dimension_numbers = #tpu.dot_dimension_numbers<[1], [0], [0], [1], [0, 0, 1, 1], [], []>} : vector<224x3xf32>, vector<3x128xf32>, vector<224x128xf32> -> vector<224x128xf32>
    %42 = arith.addf %36, %41 : vector<224x128xf32>
    %43 = vector.extract_strided_slice %1 {offsets = [1, 0, 0], sizes = [7, 32, 3], strides = [1, 1, 1]} : vector<8x33x3xf32> to vector<7x32x3xf32>
    %44 = vector.shape_cast %43 : vector<7x32x3xf32> to vector<224x3xf32>
    %c2_46 = arith.constant 2 : index
    %c0_47 = arith.constant 0 : index
    %c0_48 = arith.constant 0 : index
    %c0_49 = arith.constant 0 : index
    %45 = vector.load %arg6[%c2_46, %c0_47, %c0_48, %c0_49] : memref<3x3x3x128xf32, #tpu.memory_space<vmem>>, vector<1x1x3x128xf32>
    %46 = vector.shape_cast %45 : vector<1x1x3x128xf32> to vector<3x128xf32>
    %cst_50 = arith.constant dense<0.000000e+00> : vector<224x128xf32>
    %47 = tpu.matmul %44, %46, %cst_50 {dimension_numbers = #tpu.dot_dimension_numbers<[1], [0], [0], [1], [0, 0, 1, 1], [], []>} : vector<224x3xf32>, vector<3x128xf32>, vector<224x128xf32> -> vector<224x128xf32>
    %48 = arith.addf %42, %47 : vector<224x128xf32>
    %49 = vector.extract_strided_slice %3 {offsets = [1, 0, 0], sizes = [7, 32, 3], strides = [1, 1, 1]} : vector<8x33x3xf32> to vector<7x32x3xf32>
    %50 = vector.shape_cast %49 : vector<7x32x3xf32> to vector<224x3xf32>
    %c2_51 = arith.constant 2 : index
    %c1_52 = arith.constant 1 : index
    %c0_53 = arith.constant 0 : index
    %c0_54 = arith.constant 0 : index
    %51 = vector.load %arg6[%c2_51, %c1_52, %c0_53, %c0_54] : memref<3x3x3x128xf32, #tpu.memory_space<vmem>>, vector<1x1x3x128xf32>
    %52 = vector.shape_cast %51 : vector<1x1x3x128xf32> to vector<3x128xf32>
    %cst_55 = arith.constant dense<0.000000e+00> : vector<224x128xf32>
    %53 = tpu.matmul %50, %52, %cst_55 {dimension_numbers = #tpu.dot_dimension_numbers<[1], [0], [0], [1], [0, 0, 1, 1], [], []>} : vector<224x3xf32>, vector<3x128xf32>, vector<224x128xf32> -> vector<224x128xf32>
    %54 = arith.addf %48, %53 : vector<224x128xf32>
    %55 = vector.extract_strided_slice %1 {offsets = [1, 1, 0], sizes = [7, 32, 3], strides = [1, 1, 1]} : vector<8x33x3xf32> to vector<7x32x3xf32>
    %56 = vector.shape_cast %55 : vector<7x32x3xf32> to vector<224x3xf32>
    %c2_56 = arith.constant 2 : index
    %c2_57 = arith.constant 2 : index
    %c0_58 = arith.constant 0 : index
    %c0_59 = arith.constant 0 : index
    %57 = vector.load %arg6[%c2_56, %c2_57, %c0_58, %c0_59] : memref<3x3x3x128xf32, #tpu.memory_space<vmem>>, vector<1x1x3x128xf32>
    %58 = vector.shape_cast %57 : vector<1x1x3x128xf32> to vector<3x128xf32>
    %cst_60 = arith.constant dense<0.000000e+00> : vector<224x128xf32>
    %59 = tpu.matmul %56, %58, %cst_60 {dimension_numbers = #tpu.dot_dimension_numbers<[1], [0], [0], [1], [0, 0, 1, 1], [], []>} : vector<224x3xf32>, vector<3x128xf32>, vector<224x128xf32> -> vector<224x128xf32>
    %60 = arith.addf %54, %59 : vector<224x128xf32>
    %61 = vector.extract_strided_slice %3 {offsets = [0, 0, 0], sizes = [7, 32, 3], strides = [1, 1, 1]} : vector<8x33x3xf32> to vector<7x32x3xf32>
    %62 = vector.shape_cast %61 : vector<7x32x3xf32> to vector<224x3xf32>
    %c0_61 = arith.constant 0 : index
    %c0_62 = arith.constant 0 : index
    %c0_63 = arith.constant 0 : index
    %c0_64 = arith.constant 0 : index
    %63 = vector.load %arg6[%c0_61, %c0_62, %c0_63, %c0_64] : memref<3x3x3x128xf32, #tpu.memory_space<vmem>>, vector<1x1x3x128xf32>
    %64 = vector.shape_cast %63 : vector<1x1x3x128xf32> to vector<3x128xf32>
    %cst_65 = arith.constant dense<0.000000e+00> : vector<224x128xf32>
    %65 = tpu.matmul %62, %64, %cst_65 {dimension_numbers = #tpu.dot_dimension_numbers<[1], [0], [0], [1], [0, 0, 1, 1], [], []>} : vector<224x3xf32>, vector<3x128xf32>, vector<224x128xf32> -> vector<224x128xf32>
    %66 = vector.extract_strided_slice %1 {offsets = [0, 1, 0], sizes = [7, 32, 3], strides = [1, 1, 1]} : vector<8x33x3xf32> to vector<7x32x3xf32>
    %67 = vector.shape_cast %66 : vector<7x32x3xf32> to vector<224x3xf32>
    %c0_66 = arith.constant 0 : index
    %c1_67 = arith.constant 1 : index
    %c0_68 = arith.constant 0 : index
    %c0_69 = arith.constant 0 : index
    %68 = vector.load %arg6[%c0_66, %c1_67, %c0_68, %c0_69] : memref<3x3x3x128xf32, #tpu.memory_space<vmem>>, vector<1x1x3x128xf32>
    %69 = vector.shape_cast %68 : vector<1x1x3x128xf32> to vector<3x128xf32>
    %cst_70 = arith.constant dense<0.000000e+00> : vector<224x128xf32>
    %70 = tpu.matmul %67, %69, %cst_70 {dimension_numbers = #tpu.dot_dimension_numbers<[1], [0], [0], [1], [0, 0, 1, 1], [], []>} : vector<224x3xf32>, vector<3x128xf32>, vector<224x128xf32> -> vector<224x128xf32>
    %71 = arith.addf %65, %70 : vector<224x128xf32>
    %72 = vector.extract_strided_slice %3 {offsets = [0, 1, 0], sizes = [7, 32, 3], strides = [1, 1, 1]} : vector<8x33x3xf32> to vector<7x32x3xf32>
    %73 = vector.shape_cast %72 : vector<7x32x3xf32> to vector<224x3xf32>
    %c0_71 = arith.constant 0 : index
    %c2_72 = arith.constant 2 : index
    %c0_73 = arith.constant 0 : index
    %c0_74 = arith.constant 0 : index
    %74 = vector.load %arg6[%c0_71, %c2_72, %c0_73, %c0_74] : memref<3x3x3x128xf32, #tpu.memory_space<vmem>>, vector<1x1x3x128xf32>
    %75 = vector.shape_cast %74 : vector<1x1x3x128xf32> to vector<3x128xf32>
    %cst_75 = arith.constant dense<0.000000e+00> : vector<224x128xf32>
    %76 = tpu.matmul %73, %75, %cst_75 {dimension_numbers = #tpu.dot_dimension_numbers<[1], [0], [0], [1], [0, 0, 1, 1], [], []>} : vector<224x3xf32>, vector<3x128xf32>, vector<224x128xf32> -> vector<224x128xf32>
    %77 = arith.addf %71, %76 : vector<224x128xf32>
    %78 = vector.extract_strided_slice %7 {offsets = [0, 0, 0], sizes = [7, 32, 3], strides = [1, 1, 1]} : vector<8x33x3xf32> to vector<7x32x3xf32>
    %79 = vector.shape_cast %78 : vector<7x32x3xf32> to vector<224x3xf32>
    %c1_76 = arith.constant 1 : index
    %c0_77 = arith.constant 0 : index
    %c0_78 = arith.constant 0 : index
    %c0_79 = arith.constant 0 : index
    %80 = vector.load %arg6[%c1_76, %c0_77, %c0_78, %c0_79] : memref<3x3x3x128xf32, #tpu.memory_space<vmem>>, vector<1x1x3x128xf32>
    %81 = vector.shape_cast %80 : vector<1x1x3x128xf32> to vector<3x128xf32>
    %cst_80 = arith.constant dense<0.000000e+00> : vector<224x128xf32>
    %82 = tpu.matmul %79, %81, %cst_80 {dimension_numbers = #tpu.dot_dimension_numbers<[1], [0], [0], [1], [0, 0, 1, 1], [], []>} : vector<224x3xf32>, vector<3x128xf32>, vector<224x128xf32> -> vector<224x128xf32>
    %83 = arith.addf %77, %82 : vector<224x128xf32>
    %84 = vector.extract_strided_slice %5 {offsets = [0, 1, 0], sizes = [7, 32, 3], strides = [1, 1, 1]} : vector<8x33x3xf32> to vector<7x32x3xf32>
    %85 = vector.shape_cast %84 : vector<7x32x3xf32> to vector<224x3xf32>
    %c1_81 = arith.constant 1 : index
    %c1_82 = arith.constant 1 : index
    %c0_83 = arith.constant 0 : index
    %c0_84 = arith.constant 0 : index
    %86 = vector.load %arg6[%c1_81, %c1_82, %c0_83, %c0_84] : memref<3x3x3x128xf32, #tpu.memory_space<vmem>>, vector<1x1x3x128xf32>
    %87 = vector.shape_cast %86 : vector<1x1x3x128xf32> to vector<3x128xf32>
    %cst_85 = arith.constant dense<0.000000e+00> : vector<224x128xf32>
    %88 = tpu.matmul %85, %87, %cst_85 {dimension_numbers = #tpu.dot_dimension_numbers<[1], [0], [0], [1], [0, 0, 1, 1], [], []>} : vector<224x3xf32>, vector<3x128xf32>, vector<224x128xf32> -> vector<224x128xf32>
    %89 = arith.addf %83, %88 : vector<224x128xf32>
    %90 = vector.extract_strided_slice %7 {offsets = [0, 1, 0], sizes = [7, 32, 3], strides = [1, 1, 1]} : vector<8x33x3xf32> to vector<7x32x3xf32>
    %91 = vector.shape_cast %90 : vector<7x32x3xf32> to vector<224x3xf32>
    %c1_86 = arith.constant 1 : index
    %c2_87 = arith.constant 2 : index
    %c0_88 = arith.constant 0 : index
    %c0_89 = arith.constant 0 : index
    %92 = vector.load %arg6[%c1_86, %c2_87, %c0_88, %c0_89] : memref<3x3x3x128xf32, #tpu.memory_space<vmem>>, vector<1x1x3x128xf32>
    %93 = vector.shape_cast %92 : vector<1x1x3x128xf32> to vector<3x128xf32>
    %cst_90 = arith.constant dense<0.000000e+00> : vector<224x128xf32>
    %94 = tpu.matmul %91, %93, %cst_90 {dimension_numbers = #tpu.dot_dimension_numbers<[1], [0], [0], [1], [0, 0, 1, 1], [], []>} : vector<224x3xf32>, vector<3x128xf32>, vector<224x128xf32> -> vector<224x128xf32>
    %95 = arith.addf %89, %94 : vector<224x128xf32>
    %96 = vector.extract_strided_slice %3 {offsets = [1, 0, 0], sizes = [7, 32, 3], strides = [1, 1, 1]} : vector<8x33x3xf32> to vector<7x32x3xf32>
    %97 = vector.shape_cast %96 : vector<7x32x3xf32> to vector<224x3xf32>
    %c2_91 = arith.constant 2 : index
    %c0_92 = arith.constant 0 : index
    %c0_93 = arith.constant 0 : index
    %c0_94 = arith.constant 0 : index
    %98 = vector.load %arg6[%c2_91, %c0_92, %c0_93, %c0_94] : memref<3x3x3x128xf32, #tpu.memory_space<vmem>>, vector<1x1x3x128xf32>
    %99 = vector.shape_cast %98 : vector<1x1x3x128xf32> to vector<3x128xf32>
    %cst_95 = arith.constant dense<0.000000e+00> : vector<224x128xf32>
    %100 = tpu.matmul %97, %99, %cst_95 {dimension_numbers = #tpu.dot_dimension_numbers<[1], [0], [0], [1], [0, 0, 1, 1], [], []>} : vector<224x3xf32>, vector<3x128xf32>, vector<224x128xf32> -> vector<224x128xf32>
    %101 = arith.addf %95, %100 : vector<224x128xf32>
    %102 = vector.extract_strided_slice %1 {offsets = [1, 1, 0], sizes = [7, 32, 3], strides = [1, 1, 1]} : vector<8x33x3xf32> to vector<7x32x3xf32>
    %103 = vector.shape_cast %102 : vector<7x32x3xf32> to vector<224x3xf32>
    %c2_96 = arith.constant 2 : index
    %c1_97 = arith.constant 1 : index
    %c0_98 = arith.constant 0 : index
    %c0_99 = arith.constant 0 : index
    %104 = vector.load %arg6[%c2_96, %c1_97, %c0_98, %c0_99] : memref<3x3x3x128xf32, #tpu.memory_space<vmem>>, vector<1x1x3x128xf32>
    %105 = vector.shape_cast %104 : vector<1x1x3x128xf32> to vector<3x128xf32>
    %cst_100 = arith.constant dense<0.000000e+00> : vector<224x128xf32>
    %106 = tpu.matmul %103, %105, %cst_100 {dimension_numbers = #tpu.dot_dimension_numbers<[1], [0], [0], [1], [0, 0, 1, 1], [], []>} : vector<224x3xf32>, vector<3x128xf32>, vector<224x128xf32> -> vector<224x128xf32>
    %107 = arith.addf %101, %106 : vector<224x128xf32>
    %108 = vector.extract_strided_slice %3 {offsets = [1, 1, 0], sizes = [7, 32, 3], strides = [1, 1, 1]} : vector<8x33x3xf32> to vector<7x32x3xf32>
    %109 = vector.shape_cast %108 : vector<7x32x3xf32> to vector<224x3xf32>
    %c2_101 = arith.constant 2 : index
    %c2_102 = arith.constant 2 : index
    %c0_103 = arith.constant 0 : index
    %c0_104 = arith.constant 0 : index
    %110 = vector.load %arg6[%c2_101, %c2_102, %c0_103, %c0_104] : memref<3x3x3x128xf32, #tpu.memory_space<vmem>>, vector<1x1x3x128xf32>
    %111 = vector.shape_cast %110 : vector<1x1x3x128xf32> to vector<3x128xf32>
    %cst_105 = arith.constant dense<0.000000e+00> : vector<224x128xf32>
    %112 = tpu.matmul %109, %111, %cst_105 {dimension_numbers = #tpu.dot_dimension_numbers<[1], [0], [0], [1], [0, 0, 1, 1], [], []>} : vector<224x3xf32>, vector<3x128xf32>, vector<224x128xf32> -> vector<224x128xf32>
    %113 = arith.addf %107, %112 : vector<224x128xf32>
    %114 = arith.maximumf %60, %113 : vector<224x128xf32>
    %115 = vector.extract_strided_slice %5 {offsets = [0, 0, 0], sizes = [7, 32, 3], strides = [1, 1, 1]} : vector<8x33x3xf32> to vector<7x32x3xf32>
    %116 = vector.shape_cast %115 : vector<7x32x3xf32> to vector<224x3xf32>
    %c0_106 = arith.constant 0 : index
    %c0_107 = arith.constant 0 : index
    %c0_108 = arith.constant 0 : index
    %c0_109 = arith.constant 0 : index
    %117 = vector.load %arg6[%c0_106, %c0_107, %c0_108, %c0_109] : memref<3x3x3x128xf32, #tpu.memory_space<vmem>>, vector<1x1x3x128xf32>
    %118 = vector.shape_cast %117 : vector<1x1x3x128xf32> to vector<3x128xf32>
    %cst_110 = arith.constant dense<0.000000e+00> : vector<224x128xf32>
    %119 = tpu.matmul %116, %118, %cst_110 {dimension_numbers = #tpu.dot_dimension_numbers<[1], [0], [0], [1], [0, 0, 1, 1], [], []>} : vector<224x3xf32>, vector<3x128xf32>, vector<224x128xf32> -> vector<224x128xf32>
    %120 = vector.extract_strided_slice %7 {offsets = [0, 0, 0], sizes = [7, 32, 3], strides = [1, 1, 1]} : vector<8x33x3xf32> to vector<7x32x3xf32>
    %121 = vector.shape_cast %120 : vector<7x32x3xf32> to vector<224x3xf32>
    %c0_111 = arith.constant 0 : index
    %c1_112 = arith.constant 1 : index
    %c0_113 = arith.constant 0 : index
    %c0_114 = arith.constant 0 : index
    %122 = vector.load %arg6[%c0_111, %c1_112, %c0_113, %c0_114] : memref<3x3x3x128xf32, #tpu.memory_space<vmem>>, vector<1x1x3x128xf32>
    %123 = vector.shape_cast %122 : vector<1x1x3x128xf32> to vector<3x128xf32>
    %cst_115 = arith.constant dense<0.000000e+00> : vector<224x128xf32>
    %124 = tpu.matmul %121, %123, %cst_115 {dimension_numbers = #tpu.dot_dimension_numbers<[1], [0], [0], [1], [0, 0, 1, 1], [], []>} : vector<224x3xf32>, vector<3x128xf32>, vector<224x128xf32> -> vector<224x128xf32>
    %125 = arith.addf %119, %124 : vector<224x128xf32>
    %126 = vector.extract_strided_slice %5 {offsets = [0, 1, 0], sizes = [7, 32, 3], strides = [1, 1, 1]} : vector<8x33x3xf32> to vector<7x32x3xf32>
    %127 = vector.shape_cast %126 : vector<7x32x3xf32> to vector<224x3xf32>
    %c0_116 = arith.constant 0 : index
    %c2_117 = arith.constant 2 : index
    %c0_118 = arith.constant 0 : index
    %c0_119 = arith.constant 0 : index
    %128 = vector.load %arg6[%c0_116, %c2_117, %c0_118, %c0_119] : memref<3x3x3x128xf32, #tpu.memory_space<vmem>>, vector<1x1x3x128xf32>
    %129 = vector.shape_cast %128 : vector<1x1x3x128xf32> to vector<3x128xf32>
    %cst_120 = arith.constant dense<0.000000e+00> : vector<224x128xf32>
    %130 = tpu.matmul %127, %129, %cst_120 {dimension_numbers = #tpu.dot_dimension_numbers<[1], [0], [0], [1], [0, 0, 1, 1], [], []>} : vector<224x3xf32>, vector<3x128xf32>, vector<224x128xf32> -> vector<224x128xf32>
    %131 = arith.addf %125, %130 : vector<224x128xf32>
    %132 = vector.extract_strided_slice %1 {offsets = [1, 0, 0], sizes = [7, 32, 3], strides = [1, 1, 1]} : vector<8x33x3xf32> to vector<7x32x3xf32>
    %133 = vector.shape_cast %132 : vector<7x32x3xf32> to vector<224x3xf32>
    %c1_121 = arith.constant 1 : index
    %c0_122 = arith.constant 0 : index
    %c0_123 = arith.constant 0 : index
    %c0_124 = arith.constant 0 : index
    %134 = vector.load %arg6[%c1_121, %c0_122, %c0_123, %c0_124] : memref<3x3x3x128xf32, #tpu.memory_space<vmem>>, vector<1x1x3x128xf32>
    %135 = vector.shape_cast %134 : vector<1x1x3x128xf32> to vector<3x128xf32>
    %cst_125 = arith.constant dense<0.000000e+00> : vector<224x128xf32>
    %136 = tpu.matmul %133, %135, %cst_125 {dimension_numbers = #tpu.dot_dimension_numbers<[1], [0], [0], [1], [0, 0, 1, 1], [], []>} : vector<224x3xf32>, vector<3x128xf32>, vector<224x128xf32> -> vector<224x128xf32>
    %137 = arith.addf %131, %136 : vector<224x128xf32>
    %138 = vector.extract_strided_slice %3 {offsets = [1, 0, 0], sizes = [7, 32, 3], strides = [1, 1, 1]} : vector<8x33x3xf32> to vector<7x32x3xf32>
    %139 = vector.shape_cast %138 : vector<7x32x3xf32> to vector<224x3xf32>
    %c1_126 = arith.constant 1 : index
    %c1_127 = arith.constant 1 : index
    %c0_128 = arith.constant 0 : index
    %c0_129 = arith.constant 0 : index
    %140 = vector.load %arg6[%c1_126, %c1_127, %c0_128, %c0_129] : memref<3x3x3x128xf32, #tpu.memory_space<vmem>>, vector<1x1x3x128xf32>
    %141 = vector.shape_cast %140 : vector<1x1x3x128xf32> to vector<3x128xf32>
    %cst_130 = arith.constant dense<0.000000e+00> : vector<224x128xf32>
    %142 = tpu.matmul %139, %141, %cst_130 {dimension_numbers = #tpu.dot_dimension_numbers<[1], [0], [0], [1], [0, 0, 1, 1], [], []>} : vector<224x3xf32>, vector<3x128xf32>, vector<224x128xf32> -> vector<224x128xf32>
    %143 = arith.addf %137, %142 : vector<224x128xf32>
    %144 = vector.extract_strided_slice %1 {offsets = [1, 1, 0], sizes = [7, 32, 3], strides = [1, 1, 1]} : vector<8x33x3xf32> to vector<7x32x3xf32>
    %145 = vector.shape_cast %144 : vector<7x32x3xf32> to vector<224x3xf32>
    %c1_131 = arith.constant 1 : index
    %c2_132 = arith.constant 2 : index
    %c0_133 = arith.constant 0 : index
    %c0_134 = arith.constant 0 : index
    %146 = vector.load %arg6[%c1_131, %c2_132, %c0_133, %c0_134] : memref<3x3x3x128xf32, #tpu.memory_space<vmem>>, vector<1x1x3x128xf32>
    %147 = vector.shape_cast %146 : vector<1x1x3x128xf32> to vector<3x128xf32>
    %cst_135 = arith.constant dense<0.000000e+00> : vector<224x128xf32>
    %148 = tpu.matmul %145, %147, %cst_135 {dimension_numbers = #tpu.dot_dimension_numbers<[1], [0], [0], [1], [0, 0, 1, 1], [], []>} : vector<224x3xf32>, vector<3x128xf32>, vector<224x128xf32> -> vector<224x128xf32>
    %149 = arith.addf %143, %148 : vector<224x128xf32>
    %150 = vector.extract_strided_slice %5 {offsets = [1, 0, 0], sizes = [7, 32, 3], strides = [1, 1, 1]} : vector<8x33x3xf32> to vector<7x32x3xf32>
    %151 = vector.shape_cast %150 : vector<7x32x3xf32> to vector<224x3xf32>
    %c2_136 = arith.constant 2 : index
    %c0_137 = arith.constant 0 : index
    %c0_138 = arith.constant 0 : index
    %c0_139 = arith.constant 0 : index
    %152 = vector.load %arg6[%c2_136, %c0_137, %c0_138, %c0_139] : memref<3x3x3x128xf32, #tpu.memory_space<vmem>>, vector<1x1x3x128xf32>
    %153 = vector.shape_cast %152 : vector<1x1x3x128xf32> to vector<3x128xf32>
    %cst_140 = arith.constant dense<0.000000e+00> : vector<224x128xf32>
    %154 = tpu.matmul %151, %153, %cst_140 {dimension_numbers = #tpu.dot_dimension_numbers<[1], [0], [0], [1], [0, 0, 1, 1], [], []>} : vector<224x3xf32>, vector<3x128xf32>, vector<224x128xf32> -> vector<224x128xf32>
    %155 = arith.addf %149, %154 : vector<224x128xf32>
    %156 = vector.extract_strided_slice %7 {offsets = [1, 0, 0], sizes = [7, 32, 3], strides = [1, 1, 1]} : vector<8x33x3xf32> to vector<7x32x3xf32>
    %157 = vector.shape_cast %156 : vector<7x32x3xf32> to vector<224x3xf32>
    %c2_141 = arith.constant 2 : index
    %c1_142 = arith.constant 1 : index
    %c0_143 = arith.constant 0 : index
    %c0_144 = arith.constant 0 : index
    %158 = vector.load %arg6[%c2_141, %c1_142, %c0_143, %c0_144] : memref<3x3x3x128xf32, #tpu.memory_space<vmem>>, vector<1x1x3x128xf32>
    %159 = vector.shape_cast %158 : vector<1x1x3x128xf32> to vector<3x128xf32>
    %cst_145 = arith.constant dense<0.000000e+00> : vector<224x128xf32>
    %160 = tpu.matmul %157, %159, %cst_145 {dimension_numbers = #tpu.dot_dimension_numbers<[1], [0], [0], [1], [0, 0, 1, 1], [], []>} : vector<224x3xf32>, vector<3x128xf32>, vector<224x128xf32> -> vector<224x128xf32>
    %161 = arith.addf %155, %160 : vector<224x128xf32>
    %162 = vector.extract_strided_slice %5 {offsets = [1, 1, 0], sizes = [7, 32, 3], strides = [1, 1, 1]} : vector<8x33x3xf32> to vector<7x32x3xf32>
    %163 = vector.shape_cast %162 : vector<7x32x3xf32> to vector<224x3xf32>
    %c2_146 = arith.constant 2 : index
    %c2_147 = arith.constant 2 : index
    %c0_148 = arith.constant 0 : index
    %c0_149 = arith.constant 0 : index
    %164 = vector.load %arg6[%c2_146, %c2_147, %c0_148, %c0_149] : memref<3x3x3x128xf32, #tpu.memory_space<vmem>>, vector<1x1x3x128xf32>
    %165 = vector.shape_cast %164 : vector<1x1x3x128xf32> to vector<3x128xf32>
    %cst_150 = arith.constant dense<0.000000e+00> : vector<224x128xf32>
    %166 = tpu.matmul %163, %165, %cst_150 {dimension_numbers = #tpu.dot_dimension_numbers<[1], [0], [0], [1], [0, 0, 1, 1], [], []>} : vector<224x3xf32>, vector<3x128xf32>, vector<224x128xf32> -> vector<224x128xf32>
    %167 = arith.addf %161, %166 : vector<224x128xf32>
    %168 = arith.maximumf %114, %167 : vector<224x128xf32>
    %169 = vector.extract_strided_slice %7 {offsets = [0, 0, 0], sizes = [7, 32, 3], strides = [1, 1, 1]} : vector<8x33x3xf32> to vector<7x32x3xf32>
    %170 = vector.shape_cast %169 : vector<7x32x3xf32> to vector<224x3xf32>
    %c0_151 = arith.constant 0 : index
    %c0_152 = arith.constant 0 : index
    %c0_153 = arith.constant 0 : index
    %c0_154 = arith.constant 0 : index
    %171 = vector.load %arg6[%c0_151, %c0_152, %c0_153, %c0_154] : memref<3x3x3x128xf32, #tpu.memory_space<vmem>>, vector<1x1x3x128xf32>
    %172 = vector.shape_cast %171 : vector<1x1x3x128xf32> to vector<3x128xf32>
    %cst_155 = arith.constant dense<0.000000e+00> : vector<224x128xf32>
    %173 = tpu.matmul %170, %172, %cst_155 {dimension_numbers = #tpu.dot_dimension_numbers<[1], [0], [0], [1], [0, 0, 1, 1], [], []>} : vector<224x3xf32>, vector<3x128xf32>, vector<224x128xf32> -> vector<224x128xf32>
    %174 = vector.extract_strided_slice %5 {offsets = [0, 1, 0], sizes = [7, 32, 3], strides = [1, 1, 1]} : vector<8x33x3xf32> to vector<7x32x3xf32>
    %175 = vector.shape_cast %174 : vector<7x32x3xf32> to vector<224x3xf32>
    %c0_156 = arith.constant 0 : index
    %c1_157 = arith.constant 1 : index
    %c0_158 = arith.constant 0 : index
    %c0_159 = arith.constant 0 : index
    %176 = vector.load %arg6[%c0_156, %c1_157, %c0_158, %c0_159] : memref<3x3x3x128xf32, #tpu.memory_space<vmem>>, vector<1x1x3x128xf32>
    %177 = vector.shape_cast %176 : vector<1x1x3x128xf32> to vector<3x128xf32>
    %cst_160 = arith.constant dense<0.000000e+00> : vector<224x128xf32>
    %178 = tpu.matmul %175, %177, %cst_160 {dimension_numbers = #tpu.dot_dimension_numbers<[1], [0], [0], [1], [0, 0, 1, 1], [], []>} : vector<224x3xf32>, vector<3x128xf32>, vector<224x128xf32> -> vector<224x128xf32>
    %179 = arith.addf %173, %178 : vector<224x128xf32>
    %180 = vector.extract_strided_slice %7 {offsets = [0, 1, 0], sizes = [7, 32, 3], strides = [1, 1, 1]} : vector<8x33x3xf32> to vector<7x32x3xf32>
    %181 = vector.shape_cast %180 : vector<7x32x3xf32> to vector<224x3xf32>
    %c0_161 = arith.constant 0 : index
    %c2_162 = arith.constant 2 : index
    %c0_163 = arith.constant 0 : index
    %c0_164 = arith.constant 0 : index
    %182 = vector.load %arg6[%c0_161, %c2_162, %c0_163, %c0_164] : memref<3x3x3x128xf32, #tpu.memory_space<vmem>>, vector<1x1x3x128xf32>
    %183 = vector.shape_cast %182 : vector<1x1x3x128xf32> to vector<3x128xf32>
    %cst_165 = arith.constant dense<0.000000e+00> : vector<224x128xf32>
    %184 = tpu.matmul %181, %183, %cst_165 {dimension_numbers = #tpu.dot_dimension_numbers<[1], [0], [0], [1], [0, 0, 1, 1], [], []>} : vector<224x3xf32>, vector<3x128xf32>, vector<224x128xf32> -> vector<224x128xf32>
    %185 = arith.addf %179, %184 : vector<224x128xf32>
    %186 = vector.extract_strided_slice %3 {offsets = [1, 0, 0], sizes = [7, 32, 3], strides = [1, 1, 1]} : vector<8x33x3xf32> to vector<7x32x3xf32>
    %187 = vector.shape_cast %186 : vector<7x32x3xf32> to vector<224x3xf32>
    %c1_166 = arith.constant 1 : index
    %c0_167 = arith.constant 0 : index
    %c0_168 = arith.constant 0 : index
    %c0_169 = arith.constant 0 : index
    %188 = vector.load %arg6[%c1_166, %c0_167, %c0_168, %c0_169] : memref<3x3x3x128xf32, #tpu.memory_space<vmem>>, vector<1x1x3x128xf32>
    %189 = vector.shape_cast %188 : vector<1x1x3x128xf32> to vector<3x128xf32>
    %cst_170 = arith.constant dense<0.000000e+00> : vector<224x128xf32>
    %190 = tpu.matmul %187, %189, %cst_170 {dimension_numbers = #tpu.dot_dimension_numbers<[1], [0], [0], [1], [0, 0, 1, 1], [], []>} : vector<224x3xf32>, vector<3x128xf32>, vector<224x128xf32> -> vector<224x128xf32>
    %191 = arith.addf %185, %190 : vector<224x128xf32>
    %192 = vector.extract_strided_slice %1 {offsets = [1, 1, 0], sizes = [7, 32, 3], strides = [1, 1, 1]} : vector<8x33x3xf32> to vector<7x32x3xf32>
    %193 = vector.shape_cast %192 : vector<7x32x3xf32> to vector<224x3xf32>
    %c1_171 = arith.constant 1 : index
    %c1_172 = arith.constant 1 : index
    %c0_173 = arith.constant 0 : index
    %c0_174 = arith.constant 0 : index
    %194 = vector.load %arg6[%c1_171, %c1_172, %c0_173, %c0_174] : memref<3x3x3x128xf32, #tpu.memory_space<vmem>>, vector<1x1x3x128xf32>
    %195 = vector.shape_cast %194 : vector<1x1x3x128xf32> to vector<3x128xf32>
    %cst_175 = arith.constant dense<0.000000e+00> : vector<224x128xf32>
    %196 = tpu.matmul %193, %195, %cst_175 {dimension_numbers = #tpu.dot_dimension_numbers<[1], [0], [0], [1], [0, 0, 1, 1], [], []>} : vector<224x3xf32>, vector<3x128xf32>, vector<224x128xf32> -> vector<224x128xf32>
    %197 = arith.addf %191, %196 : vector<224x128xf32>
    %198 = vector.extract_strided_slice %3 {offsets = [1, 1, 0], sizes = [7, 32, 3], strides = [1, 1, 1]} : vector<8x33x3xf32> to vector<7x32x3xf32>
    %199 = vector.shape_cast %198 : vector<7x32x3xf32> to vector<224x3xf32>
    %c1_176 = arith.constant 1 : index
    %c2_177 = arith.constant 2 : index
    %c0_178 = arith.constant 0 : index
    %c0_179 = arith.constant 0 : index
    %200 = vector.load %arg6[%c1_176, %c2_177, %c0_178, %c0_179] : memref<3x3x3x128xf32, #tpu.memory_space<vmem>>, vector<1x1x3x128xf32>
    %201 = vector.shape_cast %200 : vector<1x1x3x128xf32> to vector<3x128xf32>
    %cst_180 = arith.constant dense<0.000000e+00> : vector<224x128xf32>
    %202 = tpu.matmul %199, %201, %cst_180 {dimension_numbers = #tpu.dot_dimension_numbers<[1], [0], [0], [1], [0, 0, 1, 1], [], []>} : vector<224x3xf32>, vector<3x128xf32>, vector<224x128xf32> -> vector<224x128xf32>
    %203 = arith.addf %197, %202 : vector<224x128xf32>
    %204 = vector.extract_strided_slice %7 {offsets = [1, 0, 0], sizes = [7, 32, 3], strides = [1, 1, 1]} : vector<8x33x3xf32> to vector<7x32x3xf32>
    %205 = vector.shape_cast %204 : vector<7x32x3xf32> to vector<224x3xf32>
    %c2_181 = arith.constant 2 : index
    %c0_182 = arith.constant 0 : index
    %c0_183 = arith.constant 0 : index
    %c0_184 = arith.constant 0 : index
    %206 = vector.load %arg6[%c2_181, %c0_182, %c0_183, %c0_184] : memref<3x3x3x128xf32, #tpu.memory_space<vmem>>, vector<1x1x3x128xf32>
    %207 = vector.shape_cast %206 : vector<1x1x3x128xf32> to vector<3x128xf32>
    %cst_185 = arith.constant dense<0.000000e+00> : vector<224x128xf32>
    %208 = tpu.matmul %205, %207, %cst_185 {dimension_numbers = #tpu.dot_dimension_numbers<[1], [0], [0], [1], [0, 0, 1, 1], [], []>} : vector<224x3xf32>, vector<3x128xf32>, vector<224x128xf32> -> vector<224x128xf32>
    %209 = arith.addf %203, %208 : vector<224x128xf32>
    %210 = vector.extract_strided_slice %5 {offsets = [1, 1, 0], sizes = [7, 32, 3], strides = [1, 1, 1]} : vector<8x33x3xf32> to vector<7x32x3xf32>
    %211 = vector.shape_cast %210 : vector<7x32x3xf32> to vector<224x3xf32>
    %c2_186 = arith.constant 2 : index
    %c1_187 = arith.constant 1 : index
    %c0_188 = arith.constant 0 : index
    %c0_189 = arith.constant 0 : index
    %212 = vector.load %arg6[%c2_186, %c1_187, %c0_188, %c0_189] : memref<3x3x3x128xf32, #tpu.memory_space<vmem>>, vector<1x1x3x128xf32>
    %213 = vector.shape_cast %212 : vector<1x1x3x128xf32> to vector<3x128xf32>
    %cst_190 = arith.constant dense<0.000000e+00> : vector<224x128xf32>
    %214 = tpu.matmul %211, %213, %cst_190 {dimension_numbers = #tpu.dot_dimension_numbers<[1], [0], [0], [1], [0, 0, 1, 1], [], []>} : vector<224x3xf32>, vector<3x128xf32>, vector<224x128xf32> -> vector<224x128xf32>
    %215 = arith.addf %209, %214 : vector<224x128xf32>
    %216 = vector.extract_strided_slice %7 {offsets = [1, 1, 0], sizes = [7, 32, 3], strides = [1, 1, 1]} : vector<8x33x3xf32> to vector<7x32x3xf32>
    %217 = vector.shape_cast %216 : vector<7x32x3xf32> to vector<224x3xf32>
    %c2_191 = arith.constant 2 : index
    %c2_192 = arith.constant 2 : index
    %c0_193 = arith.constant 0 : index
    %c0_194 = arith.constant 0 : index
    %218 = vector.load %arg6[%c2_191, %c2_192, %c0_193, %c0_194] : memref<3x3x3x128xf32, #tpu.memory_space<vmem>>, vector<1x1x3x128xf32>
    %219 = vector.shape_cast %218 : vector<1x1x3x128xf32> to vector<3x128xf32>
    %cst_195 = arith.constant dense<0.000000e+00> : vector<224x128xf32>
    %220 = tpu.matmul %217, %219, %cst_195 {dimension_numbers = #tpu.dot_dimension_numbers<[1], [0], [0], [1], [0, 0, 1, 1], [], []>} : vector<224x3xf32>, vector<3x128xf32>, vector<224x128xf32> -> vector<224x128xf32>
    %221 = arith.addf %215, %220 : vector<224x128xf32>
    %222 = arith.maximumf %168, %221 : vector<224x128xf32>
    %c0_196 = arith.constant 0 : index
    %c0_197 = arith.constant 0 : index
    %223 = vector.load %arg7[%c0_196, %c0_197] : memref<1x128xf32, #tpu.memory_space<vmem>>, vector<1x128xf32>
    %224 = vector.broadcast %223 : vector<1x128xf32> to vector<224x128xf32>
    %225 = arith.addf %222, %224 : vector<224x128xf32>
    %cst_198 = arith.constant 0.000000e+00 : f32
    %226 = vector.broadcast %cst_198 : f32 to vector<224x128xf32>
    %227 = arith.maximumf %225, %226 : vector<224x128xf32>
    %228 = vector.shape_cast %227 : vector<224x128xf32> to vector<7x32x128xf32>
    %229 = vector.extract_strided_slice %228 {offsets = [0, 0, 0], sizes = [7, 28, 128], strides = [1, 1, 1]} : vector<7x32x128xf32> to vector<7x28x128xf32>
    %c0_199 = arith.constant 0 : index
    %c0_200 = arith.constant 0 : index
    %c0_201 = arith.constant 0 : index
    %c0_202 = arith.constant 0 : index
    %230 = vector.load %arg8[%c0_199, %c0_200, %c0_201, %c0_202] : memref<1x7x28x128xf32, #tpu.memory_space<vmem>>, vector<1x7x28x128xf32>
    %231 = vector.shape_cast %230 : vector<1x7x28x128xf32> to vector<7x28x128xf32>
    %232 = vector.shape_cast %229 : vector<7x28x128xf32> to vector<1x7x28x128xf32>
    tpu.vector_store %arg8[%c0_199, %c0_200, %c0_201, %c0_202], %232 {strides = array<i32>} : memref<1x7x28x128xf32, #tpu.memory_space<vmem>>, vector<1x7x28x128xf32>,
    return
  }
  func.func @transform_0(%arg0: i32, %arg1: i32) -> (i32, i32, i32, i32, i32) {
    %c0_i32 = arith.constant 0 : i32
    %c0_i32_0 = arith.constant 0 : i32
    %c0_i32_1 = arith.constant 0 : i32
    %c0_i32_2 = arith.constant 0 : i32
    return %arg0, %arg1, %c0_i32, %c0_i32_0, %c0_i32_1 : i32, i32, i32, i32, i32
  }
  func.func @transform_1(%arg0: i32, %arg1: i32) -> (i32, i32, i32, i32, i32) {
    %c0_i32 = arith.constant 0 : i32
    %c0_i32_0 = arith.constant 0 : i32
    %c0_i32_1 = arith.constant 0 : i32
    %c0_i32_2 = arith.constant 0 : i32
    return %arg0, %arg1, %c0_i32, %c0_i32_0, %c0_i32_1 : i32, i32, i32, i32, i32
  }
  func.func @transform_2(%arg0: i32, %arg1: i32) -> (i32, i32, i32, i32, i32) {
    %c0_i32 = arith.constant 0 : i32
    %c0_i32_0 = arith.constant 0 : i32
    %c0_i32_1 = arith.constant 0 : i32
    %c0_i32_2 = arith.constant 0 : i32
    return %arg0, %arg1, %c0_i32, %c0_i32_0, %c0_i32_1 : i32, i32, i32, i32, i32
  }
  func.func @transform_3(%arg0: i32, %arg1: i32) -> (i32, i32, i32, i32, i32) {
    %c0_i32 = arith.constant 0 : i32
    %c0_i32_0 = arith.constant 0 : i32
    %c0_i32_1 = arith.constant 0 : i32
    %c0_i32_2 = arith.constant 0 : i32
    return %arg0, %arg1, %c0_i32, %c0_i32_0, %c0_i32_1 : i32, i32, i32, i32, i32
  }
  func.func @transform_4(%arg0: i32, %arg1: i32) -> (i32, i32, i32, i32) {
    %c0_i32 = arith.constant 0 : i32
    %c0_i32_0 = arith.constant 0 : i32
    %c0_i32_1 = arith.constant 0 : i32
    %c0_i32_2 = arith.constant 0 : i32
    %c0_i32_3 = arith.constant 0 : i32
    return %c0_i32, %c0_i32_0, %c0_i32_1, %c0_i32_2 : i32, i32, i32, i32
  }
  func.func @transform_5(%arg0: i32, %arg1: i32) -> (i32, i32) {
    %c0_i32 = arith.constant 0 : i32
    %c0_i32_0 = arith.constant 0 : i32
    %c0_i32_1 = arith.constant 0 : i32
    return %c0_i32, %c0_i32_0 : i32, i32
  }
  func.func @transform_6(%arg0: i32, %arg1: i32) -> (i32, i32, i32, i32) {
    %c0_i32 = arith.constant 0 : i32
    %c0_i32_0 = arith.constant 0 : i32
    %c0_i32_1 = arith.constant 0 : i32
    return %arg0, %arg1, %c0_i32, %c0_i32_0 : i32, i32, i32, i32
  }
}

module attributes {stable_mosaic.version = 11 : i64} {
  func.func @_conv3x3_relu_pool_kernel(%arg0: i32, %arg1: i32, %arg2: memref<1x1x8x17x128xf32, #tpu.memory_space<vmem>>, %arg3: memref<1x1x8x17x128xf32, #tpu.memory_space<vmem>>, %arg4: memref<1x1x8x17x128xf32, #tpu.memory_space<vmem>>, %arg5: memref<1x1x8x17x128xf32, #tpu.memory_space<vmem>>, %arg6: memref<3x3x128x128xf32, #tpu.memory_space<vmem>>, %arg7: memref<1x128xf32, #tpu.memory_space<vmem>>, %arg8: memref<1x7x14x128xf32, #tpu.memory_space<vmem>>) attributes {dimension_semantics = [#tpu.dimension_semantics<parallel>, #tpu.dimension_semantics<parallel>], iteration_bounds = array<i64: 2, 2>, scalar_prefetch = 0 : i64, scratch_operands = 0 : i64, tpu.core_type = #tpu.core_type<tc>, window_params = [{transform_indices = @transform_0, window_bounds = array<i64: 1, 1, 8, 17, 128>}, {transform_indices = @transform_1, window_bounds = array<i64: 1, 1, 8, 17, 128>}, {transform_indices = @transform_2, window_bounds = array<i64: 1, 1, 8, 17, 128>}, {transform_indices = @transform_3, window_bounds = array<i64: 1, 1, 8, 17, 128>}, {pipeline_mode = #tpu.pipeline_mode<synchronous>, transform_indices = @transform_4, window_bounds = array<i64: 3, 3, 128, 128>}, {pipeline_mode = #tpu.pipeline_mode<synchronous>, transform_indices = @transform_5, window_bounds = array<i64: 1, 128>}, {transform_indices = @transform_6, window_bounds = array<i64: 1, 7, 14, 128>}]} {
    %c0 = arith.constant 0 : index
    %c0_0 = arith.constant 0 : index
    %c0_1 = arith.constant 0 : index
    %c0_2 = arith.constant 0 : index
    %c0_3 = arith.constant 0 : index
    %0 = vector.load %arg2[%c0, %c0_0, %c0_1, %c0_2, %c0_3] : memref<1x1x8x17x128xf32, #tpu.memory_space<vmem>>, vector<1x1x8x17x128xf32>
    %1 = vector.shape_cast %0 : vector<1x1x8x17x128xf32> to vector<8x17x128xf32>
    %c0_4 = arith.constant 0 : index
    %c0_5 = arith.constant 0 : index
    %c0_6 = arith.constant 0 : index
    %c0_7 = arith.constant 0 : index
    %c0_8 = arith.constant 0 : index
    %2 = vector.load %arg3[%c0_4, %c0_5, %c0_6, %c0_7, %c0_8] : memref<1x1x8x17x128xf32, #tpu.memory_space<vmem>>, vector<1x1x8x17x128xf32>
    %3 = vector.shape_cast %2 : vector<1x1x8x17x128xf32> to vector<8x17x128xf32>
    %c0_9 = arith.constant 0 : index
    %c0_10 = arith.constant 0 : index
    %c0_11 = arith.constant 0 : index
    %c0_12 = arith.constant 0 : index
    %c0_13 = arith.constant 0 : index
    %4 = vector.load %arg4[%c0_9, %c0_10, %c0_11, %c0_12, %c0_13] : memref<1x1x8x17x128xf32, #tpu.memory_space<vmem>>, vector<1x1x8x17x128xf32>
    %5 = vector.shape_cast %4 : vector<1x1x8x17x128xf32> to vector<8x17x128xf32>
    %c0_14 = arith.constant 0 : index
    %c0_15 = arith.constant 0 : index
    %c0_16 = arith.constant 0 : index
    %c0_17 = arith.constant 0 : index
    %c0_18 = arith.constant 0 : index
    %6 = vector.load %arg5[%c0_14, %c0_15, %c0_16, %c0_17, %c0_18] : memref<1x1x8x17x128xf32, #tpu.memory_space<vmem>>, vector<1x1x8x17x128xf32>
    %7 = vector.shape_cast %6 : vector<1x1x8x17x128xf32> to vector<8x17x128xf32>
    %8 = vector.extract_strided_slice %1 {offsets = [0, 0, 0], sizes = [7, 16, 128], strides = [1, 1, 1]} : vector<8x17x128xf32> to vector<7x16x128xf32>
    %9 = vector.shape_cast %8 : vector<7x16x128xf32> to vector<112x128xf32>
    %c0_19 = arith.constant 0 : index
    %c0_20 = arith.constant 0 : index
    %c0_21 = arith.constant 0 : index
    %c0_22 = arith.constant 0 : index
    %10 = vector.load %arg6[%c0_19, %c0_20, %c0_21, %c0_22] : memref<3x3x128x128xf32, #tpu.memory_space<vmem>>, vector<1x1x128x128xf32>
    %11 = vector.shape_cast %10 : vector<1x1x128x128xf32> to vector<128x128xf32>
    %cst = arith.constant dense<0.000000e+00> : vector<112x128xf32>
    %12 = tpu.matmul %9, %11, %cst {dimension_numbers = #tpu.dot_dimension_numbers<[1], [0], [0], [1], [0, 0, 1, 1], [], []>} : vector<112x128xf32>, vector<128x128xf32>, vector<112x128xf32> -> vector<112x128xf32>
    %13 = vector.extract_strided_slice %3 {offsets = [0, 0, 0], sizes = [7, 16, 128], strides = [1, 1, 1]} : vector<8x17x128xf32> to vector<7x16x128xf32>
    %14 = vector.shape_cast %13 : vector<7x16x128xf32> to vector<112x128xf32>
    %c0_23 = arith.constant 0 : index
    %c1 = arith.constant 1 : index
    %c0_24 = arith.constant 0 : index
    %c0_25 = arith.constant 0 : index
    %15 = vector.load %arg6[%c0_23, %c1, %c0_24, %c0_25] : memref<3x3x128x128xf32, #tpu.memory_space<vmem>>, vector<1x1x128x128xf32>
    %16 = vector.shape_cast %15 : vector<1x1x128x128xf32> to vector<128x128xf32>
    %cst_26 = arith.constant dense<0.000000e+00> : vector<112x128xf32>
    %17 = tpu.matmul %14, %16, %cst_26 {dimension_numbers = #tpu.dot_dimension_numbers<[1], [0], [0], [1], [0, 0, 1, 1], [], []>} : vector<112x128xf32>, vector<128x128xf32>, vector<112x128xf32> -> vector<112x128xf32>
    %18 = arith.addf %12, %17 : vector<112x128xf32>
    %19 = vector.extract_strided_slice %1 {offsets = [0, 1, 0], sizes = [7, 16, 128], strides = [1, 1, 1]} : vector<8x17x128xf32> to vector<7x16x128xf32>
    %20 = vector.shape_cast %19 : vector<7x16x128xf32> to vector<112x128xf32>
    %c0_27 = arith.constant 0 : index
    %c2 = arith.constant 2 : index
    %c0_28 = arith.constant 0 : index
    %c0_29 = arith.constant 0 : index
    %21 = vector.load %arg6[%c0_27, %c2, %c0_28, %c0_29] : memref<3x3x128x128xf32, #tpu.memory_space<vmem>>, vector<1x1x128x128xf32>
    %22 = vector.shape_cast %21 : vector<1x1x128x128xf32> to vector<128x128xf32>
    %cst_30 = arith.constant dense<0.000000e+00> : vector<112x128xf32>
    %23 = tpu.matmul %20, %22, %cst_30 {dimension_numbers = #tpu.dot_dimension_numbers<[1], [0], [0], [1], [0, 0, 1, 1], [], []>} : vector<112x128xf32>, vector<128x128xf32>, vector<112x128xf32> -> vector<112x128xf32>
    %24 = arith.addf %18, %23 : vector<112x128xf32>
    %25 = vector.extract_strided_slice %5 {offsets = [0, 0, 0], sizes = [7, 16, 128], strides = [1, 1, 1]} : vector<8x17x128xf32> to vector<7x16x128xf32>
    %26 = vector.shape_cast %25 : vector<7x16x128xf32> to vector<112x128xf32>
    %c1_31 = arith.constant 1 : index
    %c0_32 = arith.constant 0 : index
    %c0_33 = arith.constant 0 : index
    %c0_34 = arith.constant 0 : index
    %27 = vector.load %arg6[%c1_31, %c0_32, %c0_33, %c0_34] : memref<3x3x128x128xf32, #tpu.memory_space<vmem>>, vector<1x1x128x128xf32>
    %28 = vector.shape_cast %27 : vector<1x1x128x128xf32> to vector<128x128xf32>
    %cst_35 = arith.constant dense<0.000000e+00> : vector<112x128xf32>
    %29 = tpu.matmul %26, %28, %cst_35 {dimension_numbers = #tpu.dot_dimension_numbers<[1], [0], [0], [1], [0, 0, 1, 1], [], []>} : vector<112x128xf32>, vector<128x128xf32>, vector<112x128xf32> -> vector<112x128xf32>
    %30 = arith.addf %24, %29 : vector<112x128xf32>
    %31 = vector.extract_strided_slice %7 {offsets = [0, 0, 0], sizes = [7, 16, 128], strides = [1, 1, 1]} : vector<8x17x128xf32> to vector<7x16x128xf32>
    %32 = vector.shape_cast %31 : vector<7x16x128xf32> to vector<112x128xf32>
    %c1_36 = arith.constant 1 : index
    %c1_37 = arith.constant 1 : index
    %c0_38 = arith.constant 0 : index
    %c0_39 = arith.constant 0 : index
    %33 = vector.load %arg6[%c1_36, %c1_37, %c0_38, %c0_39] : memref<3x3x128x128xf32, #tpu.memory_space<vmem>>, vector<1x1x128x128xf32>
    %34 = vector.shape_cast %33 : vector<1x1x128x128xf32> to vector<128x128xf32>
    %cst_40 = arith.constant dense<0.000000e+00> : vector<112x128xf32>
    %35 = tpu.matmul %32, %34, %cst_40 {dimension_numbers = #tpu.dot_dimension_numbers<[1], [0], [0], [1], [0, 0, 1, 1], [], []>} : vector<112x128xf32>, vector<128x128xf32>, vector<112x128xf32> -> vector<112x128xf32>
    %36 = arith.addf %30, %35 : vector<112x128xf32>
    %37 = vector.extract_strided_slice %5 {offsets = [0, 1, 0], sizes = [7, 16, 128], strides = [1, 1, 1]} : vector<8x17x128xf32> to vector<7x16x128xf32>
    %38 = vector.shape_cast %37 : vector<7x16x128xf32> to vector<112x128xf32>
    %c1_41 = arith.constant 1 : index
    %c2_42 = arith.constant 2 : index
    %c0_43 = arith.constant 0 : index
    %c0_44 = arith.constant 0 : index
    %39 = vector.load %arg6[%c1_41, %c2_42, %c0_43, %c0_44] : memref<3x3x128x128xf32, #tpu.memory_space<vmem>>, vector<1x1x128x128xf32>
    %40 = vector.shape_cast %39 : vector<1x1x128x128xf32> to vector<128x128xf32>
    %cst_45 = arith.constant dense<0.000000e+00> : vector<112x128xf32>
    %41 = tpu.matmul %38, %40, %cst_45 {dimension_numbers = #tpu.dot_dimension_numbers<[1], [0], [0], [1], [0, 0, 1, 1], [], []>} : vector<112x128xf32>, vector<128x128xf32>, vector<112x128xf32> -> vector<112x128xf32>
    %42 = arith.addf %36, %41 : vector<112x128xf32>
    %43 = vector.extract_strided_slice %1 {offsets = [1, 0, 0], sizes = [7, 16, 128], strides = [1, 1, 1]} : vector<8x17x128xf32> to vector<7x16x128xf32>
    %44 = vector.shape_cast %43 : vector<7x16x128xf32> to vector<112x128xf32>
    %c2_46 = arith.constant 2 : index
    %c0_47 = arith.constant 0 : index
    %c0_48 = arith.constant 0 : index
    %c0_49 = arith.constant 0 : index
    %45 = vector.load %arg6[%c2_46, %c0_47, %c0_48, %c0_49] : memref<3x3x128x128xf32, #tpu.memory_space<vmem>>, vector<1x1x128x128xf32>
    %46 = vector.shape_cast %45 : vector<1x1x128x128xf32> to vector<128x128xf32>
    %cst_50 = arith.constant dense<0.000000e+00> : vector<112x128xf32>
    %47 = tpu.matmul %44, %46, %cst_50 {dimension_numbers = #tpu.dot_dimension_numbers<[1], [0], [0], [1], [0, 0, 1, 1], [], []>} : vector<112x128xf32>, vector<128x128xf32>, vector<112x128xf32> -> vector<112x128xf32>
    %48 = arith.addf %42, %47 : vector<112x128xf32>
    %49 = vector.extract_strided_slice %3 {offsets = [1, 0, 0], sizes = [7, 16, 128], strides = [1, 1, 1]} : vector<8x17x128xf32> to vector<7x16x128xf32>
    %50 = vector.shape_cast %49 : vector<7x16x128xf32> to vector<112x128xf32>
    %c2_51 = arith.constant 2 : index
    %c1_52 = arith.constant 1 : index
    %c0_53 = arith.constant 0 : index
    %c0_54 = arith.constant 0 : index
    %51 = vector.load %arg6[%c2_51, %c1_52, %c0_53, %c0_54] : memref<3x3x128x128xf32, #tpu.memory_space<vmem>>, vector<1x1x128x128xf32>
    %52 = vector.shape_cast %51 : vector<1x1x128x128xf32> to vector<128x128xf32>
    %cst_55 = arith.constant dense<0.000000e+00> : vector<112x128xf32>
    %53 = tpu.matmul %50, %52, %cst_55 {dimension_numbers = #tpu.dot_dimension_numbers<[1], [0], [0], [1], [0, 0, 1, 1], [], []>} : vector<112x128xf32>, vector<128x128xf32>, vector<112x128xf32> -> vector<112x128xf32>
    %54 = arith.addf %48, %53 : vector<112x128xf32>
    %55 = vector.extract_strided_slice %1 {offsets = [1, 1, 0], sizes = [7, 16, 128], strides = [1, 1, 1]} : vector<8x17x128xf32> to vector<7x16x128xf32>
    %56 = vector.shape_cast %55 : vector<7x16x128xf32> to vector<112x128xf32>
    %c2_56 = arith.constant 2 : index
    %c2_57 = arith.constant 2 : index
    %c0_58 = arith.constant 0 : index
    %c0_59 = arith.constant 0 : index
    %57 = vector.load %arg6[%c2_56, %c2_57, %c0_58, %c0_59] : memref<3x3x128x128xf32, #tpu.memory_space<vmem>>, vector<1x1x128x128xf32>
    %58 = vector.shape_cast %57 : vector<1x1x128x128xf32> to vector<128x128xf32>
    %cst_60 = arith.constant dense<0.000000e+00> : vector<112x128xf32>
    %59 = tpu.matmul %56, %58, %cst_60 {dimension_numbers = #tpu.dot_dimension_numbers<[1], [0], [0], [1], [0, 0, 1, 1], [], []>} : vector<112x128xf32>, vector<128x128xf32>, vector<112x128xf32> -> vector<112x128xf32>
    %60 = arith.addf %54, %59 : vector<112x128xf32>
    %61 = vector.extract_strided_slice %3 {offsets = [0, 0, 0], sizes = [7, 16, 128], strides = [1, 1, 1]} : vector<8x17x128xf32> to vector<7x16x128xf32>
    %62 = vector.shape_cast %61 : vector<7x16x128xf32> to vector<112x128xf32>
    %c0_61 = arith.constant 0 : index
    %c0_62 = arith.constant 0 : index
    %c0_63 = arith.constant 0 : index
    %c0_64 = arith.constant 0 : index
    %63 = vector.load %arg6[%c0_61, %c0_62, %c0_63, %c0_64] : memref<3x3x128x128xf32, #tpu.memory_space<vmem>>, vector<1x1x128x128xf32>
    %64 = vector.shape_cast %63 : vector<1x1x128x128xf32> to vector<128x128xf32>
    %cst_65 = arith.constant dense<0.000000e+00> : vector<112x128xf32>
    %65 = tpu.matmul %62, %64, %cst_65 {dimension_numbers = #tpu.dot_dimension_numbers<[1], [0], [0], [1], [0, 0, 1, 1], [], []>} : vector<112x128xf32>, vector<128x128xf32>, vector<112x128xf32> -> vector<112x128xf32>
    %66 = vector.extract_strided_slice %1 {offsets = [0, 1, 0], sizes = [7, 16, 128], strides = [1, 1, 1]} : vector<8x17x128xf32> to vector<7x16x128xf32>
    %67 = vector.shape_cast %66 : vector<7x16x128xf32> to vector<112x128xf32>
    %c0_66 = arith.constant 0 : index
    %c1_67 = arith.constant 1 : index
    %c0_68 = arith.constant 0 : index
    %c0_69 = arith.constant 0 : index
    %68 = vector.load %arg6[%c0_66, %c1_67, %c0_68, %c0_69] : memref<3x3x128x128xf32, #tpu.memory_space<vmem>>, vector<1x1x128x128xf32>
    %69 = vector.shape_cast %68 : vector<1x1x128x128xf32> to vector<128x128xf32>
    %cst_70 = arith.constant dense<0.000000e+00> : vector<112x128xf32>
    %70 = tpu.matmul %67, %69, %cst_70 {dimension_numbers = #tpu.dot_dimension_numbers<[1], [0], [0], [1], [0, 0, 1, 1], [], []>} : vector<112x128xf32>, vector<128x128xf32>, vector<112x128xf32> -> vector<112x128xf32>
    %71 = arith.addf %65, %70 : vector<112x128xf32>
    %72 = vector.extract_strided_slice %3 {offsets = [0, 1, 0], sizes = [7, 16, 128], strides = [1, 1, 1]} : vector<8x17x128xf32> to vector<7x16x128xf32>
    %73 = vector.shape_cast %72 : vector<7x16x128xf32> to vector<112x128xf32>
    %c0_71 = arith.constant 0 : index
    %c2_72 = arith.constant 2 : index
    %c0_73 = arith.constant 0 : index
    %c0_74 = arith.constant 0 : index
    %74 = vector.load %arg6[%c0_71, %c2_72, %c0_73, %c0_74] : memref<3x3x128x128xf32, #tpu.memory_space<vmem>>, vector<1x1x128x128xf32>
    %75 = vector.shape_cast %74 : vector<1x1x128x128xf32> to vector<128x128xf32>
    %cst_75 = arith.constant dense<0.000000e+00> : vector<112x128xf32>
    %76 = tpu.matmul %73, %75, %cst_75 {dimension_numbers = #tpu.dot_dimension_numbers<[1], [0], [0], [1], [0, 0, 1, 1], [], []>} : vector<112x128xf32>, vector<128x128xf32>, vector<112x128xf32> -> vector<112x128xf32>
    %77 = arith.addf %71, %76 : vector<112x128xf32>
    %78 = vector.extract_strided_slice %7 {offsets = [0, 0, 0], sizes = [7, 16, 128], strides = [1, 1, 1]} : vector<8x17x128xf32> to vector<7x16x128xf32>
    %79 = vector.shape_cast %78 : vector<7x16x128xf32> to vector<112x128xf32>
    %c1_76 = arith.constant 1 : index
    %c0_77 = arith.constant 0 : index
    %c0_78 = arith.constant 0 : index
    %c0_79 = arith.constant 0 : index
    %80 = vector.load %arg6[%c1_76, %c0_77, %c0_78, %c0_79] : memref<3x3x128x128xf32, #tpu.memory_space<vmem>>, vector<1x1x128x128xf32>
    %81 = vector.shape_cast %80 : vector<1x1x128x128xf32> to vector<128x128xf32>
    %cst_80 = arith.constant dense<0.000000e+00> : vector<112x128xf32>
    %82 = tpu.matmul %79, %81, %cst_80 {dimension_numbers = #tpu.dot_dimension_numbers<[1], [0], [0], [1], [0, 0, 1, 1], [], []>} : vector<112x128xf32>, vector<128x128xf32>, vector<112x128xf32> -> vector<112x128xf32>
    %83 = arith.addf %77, %82 : vector<112x128xf32>
    %84 = vector.extract_strided_slice %5 {offsets = [0, 1, 0], sizes = [7, 16, 128], strides = [1, 1, 1]} : vector<8x17x128xf32> to vector<7x16x128xf32>
    %85 = vector.shape_cast %84 : vector<7x16x128xf32> to vector<112x128xf32>
    %c1_81 = arith.constant 1 : index
    %c1_82 = arith.constant 1 : index
    %c0_83 = arith.constant 0 : index
    %c0_84 = arith.constant 0 : index
    %86 = vector.load %arg6[%c1_81, %c1_82, %c0_83, %c0_84] : memref<3x3x128x128xf32, #tpu.memory_space<vmem>>, vector<1x1x128x128xf32>
    %87 = vector.shape_cast %86 : vector<1x1x128x128xf32> to vector<128x128xf32>
    %cst_85 = arith.constant dense<0.000000e+00> : vector<112x128xf32>
    %88 = tpu.matmul %85, %87, %cst_85 {dimension_numbers = #tpu.dot_dimension_numbers<[1], [0], [0], [1], [0, 0, 1, 1], [], []>} : vector<112x128xf32>, vector<128x128xf32>, vector<112x128xf32> -> vector<112x128xf32>
    %89 = arith.addf %83, %88 : vector<112x128xf32>
    %90 = vector.extract_strided_slice %7 {offsets = [0, 1, 0], sizes = [7, 16, 128], strides = [1, 1, 1]} : vector<8x17x128xf32> to vector<7x16x128xf32>
    %91 = vector.shape_cast %90 : vector<7x16x128xf32> to vector<112x128xf32>
    %c1_86 = arith.constant 1 : index
    %c2_87 = arith.constant 2 : index
    %c0_88 = arith.constant 0 : index
    %c0_89 = arith.constant 0 : index
    %92 = vector.load %arg6[%c1_86, %c2_87, %c0_88, %c0_89] : memref<3x3x128x128xf32, #tpu.memory_space<vmem>>, vector<1x1x128x128xf32>
    %93 = vector.shape_cast %92 : vector<1x1x128x128xf32> to vector<128x128xf32>
    %cst_90 = arith.constant dense<0.000000e+00> : vector<112x128xf32>
    %94 = tpu.matmul %91, %93, %cst_90 {dimension_numbers = #tpu.dot_dimension_numbers<[1], [0], [0], [1], [0, 0, 1, 1], [], []>} : vector<112x128xf32>, vector<128x128xf32>, vector<112x128xf32> -> vector<112x128xf32>
    %95 = arith.addf %89, %94 : vector<112x128xf32>
    %96 = vector.extract_strided_slice %3 {offsets = [1, 0, 0], sizes = [7, 16, 128], strides = [1, 1, 1]} : vector<8x17x128xf32> to vector<7x16x128xf32>
    %97 = vector.shape_cast %96 : vector<7x16x128xf32> to vector<112x128xf32>
    %c2_91 = arith.constant 2 : index
    %c0_92 = arith.constant 0 : index
    %c0_93 = arith.constant 0 : index
    %c0_94 = arith.constant 0 : index
    %98 = vector.load %arg6[%c2_91, %c0_92, %c0_93, %c0_94] : memref<3x3x128x128xf32, #tpu.memory_space<vmem>>, vector<1x1x128x128xf32>
    %99 = vector.shape_cast %98 : vector<1x1x128x128xf32> to vector<128x128xf32>
    %cst_95 = arith.constant dense<0.000000e+00> : vector<112x128xf32>
    %100 = tpu.matmul %97, %99, %cst_95 {dimension_numbers = #tpu.dot_dimension_numbers<[1], [0], [0], [1], [0, 0, 1, 1], [], []>} : vector<112x128xf32>, vector<128x128xf32>, vector<112x128xf32> -> vector<112x128xf32>
    %101 = arith.addf %95, %100 : vector<112x128xf32>
    %102 = vector.extract_strided_slice %1 {offsets = [1, 1, 0], sizes = [7, 16, 128], strides = [1, 1, 1]} : vector<8x17x128xf32> to vector<7x16x128xf32>
    %103 = vector.shape_cast %102 : vector<7x16x128xf32> to vector<112x128xf32>
    %c2_96 = arith.constant 2 : index
    %c1_97 = arith.constant 1 : index
    %c0_98 = arith.constant 0 : index
    %c0_99 = arith.constant 0 : index
    %104 = vector.load %arg6[%c2_96, %c1_97, %c0_98, %c0_99] : memref<3x3x128x128xf32, #tpu.memory_space<vmem>>, vector<1x1x128x128xf32>
    %105 = vector.shape_cast %104 : vector<1x1x128x128xf32> to vector<128x128xf32>
    %cst_100 = arith.constant dense<0.000000e+00> : vector<112x128xf32>
    %106 = tpu.matmul %103, %105, %cst_100 {dimension_numbers = #tpu.dot_dimension_numbers<[1], [0], [0], [1], [0, 0, 1, 1], [], []>} : vector<112x128xf32>, vector<128x128xf32>, vector<112x128xf32> -> vector<112x128xf32>
    %107 = arith.addf %101, %106 : vector<112x128xf32>
    %108 = vector.extract_strided_slice %3 {offsets = [1, 1, 0], sizes = [7, 16, 128], strides = [1, 1, 1]} : vector<8x17x128xf32> to vector<7x16x128xf32>
    %109 = vector.shape_cast %108 : vector<7x16x128xf32> to vector<112x128xf32>
    %c2_101 = arith.constant 2 : index
    %c2_102 = arith.constant 2 : index
    %c0_103 = arith.constant 0 : index
    %c0_104 = arith.constant 0 : index
    %110 = vector.load %arg6[%c2_101, %c2_102, %c0_103, %c0_104] : memref<3x3x128x128xf32, #tpu.memory_space<vmem>>, vector<1x1x128x128xf32>
    %111 = vector.shape_cast %110 : vector<1x1x128x128xf32> to vector<128x128xf32>
    %cst_105 = arith.constant dense<0.000000e+00> : vector<112x128xf32>
    %112 = tpu.matmul %109, %111, %cst_105 {dimension_numbers = #tpu.dot_dimension_numbers<[1], [0], [0], [1], [0, 0, 1, 1], [], []>} : vector<112x128xf32>, vector<128x128xf32>, vector<112x128xf32> -> vector<112x128xf32>
    %113 = arith.addf %107, %112 : vector<112x128xf32>
    %114 = arith.maximumf %60, %113 : vector<112x128xf32>
    %115 = vector.extract_strided_slice %5 {offsets = [0, 0, 0], sizes = [7, 16, 128], strides = [1, 1, 1]} : vector<8x17x128xf32> to vector<7x16x128xf32>
    %116 = vector.shape_cast %115 : vector<7x16x128xf32> to vector<112x128xf32>
    %c0_106 = arith.constant 0 : index
    %c0_107 = arith.constant 0 : index
    %c0_108 = arith.constant 0 : index
    %c0_109 = arith.constant 0 : index
    %117 = vector.load %arg6[%c0_106, %c0_107, %c0_108, %c0_109] : memref<3x3x128x128xf32, #tpu.memory_space<vmem>>, vector<1x1x128x128xf32>
    %118 = vector.shape_cast %117 : vector<1x1x128x128xf32> to vector<128x128xf32>
    %cst_110 = arith.constant dense<0.000000e+00> : vector<112x128xf32>
    %119 = tpu.matmul %116, %118, %cst_110 {dimension_numbers = #tpu.dot_dimension_numbers<[1], [0], [0], [1], [0, 0, 1, 1], [], []>} : vector<112x128xf32>, vector<128x128xf32>, vector<112x128xf32> -> vector<112x128xf32>
    %120 = vector.extract_strided_slice %7 {offsets = [0, 0, 0], sizes = [7, 16, 128], strides = [1, 1, 1]} : vector<8x17x128xf32> to vector<7x16x128xf32>
    %121 = vector.shape_cast %120 : vector<7x16x128xf32> to vector<112x128xf32>
    %c0_111 = arith.constant 0 : index
    %c1_112 = arith.constant 1 : index
    %c0_113 = arith.constant 0 : index
    %c0_114 = arith.constant 0 : index
    %122 = vector.load %arg6[%c0_111, %c1_112, %c0_113, %c0_114] : memref<3x3x128x128xf32, #tpu.memory_space<vmem>>, vector<1x1x128x128xf32>
    %123 = vector.shape_cast %122 : vector<1x1x128x128xf32> to vector<128x128xf32>
    %cst_115 = arith.constant dense<0.000000e+00> : vector<112x128xf32>
    %124 = tpu.matmul %121, %123, %cst_115 {dimension_numbers = #tpu.dot_dimension_numbers<[1], [0], [0], [1], [0, 0, 1, 1], [], []>} : vector<112x128xf32>, vector<128x128xf32>, vector<112x128xf32> -> vector<112x128xf32>
    %125 = arith.addf %119, %124 : vector<112x128xf32>
    %126 = vector.extract_strided_slice %5 {offsets = [0, 1, 0], sizes = [7, 16, 128], strides = [1, 1, 1]} : vector<8x17x128xf32> to vector<7x16x128xf32>
    %127 = vector.shape_cast %126 : vector<7x16x128xf32> to vector<112x128xf32>
    %c0_116 = arith.constant 0 : index
    %c2_117 = arith.constant 2 : index
    %c0_118 = arith.constant 0 : index
    %c0_119 = arith.constant 0 : index
    %128 = vector.load %arg6[%c0_116, %c2_117, %c0_118, %c0_119] : memref<3x3x128x128xf32, #tpu.memory_space<vmem>>, vector<1x1x128x128xf32>
    %129 = vector.shape_cast %128 : vector<1x1x128x128xf32> to vector<128x128xf32>
    %cst_120 = arith.constant dense<0.000000e+00> : vector<112x128xf32>
    %130 = tpu.matmul %127, %129, %cst_120 {dimension_numbers = #tpu.dot_dimension_numbers<[1], [0], [0], [1], [0, 0, 1, 1], [], []>} : vector<112x128xf32>, vector<128x128xf32>, vector<112x128xf32> -> vector<112x128xf32>
    %131 = arith.addf %125, %130 : vector<112x128xf32>
    %132 = vector.extract_strided_slice %1 {offsets = [1, 0, 0], sizes = [7, 16, 128], strides = [1, 1, 1]} : vector<8x17x128xf32> to vector<7x16x128xf32>
    %133 = vector.shape_cast %132 : vector<7x16x128xf32> to vector<112x128xf32>
    %c1_121 = arith.constant 1 : index
    %c0_122 = arith.constant 0 : index
    %c0_123 = arith.constant 0 : index
    %c0_124 = arith.constant 0 : index
    %134 = vector.load %arg6[%c1_121, %c0_122, %c0_123, %c0_124] : memref<3x3x128x128xf32, #tpu.memory_space<vmem>>, vector<1x1x128x128xf32>
    %135 = vector.shape_cast %134 : vector<1x1x128x128xf32> to vector<128x128xf32>
    %cst_125 = arith.constant dense<0.000000e+00> : vector<112x128xf32>
    %136 = tpu.matmul %133, %135, %cst_125 {dimension_numbers = #tpu.dot_dimension_numbers<[1], [0], [0], [1], [0, 0, 1, 1], [], []>} : vector<112x128xf32>, vector<128x128xf32>, vector<112x128xf32> -> vector<112x128xf32>
    %137 = arith.addf %131, %136 : vector<112x128xf32>
    %138 = vector.extract_strided_slice %3 {offsets = [1, 0, 0], sizes = [7, 16, 128], strides = [1, 1, 1]} : vector<8x17x128xf32> to vector<7x16x128xf32>
    %139 = vector.shape_cast %138 : vector<7x16x128xf32> to vector<112x128xf32>
    %c1_126 = arith.constant 1 : index
    %c1_127 = arith.constant 1 : index
    %c0_128 = arith.constant 0 : index
    %c0_129 = arith.constant 0 : index
    %140 = vector.load %arg6[%c1_126, %c1_127, %c0_128, %c0_129] : memref<3x3x128x128xf32, #tpu.memory_space<vmem>>, vector<1x1x128x128xf32>
    %141 = vector.shape_cast %140 : vector<1x1x128x128xf32> to vector<128x128xf32>
    %cst_130 = arith.constant dense<0.000000e+00> : vector<112x128xf32>
    %142 = tpu.matmul %139, %141, %cst_130 {dimension_numbers = #tpu.dot_dimension_numbers<[1], [0], [0], [1], [0, 0, 1, 1], [], []>} : vector<112x128xf32>, vector<128x128xf32>, vector<112x128xf32> -> vector<112x128xf32>
    %143 = arith.addf %137, %142 : vector<112x128xf32>
    %144 = vector.extract_strided_slice %1 {offsets = [1, 1, 0], sizes = [7, 16, 128], strides = [1, 1, 1]} : vector<8x17x128xf32> to vector<7x16x128xf32>
    %145 = vector.shape_cast %144 : vector<7x16x128xf32> to vector<112x128xf32>
    %c1_131 = arith.constant 1 : index
    %c2_132 = arith.constant 2 : index
    %c0_133 = arith.constant 0 : index
    %c0_134 = arith.constant 0 : index
    %146 = vector.load %arg6[%c1_131, %c2_132, %c0_133, %c0_134] : memref<3x3x128x128xf32, #tpu.memory_space<vmem>>, vector<1x1x128x128xf32>
    %147 = vector.shape_cast %146 : vector<1x1x128x128xf32> to vector<128x128xf32>
    %cst_135 = arith.constant dense<0.000000e+00> : vector<112x128xf32>
    %148 = tpu.matmul %145, %147, %cst_135 {dimension_numbers = #tpu.dot_dimension_numbers<[1], [0], [0], [1], [0, 0, 1, 1], [], []>} : vector<112x128xf32>, vector<128x128xf32>, vector<112x128xf32> -> vector<112x128xf32>
    %149 = arith.addf %143, %148 : vector<112x128xf32>
    %150 = vector.extract_strided_slice %5 {offsets = [1, 0, 0], sizes = [7, 16, 128], strides = [1, 1, 1]} : vector<8x17x128xf32> to vector<7x16x128xf32>
    %151 = vector.shape_cast %150 : vector<7x16x128xf32> to vector<112x128xf32>
    %c2_136 = arith.constant 2 : index
    %c0_137 = arith.constant 0 : index
    %c0_138 = arith.constant 0 : index
    %c0_139 = arith.constant 0 : index
    %152 = vector.load %arg6[%c2_136, %c0_137, %c0_138, %c0_139] : memref<3x3x128x128xf32, #tpu.memory_space<vmem>>, vector<1x1x128x128xf32>
    %153 = vector.shape_cast %152 : vector<1x1x128x128xf32> to vector<128x128xf32>
    %cst_140 = arith.constant dense<0.000000e+00> : vector<112x128xf32>
    %154 = tpu.matmul %151, %153, %cst_140 {dimension_numbers = #tpu.dot_dimension_numbers<[1], [0], [0], [1], [0, 0, 1, 1], [], []>} : vector<112x128xf32>, vector<128x128xf32>, vector<112x128xf32> -> vector<112x128xf32>
    %155 = arith.addf %149, %154 : vector<112x128xf32>
    %156 = vector.extract_strided_slice %7 {offsets = [1, 0, 0], sizes = [7, 16, 128], strides = [1, 1, 1]} : vector<8x17x128xf32> to vector<7x16x128xf32>
    %157 = vector.shape_cast %156 : vector<7x16x128xf32> to vector<112x128xf32>
    %c2_141 = arith.constant 2 : index
    %c1_142 = arith.constant 1 : index
    %c0_143 = arith.constant 0 : index
    %c0_144 = arith.constant 0 : index
    %158 = vector.load %arg6[%c2_141, %c1_142, %c0_143, %c0_144] : memref<3x3x128x128xf32, #tpu.memory_space<vmem>>, vector<1x1x128x128xf32>
    %159 = vector.shape_cast %158 : vector<1x1x128x128xf32> to vector<128x128xf32>
    %cst_145 = arith.constant dense<0.000000e+00> : vector<112x128xf32>
    %160 = tpu.matmul %157, %159, %cst_145 {dimension_numbers = #tpu.dot_dimension_numbers<[1], [0], [0], [1], [0, 0, 1, 1], [], []>} : vector<112x128xf32>, vector<128x128xf32>, vector<112x128xf32> -> vector<112x128xf32>
    %161 = arith.addf %155, %160 : vector<112x128xf32>
    %162 = vector.extract_strided_slice %5 {offsets = [1, 1, 0], sizes = [7, 16, 128], strides = [1, 1, 1]} : vector<8x17x128xf32> to vector<7x16x128xf32>
    %163 = vector.shape_cast %162 : vector<7x16x128xf32> to vector<112x128xf32>
    %c2_146 = arith.constant 2 : index
    %c2_147 = arith.constant 2 : index
    %c0_148 = arith.constant 0 : index
    %c0_149 = arith.constant 0 : index
    %164 = vector.load %arg6[%c2_146, %c2_147, %c0_148, %c0_149] : memref<3x3x128x128xf32, #tpu.memory_space<vmem>>, vector<1x1x128x128xf32>
    %165 = vector.shape_cast %164 : vector<1x1x128x128xf32> to vector<128x128xf32>
    %cst_150 = arith.constant dense<0.000000e+00> : vector<112x128xf32>
    %166 = tpu.matmul %163, %165, %cst_150 {dimension_numbers = #tpu.dot_dimension_numbers<[1], [0], [0], [1], [0, 0, 1, 1], [], []>} : vector<112x128xf32>, vector<128x128xf32>, vector<112x128xf32> -> vector<112x128xf32>
    %167 = arith.addf %161, %166 : vector<112x128xf32>
    %168 = arith.maximumf %114, %167 : vector<112x128xf32>
    %169 = vector.extract_strided_slice %7 {offsets = [0, 0, 0], sizes = [7, 16, 128], strides = [1, 1, 1]} : vector<8x17x128xf32> to vector<7x16x128xf32>
    %170 = vector.shape_cast %169 : vector<7x16x128xf32> to vector<112x128xf32>
    %c0_151 = arith.constant 0 : index
    %c0_152 = arith.constant 0 : index
    %c0_153 = arith.constant 0 : index
    %c0_154 = arith.constant 0 : index
    %171 = vector.load %arg6[%c0_151, %c0_152, %c0_153, %c0_154] : memref<3x3x128x128xf32, #tpu.memory_space<vmem>>, vector<1x1x128x128xf32>
    %172 = vector.shape_cast %171 : vector<1x1x128x128xf32> to vector<128x128xf32>
    %cst_155 = arith.constant dense<0.000000e+00> : vector<112x128xf32>
    %173 = tpu.matmul %170, %172, %cst_155 {dimension_numbers = #tpu.dot_dimension_numbers<[1], [0], [0], [1], [0, 0, 1, 1], [], []>} : vector<112x128xf32>, vector<128x128xf32>, vector<112x128xf32> -> vector<112x128xf32>
    %174 = vector.extract_strided_slice %5 {offsets = [0, 1, 0], sizes = [7, 16, 128], strides = [1, 1, 1]} : vector<8x17x128xf32> to vector<7x16x128xf32>
    %175 = vector.shape_cast %174 : vector<7x16x128xf32> to vector<112x128xf32>
    %c0_156 = arith.constant 0 : index
    %c1_157 = arith.constant 1 : index
    %c0_158 = arith.constant 0 : index
    %c0_159 = arith.constant 0 : index
    %176 = vector.load %arg6[%c0_156, %c1_157, %c0_158, %c0_159] : memref<3x3x128x128xf32, #tpu.memory_space<vmem>>, vector<1x1x128x128xf32>
    %177 = vector.shape_cast %176 : vector<1x1x128x128xf32> to vector<128x128xf32>
    %cst_160 = arith.constant dense<0.000000e+00> : vector<112x128xf32>
    %178 = tpu.matmul %175, %177, %cst_160 {dimension_numbers = #tpu.dot_dimension_numbers<[1], [0], [0], [1], [0, 0, 1, 1], [], []>} : vector<112x128xf32>, vector<128x128xf32>, vector<112x128xf32> -> vector<112x128xf32>
    %179 = arith.addf %173, %178 : vector<112x128xf32>
    %180 = vector.extract_strided_slice %7 {offsets = [0, 1, 0], sizes = [7, 16, 128], strides = [1, 1, 1]} : vector<8x17x128xf32> to vector<7x16x128xf32>
    %181 = vector.shape_cast %180 : vector<7x16x128xf32> to vector<112x128xf32>
    %c0_161 = arith.constant 0 : index
    %c2_162 = arith.constant 2 : index
    %c0_163 = arith.constant 0 : index
    %c0_164 = arith.constant 0 : index
    %182 = vector.load %arg6[%c0_161, %c2_162, %c0_163, %c0_164] : memref<3x3x128x128xf32, #tpu.memory_space<vmem>>, vector<1x1x128x128xf32>
    %183 = vector.shape_cast %182 : vector<1x1x128x128xf32> to vector<128x128xf32>
    %cst_165 = arith.constant dense<0.000000e+00> : vector<112x128xf32>
    %184 = tpu.matmul %181, %183, %cst_165 {dimension_numbers = #tpu.dot_dimension_numbers<[1], [0], [0], [1], [0, 0, 1, 1], [], []>} : vector<112x128xf32>, vector<128x128xf32>, vector<112x128xf32> -> vector<112x128xf32>
    %185 = arith.addf %179, %184 : vector<112x128xf32>
    %186 = vector.extract_strided_slice %3 {offsets = [1, 0, 0], sizes = [7, 16, 128], strides = [1, 1, 1]} : vector<8x17x128xf32> to vector<7x16x128xf32>
    %187 = vector.shape_cast %186 : vector<7x16x128xf32> to vector<112x128xf32>
    %c1_166 = arith.constant 1 : index
    %c0_167 = arith.constant 0 : index
    %c0_168 = arith.constant 0 : index
    %c0_169 = arith.constant 0 : index
    %188 = vector.load %arg6[%c1_166, %c0_167, %c0_168, %c0_169] : memref<3x3x128x128xf32, #tpu.memory_space<vmem>>, vector<1x1x128x128xf32>
    %189 = vector.shape_cast %188 : vector<1x1x128x128xf32> to vector<128x128xf32>
    %cst_170 = arith.constant dense<0.000000e+00> : vector<112x128xf32>
    %190 = tpu.matmul %187, %189, %cst_170 {dimension_numbers = #tpu.dot_dimension_numbers<[1], [0], [0], [1], [0, 0, 1, 1], [], []>} : vector<112x128xf32>, vector<128x128xf32>, vector<112x128xf32> -> vector<112x128xf32>
    %191 = arith.addf %185, %190 : vector<112x128xf32>
    %192 = vector.extract_strided_slice %1 {offsets = [1, 1, 0], sizes = [7, 16, 128], strides = [1, 1, 1]} : vector<8x17x128xf32> to vector<7x16x128xf32>
    %193 = vector.shape_cast %192 : vector<7x16x128xf32> to vector<112x128xf32>
    %c1_171 = arith.constant 1 : index
    %c1_172 = arith.constant 1 : index
    %c0_173 = arith.constant 0 : index
    %c0_174 = arith.constant 0 : index
    %194 = vector.load %arg6[%c1_171, %c1_172, %c0_173, %c0_174] : memref<3x3x128x128xf32, #tpu.memory_space<vmem>>, vector<1x1x128x128xf32>
    %195 = vector.shape_cast %194 : vector<1x1x128x128xf32> to vector<128x128xf32>
    %cst_175 = arith.constant dense<0.000000e+00> : vector<112x128xf32>
    %196 = tpu.matmul %193, %195, %cst_175 {dimension_numbers = #tpu.dot_dimension_numbers<[1], [0], [0], [1], [0, 0, 1, 1], [], []>} : vector<112x128xf32>, vector<128x128xf32>, vector<112x128xf32> -> vector<112x128xf32>
    %197 = arith.addf %191, %196 : vector<112x128xf32>
    %198 = vector.extract_strided_slice %3 {offsets = [1, 1, 0], sizes = [7, 16, 128], strides = [1, 1, 1]} : vector<8x17x128xf32> to vector<7x16x128xf32>
    %199 = vector.shape_cast %198 : vector<7x16x128xf32> to vector<112x128xf32>
    %c1_176 = arith.constant 1 : index
    %c2_177 = arith.constant 2 : index
    %c0_178 = arith.constant 0 : index
    %c0_179 = arith.constant 0 : index
    %200 = vector.load %arg6[%c1_176, %c2_177, %c0_178, %c0_179] : memref<3x3x128x128xf32, #tpu.memory_space<vmem>>, vector<1x1x128x128xf32>
    %201 = vector.shape_cast %200 : vector<1x1x128x128xf32> to vector<128x128xf32>
    %cst_180 = arith.constant dense<0.000000e+00> : vector<112x128xf32>
    %202 = tpu.matmul %199, %201, %cst_180 {dimension_numbers = #tpu.dot_dimension_numbers<[1], [0], [0], [1], [0, 0, 1, 1], [], []>} : vector<112x128xf32>, vector<128x128xf32>, vector<112x128xf32> -> vector<112x128xf32>
    %203 = arith.addf %197, %202 : vector<112x128xf32>
    %204 = vector.extract_strided_slice %7 {offsets = [1, 0, 0], sizes = [7, 16, 128], strides = [1, 1, 1]} : vector<8x17x128xf32> to vector<7x16x128xf32>
    %205 = vector.shape_cast %204 : vector<7x16x128xf32> to vector<112x128xf32>
    %c2_181 = arith.constant 2 : index
    %c0_182 = arith.constant 0 : index
    %c0_183 = arith.constant 0 : index
    %c0_184 = arith.constant 0 : index
    %206 = vector.load %arg6[%c2_181, %c0_182, %c0_183, %c0_184] : memref<3x3x128x128xf32, #tpu.memory_space<vmem>>, vector<1x1x128x128xf32>
    %207 = vector.shape_cast %206 : vector<1x1x128x128xf32> to vector<128x128xf32>
    %cst_185 = arith.constant dense<0.000000e+00> : vector<112x128xf32>
    %208 = tpu.matmul %205, %207, %cst_185 {dimension_numbers = #tpu.dot_dimension_numbers<[1], [0], [0], [1], [0, 0, 1, 1], [], []>} : vector<112x128xf32>, vector<128x128xf32>, vector<112x128xf32> -> vector<112x128xf32>
    %209 = arith.addf %203, %208 : vector<112x128xf32>
    %210 = vector.extract_strided_slice %5 {offsets = [1, 1, 0], sizes = [7, 16, 128], strides = [1, 1, 1]} : vector<8x17x128xf32> to vector<7x16x128xf32>
    %211 = vector.shape_cast %210 : vector<7x16x128xf32> to vector<112x128xf32>
    %c2_186 = arith.constant 2 : index
    %c1_187 = arith.constant 1 : index
    %c0_188 = arith.constant 0 : index
    %c0_189 = arith.constant 0 : index
    %212 = vector.load %arg6[%c2_186, %c1_187, %c0_188, %c0_189] : memref<3x3x128x128xf32, #tpu.memory_space<vmem>>, vector<1x1x128x128xf32>
    %213 = vector.shape_cast %212 : vector<1x1x128x128xf32> to vector<128x128xf32>
    %cst_190 = arith.constant dense<0.000000e+00> : vector<112x128xf32>
    %214 = tpu.matmul %211, %213, %cst_190 {dimension_numbers = #tpu.dot_dimension_numbers<[1], [0], [0], [1], [0, 0, 1, 1], [], []>} : vector<112x128xf32>, vector<128x128xf32>, vector<112x128xf32> -> vector<112x128xf32>
    %215 = arith.addf %209, %214 : vector<112x128xf32>
    %216 = vector.extract_strided_slice %7 {offsets = [1, 1, 0], sizes = [7, 16, 128], strides = [1, 1, 1]} : vector<8x17x128xf32> to vector<7x16x128xf32>
    %217 = vector.shape_cast %216 : vector<7x16x128xf32> to vector<112x128xf32>
    %c2_191 = arith.constant 2 : index
    %c2_192 = arith.constant 2 : index
    %c0_193 = arith.constant 0 : index
    %c0_194 = arith.constant 0 : index
    %218 = vector.load %arg6[%c2_191, %c2_192, %c0_193, %c0_194] : memref<3x3x128x128xf32, #tpu.memory_space<vmem>>, vector<1x1x128x128xf32>
    %219 = vector.shape_cast %218 : vector<1x1x128x128xf32> to vector<128x128xf32>
    %cst_195 = arith.constant dense<0.000000e+00> : vector<112x128xf32>
    %220 = tpu.matmul %217, %219, %cst_195 {dimension_numbers = #tpu.dot_dimension_numbers<[1], [0], [0], [1], [0, 0, 1, 1], [], []>} : vector<112x128xf32>, vector<128x128xf32>, vector<112x128xf32> -> vector<112x128xf32>
    %221 = arith.addf %215, %220 : vector<112x128xf32>
    %222 = arith.maximumf %168, %221 : vector<112x128xf32>
    %c0_196 = arith.constant 0 : index
    %c0_197 = arith.constant 0 : index
    %223 = vector.load %arg7[%c0_196, %c0_197] : memref<1x128xf32, #tpu.memory_space<vmem>>, vector<1x128xf32>
    %224 = vector.broadcast %223 : vector<1x128xf32> to vector<112x128xf32>
    %225 = arith.addf %222, %224 : vector<112x128xf32>
    %cst_198 = arith.constant 0.000000e+00 : f32
    %226 = vector.broadcast %cst_198 : f32 to vector<112x128xf32>
    %227 = arith.maximumf %225, %226 : vector<112x128xf32>
    %228 = vector.shape_cast %227 : vector<112x128xf32> to vector<7x16x128xf32>
    %229 = vector.extract_strided_slice %228 {offsets = [0, 0, 0], sizes = [7, 14, 128], strides = [1, 1, 1]} : vector<7x16x128xf32> to vector<7x14x128xf32>
    %c0_199 = arith.constant 0 : index
    %c0_200 = arith.constant 0 : index
    %c0_201 = arith.constant 0 : index
    %c0_202 = arith.constant 0 : index
    %230 = vector.load %arg8[%c0_199, %c0_200, %c0_201, %c0_202] : memref<1x7x14x128xf32, #tpu.memory_space<vmem>>, vector<1x7x14x128xf32>
    %231 = vector.shape_cast %230 : vector<1x7x14x128xf32> to vector<7x14x128xf32>
    %232 = vector.shape_cast %229 : vector<7x14x128xf32> to vector<1x7x14x128xf32>
    tpu.vector_store %arg8[%c0_199, %c0_200, %c0_201, %c0_202], %232 {strides = array<i32>} : memref<1x7x14x128xf32, #tpu.memory_space<vmem>>, vector<1x7x14x128xf32>,
    return
  }
  func.func @transform_0(%arg0: i32, %arg1: i32) -> (i32, i32, i32, i32, i32) {
    %c0_i32 = arith.constant 0 : i32
    %c0_i32_0 = arith.constant 0 : i32
    %c0_i32_1 = arith.constant 0 : i32
    %c0_i32_2 = arith.constant 0 : i32
    return %arg0, %arg1, %c0_i32, %c0_i32_0, %c0_i32_1 : i32, i32, i32, i32, i32
  }
  func.func @transform_1(%arg0: i32, %arg1: i32) -> (i32, i32, i32, i32, i32) {
    %c0_i32 = arith.constant 0 : i32
    %c0_i32_0 = arith.constant 0 : i32
    %c0_i32_1 = arith.constant 0 : i32
    %c0_i32_2 = arith.constant 0 : i32
    return %arg0, %arg1, %c0_i32, %c0_i32_0, %c0_i32_1 : i32, i32, i32, i32, i32
  }
  func.func @transform_2(%arg0: i32, %arg1: i32) -> (i32, i32, i32, i32, i32) {
    %c0_i32 = arith.constant 0 : i32
    %c0_i32_0 = arith.constant 0 : i32
    %c0_i32_1 = arith.constant 0 : i32
    %c0_i32_2 = arith.constant 0 : i32
    return %arg0, %arg1, %c0_i32, %c0_i32_0, %c0_i32_1 : i32, i32, i32, i32, i32
  }
  func.func @transform_3(%arg0: i32, %arg1: i32) -> (i32, i32, i32, i32, i32) {
    %c0_i32 = arith.constant 0 : i32
    %c0_i32_0 = arith.constant 0 : i32
    %c0_i32_1 = arith.constant 0 : i32
    %c0_i32_2 = arith.constant 0 : i32
    return %arg0, %arg1, %c0_i32, %c0_i32_0, %c0_i32_1 : i32, i32, i32, i32, i32
  }
  func.func @transform_4(%arg0: i32, %arg1: i32) -> (i32, i32, i32, i32) {
    %c0_i32 = arith.constant 0 : i32
    %c0_i32_0 = arith.constant 0 : i32
    %c0_i32_1 = arith.constant 0 : i32
    %c0_i32_2 = arith.constant 0 : i32
    %c0_i32_3 = arith.constant 0 : i32
    return %c0_i32, %c0_i32_0, %c0_i32_1, %c0_i32_2 : i32, i32, i32, i32
  }
  func.func @transform_5(%arg0: i32, %arg1: i32) -> (i32, i32) {
    %c0_i32 = arith.constant 0 : i32
    %c0_i32_0 = arith.constant 0 : i32
    %c0_i32_1 = arith.constant 0 : i32
    return %c0_i32, %c0_i32_0 : i32, i32
  }
  func.func @transform_6(%arg0: i32, %arg1: i32) -> (i32, i32, i32, i32) {
    %c0_i32 = arith.constant 0 : i32
    %c0_i32_0 = arith.constant 0 : i32
    %c0_i32_1 = arith.constant 0 : i32
    return %arg0, %arg1, %c0_i32, %c0_i32_0 : i32, i32, i32, i32
  }
}

module attributes {stable_mosaic.version = 11 : i64} {
  func.func @_adaptive_avgpool_kernel(%arg0: i32, %arg1: memref<1x14x7x128xf32, #tpu.memory_space<vmem>>, %arg2: memref<1x14x7x128xf32, #tpu.memory_space<vmem>>, %arg3: memref<1x7x7x128xf32, #tpu.memory_space<vmem>>) attributes {dimension_semantics = [#tpu.dimension_semantics<parallel>], iteration_bounds = array<i64: 2>, scalar_prefetch = 0 : i64, scratch_operands = 0 : i64, tpu.core_type = #tpu.core_type<tc>, window_params = [{transform_indices = @transform_0, window_bounds = array<i64: 1, 14, 7, 128>}, {transform_indices = @transform_1, window_bounds = array<i64: 1, 14, 7, 128>}, {transform_indices = @transform_2, window_bounds = array<i64: 1, 7, 7, 128>}]} {
    %c0 = arith.constant 0 : index
    %c0_0 = arith.constant 0 : index
    %c0_1 = arith.constant 0 : index
    %c0_2 = arith.constant 0 : index
    %0 = vector.load %arg1[%c0, %c0_0, %c0_1, %c0_2] : memref<1x14x7x128xf32, #tpu.memory_space<vmem>>, vector<1x14x7x128xf32>
    %1 = vector.shape_cast %0 : vector<1x14x7x128xf32> to vector<14x7x128xf32>
    %2 = vector.shape_cast %1 : vector<14x7x128xf32> to vector<7x2x7x128xf32>
    %3 = vector.extract_strided_slice %2 {offsets = [0, 0, 0, 0], sizes = [7, 1, 7, 128], strides = [1, 1, 1, 1]} : vector<7x2x7x128xf32> to vector<7x1x7x128xf32>
    %4 = vector.shape_cast %3 : vector<7x1x7x128xf32> to vector<7x7x128xf32>
    %5 = vector.extract_strided_slice %2 {offsets = [0, 1, 0, 0], sizes = [7, 1, 7, 128], strides = [1, 1, 1, 1]} : vector<7x2x7x128xf32> to vector<7x1x7x128xf32>
    %6 = vector.shape_cast %5 : vector<7x1x7x128xf32> to vector<7x7x128xf32>
    %7 = arith.addf %4, %6 : vector<7x7x128xf32>
    %c0_3 = arith.constant 0 : index
    %c0_4 = arith.constant 0 : index
    %c0_5 = arith.constant 0 : index
    %c0_6 = arith.constant 0 : index
    %8 = vector.load %arg2[%c0_3, %c0_4, %c0_5, %c0_6] : memref<1x14x7x128xf32, #tpu.memory_space<vmem>>, vector<1x14x7x128xf32>
    %9 = vector.shape_cast %8 : vector<1x14x7x128xf32> to vector<14x7x128xf32>
    %10 = vector.shape_cast %9 : vector<14x7x128xf32> to vector<7x2x7x128xf32>
    %11 = vector.extract_strided_slice %10 {offsets = [0, 0, 0, 0], sizes = [7, 1, 7, 128], strides = [1, 1, 1, 1]} : vector<7x2x7x128xf32> to vector<7x1x7x128xf32>
    %12 = vector.shape_cast %11 : vector<7x1x7x128xf32> to vector<7x7x128xf32>
    %13 = arith.addf %7, %12 : vector<7x7x128xf32>
    %14 = vector.extract_strided_slice %10 {offsets = [0, 1, 0, 0], sizes = [7, 1, 7, 128], strides = [1, 1, 1, 1]} : vector<7x2x7x128xf32> to vector<7x1x7x128xf32>
    %15 = vector.shape_cast %14 : vector<7x1x7x128xf32> to vector<7x7x128xf32>
    %16 = arith.addf %13, %15 : vector<7x7x128xf32>
    %cst = arith.constant 2.500000e-01 : f32
    %17 = vector.broadcast %cst : f32 to vector<7x7x128xf32>
    %18 = arith.mulf %16, %17 : vector<7x7x128xf32>
    %c0_7 = arith.constant 0 : index
    %c0_8 = arith.constant 0 : index
    %c0_9 = arith.constant 0 : index
    %c0_10 = arith.constant 0 : index
    %19 = vector.load %arg3[%c0_7, %c0_8, %c0_9, %c0_10] : memref<1x7x7x128xf32, #tpu.memory_space<vmem>>, vector<1x7x7x128xf32>
    %20 = vector.shape_cast %19 : vector<1x7x7x128xf32> to vector<7x7x128xf32>
    %21 = vector.shape_cast %18 : vector<7x7x128xf32> to vector<1x7x7x128xf32>
    tpu.vector_store %arg3[%c0_7, %c0_8, %c0_9, %c0_10], %21 {strides = array<i32>} : memref<1x7x7x128xf32, #tpu.memory_space<vmem>>, vector<1x7x7x128xf32>,
    return
  }
  func.func @transform_0(%arg0: i32) -> (i32, i32, i32, i32) {
    %c0_i32 = arith.constant 0 : i32
    %c0_i32_0 = arith.constant 0 : i32
    %c0_i32_1 = arith.constant 0 : i32
    %c0_i32_2 = arith.constant 0 : i32
    return %arg0, %c0_i32, %c0_i32_0, %c0_i32_1 : i32, i32, i32, i32
  }
  func.func @transform_1(%arg0: i32) -> (i32, i32, i32, i32) {
    %c0_i32 = arith.constant 0 : i32
    %c0_i32_0 = arith.constant 0 : i32
    %c0_i32_1 = arith.constant 0 : i32
    %c0_i32_2 = arith.constant 0 : i32
    return %arg0, %c0_i32, %c0_i32_0, %c0_i32_1 : i32, i32, i32, i32
  }
  func.func @transform_2(%arg0: i32) -> (i32, i32, i32, i32) {
    %c0_i32 = arith.constant 0 : i32
    %c0_i32_0 = arith.constant 0 : i32
    %c0_i32_1 = arith.constant 0 : i32
    %c0_i32_2 = arith.constant 0 : i32
    return %arg0, %c0_i32, %c0_i32_0, %c0_i32_1 : i32, i32, i32, i32
  }
}

module attributes {stable_mosaic.version = 11 : i64} {
  func.func @_mlp_head_kernel(%arg0: memref<2x896xf32, #tpu.memory_space<vmem>>, %arg1: memref<896x128xf32, #tpu.memory_space<vmem>>, %arg2: memref<1x128xf32, #tpu.memory_space<vmem>>, %arg3: memref<128x128xf32, #tpu.memory_space<vmem>>, %arg4: memref<1x128xf32, #tpu.memory_space<vmem>>, %arg5: memref<128x128xf32, #tpu.memory_space<vmem>>, %arg6: memref<1x128xf32, #tpu.memory_space<vmem>>, %arg7: memref<2x128xf32, #tpu.memory_space<vmem>>) attributes {dimension_semantics = [], scalar_prefetch = 0 : i64, scratch_operands = 0 : i64, tpu.core_type = #tpu.core_type<tc>} {
    %c0 = arith.constant 0 : index
    %c0_0 = arith.constant 0 : index
    %0 = vector.load %arg0[%c0, %c0_0] : memref<2x896xf32, #tpu.memory_space<vmem>>, vector<2x896xf32>
    %c0_1 = arith.constant 0 : index
    %c0_2 = arith.constant 0 : index
    %1 = vector.load %arg1[%c0_1, %c0_2] : memref<896x128xf32, #tpu.memory_space<vmem>>, vector<896x128xf32>
    %cst = arith.constant dense<0.000000e+00> : vector<2x128xf32>
    %2 = tpu.matmul %0, %1, %cst {dimension_numbers = #tpu.dot_dimension_numbers<[1], [0], [0], [1], [0, 0, 1, 1], [], []>} : vector<2x896xf32>, vector<896x128xf32>, vector<2x128xf32> -> vector<2x128xf32>
    %c0_3 = arith.constant 0 : index
    %c0_4 = arith.constant 0 : index
    %3 = vector.load %arg2[%c0_3, %c0_4] : memref<1x128xf32, #tpu.memory_space<vmem>>, vector<1x128xf32>
    %4 = vector.broadcast %3 : vector<1x128xf32> to vector<2x128xf32>
    %5 = arith.addf %2, %4 : vector<2x128xf32>
    %cst_5 = arith.constant 0.000000e+00 : f32
    %6 = vector.broadcast %cst_5 : f32 to vector<2x128xf32>
    %7 = arith.maximumf %5, %6 : vector<2x128xf32>
    %c0_6 = arith.constant 0 : index
    %c0_7 = arith.constant 0 : index
    %8 = vector.load %arg3[%c0_6, %c0_7] : memref<128x128xf32, #tpu.memory_space<vmem>>, vector<128x128xf32>
    %cst_8 = arith.constant dense<0.000000e+00> : vector<2x128xf32>
    %9 = tpu.matmul %7, %8, %cst_8 {dimension_numbers = #tpu.dot_dimension_numbers<[1], [0], [0], [1], [0, 0, 1, 1], [], []>} : vector<2x128xf32>, vector<128x128xf32>, vector<2x128xf32> -> vector<2x128xf32>
    %c0_9 = arith.constant 0 : index
    %c0_10 = arith.constant 0 : index
    %10 = vector.load %arg4[%c0_9, %c0_10] : memref<1x128xf32, #tpu.memory_space<vmem>>, vector<1x128xf32>
    %11 = vector.broadcast %10 : vector<1x128xf32> to vector<2x128xf32>
    %12 = arith.addf %9, %11 : vector<2x128xf32>
    %cst_11 = arith.constant 0.000000e+00 : f32
    %13 = vector.broadcast %cst_11 : f32 to vector<2x128xf32>
    %14 = arith.maximumf %12, %13 : vector<2x128xf32>
    %c0_12 = arith.constant 0 : index
    %c0_13 = arith.constant 0 : index
    %15 = vector.load %arg5[%c0_12, %c0_13] : memref<128x128xf32, #tpu.memory_space<vmem>>, vector<128x128xf32>
    %cst_14 = arith.constant dense<0.000000e+00> : vector<2x128xf32>
    %16 = tpu.matmul %14, %15, %cst_14 {dimension_numbers = #tpu.dot_dimension_numbers<[1], [0], [0], [1], [0, 0, 1, 1], [], []>} : vector<2x128xf32>, vector<128x128xf32>, vector<2x128xf32> -> vector<2x128xf32>
    %c0_15 = arith.constant 0 : index
    %c0_16 = arith.constant 0 : index
    %17 = vector.load %arg6[%c0_15, %c0_16] : memref<1x128xf32, #tpu.memory_space<vmem>>, vector<1x128xf32>
    %18 = vector.broadcast %17 : vector<1x128xf32> to vector<2x128xf32>
    %19 = arith.addf %16, %18 : vector<2x128xf32>
    %c0_17 = arith.constant 0 : index
    %c0_18 = arith.constant 0 : index
    %20 = vector.load %arg7[%c0_17, %c0_18] : memref<2x128xf32, #tpu.memory_space<vmem>>, vector<2x128xf32>
    tpu.vector_store %arg7[%c0_17, %c0_18], %19 {strides = array<i32>} : memref<2x128xf32, #tpu.memory_space<vmem>>, vector<2x128xf32>,
    return
  }
}

</mosaic_0001>

<llo_original>
// kernel: vgg_forward.6
$region0: #{vgg_forward.6}
  #allocation0 [shape = 'u32[]', space=smem, size = 0x4, offset = 0x4, fixed_abs, tag = 'smem constant byte address 0x4 - core index']
  #allocation1 [shape = 'u32[72,128]{1,0:T(1,128)}', space=vmem, size = 0x9000, scoped, tag = 'internal scratch']
  %s0 = inlined_call_operand.vmem [shape: f32[2,14,7,128], index: 0, kind: input, shape index: {}]
  %s1 = inlined_call_operand.vmem [shape: f32[2,14,7,128], index: 1, kind: input, shape index: {}]
  %s2 = inlined_call_operand.vmem [shape: f32[2,7,7,128], index: 2, kind: output, shape index: {}]
  %s3 = sld [smem:[#allocation0]]
  $region41: #{vgg_forward.6} parent=0
    _
  %s5 = ssub.s32 1, %s3
  %s6 = scalar_select 0, %s5, %s3
  loop: start=0, step=1, limit=4
  $region2: #{vgg_forward.6} parent=0 // loop_pre_header
    _
  $region3: #{vgg_forward.6} parent=0 // loop_header
    %s8 = sphi 0, %s12
    %p9 = scmp.ge.s32.totalorder %s8, 4
    %s18 = sphi 0, %s20
    %s21 = sphi 0, %s18
    %s22 = sphi 0, %s21
    %s38 = sphi 0, %s22
    %s44 = sphi 0, %s46
    %s47 = sphi 0, %s44
    %s48 = sphi 0, %s47
    %s64 = sphi 0, %s48
    %s70 = sphi 0, %s72
    %s73 = sphi 0, %s70
    %s74 = sphi 0, %s73
    %s90 = sphi 0, %s74
  $region4: #{vgg_forward.6} parent=0 // loop_header_branch
    %11 = sbr.rel (%p9) target = $region8
  $region5: #{vgg_forward.6} parent=0 // loop_body
    %s13 = ssub.s32 %s8, 1
    %s14 = ssub.s32 %s8, 2
    %s15 = sadd.s32 %s8, 1
    %s16 = ssub.s32 %s8, %s15
    %p17 = scmp.eq.s32.totalorder %s16, 0
    %s19 = sadd.s32 %s18, 1
    %s20 = scalar_select %p17, %s18, %s19
    %p23 = pneg %p17
    %p24 = scmp.eq.s32.totalorder %s8, 1
    %p25 = por %p23, %p24
    %p26 = scmp.ne.s32.totalorder %s18, %s21
    %p27 = scmp.eq.s32.totalorder %s8, 0
    %p28 = por %p26, %p27
    %p29 = scmp.ne.s32.totalorder %s18, %s21
    %p30 = scmp.eq.s32.totalorder %s13, 1
    %p31 = por %p29, %p30
    %p32 = scmp.ne.s32.totalorder %s21, %s22
    %p33 = scmp.eq.s32.totalorder %s13, 0
    %p34 = por %p32, %p33
    %p35 = scmp.ne.s32.totalorder %s21, %s22
    %p36 = scmp.eq.s32.totalorder %s14, 1
    %p37 = por %p35, %p36
    %p39 = scmp.ne.s32.totalorder %s22, %s38
    %p40 = scmp.eq.s32.totalorder %s14, 0
    %p41 = por %p39, %p40
    %s42 = ssub.s32 %s8, %s15
    %p43 = scmp.eq.s32.totalorder %s42, 0
    %s45 = sadd.s32 %s44, 1
    %s46 = scalar_select %p43, %s44, %s45
    %p49 = pneg %p43
    %p50 = scmp.eq.s32.totalorder %s8, 1
    %p51 = por %p49, %p50
    %p52 = scmp.ne.s32.totalorder %s44, %s47
    %p53 = scmp.eq.s32.totalorder %s8, 0
    %p54 = por %p52, %p53
    %p55 = scmp.ne.s32.totalorder %s44, %s47
    %p56 = scmp.eq.s32.totalorder %s13, 1
    %p57 = por %p55, %p56
    %p58 = scmp.ne.s32.totalorder %s47, %s48
    %p59 = scmp.eq.s32.totalorder %s13, 0
    %p60 = por %p58, %p59
    %p61 = scmp.ne.s32.totalorder %s47, %s48
    %p62 = scmp.eq.s32.totalorder %s14, 1
    %p63 = por %p61, %p62
    %p65 = scmp.ne.s32.totalorder %s48, %s64
    %p66 = scmp.eq.s32.totalorder %s14, 0
    %p67 = por %p65, %p66
    %s68 = ssub.s32 %s8, %s15
    %p69 = scmp.eq.s32.totalorder %s68, 0
    %s71 = sadd.s32 %s70, 1
    %s72 = scalar_select %p69, %s70, %s71
    %p75 = pneg %p69
    %p76 = scmp.eq.s32.totalorder %s8, 1
    %p77 = por %p75, %p76
    %p78 = scmp.ne.s32.totalorder %s70, %s73
    %p79 = scmp.eq.s32.totalorder %s8, 0
    %p80 = por %p78, %p79
    %p81 = scmp.ne.s32.totalorder %s70, %s73
    %p82 = scmp.eq.s32.totalorder %s13, 1
    %p83 = por %p81, %p82
    %p84 = scmp.ne.s32.totalorder %s73, %s74
    %p85 = scmp.eq.s32.totalorder %s13, 0
    %p86 = por %p84, %p85
    %p87 = scmp.ne.s32.totalorder %s73, %s74
    %p88 = scmp.eq.s32.totalorder %s14, 1
    %p89 = por %p87, %p88
    %p91 = scmp.ne.s32.totalorder %s74, %s90
    %p92 = scmp.eq.s32.totalorder %s14, 0
    %p93 = por %p91, %p92
    %p94 = scmp.le.s32.totalorder 1, %s8
    %p95 = scmp.lt.s32.totalorder %s8, 3
    %p96 = pnand %p94, %p95
    %p97 = pneg %p96
    // Predicated region
    $region9: #{vgg_forward.6} parent=5 // pred_check
      _
    $region10: #{vgg_forward.6} parent=5 // pred_check_branch
      %99 = sbr.rel (%p96) target = $region12
    $region11: #{vgg_forward.6} parent=5 // pred_region
      %s100 = ssub.s32 %s8, 1
    $region12: #{vgg_forward.6} parent=5 // pred_fallthru
      _
    %p101 = scmp.lt.s32.totalorder %s8, 2
    // Predicated region
    $region13: #{vgg_forward.6} parent=5 // pred_check
      %p102 = pneg %p101
    $region14: #{vgg_forward.6} parent=5 // pred_check_branch
      %104 = sbr.rel (%p102) target = $region16
    $region15: #{vgg_forward.6} parent=5 // pred_region
      // Predicated region
      $region17: #{vgg_forward.6} parent=15 // pred_check
        %p105 = pneg %p28
      $region18: #{vgg_forward.6} parent=15 // pred_check_branch
        %107 = sbr.rel (%p105) target = $region20
      $region19: #{vgg_forward.6} parent=15 // pred_region
        %p108 = scmp.lt.s32.totalorder %s8, 1
        %s109 = scalar_select %p108, %s8, 1
        %s110 = smul.addr %s109, 14
        %s111 = smul.addr %s110, 8
        %s112 = scalar_lea.vmem %s0, %s111
      $region20: #{vgg_forward.6} parent=15 // pred_fallthru
        _
      // Predicated region
      $region21: #{vgg_forward.6} parent=15 // pred_check
        %p113 = pneg %p54
      $region22: #{vgg_forward.6} parent=15 // pred_check_branch
        %115 = sbr.rel (%p113) target = $region24
      $region23: #{vgg_forward.6} parent=15 // pred_region
        %p116 = scmp.lt.s32.totalorder %s8, 1
        %s117 = scalar_select %p116, %s8, 1
        %s118 = smul.addr %s117, 14
        %s119 = smul.addr %s118, 8
        %s120 = scalar_lea.vmem %s1, %s119
      $region24: #{vgg_forward.6} parent=15 // pred_fallthru
        _
    $region16: #{vgg_forward.6} parent=5 // pred_fallthru
      _
    %p121 = scmp.le.s32.totalorder 1, %s8
    %p122 = scmp.lt.s32.totalorder %s8, 3
    %p123 = pnand %p121, %p122
    %p124 = pneg %p123
    // Predicated region
    $region25: #{vgg_forward.6} parent=5 // pred_check
      _
    $region26: #{vgg_forward.6} parent=5 // pred_check_branch
      %126 = sbr.rel (%p123) target = $region28
    $region27: #{vgg_forward.6} parent=5 // pred_region
      %s127 = ssub.s32 %s8, 1
      %p128 = scmp.lt.s32.totalorder %s13, 1
      %s129 = scalar_select %p128, %s13, 1
      %s130 = smul.addr %s129, 14
      %s131 = smul.addr %s130, 8
      %s132 = scalar_lea.vmem %s0, %s131
      %p133 = pneg %p34
      %p134 = pneg %p31
      %p135 = scmp.lt.s32.totalorder %s13, 1
      %s136 = scalar_select %p135, %s13, 1
      %s137 = smul.addr %s136, 14
      %s138 = smul.addr %s137, 8
      %s139 = scalar_lea.vmem %s1, %s138
      %p140 = pneg %p60
      %p141 = pneg %p57
      %p142 = pneg %p86
      %p143 = pneg %p83
      %p144 = scmp.lt.s32.totalorder %s13, 1
      %s145 = scalar_select %p144, %s13, 1
      %s146 = smul.addr %s145, 7
      %s147 = smul.addr %s146, 8
      %s148 = scalar_lea.vmem %s2, %s147
      %p149 = scmp.lt.s32.totalorder %s13, 1
      %s150 = scalar_select %p149, %s13, 1
      %s151 = smul.addr %s150, 14
      %s152 = smul.addr %s151, 8
      %s153 = scalar_lea.vmem %s0, %s152
      %p154 = scmp.lt.s32.totalorder %s13, 1
      %s155 = scalar_select %p154, %s13, 1
      %s156 = smul.addr %s155, 14
      %s157 = smul.addr %s156, 8
      %s158 = scalar_lea.vmem %s1, %s157
      %p159 = scmp.lt.s32.totalorder %s13, 1
      %s160 = scalar_select %p159, %s13, 1
      %s161 = smul.addr %s160, 7
      %s162 = smul.addr %s161, 8
      %s163 = scalar_lea.vmem %s2, %s162
      %v164 = vld [vmem:[%s153] sm:$0x7f]
      %v165 = vld [vmem:[%s153 + $0x8] sm:$0x7f]
      %v166 = vld [vmem:[%s153 + $0x10] sm:$0x7f]
      %v167 = vld [vmem:[%s153 + $0x18] sm:$0x7f]
      %v168 = vld [vmem:[%s153 + $0x20] sm:$0x7f]
      %v169 = vld [vmem:[%s153 + $0x28] sm:$0x7f]
      %v170 = vld [vmem:[%s153 + $0x30] sm:$0x7f]
      %v171 = vld [vmem:[%s153 + $0x38] sm:$0x7f]
      %v172 = vld [vmem:[%s153 + $0x40] sm:$0x7f]
      %v173 = vld [vmem:[%s153 + $0x48] sm:$0x7f]
      %v174 = vld [vmem:[%s153 + $0x50] sm:$0x7f]
      %v175 = vld [vmem:[%s153 + $0x58] sm:$0x7f]
      %v176 = vld [vmem:[%s153 + $0x60] sm:$0x7f]
      %v177 = vld [vmem:[%s153 + $0x68] sm:$0x7f]
      %v178 = vadd.f32 %v164, %v165
      %v179 = vadd.f32 %v166, %v167
      %v180 = vadd.f32 %v168, %v169
      %v181 = vadd.f32 %v170, %v171
      %v182 = vadd.f32 %v172, %v173
      %v183 = vadd.f32 %v174, %v175
      %v184 = vadd.f32 %v176, %v177
      %v185 = vld [vmem:[%s158] sm:$0x7f]
      %v186 = vld [vmem:[%s158 + $0x8] sm:$0x7f]
      %v187 = vld [vmem:[%s158 + $0x10] sm:$0x7f]
      %v188 = vld [vmem:[%s158 + $0x18] sm:$0x7f]
      %v189 = vld [vmem:[%s158 + $0x20] sm:$0x7f]
      %v190 = vld [vmem:[%s158 + $0x28] sm:$0x7f]
      %v191 = vld [vmem:[%s158 + $0x30] sm:$0x7f]
      %v192 = vld [vmem:[%s158 + $0x38] sm:$0x7f]
      %v193 = vld [vmem:[%s158 + $0x40] sm:$0x7f]
      %v194 = vld [vmem:[%s158 + $0x48] sm:$0x7f]
      %v195 = vld [vmem:[%s158 + $0x50] sm:$0x7f]
      %v196 = vld [vmem:[%s158 + $0x58] sm:$0x7f]
      %v197 = vld [vmem:[%s158 + $0x60] sm:$0x7f]
      %v198 = vld [vmem:[%s158 + $0x68] sm:$0x7f]
      %v199 = vadd.f32 %v178, %v185
      %v200 = vadd.f32 %v179, %v187
      %v201 = vadd.f32 %v180, %v189
      %v202 = vadd.f32 %v181, %v191
      %v203 = vadd.f32 %v182, %v193
      %v204 = vadd.f32 %v183, %v195
      %v205 = vadd.f32 %v184, %v197
      %v206 = vadd.f32 %v199, %v186
      %v207 = vadd.f32 %v200, %v188
      %v208 = vadd.f32 %v201, %v190
      %v209 = vadd.f32 %v202, %v192
      %v210 = vadd.f32 %v203, %v194
      %v211 = vadd.f32 %v204, %v196
      %v212 = vadd.f32 %v205, %v198
      %v213 = vmul.f32 %v206, 0.25
      %v214 = vmul.f32 %v207, 0.25
      %v215 = vmul.f32 %v208, 0.25
      %v216 = vmul.f32 %v209, 0.25
      %v217 = vmul.f32 %v210, 0.25
      %v218 = vmul.f32 %v211, 0.25
      %v219 = vmul.f32 %v212, 0.25
      %220 = vst [vmem:[%s163] sm:$0x7f] %v213
      %221 = vst [vmem:[%s163 + $0x8] sm:$0x7f] %v214
      %222 = vst [vmem:[%s163 + $0x10] sm:$0x7f] %v215
      %223 = vst [vmem:[%s163 + $0x18] sm:$0x7f] %v216
      %224 = vst [vmem:[%s163 + $0x20] sm:$0x7f] %v217
      %225 = vst [vmem:[%s163 + $0x28] sm:$0x7f] %v218
      %226 = vst [vmem:[%s163 + $0x30] sm:$0x7f] %v219
      %p227 = scmp.lt.s32.totalorder %s13, 1
      %s228 = scalar_select %p227, %s13, 1
      %s229 = smul.addr %s228, 7
      %s230 = smul.addr %s229, 8
      %s231 = scalar_lea.vmem %s2, %s230
      // Predicated region
      $region29: #{vgg_forward.6} parent=27 // pred_check
        %p232 = pneg %p83
      $region30: #{vgg_forward.6} parent=27 // pred_check_branch
        %234 = sbr.rel (%p232) target = $region32
      $region31: #{vgg_forward.6} parent=27 // pred_region
        _
      $region32: #{vgg_forward.6} parent=27 // pred_fallthru
        _
    $region28: #{vgg_forward.6} parent=5 // pred_fallthru
      _
    %p235 = scmp.le.s32.totalorder 2, %s8
    // Predicated region
    $region33: #{vgg_forward.6} parent=5 // pred_check
      %p236 = pneg %p235
    $region34: #{vgg_forward.6} parent=5 // pred_check_branch
      %238 = sbr.rel (%p236) target = $region36
    $region35: #{vgg_forward.6} parent=5 // pred_region
      %s239 = ssub.s32 %s8, 2
      // Predicated region
      $region37: #{vgg_forward.6} parent=35 // pred_check
        %p240 = pneg %p89
      $region38: #{vgg_forward.6} parent=35 // pred_check_branch
        %242 = sbr.rel (%p240) target = $region40
      $region39: #{vgg_forward.6} parent=35 // pred_region
        %p243 = scmp.lt.s32.totalorder %s14, 1
        %s244 = scalar_select %p243, %s14, 1
        %s245 = smul.addr %s244, 7
        %s246 = smul.addr %s245, 8
        %s247 = scalar_lea.vmem %s2, %s246
      $region40: #{vgg_forward.6} parent=35 // pred_fallthru
        _
    $region36: #{vgg_forward.6} parent=5 // pred_fallthru
      _
  $region6: #{vgg_forward.6} parent=0 // loop_footer
    %s12 = sadd.s32 1, %s8
  $region7: #{vgg_forward.6} parent=0 // loop_footer_branch
    %7 = sbr.rel target = $region3
  $region8: #{vgg_forward.6} parent=0 // loop_exit
    _

// kernel: vgg_forward.4
$region0: #{vgg_forward.4}
  #allocation0 [shape = 'u32[]', space=smem, size = 0x4, offset = 0x4, fixed_abs, tag = 'smem constant byte address 0x4 - core index']
  #allocation1 [shape = 'u32[72,128]{1,0:T(1,128)}', space=vmem, size = 0x9000, scoped, tag = 'internal scratch']
  %s0 = inlined_call_operand.vmem [shape: f32[2,4,8,33,3], index: 0, kind: input, shape index: {}]
  %s1 = inlined_call_operand.vmem [shape: f32[2,4,8,33,3], index: 1, kind: input, shape index: {}]
  %s2 = inlined_call_operand.vmem [shape: f32[2,4,8,33,3], index: 2, kind: input, shape index: {}]
  %s3 = inlined_call_operand.vmem [shape: f32[2,4,8,33,3], index: 3, kind: input, shape index: {}]
  %s4 = inlined_call_operand.vmem [shape: f32[3,3,3,128], index: 4, kind: input, shape index: {}]
  %s5 = inlined_call_operand.vmem [shape: f32[1,128], index: 5, kind: input, shape index: {}]
  %s6 = inlined_call_operand.vmem [shape: f32[2,28,28,128], index: 6, kind: output, shape index: {}]
  %s7 = sld [smem:[#allocation0]]
  $region57: #{vgg_forward.4} parent=0
    _
  %s9 = ssub.s32 1, %s7
  %s10 = scalar_select 0, %s9, %s7
  loop: start=0, step=1, limit=10
  $region2: #{vgg_forward.4} parent=0 // loop_pre_header
    _
  $region3: #{vgg_forward.4} parent=0 // loop_header
    %s12 = sphi 0, %s16
    %p13 = scmp.ge.s32.totalorder %s12, 10
    %s19 = sphi 0, %s31
    %s20 = sphi 0, %s27
    %s21 = sphi 0, %s19
    %s22 = sphi 0, %s20
    %s23 = sphi 0, %s21
    %s24 = sphi 0, %s22
    %s36 = sphi 0, %s38
    %s39 = sphi 0, %s36
    %s40 = sphi 0, %s39
    %s56 = sphi 0, %s40
    %s64 = sphi 0, %s66
    %s67 = sphi 0, %s64
    %s68 = sphi 0, %s67
    %s84 = sphi 0, %s68
    %s92 = sphi 0, %s94
    %s95 = sphi 0, %s92
    %s96 = sphi 0, %s95
    %s112 = sphi 0, %s96
    %s120 = sphi 0, %s122
    %s123 = sphi 0, %s120
    %s124 = sphi 0, %s123
    %s140 = sphi 0, %s124
    %s144 = sphi 0, %s144
    %s146 = sphi 0, %s144
    %s147 = sphi 0, %s146
    %s161 = sphi 0, %s147
    %s165 = sphi 0, %s165
    %s167 = sphi 0, %s165
    %s168 = sphi 0, %s167
    %s182 = sphi 0, %s168
    %s190 = sphi 0, %s192
    %s193 = sphi 0, %s190
    %s194 = sphi 0, %s193
    %s210 = sphi 0, %s194
  $region4: #{vgg_forward.4} parent=0 // loop_header_branch
    %15 = sbr.rel (%p13) target = $region8
  $region5: #{vgg_forward.4} parent=0 // loop_body
    %s17 = ssub.s32 %s12, 1
    %s18 = ssub.s32 %s12, 2
    %s25 = sadd.s32 1, %s20
    %p26 = scmp.ge.s32.totalorder %s25, 4
    %s27 = scalar_select %p26, 0, %s25
    %s28 = sadd.s32 1, %s19
    %s29 = scalar_select %p26, %s28, %s19
    %p30 = scmp.ge.s32.totalorder %s29, 2
    %s31 = scalar_select %p30, 0, %s29
    %s32 = ssub.s32 %s19, %s31
    %s33 = ssub.s32 %s20, %s27
    %s34 = sor.u32 %s32, %s33
    %p35 = scmp.eq.s32.totalorder %s34, 0
    %s37 = sadd.s32 %s36, 1
    %s38 = scalar_select %p35, %s36, %s37
    %p41 = pneg %p35
    %p42 = scmp.eq.s32.totalorder %s12, 7
    %p43 = por %p41, %p42
    %p44 = scmp.ne.s32.totalorder %s36, %s39
    %p45 = scmp.eq.s32.totalorder %s12, 0
    %p46 = por %p44, %p45
    %p47 = scmp.ne.s32.totalorder %s36, %s39
    %p48 = scmp.eq.s32.totalorder %s17, 7
    %p49 = por %p47, %p48
    %p50 = scmp.ne.s32.totalorder %s39, %s40
    %p51 = scmp.eq.s32.totalorder %s17, 0
    %p52 = por %p50, %p51
    %p53 = scmp.ne.s32.totalorder %s39, %s40
    %p54 = scmp.eq.s32.totalorder %s18, 7
    %p55 = por %p53, %p54
    %p57 = scmp.ne.s32.totalorder %s40, %s56
    %p58 = scmp.eq.s32.totalorder %s18, 0
    %p59 = por %p57, %p58
    %s60 = ssub.s32 %s19, %s31
    %s61 = ssub.s32 %s20, %s27
    %s62 = sor.u32 %s60, %s61
    %p63 = scmp.eq.s32.totalorder %s62, 0
    %s65 = sadd.s32 %s64, 1
    %s66 = scalar_select %p63, %s64, %s65
    %p69 = pneg %p63
    %p70 = scmp.eq.s32.totalorder %s12, 7
    %p71 = por %p69, %p70
    %p72 = scmp.ne.s32.totalorder %s64, %s67
    %p73 = scmp.eq.s32.totalorder %s12, 0
    %p74 = por %p72, %p73
    %p75 = scmp.ne.s32.totalorder %s64, %s67
    %p76 = scmp.eq.s32.totalorder %s17, 7
    %p77 = por %p75, %p76
    %p78 = scmp.ne.s32.totalorder %s67, %s68
    %p79 = scmp.eq.s32.totalorder %s17, 0
    %p80 = por %p78, %p79
    %p81 = scmp.ne.s32.totalorder %s67, %s68
    %p82 = scmp.eq.s32.totalorder %s18, 7
    %p83 = por %p81, %p82
    %p85 = scmp.ne.s32.totalorder %s68, %s84
    %p86 = scmp.eq.s32.totalorder %s18, 0
    %p87 = por %p85, %p86
    %s88 = ssub.s32 %s19, %s31
    %s89 = ssub.s32 %s20, %s27
    %s90 = sor.u32 %s88, %s89
    %p91 = scmp.eq.s32.totalorder %s90, 0
    %s93 = sadd.s32 %s92, 1
    %s94 = scalar_select %p91, %s92, %s93
    %p97 = pneg %p91
    %p98 = scmp.eq.s32.totalorder %s12, 7
    %p99 = por %p97, %p98
    %p100 = scmp.ne.s32.totalorder %s92, %s95
    %p101 = scmp.eq.s32.totalorder %s12, 0
    %p102 = por %p100, %p101
    %p103 = scmp.ne.s32.totalorder %s92, %s95
    %p104 = scmp.eq.s32.totalorder %s17, 7
    %p105 = por %p103, %p104
    %p106 = scmp.ne.s32.totalorder %s95, %s96
    %p107 = scmp.eq.s32.totalorder %s17, 0
    %p108 = por %p106, %p107
    %p109 = scmp.ne.s32.totalorder %s95, %s96
    %p110 = scmp.eq.s32.totalorder %s18, 7
    %p111 = por %p109, %p110
    %p113 = scmp.ne.s32.totalorder %s96, %s112
    %p114 = scmp.eq.s32.totalorder %s18, 0
    %p115 = por %p113, %p114
    %s116 = ssub.s32 %s19, %s31
    %s117 = ssub.s32 %s20, %s27
    %s118 = sor.u32 %s116, %s117
    %p119 = scmp.eq.s32.totalorder %s118, 0
    %s121 = sadd.s32 %s120, 1
    %s122 = scalar_select %p119, %s120, %s121
    %p125 = pneg %p119
    %p126 = scmp.eq.s32.totalorder %s12, 7
    %p127 = por %p125, %p126
    %p128 = scmp.ne.s32.totalorder %s120, %s123
    %p129 = scmp.eq.s32.totalorder %s12, 0
    %p130 = por %p128, %p129
    %p131 = scmp.ne.s32.totalorder %s120, %s123
    %p132 = scmp.eq.s32.totalorder %s17, 7
    %p133 = por %p131, %p132
    %p134 = scmp.ne.s32.totalorder %s123, %s124
    %p135 = scmp.eq.s32.totalorder %s17, 0
    %p136 = por %p134, %p135
    %p137 = scmp.ne.s32.totalorder %s123, %s124
    %p138 = scmp.eq.s32.totalorder %s18, 7
    %p139 = por %p137, %p138
    %p141 = scmp.ne.s32.totalorder %s124, %s140
    %p142 = scmp.eq.s32.totalorder %s18, 0
    %p143 = por %p141, %p142
    %s145 = sadd.s32 %s144, 1
    %p148 = scmp.eq.s32.totalorder %s12, 7
    %p149 = scmp.ne.s32.totalorder %s144, %s146
    %p150 = scmp.eq.s32.totalorder %s12, 0
    %p151 = por %p149, %p150
    %p152 = scmp.ne.s32.totalorder %s144, %s146
    %p153 = scmp.eq.s32.totalorder %s17, 7
    %p154 = por %p152, %p153
    %p155 = scmp.ne.s32.totalorder %s146, %s147
    %p156 = scmp.eq.s32.totalorder %s17, 0
    %p157 = por %p155, %p156
    %p158 = scmp.ne.s32.totalorder %s146, %s147
    %p159 = scmp.eq.s32.totalorder %s18, 7
    %p160 = por %p158, %p159
    %p162 = scmp.ne.s32.totalorder %s147, %s161
    %p163 = scmp.eq.s32.totalorder %s18, 0
    %p164 = por %p162, %p163
    %s166 = sadd.s32 %s165, 1
    %p169 = scmp.eq.s32.totalorder %s12, 7
    %p170 = scmp.ne.s32.totalorder %s165, %s167
    %p171 = scmp.eq.s32.totalorder %s12, 0
    %p172 = por %p170, %p171
    %p173 = scmp.ne.s32.totalorder %s165, %s167
    %p174 = scmp.eq.s32.totalorder %s17, 7
    %p175 = por %p173, %p174
    %p176 = scmp.ne.s32.totalorder %s167, %s168
    %p177 = scmp.eq.s32.totalorder %s17, 0
    %p178 = por %p176, %p177
    %p179 = scmp.ne.s32.totalorder %s167, %s168
    %p180 = scmp.eq.s32.totalorder %s18, 7
    %p181 = por %p179, %p180
    %p183 = scmp.ne.s32.totalorder %s168, %s182
    %p184 = scmp.eq.s32.totalorder %s18, 0
    %p185 = por %p183, %p184
    %s186 = ssub.s32 %s19, %s31
    %s187 = ssub.s32 %s20, %s27
    %s188 = sor.u32 %s186, %s187
    %p189 = scmp.eq.s32.totalorder %s188, 0
    %s191 = sadd.s32 %s190, 1
    %s192 = scalar_select %p189, %s190, %s191
    %p195 = pneg %p189
    %p196 = scmp.eq.s32.totalorder %s12, 7
    %p197 = por %p195, %p196
    %p198 = scmp.ne.s32.totalorder %s190, %s193
    %p199 = scmp.eq.s32.totalorder %s12, 0
    %p200 = por %p198, %p199
    %p201 = scmp.ne.s32.totalorder %s190, %s193
    %p202 = scmp.eq.s32.totalorder %s17, 7
    %p203 = por %p201, %p202
    %p204 = scmp.ne.s32.totalorder %s193, %s194
    %p205 = scmp.eq.s32.totalorder %s17, 0
    %p206 = por %p204, %p205
    %p207 = scmp.ne.s32.totalorder %s193, %s194
    %p208 = scmp.eq.s32.totalorder %s18, 7
    %p209 = por %p207, %p208
    %p211 = scmp.ne.s32.totalorder %s194, %s210
    %p212 = scmp.eq.s32.totalorder %s18, 0
    %p213 = por %p211, %p212
    %p214 = scmp.le.s32.totalorder 1, %s12
    %p215 = scmp.lt.s32.totalorder %s12, 9
    %p216 = pnand %p214, %p215
    %p217 = pneg %p216
    // Predicated region
    $region9: #{vgg_forward.4} parent=5 // pred_check
      _
    $region10: #{vgg_forward.4} parent=5 // pred_check_branch
      %219 = sbr.rel (%p216) target = $region12
    $region11: #{vgg_forward.4} parent=5 // pred_region
      %s220 = ssub.s32 %s12, 1
      // Predicated region
      $region13: #{vgg_forward.4} parent=11 // pred_check
        %p221 = pneg %p157
      $region14: #{vgg_forward.4} parent=11 // pred_check_branch
        %223 = sbr.rel (%p221) target = $region16
      $region15: #{vgg_forward.4} parent=11 // pred_region
        _
      $region16: #{vgg_forward.4} parent=11 // pred_fallthru
        _
      // Predicated region
      $region17: #{vgg_forward.4} parent=11 // pred_check
        %p224 = pneg %p178
      $region18: #{vgg_forward.4} parent=11 // pred_check_branch
        %226 = sbr.rel (%p224) target = $region20
      $region19: #{vgg_forward.4} parent=11 // pred_region
        _
      $region20: #{vgg_forward.4} parent=11 // pred_fallthru
        _
    $region12: #{vgg_forward.4} parent=5 // pred_fallthru
      _
    %p227 = scmp.lt.s32.totalorder %s12, 8
    // Predicated region
    $region21: #{vgg_forward.4} parent=5 // pred_check
      %p228 = pneg %p227
    $region22: #{vgg_forward.4} parent=5 // pred_check_branch
      %230 = sbr.rel (%p228) target = $region24
    $region23: #{vgg_forward.4} parent=5 // pred_region
      // Predicated region
      $region25: #{vgg_forward.4} parent=23 // pred_check
        %p231 = pneg %p46
      $region26: #{vgg_forward.4} parent=23 // pred_check_branch
        %233 = sbr.rel (%p231) target = $region28
      $region27: #{vgg_forward.4} parent=23 // pred_region
        %p234 = scmp.lt.s32.totalorder %s19, 1
        %s235 = scalar_select %p234, %s19, 1
        %p236 = scmp.lt.s32.totalorder %s20, 3
        %s237 = scalar_select %p236, %s20, 3
        %s238 = smul.addr %s237, 40
        %s239 = smul.addr %s235, 160
        %s240 = sadd.s32 %s238, %s239
        %s241 = smul.addr %s240, 8
        %s242 = scalar_lea.vmem %s0, %s241
      $region28: #{vgg_forward.4} parent=23 // pred_fallthru
        _
      // Predicated region
      $region29: #{vgg_forward.4} parent=23 // pred_check
        %p243 = pneg %p74
      $region30: #{vgg_forward.4} parent=23 // pred_check_branch
        %245 = sbr.rel (%p243) target = $region32
      $region31: #{vgg_forward.4} parent=23 // pred_region
        %p246 = scmp.lt.s32.totalorder %s19, 1
        %s247 = scalar_select %p246, %s19, 1
        %p248 = scmp.lt.s32.totalorder %s20, 3
        %s249 = scalar_select %p248, %s20, 3
        %s250 = smul.addr %s249, 40
        %s251 = smul.addr %s247, 160
        %s252 = sadd.s32 %s250, %s251
        %s253 = smul.addr %s252, 8
        %s254 = scalar_lea.vmem %s1, %s253
      $region32: #{vgg_forward.4} parent=23 // pred_fallthru
        _
      // Predicated region
      $region33: #{vgg_forward.4} parent=23 // pred_check
        %p255 = pneg %p102
      $region34: #{vgg_forward.4} parent=23 // pred_check_branch
        %257 = sbr.rel (%p255) target = $region36
      $region35: #{vgg_forward.4} parent=23 // pred_region
        %p258 = scmp.lt.s32.totalorder %s19, 1
        %s259 = scalar_select %p258, %s19, 1
        %p260 = scmp.lt.s32.totalorder %s20, 3
        %s261 = scalar_select %p260, %s20, 3
        %s262 = smul.addr %s261, 40
        %s263 = smul.addr %s259, 160
        %s264 = sadd.s32 %s262, %s263
        %s265 = smul.addr %s264, 8
        %s266 = scalar_lea.vmem %s2, %s265
      $region36: #{vgg_forward.4} parent=23 // pred_fallthru
        _
      // Predicated region
      $region37: #{vgg_forward.4} parent=23 // pred_check
        %p267 = pneg %p130
      $region38: #{vgg_forward.4} parent=23 // pred_check_branch
        %269 = sbr.rel (%p267) target = $region40
      $region39: #{vgg_forward.4} parent=23 // pred_region
        %p270 = scmp.lt.s32.totalorder %s19, 1
        %s271 = scalar_select %p270, %s19, 1
        %p272 = scmp.lt.s32.totalorder %s20, 3
        %s273 = scalar_select %p272, %s20, 3
        %s274 = smul.addr %s273, 40
        %s275 = smul.addr %s271, 160
        %s276 = sadd.s32 %s274, %s275
        %s277 = smul.addr %s276, 8
        %s278 = scalar_lea.vmem %s3, %s277
      $region40: #{vgg_forward.4} parent=23 // pred_fallthru
        _
    $region24: #{vgg_forward.4} parent=5 // pred_fallthru
      _
    %p279 = scmp.le.s32.totalorder 1, %s12
    %p280 = scmp.lt.s32.totalorder %s12, 9
    %p281 = pnand %p279, %p280
    %p282 = pneg %p281
    // Predicated region
    $region41: #{vgg_forward.4} parent=5 // pred_check
      _
    $region42: #{vgg_forward.4} parent=5 // pred_check_branch
      %284 = sbr.rel (%p281) target = $region44
    $region43: #{vgg_forward.4} parent=5 // pred_region
      %s285 = ssub.s32 %s12, 1
      %p286 = scmp.lt.s32.totalorder %s21, 1
      %s287 = scalar_select %p286, %s21, 1
      %p288 = scmp.lt.s32.totalorder %s22, 3
      %s289 = scalar_select %p288, %s22, 3
      %s290 = smul.addr %s289, 40
      %s291 = smul.addr %s287, 160
      %s292 = sadd.s32 %s290, %s291
      %s293 = smul.addr %s292, 8
      %s294 = scalar_lea.vmem %s0, %s293
      %p295 = pneg %p52
      %p296 = pneg %p49
      %p297 = scmp.lt.s32.totalorder %s21, 1
      %s298 = scalar_select %p297, %s21, 1
      %p299 = scmp.lt.s32.totalorder %s22, 3
      %s300 = scalar_select %p299, %s22, 3
      %s301 = smul.addr %s300, 40
      %s302 = smul.addr %s298, 160
      %s303 = sadd.s32 %s301, %s302
      %s304 = smul.addr %s303, 8
      %s305 = scalar_lea.vmem %s1, %s304
      %p306 = pneg %p80
      %p307 = pneg %p77
      %p308 = scmp.lt.s32.totalorder %s21, 1
      %s309 = scalar_select %p308, %s21, 1
      %p310 = scmp.lt.s32.totalorder %s22, 3
      %s311 = scalar_select %p310, %s22, 3
      %s312 = smul.addr %s311, 40
      %s313 = smul.addr %s309, 160
      %s314 = sadd.s32 %s312, %s313
      %s315 = smul.addr %s314, 8
      %s316 = scalar_lea.vmem %s2, %s315
      %p317 = pneg %p108
      %p318 = pneg %p105
      %p319 = scmp.lt.s32.totalorder %s21, 1
      %s320 = scalar_select %p319, %s21, 1
      %p321 = scmp.lt.s32.totalorder %s22, 3
      %s322 = scalar_select %p321, %s22, 3
      %s323 = smul.addr %s322, 40
      %s324 = smul.addr %s320, 160
      %s325 = sadd.s32 %s323, %s324
      %s326 = smul.addr %s325, 8
      %s327 = scalar_lea.vmem %s3, %s326
      %p328 = pneg %p136
      %p329 = pneg %p133
      %p330 = pneg %p157
      %p331 = pneg %p154
      %p332 = pneg %p178
      %p333 = pneg %p175
      %p334 = pneg %p206
      %p335 = pneg %p203
      %s336 = smul.u32 7, %s22
      %p337 = scmp.lt.s32.totalorder %s21, 1
      %s338 = scalar_select %p337, %s21, 1
      %p339 = scmp.lt.s32.totalorder %s336, 27
      %s340 = scalar_select %p339, %s336, 27
      %s341 = smul.addr %s340, 4
      %s342 = smul.addr %s338, 112
      %s343 = sadd.s32 %s341, %s342
      %s344 = smul.addr %s343, 8
      %s345 = scalar_lea.vmem %s6, %s344
      %p346 = scmp.lt.s32.totalorder %s21, 1
      %s347 = scalar_select %p346, %s21, 1
      %p348 = scmp.lt.s32.totalorder %s22, 3
      %s349 = scalar_select %p348, %s22, 3
      %s350 = smul.addr %s349, 40
      %s351 = smul.addr %s347, 160
      %s352 = sadd.s32 %s350, %s351
      %s353 = smul.addr %s352, 8
      %s354 = scalar_lea.vmem %s0, %s353
      %p355 = scmp.lt.s32.totalorder %s21, 1
      %s356 = scalar_select %p355, %s21, 1
      %p357 = scmp.lt.s32.totalorder %s22, 3
      %s358 = scalar_select %p357, %s22, 3
      %s359 = smul.addr %s358, 40
      %s360 = smul.addr %s356, 160
      %s361 = sadd.s32 %s359, %s360
      %s362 = smul.addr %s361, 8
      %s363 = scalar_lea.vmem %s1, %s362
      %p364 = scmp.lt.s32.totalorder %s21, 1
      %s365 = scalar_select %p364, %s21, 1
      %p366 = scmp.lt.s32.totalorder %s22, 3
      %s367 = scalar_select %p366, %s22, 3
      %s368 = smul.addr %s367, 40
      %s369 = smul.addr %s365, 160
      %s370 = sadd.s32 %s368, %s369
      %s371 = smul.addr %s370, 8
      %s372 = scalar_lea.vmem %s2, %s371
      %p373 = scmp.lt.s32.totalorder %s21, 1
      %s374 = scalar_select %p373, %s21, 1
      %p375 = scmp.lt.s32.totalorder %s22, 3
      %s376 = scalar_select %p375, %s22, 3
      %s377 = smul.addr %s376, 40
      %s378 = smul.addr %s374, 160
      %s379 = sadd.s32 %s377, %s378
      %s380 = smul.addr %s379, 8
      %s381 = scalar_lea.vmem %s3, %s380
      %s382 = smul.u32 7, %s22
      %p383 = scmp.lt.s32.totalorder %s21, 1
      %s384 = scalar_select %p383, %s21, 1
      %p385 = scmp.lt.s32.totalorder %s382, 27
      %s386 = scalar_select %p385, %s382, 27
      %s387 = smul.addr %s386, 4
      %s388 = smul.addr %s384, 112
      %s389 = sadd.s32 %s387, %s388
      %s390 = smul.addr %s389, 8
      %s391 = scalar_lea.vmem %s6, %s390
      %s392 = smul.u32 7, %s22
      %v393 = vld [vmem:[%s354] sm:$0xff]
      %v394 = vld [vmem:[%s354 + $0x8] sm:$0xff]
      %v395 = vld [vmem:[%s354 + $0x10] sm:$0xff]
      %v396 = vld [vmem:[%s354 + $0x18] sm:$0xff]
      %v397 = vld [vmem:[%s354 + $0x20] sm:$0x1]
      %v398 = vld [vmem:[%s354 + $0x28] sm:$0xff]
      %v399 = vld [vmem:[%s354 + $0x30] sm:$0xff]
      %v400 = vld [vmem:[%s354 + $0x38] sm:$0xff]
      %v401 = vld [vmem:[%s354 + $0x40] sm:$0xff]
      %v402 = vld [vmem:[%s354 + $0x48] sm:$0x1]
      %v403 = vld [vmem:[%s354 + $0x50] sm:$0xff]
      %v404 = vld [vmem:[%s354 + $0x58] sm:$0xff]
      %v405 = vld [vmem:[%s354 + $0x60] sm:$0xff]
      %v406 = vld [vmem:[%s354 + $0x68] sm:$0xff]
      %v407 = vld [vmem:[%s354 + $0x70] sm:$0x1]
      %v408 = vld [vmem:[%s354 + $0x78] sm:$0xff]
      %v409 = vld [vmem:[%s354 + $0x80] sm:$0xff]
      %v410 = vld [vmem:[%s354 + $0x88] sm:$0xff]
      %v411 = vld [vmem:[%s354 + $0x90] sm:$0xff]
      %v412 = vld [vmem:[%s354 + $0x98] sm:$0x1]
      %v413 = vld [vmem:[%s354 + $0xa0] sm:$0xff]
      %v414 = vld [vmem:[%s354 + $0xa8] sm:$0xff]
      %v415 = vld [vmem:[%s354 + $0xb0] sm:$0xff]
      %v416 = vld [vmem:[%s354 + $0xb8] sm:$0xff]
      %v417 = vld [vmem:[%s354 + $0xc0] sm:$0x1]
      %v418 = vld [vmem:[%s354 + $0xc8] sm:$0xff]
      %v419 = vld [vmem:[%s354 + $0xd0] sm:$0xff]
      %v420 = vld [vmem:[%s354 + $0xd8] sm:$0xff]
      %v421 = vld [vmem:[%s354 + $0xe0] sm:$0xff]
      %v422 = vld [vmem:[%s354 + $0xe8] sm:$0x1]
      %v423 = vld [vmem:[%s354 + $0xf0] sm:$0xff]
      %v424 = vld [vmem:[%s354 + $0xf8] sm:$0xff]
      %v425 = vld [vmem:[%s354 + $0x100] sm:$0xff]
      %v426 = vld [vmem:[%s354 + $0x108] sm:$0xff]
      %v427 = vld [vmem:[%s354 + $0x110] sm:$0x1]
      %v428 = vld [vmem:[%s354 + $0x118] sm:$0xff]
      %v429 = vld [vmem:[%s354 + $0x120] sm:$0xff]
      %v430 = vld [vmem:[%s354 + $0x128] sm:$0xff]
      %v431 = vld [vmem:[%s354 + $0x130] sm:$0xff]
      %v432 = vld [vmem:[%s354 + $0x138] sm:$0x1]
      %v433 = vld [vmem:[%s363] sm:$0xff]
      %v434 = vld [vmem:[%s363 + $0x8] sm:$0xff]
      %v435 = vld [vmem:[%s363 + $0x10] sm:$0xff]
      %v436 = vld [vmem:[%s363 + $0x18] sm:$0xff]
      %v437 = vld [vmem:[%s363 + $0x20] sm:$0x1]
      %v438 = vld [vmem:[%s363 + $0x28] sm:$0xff]
      %v439 = vld [vmem:[%s363 + $0x30] sm:$0xff]
      %v440 = vld [vmem:[%s363 + $0x38] sm:$0xff]
      %v441 = vld [vmem:[%s363 + $0x40] sm:$0xff]
      %v442 = vld [vmem:[%s363 + $0x48] sm:$0x1]
      %v443 = vld [vmem:[%s363 + $0x50] sm:$0xff]
      %v444 = vld [vmem:[%s363 + $0x58] sm:$0xff]
      %v445 = vld [vmem:[%s363 + $0x60] sm:$0xff]
      %v446 = vld [vmem:[%s363 + $0x68] sm:$0xff]
      %v447 = vld [vmem:[%s363 + $0x70] sm:$0x1]
      %v448 = vld [vmem:[%s363 + $0x78] sm:$0xff]
      %v449 = vld [vmem:[%s363 + $0x80] sm:$0xff]
      %v450 = vld [vmem:[%s363 + $0x88] sm:$0xff]
      %v451 = vld [vmem:[%s363 + $0x90] sm:$0xff]
      %v452 = vld [vmem:[%s363 + $0x98] sm:$0x1]
      %v453 = vld [vmem:[%s363 + $0xa0] sm:$0xff]
      %v454 = vld [vmem:[%s363 + $0xa8] sm:$0xff]
      %v455 = vld [vmem:[%s363 + $0xb0] sm:$0xff]
      %v456 = vld [vmem:[%s363 + $0xb8] sm:$0xff]
      %v457 = vld [vmem:[%s363 + $0xc0] sm:$0x1]
      %v458 = vld [vmem:[%s363 + $0xc8] sm:$0xff]
      %v459 = vld [vmem:[%s363 + $0xd0] sm:$0xff]
      %v460 = vld [vmem:[%s363 + $0xd8] sm:$0xff]
      %v461 = vld [vmem:[%s363 + $0xe0] sm:$0xff]
      %v462 = vld [vmem:[%s363 + $0xe8] sm:$0x1]
      %v463 = vld [vmem:[%s363 + $0xf0] sm:$0xff]
      %v464 = vld [vmem:[%s363 + $0xf8] sm:$0xff]
      %v465 = vld [vmem:[%s363 + $0x100] sm:$0xff]
      %v466 = vld [vmem:[%s363 + $0x108] sm:$0xff]
      %v467 = vld [vmem:[%s363 + $0x110] sm:$0x1]
      %v468 = vld [vmem:[%s363 + $0x118] sm:$0xff]
      %v469 = vld [vmem:[%s363 + $0x120] sm:$0xff]
      %v470 = vld [vmem:[%s363 + $0x128] sm:$0xff]
      %v471 = vld [vmem:[%s363 + $0x130] sm:$0xff]
      %v472 = vld [vmem:[%s363 + $0x138] sm:$0x1]
      %v473 = vld [vmem:[%s372] sm:$0xff]
      %v474 = vld [vmem:[%s372 + $0x8] sm:$0xff]
      %v475 = vld [vmem:[%s372 + $0x10] sm:$0xff]
      %v476 = vld [vmem:[%s372 + $0x18] sm:$0xff]
      %v477 = vld [vmem:[%s372 + $0x20] sm:$0x1]
      %v478 = vld [vmem:[%s372 + $0x28] sm:$0xff]
      %v479 = vld [vmem:[%s372 + $0x30] sm:$0xff]
      %v480 = vld [vmem:[%s372 + $0x38] sm:$0xff]
      %v481 = vld [vmem:[%s372 + $0x40] sm:$0xff]
      %v482 = vld [vmem:[%s372 + $0x48] sm:$0x1]
      %v483 = vld [vmem:[%s372 + $0x50] sm:$0xff]
      %v484 = vld [vmem:[%s372 + $0x58] sm:$0xff]
      %v485 = vld [vmem:[%s372 + $0x60] sm:$0xff]
      %v486 = vld [vmem:[%s372 + $0x68] sm:$0xff]
      %v487 = vld [vmem:[%s372 + $0x70] sm:$0x1]
      %v488 = vld [vmem:[%s372 + $0x78] sm:$0xff]
      %v489 = vld [vmem:[%s372 + $0x80] sm:$0xff]
      %v490 = vld [vmem:[%s372 + $0x88] sm:$0xff]
      %v491 = vld [vmem:[%s372 + $0x90] sm:$0xff]
      %v492 = vld [vmem:[%s372 + $0x98] sm:$0x1]
      %v493 = vld [vmem:[%s372 + $0xa0] sm:$0xff]
      %v494 = vld [vmem:[%s372 + $0xa8] sm:$0xff]
      %v495 = vld [vmem:[%s372 + $0xb0] sm:$0xff]
      %v496 = vld [vmem:[%s372 + $0xb8] sm:$0xff]
      %v497 = vld [vmem:[%s372 + $0xc0] sm:$0x1]
      %v498 = vld [vmem:[%s372 + $0xc8] sm:$0xff]
      %v499 = vld [vmem:[%s372 + $0xd0] sm:$0xff]
      %v500 = vld [vmem:[%s372 + $0xd8] sm:$0xff]
      %v501 = vld [vmem:[%s372 + $0xe0] sm:$0xff]
      %v502 = vld [vmem:[%s372 + $0xe8] sm:$0x1]
      %v503 = vld [vmem:[%s372 + $0xf0] sm:$0xff]
      %v504 = vld [vmem:[%s372 + $0xf8] sm:$0xff]
      %v505 = vld [vmem:[%s372 + $0x100] sm:$0xff]
      %v506 = vld [vmem:[%s372 + $0x108] sm:$0xff]
      %v507 = vld [vmem:[%s372 + $0x110] sm:$0x1]
      %v508 = vld [vmem:[%s372 + $0x118] sm:$0xff]
      %v509 = vld [vmem:[%s372 + $0x120] sm:$0xff]
      %v510 = vld [vmem:[%s372 + $0x128] sm:$0xff]
      %v511 = vld [vmem:[%s372 + $0x130] sm:$0xff]
      %v512 = vld [vmem:[%s372 + $0x138] sm:$0x1]
      %v513 = vld [vmem:[%s381] sm:$0xff]
      %v514 = vld [vmem:[%s381 + $0x8] sm:$0xff]
      %v515 = vld [vmem:[%s381 + $0x10] sm:$0xff]
      %v516 = vld [vmem:[%s381 + $0x18] sm:$0xff]
      %v517 = vld [vmem:[%s381 + $0x20] sm:$0x1]
      %v518 = vld [vmem:[%s381 + $0x28] sm:$0xff]
      %v519 = vld [vmem:[%s381 + $0x30] sm:$0xff]
      %v520 = vld [vmem:[%s381 + $0x38] sm:$0xff]
      %v521 = vld [vmem:[%s381 + $0x40] sm:$0xff]
      %v522 = vld [vmem:[%s381 + $0x48] sm:$0x1]
      %v523 = vld [vmem:[%s381 + $0x50] sm:$0xff]
      %v524 = vld [vmem:[%s381 + $0x58] sm:$0xff]
      %v525 = vld [vmem:[%s381 + $0x60] sm:$0xff]
      %v526 = vld [vmem:[%s381 + $0x68] sm:$0xff]
      %v527 = vld [vmem:[%s381 + $0x70] sm:$0x1]
      %v528 = vld [vmem:[%s381 + $0x78] sm:$0xff]
      %v529 = vld [vmem:[%s381 + $0x80] sm:$0xff]
      %v530 = vld [vmem:[%s381 + $0x88] sm:$0xff]
      %v531 = vld [vmem:[%s381 + $0x90] sm:$0xff]
      %v532 = vld [vmem:[%s381 + $0x98] sm:$0x1]
      %v533 = vld [vmem:[%s381 + $0xa0] sm:$0xff]
      %v534 = vld [vmem:[%s381 + $0xa8] sm:$0xff]
      %v535 = vld [vmem:[%s381 + $0xb0] sm:$0xff]
      %v536 = vld [vmem:[%s381 + $0xb8] sm:$0xff]
      %v537 = vld [vmem:[%s381 + $0xc0] sm:$0x1]
      %v538 = vld [vmem:[%s381 + $0xc8] sm:$0xff]
      %v539 = vld [vmem:[%s381 + $0xd0] sm:$0xff]
      %v540 = vld [vmem:[%s381 + $0xd8] sm:$0xff]
      %v541 = vld [vmem:[%s381 + $0xe0] sm:$0xff]
      %v542 = vld [vmem:[%s381 + $0xe8] sm:$0x1]
      %v543 = vld [vmem:[%s381 + $0xf0] sm:$0xff]
      %v544 = vld [vmem:[%s381 + $0xf8] sm:$0xff]
      %v545 = vld [vmem:[%s381 + $0x100] sm:$0xff]
      %v546 = vld [vmem:[%s381 + $0x108] sm:$0xff]
      %v547 = vld [vmem:[%s381 + $0x110] sm:$0x1]
      %v548 = vld [vmem:[%s381 + $0x118] sm:$0xff]
      %v549 = vld [vmem:[%s381 + $0x120] sm:$0xff]
      %v550 = vld [vmem:[%s381 + $0x128] sm:$0xff]
      %v551 = vld [vmem:[%s381 + $0x130] sm:$0xff]
      %v552 = vld [vmem:[%s381 + $0x138] sm:$0x1]
      %v553 = vld [vmem:[%s4] sm:$0x7]
      %s554 = scalar_lea.vmem %s4, 4
      %v555 = vld [vmem:[%s554] sm:$0x7]
      %vm556 = vcmask 23552
      %v558 = vsel %vm556, %v433, 0
      %v561 = vsel %vm556, %v434, 0
      %v564 = vsel %vm556, %v435, 0
      %v567 = vsel %vm556, %v436, 0
      %v570 = vsel %vm556, %v438, 0
      %v573 = vsel %vm556, %v439, 0
      %v576 = vsel %vm556, %v440, 0
      %v579 = vsel %vm556, %v441, 0
      %v582 = vsel %vm556, %v443, 0
      %v585 = vsel %vm556, %v444, 0
      %v588 = vsel %vm556, %v445, 0
      %v591 = vsel %vm556, %v446, 0
      %v594 = vsel %vm556, %v448, 0
      %v597 = vsel %vm556, %v449, 0
      %v600 = vsel %vm556, %v450, 0
      %v603 = vsel %vm556, %v451, 0
      %v606 = vsel %vm556, %v453, 0
      %v609 = vsel %vm556, %v454, 0
      %v612 = vsel %vm556, %v455, 0
      %v615 = vsel %vm556, %v456, 0
      %v618 = vsel %vm556, %v458, 0
      %v621 = vsel %vm556, %v459, 0
      %v624 = vsel %vm556, %v460, 0
      %v627 = vsel %vm556, %v461, 0
      %v630 = vsel %vm556, %v463, 0
      %v633 = vsel %vm556, %v464, 0
      %v636 = vsel %vm556, %v465, 0
      %v639 = vsel %vm556, %v466, 0
      %vm641 = vcmask 1042432
      %v643 = vsel %vm641, %v555, 0
      %645 = vmatpush.msra.mxu0 0.0
      %646 = vmatpush.msra.mxu0 0.0
      %647 = vmatpush.msra.mxu0 0.0
      %648 = vmatpush.msra.mxu0 0.0
      %649 = vmatpush.msra.mxu0 0.0
      %650 = vmatpush.msra.mxu0 0.0
      %651 = vmatpush.msra.mxu0 0.0
      %652 = vmatpush.msra.mxu0 0.0
      %653 = vmatpush.msra.mxu0 0.0
      %654 = vmatpush.msra.mxu0 0.0
      %655 = vmatpush.msra.mxu0 0.0
      %656 = vmatpush.msra.mxu0 0.0
      %657 = vmatpush.msra.mxu0 0.0
      %658 = vmatpush.msra.mxu0 0.0
      %659 = vmatpush.msra.mxu0 0.0
      %660 = vmatpush.msra.mxu0 %v643
      %661 = vmatmul.f32.gmra.mxu0 %v558
      %v662 = vpop.f32.mrf.mxu0
      %v663 = vadd.f32 0.0, %v662
      %664 = vmatmul.f32.gmra.mxu0 %v561
      %v665 = vpop.f32.mrf.mxu0
      %v666 = vadd.f32 0.0, %v665
      %667 = vmatmul.f32.gmra.mxu0 %v564
      %v668 = vpop.f32.mrf.mxu0
      %v669 = vadd.f32 0.0, %v668
      %670 = vmatmul.f32.gmra.mxu0 %v567
      %v671 = vpop.f32.mrf.mxu0
      %v672 = vadd.f32 0.0, %v671
      %673 = vmatmul.f32.gmra.mxu0 %v570
      %v674 = vpop.f32.mrf.mxu0
      %v675 = vadd.f32 0.0, %v674
      %676 = vmatmul.f32.gmra.mxu0 %v573
      %v677 = vpop.f32.mrf.mxu0
      %v678 = vadd.f32 0.0, %v677
      %679 = vmatmul.f32.gmra.mxu0 %v576
      %v680 = vpop.f32.mrf.mxu0
      %v681 = vadd.f32 0.0, %v680
      %682 = vmatmul.f32.gmra.mxu0 %v579
      %v683 = vpop.f32.mrf.mxu0
      %v684 = vadd.f32 0.0, %v683
      %685 = vmatmul.f32.gmra.mxu0 %v582
      %v686 = vpop.f32.mrf.mxu0
      %v687 = vadd.f32 0.0, %v686
      %688 = vmatmul.f32.gmra.mxu0 %v585
      %v689 = vpop.f32.mrf.mxu0
      %v690 = vadd.f32 0.0, %v689
      %691 = vmatmul.f32.gmra.mxu0 %v588
      %v692 = vpop.f32.mrf.mxu0
      %v693 = vadd.f32 0.0, %v692
      %694 = vmatmul.f32.gmra.mxu0 %v591
      %v695 = vpop.f32.mrf.mxu0
      %v696 = vadd.f32 0.0, %v695
      %697 = vmatmul.f32.gmra.mxu0 %v594
      %v698 = vpop.f32.mrf.mxu0
      %v699 = vadd.f32 0.0, %v698
      %700 = vmatmul.f32.gmra.mxu0 %v597
      %v701 = vpop.f32.mrf.mxu0
      %v702 = vadd.f32 0.0, %v701
      %703 = vmatmul.f32.gmra.mxu0 %v600
      %v704 = vpop.f32.mrf.mxu0
      %v705 = vadd.f32 0.0, %v704
      %706 = vmatmul.f32.gmra.mxu0 %v603
      %v707 = vpop.f32.mrf.mxu0
      %v708 = vadd.f32 0.0, %v707
      %709 = vmatmul.f32.gmra.mxu0 %v606
      %v710 = vpop.f32.mrf.mxu0
      %v711 = vadd.f32 0.0, %v710
      %712 = vmatmul.f32.gmra.mxu0 %v609
      %v713 = vpop.f32.mrf.mxu0
      %v714 = vadd.f32 0.0, %v713
      %715 = vmatmul.f32.gmra.mxu0 %v612
      %v716 = vpop.f32.mrf.mxu0
      %v717 = vadd.f32 0.0, %v716
      %718 = vmatmul.f32.gmra.mxu0 %v615
      %v719 = vpop.f32.mrf.mxu0
      %v720 = vadd.f32 0.0, %v719
      %721 = vmatmul.f32.gmra.mxu0 %v618
      %v722 = vpop.f32.mrf.mxu0
      %v723 = vadd.f32 0.0, %v722
      %724 = vmatmul.f32.gmra.mxu0 %v621
      %v725 = vpop.f32.mrf.mxu0
      %v726 = vadd.f32 0.0, %v725
      %727 = vmatmul.f32.gmra.mxu0 %v624
      %v728 = vpop.f32.mrf.mxu0
      %v729 = vadd.f32 0.0, %v728
      %730 = vmatmul.f32.gmra.mxu0 %v627
      %v731 = vpop.f32.mrf.mxu0
      %v732 = vadd.f32 0.0, %v731
      %733 = vmatmul.f32.gmra.mxu0 %v630
      %v734 = vpop.f32.mrf.mxu0
      %v735 = vadd.f32 0.0, %v734
      %736 = vmatmul.f32.gmra.mxu0 %v633
      %v737 = vpop.f32.mrf.mxu0
      %v738 = vadd.f32 0.0, %v737
      %739 = vmatmul.f32.gmra.mxu0 %v636
      %v740 = vpop.f32.mrf.mxu0
      %v741 = vadd.f32 0.0, %v740
      %742 = vmatmul.f32.gmra.mxu0 %v639
      %v743 = vpop.f32.mrf.mxu0
      %v744 = vadd.f32 0.0, %v743
      %745 = vdwg.mxu0
      %v747 = vsel %vm556, %v393, 0
      %v750 = vsel %vm556, %v394, 0
      %v753 = vsel %vm556, %v395, 0
      %v756 = vsel %vm556, %v396, 0
      %v759 = vsel %vm556, %v398, 0
      %v762 = vsel %vm556, %v399, 0
      %v765 = vsel %vm556, %v400, 0
      %v768 = vsel %vm556, %v401, 0
      %v771 = vsel %vm556, %v403, 0
      %v774 = vsel %vm556, %v404, 0
      %v777 = vsel %vm556, %v405, 0
      %v780 = vsel %vm556, %v406, 0
      %v783 = vsel %vm556, %v408, 0
      %v786 = vsel %vm556, %v409, 0
      %v789 = vsel %vm556, %v410, 0
      %v792 = vsel %vm556, %v411, 0
      %v795 = vsel %vm556, %v413, 0
      %v798 = vsel %vm556, %v414, 0
      %v801 = vsel %vm556, %v415, 0
      %v804 = vsel %vm556, %v416, 0
      %v807 = vsel %vm556, %v418, 0
      %v810 = vsel %vm556, %v419, 0
      %v813 = vsel %vm556, %v420, 0
      %v816 = vsel %vm556, %v421, 0
      %v819 = vsel %vm556, %v423, 0
      %v822 = vsel %vm556, %v424, 0
      %v825 = vsel %vm556, %v425, 0
      %v828 = vsel %vm556, %v426, 0
      %v831 = vsel %vm641, %v553, 0
      %833 = vmatpush.msra.mxu0 0.0
      %834 = vmatpush.msra.mxu0 0.0
      %835 = vmatpush.msra.mxu0 0.0
      %836 = vmatpush.msra.mxu0 0.0
      %837 = vmatpush.msra.mxu0 0.0
      %838 = vmatpush.msra.mxu0 0.0
      %839 = vmatpush.msra.mxu0 0.0
      %840 = vmatpush.msra.mxu0 0.0
      %841 = vmatpush.msra.mxu0 0.0
      %842 = vmatpush.msra.mxu0 0.0
      %843 = vmatpush.msra.mxu0 0.0
      %844 = vmatpush.msra.mxu0 0.0
      %845 = vmatpush.msra.mxu0 0.0
      %846 = vmatpush.msra.mxu0 0.0
      %847 = vmatpush.msra.mxu0 0.0
      %848 = vmatpush.msra.mxu0 %v831
      %849 = vmatmul.f32.gmra.mxu0 %v747
      %v850 = vpop.f32.mrf.mxu0
      %v851 = vadd.f32 %v663, %v850
      %852 = vmatmul.f32.gmra.mxu0 %v750
      %v853 = vpop.f32.mrf.mxu0
      %v854 = vadd.f32 %v666, %v853
      %855 = vmatmul.f32.gmra.mxu0 %v753
      %v856 = vpop.f32.mrf.mxu0
      %v857 = vadd.f32 %v669, %v856
      %858 = vmatmul.f32.gmra.mxu0 %v756
      %v859 = vpop.f32.mrf.mxu0
      %v860 = vadd.f32 %v672, %v859
      %861 = vmatmul.f32.gmra.mxu0 %v759
      %v862 = vpop.f32.mrf.mxu0
      %v863 = vadd.f32 %v675, %v862
      %864 = vmatmul.f32.gmra.mxu0 %v762
      %v865 = vpop.f32.mrf.mxu0
      %v866 = vadd.f32 %v678, %v865
      %867 = vmatmul.f32.gmra.mxu0 %v765
      %v868 = vpop.f32.mrf.mxu0
      %v869 = vadd.f32 %v681, %v868
      %870 = vmatmul.f32.gmra.mxu0 %v768
      %v871 = vpop.f32.mrf.mxu0
      %v872 = vadd.f32 %v684, %v871
      %873 = vmatmul.f32.gmra.mxu0 %v771
      %v874 = vpop.f32.mrf.mxu0
      %v875 = vadd.f32 %v687, %v874
      %876 = vmatmul.f32.gmra.mxu0 %v774
      %v877 = vpop.f32.mrf.mxu0
      %v878 = vadd.f32 %v690, %v877
      %879 = vmatmul.f32.gmra.mxu0 %v777
      %v880 = vpop.f32.mrf.mxu0
      %v881 = vadd.f32 %v693, %v880
      %882 = vmatmul.f32.gmra.mxu0 %v780
      %v883 = vpop.f32.mrf.mxu0
      %v884 = vadd.f32 %v696, %v883
      %885 = vmatmul.f32.gmra.mxu0 %v783
      %v886 = vpop.f32.mrf.mxu0
      %v887 = vadd.f32 %v699, %v886
      %888 = vmatmul.f32.gmra.mxu0 %v786
      %v889 = vpop.f32.mrf.mxu0
      %v890 = vadd.f32 %v702, %v889
      %891 = vmatmul.f32.gmra.mxu0 %v789
      %v892 = vpop.f32.mrf.mxu0
      %v893 = vadd.f32 %v705, %v892
      %894 = vmatmul.f32.gmra.mxu0 %v792
      %v895 = vpop.f32.mrf.mxu0
      %v896 = vadd.f32 %v708, %v895
      %897 = vmatmul.f32.gmra.mxu0 %v795
      %v898 = vpop.f32.mrf.mxu0
      %v899 = vadd.f32 %v711, %v898
      %900 = vmatmul.f32.gmra.mxu0 %v798
      %v901 = vpop.f32.mrf.mxu0
      %v902 = vadd.f32 %v714, %v901
      %903 = vmatmul.f32.gmra.mxu0 %v801
      %v904 = vpop.f32.mrf.mxu0
      %v905 = vadd.f32 %v717, %v904
      %906 = vmatmul.f32.gmra.mxu0 %v804
      %v907 = vpop.f32.mrf.mxu0
      %v908 = vadd.f32 %v720, %v907
      %909 = vmatmul.f32.gmra.mxu0 %v807
      %v910 = vpop.f32.mrf.mxu0
      %v911 = vadd.f32 %v723, %v910
      %912 = vmatmul.f32.gmra.mxu0 %v810
      %v913 = vpop.f32.mrf.mxu0
      %v914 = vadd.f32 %v726, %v913
      %915 = vmatmul.f32.gmra.mxu0 %v813
      %v916 = vpop.f32.mrf.mxu0
      %v917 = vadd.f32 %v729, %v916
      %918 = vmatmul.f32.gmra.mxu0 %v816
      %v919 = vpop.f32.mrf.mxu0
      %v920 = vadd.f32 %v732, %v919
      %921 = vmatmul.f32.gmra.mxu0 %v819
      %v922 = vpop.f32.mrf.mxu0
      %v923 = vadd.f32 %v735, %v922
      %924 = vmatmul.f32.gmra.mxu0 %v822
      %v925 = vpop.f32.mrf.mxu0
      %v926 = vadd.f32 %v738, %v925
      %927 = vmatmul.f32.gmra.mxu0 %v825
      %v928 = vpop.f32.mrf.mxu0
      %v929 = vadd.f32 %v741, %v928
      %930 = vmatmul.f32.gmra.mxu0 %v828
      %v931 = vpop.f32.mrf.mxu0
      %v932 = vadd.f32 %v744, %v931
      %933 = vdwg.mxu0
      %vm941 = vcmask 1046528
      %v942 = vrot.slane %v393, 1
      %v943 = vrot.slane %v394, 1
      %v944 = vsel %vm941, %v942, %v943
      %v945 = vrot.slane %v395, 1
      %v946 = vsel %vm941, %v943, %v945
      %v947 = vrot.slane %v396, 1
      %v948 = vsel %vm941, %v945, %v947
      %v949 = vrot.slane %v397, 1
      %v950 = vsel %vm941, %v947, %v949
      %v951 = vrot.slane %v398, 1
      %v952 = vrot.slane %v399, 1
      %v953 = vsel %vm941, %v951, %v952
      %v954 = vrot.slane %v400, 1
      %v955 = vsel %vm941, %v952, %v954
      %v956 = vrot.slane %v401, 1
      %v957 = vsel %vm941, %v954, %v956
      %v958 = vrot.slane %v402, 1
      %v959 = vsel %vm941, %v956, %v958
      %v960 = vrot.slane %v403, 1
      %v961 = vrot.slane %v404, 1
      %v962 = vsel %vm941, %v960, %v961
      %v963 = vrot.slane %v405, 1
      %v964 = vsel %vm941, %v961, %v963
      %v965 = vrot.slane %v406, 1
      %v966 = vsel %vm941, %v963, %v965
      %v967 = vrot.slane %v407, 1
      %v968 = vsel %vm941, %v965, %v967
      %v969 = vrot.slane %v408, 1
      %v970 = vrot.slane %v409, 1
      %v971 = vsel %vm941, %v969, %v970
      %v972 = vrot.slane %v410, 1
      %v973 = vsel %vm941, %v970, %v972
      %v974 = vrot.slane %v411, 1
      %v975 = vsel %vm941, %v972, %v974
      %v976 = vrot.slane %v412, 1
      %v977 = vsel %vm941, %v974, %v976
      %v978 = vrot.slane %v413, 1
      %v979 = vrot.slane %v414, 1
      %v980 = vsel %vm941, %v978, %v979
      %v981 = vrot.slane %v415, 1
      %v982 = vsel %vm941, %v979, %v981
      %v983 = vrot.slane %v416, 1
      %v984 = vsel %vm941, %v981, %v983
      %v985 = vrot.slane %v417, 1
      %v986 = vsel %vm941, %v983, %v985
      %v987 = vrot.slane %v418, 1
      %v988 = vrot.slane %v419, 1
      %v989 = vsel %vm941, %v987, %v988
      %v990 = vrot.slane %v420, 1
      %v991 = vsel %vm941, %v988, %v990
      %v992 = vrot.slane %v421, 1
      %v993 = vsel %vm941, %v990, %v992
      %v994 = vrot.slane %v422, 1
      %v995 = vsel %vm941, %v992, %v994
      %v996 = vrot.slane %v423, 1
      %v997 = vrot.slane %v424, 1
      %v998 = vsel %vm941, %v996, %v997
      %v999 = vrot.slane %v425, 1
      %v1000 = vsel %vm941, %v997, %v999
      %v1001 = vrot.slane %v426, 1
      %v1002 = vsel %vm941, %v999, %v1001
      %v1003 = vrot.slane %v427, 1
      %v1004 = vsel %vm941, %v1001, %v1003
      %s1005 = scalar_lea.vmem %s4, 8
      %v1006 = vld [vmem:[%s1005] sm:$0x7]
      %v1007 = vsel %vm556, %v944, 0
      %v1009 = vsel %vm556, %v946, 0
      %v1011 = vsel %vm556, %v948, 0
      %v1013 = vsel %vm556, %v950, 0
      %v1015 = vsel %vm556, %v953, 0
      %v1017 = vsel %vm556, %v955, 0
      %v1019 = vsel %vm556, %v957, 0
      %v1021 = vsel %vm556, %v959, 0
      %v1023 = vsel %vm556, %v962, 0
      %v1025 = vsel %vm556, %v964, 0
      %v1027 = vsel %vm556, %v966, 0
      %v1029 = vsel %vm556, %v968, 0
      %v1031 = vsel %vm556, %v971, 0
      %v1033 = vsel %vm556, %v973, 0
      %v1035 = vsel %vm556, %v975, 0
      %v1037 = vsel %vm556, %v977, 0
      %v1039 = vsel %vm556, %v980, 0
      %v1041 = vsel %vm556, %v982, 0
      %v1043 = vsel %vm556, %v984, 0
      %v1045 = vsel %vm556, %v986, 0
      %v1047 = vsel %vm556, %v989, 0
      %v1049 = vsel %vm556, %v991, 0
      %v1051 = vsel %vm556, %v993, 0
      %v1053 = vsel %vm556, %v995, 0
      %v1055 = vsel %vm556, %v998, 0
      %v1057 = vsel %vm556, %v1000, 0
      %v1059 = vsel %vm556, %v1002, 0
      %v1061 = vsel %vm556, %v1004, 0
      %v1064 = vsel %vm641, %v1006, 0
      %1066 = vmatpush.msra.mxu0 0.0
      %1067 = vmatpush.msra.mxu0 0.0
      %1068 = vmatpush.msra.mxu0 0.0
      %1069 = vmatpush.msra.mxu0 0.0
      %1070 = vmatpush.msra.mxu0 0.0
      %1071 = vmatpush.msra.mxu0 0.0
      %1072 = vmatpush.msra.mxu0 0.0
      %1073 = vmatpush.msra.mxu0 0.0
      %1074 = vmatpush.msra.mxu0 0.0
      %1075 = vmatpush.msra.mxu0 0.0
      %1076 = vmatpush.msra.mxu0 0.0
      %1077 = vmatpush.msra.mxu0 0.0
      %1078 = vmatpush.msra.mxu0 0.0
      %1079 = vmatpush.msra.mxu0 0.0
      %1080 = vmatpush.msra.mxu0 0.0
      %1081 = vmatpush.msra.mxu0 %v1064
      %1082 = vmatmul.f32.gmra.mxu0 %v1007
      %v1083 = vpop.f32.mrf.mxu0
      %v1084 = vadd.f32 0.0, %v1083
      %1085 = vmatmul.f32.gmra.mxu0 %v1009
      %v1086 = vpop.f32.mrf.mxu0
      %v1087 = vadd.f32 0.0, %v1086
      %1088 = vmatmul.f32.gmra.mxu0 %v1011
      %v1089 = vpop.f32.mrf.mxu0
      %v1090 = vadd.f32 0.0, %v1089
      %1091 = vmatmul.f32.gmra.mxu0 %v1013
      %v1092 = vpop.f32.mrf.mxu0
      %v1093 = vadd.f32 0.0, %v1092
      %1094 = vmatmul.f32.gmra.mxu0 %v1015
      %v1095 = vpop.f32.mrf.mxu0
      %v1096 = vadd.f32 0.0, %v1095
      %1097 = vmatmul.f32.gmra.mxu0 %v1017
      %v1098 = vpop.f32.mrf.mxu0
      %v1099 = vadd.f32 0.0, %v1098
      %1100 = vmatmul.f32.gmra.mxu0 %v1019
      %v1101 = vpop.f32.mrf.mxu0
      %v1102 = vadd.f32 0.0, %v1101
      %1103 = vmatmul.f32.gmra.mxu0 %v1021
      %v1104 = vpop.f32.mrf.mxu0
      %v1105 = vadd.f32 0.0, %v1104
      %1106 = vmatmul.f32.gmra.mxu0 %v1023
      %v1107 = vpop.f32.mrf.mxu0
      %v1108 = vadd.f32 0.0, %v1107
      %1109 = vmatmul.f32.gmra.mxu0 %v1025
      %v1110 = vpop.f32.mrf.mxu0
      %v1111 = vadd.f32 0.0, %v1110
      %1112 = vmatmul.f32.gmra.mxu0 %v1027
      %v1113 = vpop.f32.mrf.mxu0
      %v1114 = vadd.f32 0.0, %v1113
      %1115 = vmatmul.f32.gmra.mxu0 %v1029
      %v1116 = vpop.f32.mrf.mxu0
      %v1117 = vadd.f32 0.0, %v1116
      %1118 = vmatmul.f32.gmra.mxu0 %v1031
      %v1119 = vpop.f32.mrf.mxu0
      %v1120 = vadd.f32 0.0, %v1119
      %1121 = vmatmul.f32.gmra.mxu0 %v1033
      %v1122 = vpop.f32.mrf.mxu0
      %v1123 = vadd.f32 0.0, %v1122
      %1124 = vmatmul.f32.gmra.mxu0 %v1035
      %v1125 = vpop.f32.mrf.mxu0
      %v1126 = vadd.f32 0.0, %v1125
      %1127 = vmatmul.f32.gmra.mxu0 %v1037
      %v1128 = vpop.f32.mrf.mxu0
      %v1129 = vadd.f32 0.0, %v1128
      %1130 = vmatmul.f32.gmra.mxu0 %v1039
      %v1131 = vpop.f32.mrf.mxu0
      %v1132 = vadd.f32 0.0, %v1131
      %1133 = vmatmul.f32.gmra.mxu0 %v1041
      %v1134 = vpop.f32.mrf.mxu0
      %v1135 = vadd.f32 0.0, %v1134
      %1136 = vmatmul.f32.gmra.mxu0 %v1043
      %v1137 = vpop.f32.mrf.mxu0
      %v1138 = vadd.f32 0.0, %v1137
      %1139 = vmatmul.f32.gmra.mxu0 %v1045
      %v1140 = vpop.f32.mrf.mxu0
      %v1141 = vadd.f32 0.0, %v1140
      %1142 = vmatmul.f32.gmra.mxu0 %v1047
      %v1143 = vpop.f32.mrf.mxu0
      %v1144 = vadd.f32 0.0, %v1143
      %1145 = vmatmul.f32.gmra.mxu0 %v1049
      %v1146 = vpop.f32.mrf.mxu0
      %v1147 = vadd.f32 0.0, %v1146
      %1148 = vmatmul.f32.gmra.mxu0 %v1051
      %v1149 = vpop.f32.mrf.mxu0
      %v1150 = vadd.f32 0.0, %v1149
      %1151 = vmatmul.f32.gmra.mxu0 %v1053
      %v1152 = vpop.f32.mrf.mxu0
      %v1153 = vadd.f32 0.0, %v1152
      %1154 = vmatmul.f32.gmra.mxu0 %v1055
      %v1155 = vpop.f32.mrf.mxu0
      %v1156 = vadd.f32 0.0, %v1155
      %1157 = vmatmul.f32.gmra.mxu0 %v1057
      %v1158 = vpop.f32.mrf.mxu0
      %v1159 = vadd.f32 0.0, %v1158
      %1160 = vmatmul.f32.gmra.mxu0 %v1059
      %v1161 = vpop.f32.mrf.mxu0
      %v1162 = vadd.f32 0.0, %v1161
      %1163 = vmatmul.f32.gmra.mxu0 %v1061
      %v1164 = vpop.f32.mrf.mxu0
      %v1165 = vadd.f32 0.0, %v1164
      %1166 = vdwg.mxu0
      %v1167 = vadd.f32 %v851, %v1084
      %v1168 = vadd.f32 %v854, %v1087
      %v1169 = vadd.f32 %v857, %v1090
      %v1170 = vadd.f32 %v860, %v1093
      %v1171 = vadd.f32 %v863, %v1096
      %v1172 = vadd.f32 %v866, %v1099
      %v1173 = vadd.f32 %v869, %v1102
      %v1174 = vadd.f32 %v872, %v1105
      %v1175 = vadd.f32 %v875, %v1108
      %v1176 = vadd.f32 %v878, %v1111
      %v1177 = vadd.f32 %v881, %v1114
      %v1178 = vadd.f32 %v884, %v1117
      %v1179 = vadd.f32 %v887, %v1120
      %v1180 = vadd.f32 %v890, %v1123
      %v1181 = vadd.f32 %v893, %v1126
      %v1182 = vadd.f32 %v896, %v1129
      %v1183 = vadd.f32 %v899, %v1132
      %v1184 = vadd.f32 %v902, %v1135
      %v1185 = vadd.f32 %v905, %v1138
      %v1186 = vadd.f32 %v908, %v1141
      %v1187 = vadd.f32 %v911, %v1144
      %v1188 = vadd.f32 %v914, %v1147
      %v1189 = vadd.f32 %v917, %v1150
      %v1190 = vadd.f32 %v920, %v1153
      %v1191 = vadd.f32 %v923, %v1156
      %v1192 = vadd.f32 %v926, %v1159
      %v1193 = vadd.f32 %v929, %v1162
      %v1194 = vadd.f32 %v932, %v1165
      %s1195 = scalar_lea.vmem %s4, 12
      %v1196 = vld [vmem:[%s1195] sm:$0x7]
      %v1198 = vsel %vm556, %v473, 0
      %v1201 = vsel %vm556, %v474, 0
      %v1204 = vsel %vm556, %v475, 0
      %v1207 = vsel %vm556, %v476, 0
      %v1210 = vsel %vm556, %v478, 0
      %v1213 = vsel %vm556, %v479, 0
      %v1216 = vsel %vm556, %v480, 0
      %v1219 = vsel %vm556, %v481, 0
      %v1222 = vsel %vm556, %v483, 0
      %v1225 = vsel %vm556, %v484, 0
      %v1228 = vsel %vm556, %v485, 0
      %v1231 = vsel %vm556, %v486, 0
      %v1234 = vsel %vm556, %v488, 0
      %v1237 = vsel %vm556, %v489, 0
      %v1240 = vsel %vm556, %v490, 0
      %v1243 = vsel %vm556, %v491, 0
      %v1246 = vsel %vm556, %v493, 0
      %v1249 = vsel %vm556, %v494, 0
      %v1252 = vsel %vm556, %v495, 0
      %v1255 = vsel %vm556, %v496, 0
      %v1258 = vsel %vm556, %v498, 0
      %v1261 = vsel %vm556, %v499, 0
      %v1264 = vsel %vm556, %v500, 0
      %v1267 = vsel %vm556, %v501, 0
      %v1270 = vsel %vm556, %v503, 0
      %v1273 = vsel %vm556, %v504, 0
      %v1276 = vsel %vm556, %v505, 0
      %v1279 = vsel %vm556, %v506, 0
      %v1282 = vsel %vm641, %v1196, 0
      %1284 = vmatpush.msra.mxu0 0.0
      %1285 = vmatpush.msra.mxu0 0.0
      %1286 = vmatpush.msra.mxu0 0.0
      %1287 = vmatpush.msra.mxu0 0.0
      %1288 = vmatpush.msra.mxu0 0.0
      %1289 = vmatpush.msra.mxu0 0.0
      %1290 = vmatpush.msra.mxu0 0.0
      %1291 = vmatpush.msra.mxu0 0.0
      %1292 = vmatpush.msra.mxu0 0.0
      %1293 = vmatpush.msra.mxu0 0.0
      %1294 = vmatpush.msra.mxu0 0.0
      %1295 = vmatpush.msra.mxu0 0.0
      %1296 = vmatpush.msra.mxu0 0.0
      %1297 = vmatpush.msra.mxu0 0.0
      %1298 = vmatpush.msra.mxu0 0.0
      %1299 = vmatpush.msra.mxu0 %v1282
      %1300 = vmatmul.f32.gmra.mxu0 %v1198
      %v1301 = vpop.f32.mrf.mxu0
      %v1302 = vadd.f32 0.0, %v1301
      %1303 = vmatmul.f32.gmra.mxu0 %v1201
      %v1304 = vpop.f32.mrf.mxu0
      %v1305 = vadd.f32 0.0, %v1304
      %1306 = vmatmul.f32.gmra.mxu0 %v1204
      %v1307 = vpop.f32.mrf.mxu0
      %v1308 = vadd.f32 0.0, %v1307
      %1309 = vmatmul.f32.gmra.mxu0 %v1207
      %v1310 = vpop.f32.mrf.mxu0
      %v1311 = vadd.f32 0.0, %v1310
      %1312 = vmatmul.f32.gmra.mxu0 %v1210
      %v1313 = vpop.f32.mrf.mxu0
      %v1314 = vadd.f32 0.0, %v1313
      %1315 = vmatmul.f32.gmra.mxu0 %v1213
      %v1316 = vpop.f32.mrf.mxu0
      %v1317 = vadd.f32 0.0, %v1316
      %1318 = vmatmul.f32.gmra.mxu0 %v1216
      %v1319 = vpop.f32.mrf.mxu0
      %v1320 = vadd.f32 0.0, %v1319
      %1321 = vmatmul.f32.gmra.mxu0 %v1219
      %v1322 = vpop.f32.mrf.mxu0
      %v1323 = vadd.f32 0.0, %v1322
      %1324 = vmatmul.f32.gmra.mxu0 %v1222
      %v1325 = vpop.f32.mrf.mxu0
      %v1326 = vadd.f32 0.0, %v1325
      %1327 = vmatmul.f32.gmra.mxu0 %v1225
      %v1328 = vpop.f32.mrf.mxu0
      %v1329 = vadd.f32 0.0, %v1328
      %1330 = vmatmul.f32.gmra.mxu0 %v1228
      %v1331 = vpop.f32.mrf.mxu0
      %v1332 = vadd.f32 0.0, %v1331
      %1333 = vmatmul.f32.gmra.mxu0 %v1231
      %v1334 = vpop.f32.mrf.mxu0
      %v1335 = vadd.f32 0.0, %v1334
      %1336 = vmatmul.f32.gmra.mxu0 %v1234
      %v1337 = vpop.f32.mrf.mxu0
      %v1338 = vadd.f32 0.0, %v1337
      %1339 = vmatmul.f32.gmra.mxu0 %v1237
      %v1340 = vpop.f32.mrf.mxu0
      %v1341 = vadd.f32 0.0, %v1340
      %1342 = vmatmul.f32.gmra.mxu0 %v1240
      %v1343 = vpop.f32.mrf.mxu0
      %v1344 = vadd.f32 0.0, %v1343
      %1345 = vmatmul.f32.gmra.mxu0 %v1243
      %v1346 = vpop.f32.mrf.mxu0
      %v1347 = vadd.f32 0.0, %v1346
      %1348 = vmatmul.f32.gmra.mxu0 %v1246
      %v1349 = vpop.f32.mrf.mxu0
      %v1350 = vadd.f32 0.0, %v1349
      %1351 = vmatmul.f32.gmra.mxu0 %v1249
      %v1352 = vpop.f32.mrf.mxu0
      %v1353 = vadd.f32 0.0, %v1352
      %1354 = vmatmul.f32.gmra.mxu0 %v1252
      %v1355 = vpop.f32.mrf.mxu0
      %v1356 = vadd.f32 0.0, %v1355
      %1357 = vmatmul.f32.gmra.mxu0 %v1255
      %v1358 = vpop.f32.mrf.mxu0
      %v1359 = vadd.f32 0.0, %v1358
      %1360 = vmatmul.f32.gmra.mxu0 %v1258
      %v1361 = vpop.f32.mrf.mxu0
      %v1362 = vadd.f32 0.0, %v1361
      %1363 = vmatmul.f32.gmra.mxu0 %v1261
      %v1364 = vpop.f32.mrf.mxu0
      %v1365 = vadd.f32 0.0, %v1364
      %1366 = vmatmul.f32.gmra.mxu0 %v1264
      %v1367 = vpop.f32.mrf.mxu0
      %v1368 = vadd.f32 0.0, %v1367
      %1369 = vmatmul.f32.gmra.mxu0 %v1267
      %v1370 = vpop.f32.mrf.mxu0
      %v1371 = vadd.f32 0.0, %v1370
      %1372 = vmatmul.f32.gmra.mxu0 %v1270
      %v1373 = vpop.f32.mrf.mxu0
      %v1374 = vadd.f32 0.0, %v1373
      %1375 = vmatmul.f32.gmra.mxu0 %v1273
      %v1376 = vpop.f32.mrf.mxu0
      %v1377 = vadd.f32 0.0, %v1376
      %1378 = vmatmul.f32.gmra.mxu0 %v1276
      %v1379 = vpop.f32.mrf.mxu0
      %v1380 = vadd.f32 0.0, %v1379
      %1381 = vmatmul.f32.gmra.mxu0 %v1279
      %v1382 = vpop.f32.mrf.mxu0
      %v1383 = vadd.f32 0.0, %v1382
      %1384 = vdwg.mxu0
      %v1385 = vadd.f32 %v1167, %v1302
      %v1386 = vadd.f32 %v1168, %v1305
      %v1387 = vadd.f32 %v1169, %v1308
      %v1388 = vadd.f32 %v1170, %v1311
      %v1389 = vadd.f32 %v1171, %v1314
      %v1390 = vadd.f32 %v1172, %v1317
      %v1391 = vadd.f32 %v1173, %v1320
      %v1392 = vadd.f32 %v1174, %v1323
      %v1393 = vadd.f32 %v1175, %v1326
      %v1394 = vadd.f32 %v1176, %v1329
      %v1395 = vadd.f32 %v1177, %v1332
      %v1396 = vadd.f32 %v1178, %v1335
      %v1397 = vadd.f32 %v1179, %v1338
      %v1398 = vadd.f32 %v1180, %v1341
      %v1399 = vadd.f32 %v1181, %v1344
      %v1400 = vadd.f32 %v1182, %v1347
      %v1401 = vadd.f32 %v1183, %v1350
      %v1402 = vadd.f32 %v1184, %v1353
      %v1403 = vadd.f32 %v1185, %v1356
      %v1404 = vadd.f32 %v1186, %v1359
      %v1405 = vadd.f32 %v1187, %v1362
      %v1406 = vadd.f32 %v1188, %v1365
      %v1407 = vadd.f32 %v1189, %v1368
      %v1408 = vadd.f32 %v1190, %v1371
      %v1409 = vadd.f32 %v1191, %v1374
      %v1410 = vadd.f32 %v1192, %v1377
      %v1411 = vadd.f32 %v1193, %v1380
      %v1412 = vadd.f32 %v1194, %v1383
      %s1413 = scalar_lea.vmem %s4, 16
      %v1414 = vld [vmem:[%s1413] sm:$0x7]
      %v1416 = vsel %vm556, %v513, 0
      %v1419 = vsel %vm556, %v514, 0
      %v1422 = vsel %vm556, %v515, 0
      %v1425 = vsel %vm556, %v516, 0
      %v1428 = vsel %vm556, %v518, 0
      %v1431 = vsel %vm556, %v519, 0
      %v1434 = vsel %vm556, %v520, 0
      %v1437 = vsel %vm556, %v521, 0
      %v1440 = vsel %vm556, %v523, 0
      %v1443 = vsel %vm556, %v524, 0
      %v1446 = vsel %vm556, %v525, 0
      %v1449 = vsel %vm556, %v526, 0
      %v1452 = vsel %vm556, %v528, 0
      %v1455 = vsel %vm556, %v529, 0
      %v1458 = vsel %vm556, %v530, 0
      %v1461 = vsel %vm556, %v531, 0
      %v1464 = vsel %vm556, %v533, 0
      %v1467 = vsel %vm556, %v534, 0
      %v1470 = vsel %vm556, %v535, 0
      %v1473 = vsel %vm556, %v536, 0
      %v1476 = vsel %vm556, %v538, 0
      %v1479 = vsel %vm556, %v539, 0
      %v1482 = vsel %vm556, %v540, 0
      %v1485 = vsel %vm556, %v541, 0
      %v1488 = vsel %vm556, %v543, 0
      %v1491 = vsel %vm556, %v544, 0
      %v1494 = vsel %vm556, %v545, 0
      %v1497 = vsel %vm556, %v546, 0
      %v1500 = vsel %vm641, %v1414, 0
      %1502 = vmatpush.msra.mxu0 0.0
      %1503 = vmatpush.msra.mxu0 0.0
      %1504 = vmatpush.msra.mxu0 0.0
      %1505 = vmatpush.msra.mxu0 0.0
      %1506 = vmatpush.msra.mxu0 0.0
      %1507 = vmatpush.msra.mxu0 0.0
      %1508 = vmatpush.msra.mxu0 0.0
      %1509 = vmatpush.msra.mxu0 0.0
      %1510 = vmatpush.msra.mxu0 0.0
      %1511 = vmatpush.msra.mxu0 0.0
      %1512 = vmatpush.msra.mxu0 0.0
      %1513 = vmatpush.msra.mxu0 0.0
      %1514 = vmatpush.msra.mxu0 0.0
      %1515 = vmatpush.msra.mxu0 0.0
      %1516 = vmatpush.msra.mxu0 0.0
      %1517 = vmatpush.msra.mxu0 %v1500
      %1518 = vmatmul.f32.gmra.mxu0 %v1416
      %v1519 = vpop.f32.mrf.mxu0
      %v1520 = vadd.f32 0.0, %v1519
      %1521 = vmatmul.f32.gmra.mxu0 %v1419
      %v1522 = vpop.f32.mrf.mxu0
      %v1523 = vadd.f32 0.0, %v1522
      %1524 = vmatmul.f32.gmra.mxu0 %v1422
      %v1525 = vpop.f32.mrf.mxu0
      %v1526 = vadd.f32 0.0, %v1525
      %1527 = vmatmul.f32.gmra.mxu0 %v1425
      %v1528 = vpop.f32.mrf.mxu0
      %v1529 = vadd.f32 0.0, %v1528
      %1530 = vmatmul.f32.gmra.mxu0 %v1428
      %v1531 = vpop.f32.mrf.mxu0
      %v1532 = vadd.f32 0.0, %v1531
      %1533 = vmatmul.f32.gmra.mxu0 %v1431
      %v1534 = vpop.f32.mrf.mxu0
      %v1535 = vadd.f32 0.0, %v1534
      %1536 = vmatmul.f32.gmra.mxu0 %v1434
      %v1537 = vpop.f32.mrf.mxu0
      %v1538 = vadd.f32 0.0, %v1537
      %1539 = vmatmul.f32.gmra.mxu0 %v1437
      %v1540 = vpop.f32.mrf.mxu0
      %v1541 = vadd.f32 0.0, %v1540
      %1542 = vmatmul.f32.gmra.mxu0 %v1440
      %v1543 = vpop.f32.mrf.mxu0
      %v1544 = vadd.f32 0.0, %v1543
      %1545 = vmatmul.f32.gmra.mxu0 %v1443
      %v1546 = vpop.f32.mrf.mxu0
      %v1547 = vadd.f32 0.0, %v1546
      %1548 = vmatmul.f32.gmra.mxu0 %v1446
      %v1549 = vpop.f32.mrf.mxu0
      %v1550 = vadd.f32 0.0, %v1549
      %1551 = vmatmul.f32.gmra.mxu0 %v1449
      %v1552 = vpop.f32.mrf.mxu0
      %v1553 = vadd.f32 0.0, %v1552
      %1554 = vmatmul.f32.gmra.mxu0 %v1452
      %v1555 = vpop.f32.mrf.mxu0
      %v1556 = vadd.f32 0.0, %v1555
      %1557 = vmatmul.f32.gmra.mxu0 %v1455
      %v1558 = vpop.f32.mrf.mxu0
      %v1559 = vadd.f32 0.0, %v1558
      %1560 = vmatmul.f32.gmra.mxu0 %v1458
      %v1561 = vpop.f32.mrf.mxu0
      %v1562 = vadd.f32 0.0, %v1561
      %1563 = vmatmul.f32.gmra.mxu0 %v1461
      %v1564 = vpop.f32.mrf.mxu0
      %v1565 = vadd.f32 0.0, %v1564
      %1566 = vmatmul.f32.gmra.mxu0 %v1464
      %v1567 = vpop.f32.mrf.mxu0
      %v1568 = vadd.f32 0.0, %v1567
      %1569 = vmatmul.f32.gmra.mxu0 %v1467
      %v1570 = vpop.f32.mrf.mxu0
      %v1571 = vadd.f32 0.0, %v1570
      %1572 = vmatmul.f32.gmra.mxu0 %v1470
      %v1573 = vpop.f32.mrf.mxu0
      %v1574 = vadd.f32 0.0, %v1573
      %1575 = vmatmul.f32.gmra.mxu0 %v1473
      %v1576 = vpop.f32.mrf.mxu0
      %v1577 = vadd.f32 0.0, %v1576
      %1578 = vmatmul.f32.gmra.mxu0 %v1476
      %v1579 = vpop.f32.mrf.mxu0
      %v1580 = vadd.f32 0.0, %v1579
      %1581 = vmatmul.f32.gmra.mxu0 %v1479
      %v1582 = vpop.f32.mrf.mxu0
      %v1583 = vadd.f32 0.0, %v1582
      %1584 = vmatmul.f32.gmra.mxu0 %v1482
      %v1585 = vpop.f32.mrf.mxu0
      %v1586 = vadd.f32 0.0, %v1585
      %1587 = vmatmul.f32.gmra.mxu0 %v1485
      %v1588 = vpop.f32.mrf.mxu0
      %v1589 = vadd.f32 0.0, %v1588
      %1590 = vmatmul.f32.gmra.mxu0 %v1488
      %v1591 = vpop.f32.mrf.mxu0
      %v1592 = vadd.f32 0.0, %v1591
      %1593 = vmatmul.f32.gmra.mxu0 %v1491
      %v1594 = vpop.f32.mrf.mxu0
      %v1595 = vadd.f32 0.0, %v1594
      %1596 = vmatmul.f32.gmra.mxu0 %v1494
      %v1597 = vpop.f32.mrf.mxu0
      %v1598 = vadd.f32 0.0, %v1597
      %1599 = vmatmul.f32.gmra.mxu0 %v1497
      %v1600 = vpop.f32.mrf.mxu0
      %v1601 = vadd.f32 0.0, %v1600
      %1602 = vdwg.mxu0
      %v1603 = vadd.f32 %v1385, %v1520
      %v1604 = vadd.f32 %v1386, %v1523
      %v1605 = vadd.f32 %v1387, %v1526
      %v1606 = vadd.f32 %v1388, %v1529
      %v1607 = vadd.f32 %v1389, %v1532
      %v1608 = vadd.f32 %v1390, %v1535
      %v1609 = vadd.f32 %v1391, %v1538
      %v1610 = vadd.f32 %v1392, %v1541
      %v1611 = vadd.f32 %v1393, %v1544
      %v1612 = vadd.f32 %v1394, %v1547
      %v1613 = vadd.f32 %v1395, %v1550
      %v1614 = vadd.f32 %v1396, %v1553
      %v1615 = vadd.f32 %v1397, %v1556
      %v1616 = vadd.f32 %v1398, %v1559
      %v1617 = vadd.f32 %v1399, %v1562
      %v1618 = vadd.f32 %v1400, %v1565
      %v1619 = vadd.f32 %v1401, %v1568
      %v1620 = vadd.f32 %v1402, %v1571
      %v1621 = vadd.f32 %v1403, %v1574
      %v1622 = vadd.f32 %v1404, %v1577
      %v1623 = vadd.f32 %v1405, %v1580
      %v1624 = vadd.f32 %v1406, %v1583
      %v1625 = vadd.f32 %v1407, %v1586
      %v1626 = vadd.f32 %v1408, %v1589
      %v1627 = vadd.f32 %v1409, %v1592
      %v1628 = vadd.f32 %v1410, %v1595
      %v1629 = vadd.f32 %v1411, %v1598
      %v1630 = vadd.f32 %v1412, %v1601
      %v1638 = vrot.slane %v473, 1
      %v1639 = vrot.slane %v474, 1
      %v1640 = vsel %vm941, %v1638, %v1639
      %v1641 = vrot.slane %v475, 1
      %v1642 = vsel %vm941, %v1639, %v1641
      %v1643 = vrot.slane %v476, 1
      %v1644 = vsel %vm941, %v1641, %v1643
      %v1645 = vrot.slane %v477, 1
      %v1646 = vsel %vm941, %v1643, %v1645
      %v1647 = vrot.slane %v478, 1
      %v1648 = vrot.slane %v479, 1
      %v1649 = vsel %vm941, %v1647, %v1648
      %v1650 = vrot.slane %v480, 1
      %v1651 = vsel %vm941, %v1648, %v1650
      %v1652 = vrot.slane %v481, 1
      %v1653 = vsel %vm941, %v1650, %v1652
      %v1654 = vrot.slane %v482, 1
      %v1655 = vsel %vm941, %v1652, %v1654
      %v1656 = vrot.slane %v483, 1
      %v1657 = vrot.slane %v484, 1
      %v1658 = vsel %vm941, %v1656, %v1657
      %v1659 = vrot.slane %v485, 1
      %v1660 = vsel %vm941, %v1657, %v1659
      %v1661 = vrot.slane %v486, 1
      %v1662 = vsel %vm941, %v1659, %v1661
      %v1663 = vrot.slane %v487, 1
      %v1664 = vsel %vm941, %v1661, %v1663
      %v1665 = vrot.slane %v488, 1
      %v1666 = vrot.slane %v489, 1
      %v1667 = vsel %vm941, %v1665, %v1666
      %v1668 = vrot.slane %v490, 1
      %v1669 = vsel %vm941, %v1666, %v1668
      %v1670 = vrot.slane %v491, 1
      %v1671 = vsel %vm941, %v1668, %v1670
      %v1672 = vrot.slane %v492, 1
      %v1673 = vsel %vm941, %v1670, %v1672
      %v1674 = vrot.slane %v493, 1
      %v1675 = vrot.slane %v494, 1
      %v1676 = vsel %vm941, %v1674, %v1675
      %v1677 = vrot.slane %v495, 1
      %v1678 = vsel %vm941, %v1675, %v1677
      %v1679 = vrot.slane %v496, 1
      %v1680 = vsel %vm941, %v1677, %v1679
      %v1681 = vrot.slane %v497, 1
      %v1682 = vsel %vm941, %v1679, %v1681
      %v1683 = vrot.slane %v498, 1
      %v1684 = vrot.slane %v499, 1
      %v1685 = vsel %vm941, %v1683, %v1684
      %v1686 = vrot.slane %v500, 1
      %v1687 = vsel %vm941, %v1684, %v1686
      %v1688 = vrot.slane %v501, 1
      %v1689 = vsel %vm941, %v1686, %v1688
      %v1690 = vrot.slane %v502, 1
      %v1691 = vsel %vm941, %v1688, %v1690
      %v1692 = vrot.slane %v503, 1
      %v1693 = vrot.slane %v504, 1
      %v1694 = vsel %vm941, %v1692, %v1693
      %v1695 = vrot.slane %v505, 1
      %v1696 = vsel %vm941, %v1693, %v1695
      %v1697 = vrot.slane %v506, 1
      %v1698 = vsel %vm941, %v1695, %v1697
      %v1699 = vrot.slane %v507, 1
      %v1700 = vsel %vm941, %v1697, %v1699
      %s1701 = scalar_lea.vmem %s4, 20
      %v1702 = vld [vmem:[%s1701] sm:$0x7]
      %v1703 = vsel %vm556, %v1640, 0
      %v1705 = vsel %vm556, %v1642, 0
      %v1707 = vsel %vm556, %v1644, 0
      %v1709 = vsel %vm556, %v1646, 0
      %v1711 = vsel %vm556, %v1649, 0
      %v1713 = vsel %vm556, %v1651, 0
      %v1715 = vsel %vm556, %v1653, 0
      %v1717 = vsel %vm556, %v1655, 0
      %v1719 = vsel %vm556, %v1658, 0
      %v1721 = vsel %vm556, %v1660, 0
      %v1723 = vsel %vm556, %v1662, 0
      %v1725 = vsel %vm556, %v1664, 0
      %v1727 = vsel %vm556, %v1667, 0
      %v1729 = vsel %vm556, %v1669, 0
      %v1731 = vsel %vm556, %v1671, 0
      %v1733 = vsel %vm556, %v1673, 0
      %v1735 = vsel %vm556, %v1676, 0
      %v1737 = vsel %vm556, %v1678, 0
      %v1739 = vsel %vm556, %v1680, 0
      %v1741 = vsel %vm556, %v1682, 0
      %v1743 = vsel %vm556, %v1685, 0
      %v1745 = vsel %vm556, %v1687, 0
      %v1747 = vsel %vm556, %v1689, 0
      %v1749 = vsel %vm556, %v1691, 0
      %v1751 = vsel %vm556, %v1694, 0
      %v1753 = vsel %vm556, %v1696, 0
      %v1755 = vsel %vm556, %v1698, 0
      %v1757 = vsel %vm556, %v1700, 0
      %v1760 = vsel %vm641, %v1702, 0
      %1762 = vmatpush.msra.mxu0 0.0
      %1763 = vmatpush.msra.mxu0 0.0
      %1764 = vmatpush.msra.mxu0 0.0
      %1765 = vmatpush.msra.mxu0 0.0
      %1766 = vmatpush.msra.mxu0 0.0
      %1767 = vmatpush.msra.mxu0 0.0
      %1768 = vmatpush.msra.mxu0 0.0
      %1769 = vmatpush.msra.mxu0 0.0
      %1770 = vmatpush.msra.mxu0 0.0
      %1771 = vmatpush.msra.mxu0 0.0
      %1772 = vmatpush.msra.mxu0 0.0
      %1773 = vmatpush.msra.mxu0 0.0
      %1774 = vmatpush.msra.mxu0 0.0
      %1775 = vmatpush.msra.mxu0 0.0
      %1776 = vmatpush.msra.mxu0 0.0
      %1777 = vmatpush.msra.mxu0 %v1760
      %1778 = vmatmul.f32.gmra.mxu0 %v1703
      %v1779 = vpop.f32.mrf.mxu0
      %v1780 = vadd.f32 0.0, %v1779
      %1781 = vmatmul.f32.gmra.mxu0 %v1705
      %v1782 = vpop.f32.mrf.mxu0
      %v1783 = vadd.f32 0.0, %v1782
      %1784 = vmatmul.f32.gmra.mxu0 %v1707
      %v1785 = vpop.f32.mrf.mxu0
      %v1786 = vadd.f32 0.0, %v1785
      %1787 = vmatmul.f32.gmra.mxu0 %v1709
      %v1788 = vpop.f32.mrf.mxu0
      %v1789 = vadd.f32 0.0, %v1788
      %1790 = vmatmul.f32.gmra.mxu0 %v1711
      %v1791 = vpop.f32.mrf.mxu0
      %v1792 = vadd.f32 0.0, %v1791
      %1793 = vmatmul.f32.gmra.mxu0 %v1713
      %v1794 = vpop.f32.mrf.mxu0
      %v1795 = vadd.f32 0.0, %v1794
      %1796 = vmatmul.f32.gmra.mxu0 %v1715
      %v1797 = vpop.f32.mrf.mxu0
      %v1798 = vadd.f32 0.0, %v1797
      %1799 = vmatmul.f32.gmra.mxu0 %v1717
      %v1800 = vpop.f32.mrf.mxu0
      %v1801 = vadd.f32 0.0, %v1800
      %1802 = vmatmul.f32.gmra.mxu0 %v1719
      %v1803 = vpop.f32.mrf.mxu0
      %v1804 = vadd.f32 0.0, %v1803
      %1805 = vmatmul.f32.gmra.mxu0 %v1721
      %v1806 = vpop.f32.mrf.mxu0
      %v1807 = vadd.f32 0.0, %v1806
      %1808 = vmatmul.f32.gmra.mxu0 %v1723
      %v1809 = vpop.f32.mrf.mxu0
      %v1810 = vadd.f32 0.0, %v1809
      %1811 = vmatmul.f32.gmra.mxu0 %v1725
      %v1812 = vpop.f32.mrf.mxu0
      %v1813 = vadd.f32 0.0, %v1812
      %1814 = vmatmul.f32.gmra.mxu0 %v1727
      %v1815 = vpop.f32.mrf.mxu0
      %v1816 = vadd.f32 0.0, %v1815
      %1817 = vmatmul.f32.gmra.mxu0 %v1729
      %v1818 = vpop.f32.mrf.mxu0
      %v1819 = vadd.f32 0.0, %v1818
      %1820 = vmatmul.f32.gmra.mxu0 %v1731
      %v1821 = vpop.f32.mrf.mxu0
      %v1822 = vadd.f32 0.0, %v1821
      %1823 = vmatmul.f32.gmra.mxu0 %v1733
      %v1824 = vpop.f32.mrf.mxu0
      %v1825 = vadd.f32 0.0, %v1824
      %1826 = vmatmul.f32.gmra.mxu0 %v1735
      %v1827 = vpop.f32.mrf.mxu0
      %v1828 = vadd.f32 0.0, %v1827
      %1829 = vmatmul.f32.gmra.mxu0 %v1737
      %v1830 = vpop.f32.mrf.mxu0
      %v1831 = vadd.f32 0.0, %v1830
      %1832 = vmatmul.f32.gmra.mxu0 %v1739
      %v1833 = vpop.f32.mrf.mxu0
      %v1834 = vadd.f32 0.0, %v1833
      %1835 = vmatmul.f32.gmra.mxu0 %v1741
      %v1836 = vpop.f32.mrf.mxu0
      %v1837 = vadd.f32 0.0, %v1836
      %1838 = vmatmul.f32.gmra.mxu0 %v1743
      %v1839 = vpop.f32.mrf.mxu0
      %v1840 = vadd.f32 0.0, %v1839
      %1841 = vmatmul.f32.gmra.mxu0 %v1745
      %v1842 = vpop.f32.mrf.mxu0
      %v1843 = vadd.f32 0.0, %v1842
      %1844 = vmatmul.f32.gmra.mxu0 %v1747
      %v1845 = vpop.f32.mrf.mxu0
      %v1846 = vadd.f32 0.0, %v1845
      %1847 = vmatmul.f32.gmra.mxu0 %v1749
      %v1848 = vpop.f32.mrf.mxu0
      %v1849 = vadd.f32 0.0, %v1848
      %1850 = vmatmul.f32.gmra.mxu0 %v1751
      %v1851 = vpop.f32.mrf.mxu0
      %v1852 = vadd.f32 0.0, %v1851
      %1853 = vmatmul.f32.gmra.mxu0 %v1753
      %v1854 = vpop.f32.mrf.mxu0
      %v1855 = vadd.f32 0.0, %v1854
      %1856 = vmatmul.f32.gmra.mxu0 %v1755
      %v1857 = vpop.f32.mrf.mxu0
      %v1858 = vadd.f32 0.0, %v1857
      %1859 = vmatmul.f32.gmra.mxu0 %v1757
      %v1860 = vpop.f32.mrf.mxu0
      %v1861 = vadd.f32 0.0, %v1860
      %1862 = vdwg.mxu0
      %v1863 = vadd.f32 %v1603, %v1780
      %v1864 = vadd.f32 %v1604, %v1783
      %v1865 = vadd.f32 %v1605, %v1786
      %v1866 = vadd.f32 %v1606, %v1789
      %v1867 = vadd.f32 %v1607, %v1792
      %v1868 = vadd.f32 %v1608, %v1795
      %v1869 = vadd.f32 %v1609, %v1798
      %v1870 = vadd.f32 %v1610, %v1801
      %v1871 = vadd.f32 %v1611, %v1804
      %v1872 = vadd.f32 %v1612, %v1807
      %v1873 = vadd.f32 %v1613, %v1810
      %v1874 = vadd.f32 %v1614, %v1813
      %v1875 = vadd.f32 %v1615, %v1816
      %v1876 = vadd.f32 %v1616, %v1819
      %v1877 = vadd.f32 %v1617, %v1822
      %v1878 = vadd.f32 %v1618, %v1825
      %v1879 = vadd.f32 %v1619, %v1828
      %v1880 = vadd.f32 %v1620, %v1831
      %v1881 = vadd.f32 %v1621, %v1834
      %v1882 = vadd.f32 %v1622, %v1837
      %v1883 = vadd.f32 %v1623, %v1840
      %v1884 = vadd.f32 %v1624, %v1843
      %v1885 = vadd.f32 %v1625, %v1846
      %v1886 = vadd.f32 %v1626, %v1849
      %v1887 = vadd.f32 %v1627, %v1852
      %v1888 = vadd.f32 %v1628, %v1855
      %v1889 = vadd.f32 %v1629, %v1858
      %v1890 = vadd.f32 %v1630, %v1861
      %s1891 = scalar_lea.vmem %s4, 24
      %v1892 = vld [vmem:[%s1891] sm:$0x7]
      %v1894 = vsel %vm556, %v428, 0
      %v1897 = vsel %vm556, %v429, 0
      %v1900 = vsel %vm556, %v430, 0
      %v1903 = vsel %vm556, %v431, 0
      %v1906 = vsel %vm641, %v1892, 0
      %1908 = vmatpush.msra.mxu0 0.0
      %1909 = vmatpush.msra.mxu0 0.0
      %1910 = vmatpush.msra.mxu0 0.0
      %1911 = vmatpush.msra.mxu0 0.0
      %1912 = vmatpush.msra.mxu0 0.0
      %1913 = vmatpush.msra.mxu0 0.0
      %1914 = vmatpush.msra.mxu0 0.0
      %1915 = vmatpush.msra.mxu0 0.0
      %1916 = vmatpush.msra.mxu0 0.0
      %1917 = vmatpush.msra.mxu0 0.0
      %1918 = vmatpush.msra.mxu0 0.0
      %1919 = vmatpush.msra.mxu0 0.0
      %1920 = vmatpush.msra.mxu0 0.0
      %1921 = vmatpush.msra.mxu0 0.0
      %1922 = vmatpush.msra.mxu0 0.0
      %1923 = vmatpush.msra.mxu0 %v1906
      %1924 = vmatmul.f32.gmra.mxu0 %v759
      %v1925 = vpop.f32.mrf.mxu0
      %v1926 = vadd.f32 0.0, %v1925
      %1927 = vmatmul.f32.gmra.mxu0 %v762
      %v1928 = vpop.f32.mrf.mxu0
      %v1929 = vadd.f32 0.0, %v1928
      %1930 = vmatmul.f32.gmra.mxu0 %v765
      %v1931 = vpop.f32.mrf.mxu0
      %v1932 = vadd.f32 0.0, %v1931
      %1933 = vmatmul.f32.gmra.mxu0 %v768
      %v1934 = vpop.f32.mrf.mxu0
      %v1935 = vadd.f32 0.0, %v1934
      %1936 = vmatmul.f32.gmra.mxu0 %v771
      %v1937 = vpop.f32.mrf.mxu0
      %v1938 = vadd.f32 0.0, %v1937
      %1939 = vmatmul.f32.gmra.mxu0 %v774
      %v1940 = vpop.f32.mrf.mxu0
      %v1941 = vadd.f32 0.0, %v1940
      %1942 = vmatmul.f32.gmra.mxu0 %v777
      %v1943 = vpop.f32.mrf.mxu0
      %v1944 = vadd.f32 0.0, %v1943
      %1945 = vmatmul.f32.gmra.mxu0 %v780
      %v1946 = vpop.f32.mrf.mxu0
      %v1947 = vadd.f32 0.0, %v1946
      %1948 = vmatmul.f32.gmra.mxu0 %v783
      %v1949 = vpop.f32.mrf.mxu0
      %v1950 = vadd.f32 0.0, %v1949
      %1951 = vmatmul.f32.gmra.mxu0 %v786
      %v1952 = vpop.f32.mrf.mxu0
      %v1953 = vadd.f32 0.0, %v1952
      %1954 = vmatmul.f32.gmra.mxu0 %v789
      %v1955 = vpop.f32.mrf.mxu0
      %v1956 = vadd.f32 0.0, %v1955
      %1957 = vmatmul.f32.gmra.mxu0 %v792
      %v1958 = vpop.f32.mrf.mxu0
      %v1959 = vadd.f32 0.0, %v1958
      %1960 = vmatmul.f32.gmra.mxu0 %v795
      %v1961 = vpop.f32.mrf.mxu0
      %v1962 = vadd.f32 0.0, %v1961
      %1963 = vmatmul.f32.gmra.mxu0 %v798
      %v1964 = vpop.f32.mrf.mxu0
      %v1965 = vadd.f32 0.0, %v1964
      %1966 = vmatmul.f32.gmra.mxu0 %v801
      %v1967 = vpop.f32.mrf.mxu0
      %v1968 = vadd.f32 0.0, %v1967
      %1969 = vmatmul.f32.gmra.mxu0 %v804
      %v1970 = vpop.f32.mrf.mxu0
      %v1971 = vadd.f32 0.0, %v1970
      %1972 = vmatmul.f32.gmra.mxu0 %v807
      %v1973 = vpop.f32.mrf.mxu0
      %v1974 = vadd.f32 0.0, %v1973
      %1975 = vmatmul.f32.gmra.mxu0 %v810
      %v1976 = vpop.f32.mrf.mxu0
      %v1977 = vadd.f32 0.0, %v1976
      %1978 = vmatmul.f32.gmra.mxu0 %v813
      %v1979 = vpop.f32.mrf.mxu0
      %v1980 = vadd.f32 0.0, %v1979
      %1981 = vmatmul.f32.gmra.mxu0 %v816
      %v1982 = vpop.f32.mrf.mxu0
      %v1983 = vadd.f32 0.0, %v1982
      %1984 = vmatmul.f32.gmra.mxu0 %v819
      %v1985 = vpop.f32.mrf.mxu0
      %v1986 = vadd.f32 0.0, %v1985
      %1987 = vmatmul.f32.gmra.mxu0 %v822
      %v1988 = vpop.f32.mrf.mxu0
      %v1989 = vadd.f32 0.0, %v1988
      %1990 = vmatmul.f32.gmra.mxu0 %v825
      %v1991 = vpop.f32.mrf.mxu0
      %v1992 = vadd.f32 0.0, %v1991
      %1993 = vmatmul.f32.gmra.mxu0 %v828
      %v1994 = vpop.f32.mrf.mxu0
      %v1995 = vadd.f32 0.0, %v1994
      %1996 = vmatmul.f32.gmra.mxu0 %v1894
      %v1997 = vpop.f32.mrf.mxu0
      %v1998 = vadd.f32 0.0, %v1997
      %1999 = vmatmul.f32.gmra.mxu0 %v1897
      %v2000 = vpop.f32.mrf.mxu0
      %v2001 = vadd.f32 0.0, %v2000
      %2002 = vmatmul.f32.gmra.mxu0 %v1900
      %v2003 = vpop.f32.mrf.mxu0
      %v2004 = vadd.f32 0.0, %v2003
      %2005 = vmatmul.f32.gmra.mxu0 %v1903
      %v2006 = vpop.f32.mrf.mxu0
      %v2007 = vadd.f32 0.0, %v2006
      %2008 = vdwg.mxu0
      %v2009 = vadd.f32 %v1863, %v1926
      %v2010 = vadd.f32 %v1864, %v1929
      %v2011 = vadd.f32 %v1865, %v1932
      %v2012 = vadd.f32 %v1866, %v1935
      %v2013 = vadd.f32 %v1867, %v1938
      %v2014 = vadd.f32 %v1868, %v1941
      %v2015 = vadd.f32 %v1869, %v1944
      %v2016 = vadd.f32 %v1870, %v1947
      %v2017 = vadd.f32 %v1871, %v1950
      %v2018 = vadd.f32 %v1872, %v1953
      %v2019 = vadd.f32 %v1873, %v1956
      %v2020 = vadd.f32 %v1874, %v1959
      %v2021 = vadd.f32 %v1875, %v1962
      %v2022 = vadd.f32 %v1876, %v1965
      %v2023 = vadd.f32 %v1877, %v1968
      %v2024 = vadd.f32 %v1878, %v1971
      %v2025 = vadd.f32 %v1879, %v1974
      %v2026 = vadd.f32 %v1880, %v1977
      %v2027 = vadd.f32 %v1881, %v1980
      %v2028 = vadd.f32 %v1882, %v1983
      %v2029 = vadd.f32 %v1883, %v1986
      %v2030 = vadd.f32 %v1884, %v1989
      %v2031 = vadd.f32 %v1885, %v1992
      %v2032 = vadd.f32 %v1886, %v1995
      %v2033 = vadd.f32 %v1887, %v1998
      %v2034 = vadd.f32 %v1888, %v2001
      %v2035 = vadd.f32 %v1889, %v2004
      %v2036 = vadd.f32 %v1890, %v2007
      %s2037 = scalar_lea.vmem %s4, 28
      %v2038 = vld [vmem:[%s2037] sm:$0x7]
      %v2040 = vsel %vm556, %v468, 0
      %v2043 = vsel %vm556, %v469, 0
      %v2046 = vsel %vm556, %v470, 0
      %v2049 = vsel %vm556, %v471, 0
      %v2052 = vsel %vm641, %v2038, 0
      %2054 = vmatpush.msra.mxu0 0.0
      %2055 = vmatpush.msra.mxu0 0.0
      %2056 = vmatpush.msra.mxu0 0.0
      %2057 = vmatpush.msra.mxu0 0.0
      %2058 = vmatpush.msra.mxu0 0.0
      %2059 = vmatpush.msra.mxu0 0.0
      %2060 = vmatpush.msra.mxu0 0.0
      %2061 = vmatpush.msra.mxu0 0.0
      %2062 = vmatpush.msra.mxu0 0.0
      %2063 = vmatpush.msra.mxu0 0.0
      %2064 = vmatpush.msra.mxu0 0.0
      %2065 = vmatpush.msra.mxu0 0.0
      %2066 = vmatpush.msra.mxu0 0.0
      %2067 = vmatpush.msra.mxu0 0.0
      %2068 = vmatpush.msra.mxu0 0.0
      %2069 = vmatpush.msra.mxu0 %v2052
      %2070 = vmatmul.f32.gmra.mxu0 %v570
      %v2071 = vpop.f32.mrf.mxu0
      %v2072 = vadd.f32 0.0, %v2071
      %2073 = vmatmul.f32.gmra.mxu0 %v573
      %v2074 = vpop.f32.mrf.mxu0
      %v2075 = vadd.f32 0.0, %v2074
      %2076 = vmatmul.f32.gmra.mxu0 %v576
      %v2077 = vpop.f32.mrf.mxu0
      %v2078 = vadd.f32 0.0, %v2077
      %2079 = vmatmul.f32.gmra.mxu0 %v579
      %v2080 = vpop.f32.mrf.mxu0
      %v2081 = vadd.f32 0.0, %v2080
      %2082 = vmatmul.f32.gmra.mxu0 %v582
      %v2083 = vpop.f32.mrf.mxu0
      %v2084 = vadd.f32 0.0, %v2083
      %2085 = vmatmul.f32.gmra.mxu0 %v585
      %v2086 = vpop.f32.mrf.mxu0
      %v2087 = vadd.f32 0.0, %v2086
      %2088 = vmatmul.f32.gmra.mxu0 %v588
      %v2089 = vpop.f32.mrf.mxu0
      %v2090 = vadd.f32 0.0, %v2089
      %2091 = vmatmul.f32.gmra.mxu0 %v591
      %v2092 = vpop.f32.mrf.mxu0
      %v2093 = vadd.f32 0.0, %v2092
      %2094 = vmatmul.f32.gmra.mxu0 %v594
      %v2095 = vpop.f32.mrf.mxu0
      %v2096 = vadd.f32 0.0, %v2095
      %2097 = vmatmul.f32.gmra.mxu0 %v597
      %v2098 = vpop.f32.mrf.mxu0
      %v2099 = vadd.f32 0.0, %v2098
      %2100 = vmatmul.f32.gmra.mxu0 %v600
      %v2101 = vpop.f32.mrf.mxu0
      %v2102 = vadd.f32 0.0, %v2101
      %2103 = vmatmul.f32.gmra.mxu0 %v603
      %v2104 = vpop.f32.mrf.mxu0
      %v2105 = vadd.f32 0.0, %v2104
      %2106 = vmatmul.f32.gmra.mxu0 %v606
      %v2107 = vpop.f32.mrf.mxu0
      %v2108 = vadd.f32 0.0, %v2107
      %2109 = vmatmul.f32.gmra.mxu0 %v609
      %v2110 = vpop.f32.mrf.mxu0
      %v2111 = vadd.f32 0.0, %v2110
      %2112 = vmatmul.f32.gmra.mxu0 %v612
      %v2113 = vpop.f32.mrf.mxu0
      %v2114 = vadd.f32 0.0, %v2113
      %2115 = vmatmul.f32.gmra.mxu0 %v615
      %v2116 = vpop.f32.mrf.mxu0
      %v2117 = vadd.f32 0.0, %v2116
      %2118 = vmatmul.f32.gmra.mxu0 %v618
      %v2119 = vpop.f32.mrf.mxu0
      %v2120 = vadd.f32 0.0, %v2119
      %2121 = vmatmul.f32.gmra.mxu0 %v621
      %v2122 = vpop.f32.mrf.mxu0
      %v2123 = vadd.f32 0.0, %v2122
      %2124 = vmatmul.f32.gmra.mxu0 %v624
      %v2125 = vpop.f32.mrf.mxu0
      %v2126 = vadd.f32 0.0, %v2125
      %2127 = vmatmul.f32.gmra.mxu0 %v627
      %v2128 = vpop.f32.mrf.mxu0
      %v2129 = vadd.f32 0.0, %v2128
      %2130 = vmatmul.f32.gmra.mxu0 %v630
      %v2131 = vpop.f32.mrf.mxu0
      %v2132 = vadd.f32 0.0, %v2131
      %2133 = vmatmul.f32.gmra.mxu0 %v633
      %v2134 = vpop.f32.mrf.mxu0
      %v2135 = vadd.f32 0.0, %v2134
      %2136 = vmatmul.f32.gmra.mxu0 %v636
      %v2137 = vpop.f32.mrf.mxu0
      %v2138 = vadd.f32 0.0, %v2137
      %2139 = vmatmul.f32.gmra.mxu0 %v639
      %v2140 = vpop.f32.mrf.mxu0
      %v2141 = vadd.f32 0.0, %v2140
      %2142 = vmatmul.f32.gmra.mxu0 %v2040
      %v2143 = vpop.f32.mrf.mxu0
      %v2144 = vadd.f32 0.0, %v2143
      %2145 = vmatmul.f32.gmra.mxu0 %v2043
      %v2146 = vpop.f32.mrf.mxu0
      %v2147 = vadd.f32 0.0, %v2146
      %2148 = vmatmul.f32.gmra.mxu0 %v2046
      %v2149 = vpop.f32.mrf.mxu0
      %v2150 = vadd.f32 0.0, %v2149
      %2151 = vmatmul.f32.gmra.mxu0 %v2049
      %v2152 = vpop.f32.mrf.mxu0
      %v2153 = vadd.f32 0.0, %v2152
      %2154 = vdwg.mxu0
      %v2155 = vadd.f32 %v2009, %v2072
      %v2156 = vadd.f32 %v2010, %v2075
      %v2157 = vadd.f32 %v2011, %v2078
      %v2158 = vadd.f32 %v2012, %v2081
      %v2159 = vadd.f32 %v2013, %v2084
      %v2160 = vadd.f32 %v2014, %v2087
      %v2161 = vadd.f32 %v2015, %v2090
      %v2162 = vadd.f32 %v2016, %v2093
      %v2163 = vadd.f32 %v2017, %v2096
      %v2164 = vadd.f32 %v2018, %v2099
      %v2165 = vadd.f32 %v2019, %v2102
      %v2166 = vadd.f32 %v2020, %v2105
      %v2167 = vadd.f32 %v2021, %v2108
      %v2168 = vadd.f32 %v2022, %v2111
      %v2169 = vadd.f32 %v2023, %v2114
      %v2170 = vadd.f32 %v2024, %v2117
      %v2171 = vadd.f32 %v2025, %v2120
      %v2172 = vadd.f32 %v2026, %v2123
      %v2173 = vadd.f32 %v2027, %v2126
      %v2174 = vadd.f32 %v2028, %v2129
      %v2175 = vadd.f32 %v2029, %v2132
      %v2176 = vadd.f32 %v2030, %v2135
      %v2177 = vadd.f32 %v2031, %v2138
      %v2178 = vadd.f32 %v2032, %v2141
      %v2179 = vadd.f32 %v2033, %v2144
      %v2180 = vadd.f32 %v2034, %v2147
      %v2181 = vadd.f32 %v2035, %v2150
      %v2182 = vadd.f32 %v2036, %v2153
      %v2184 = vrot.slane %v428, 1
      %v2185 = vrot.slane %v429, 1
      %v2186 = vsel %vm941, %v2184, %v2185
      %v2187 = vrot.slane %v430, 1
      %v2188 = vsel %vm941, %v2185, %v2187
      %v2189 = vrot.slane %v431, 1
      %v2190 = vsel %vm941, %v2187, %v2189
      %v2191 = vrot.slane %v432, 1
      %v2192 = vsel %vm941, %v2189, %v2191
      %s2193 = scalar_lea.vmem %s4, 32
      %v2194 = vld [vmem:[%s2193] sm:$0x7]
      %v2195 = vsel %vm556, %v2186, 0
      %v2197 = vsel %vm556, %v2188, 0
      %v2199 = vsel %vm556, %v2190, 0
      %v2201 = vsel %vm556, %v2192, 0
      %v2204 = vsel %vm641, %v2194, 0
      %2206 = vmatpush.msra.mxu0 0.0
      %2207 = vmatpush.msra.mxu0 0.0
      %2208 = vmatpush.msra.mxu0 0.0
      %2209 = vmatpush.msra.mxu0 0.0
      %2210 = vmatpush.msra.mxu0 0.0
      %2211 = vmatpush.msra.mxu0 0.0
      %2212 = vmatpush.msra.mxu0 0.0
      %2213 = vmatpush.msra.mxu0 0.0
      %2214 = vmatpush.msra.mxu0 0.0
      %2215 = vmatpush.msra.mxu0 0.0
      %2216 = vmatpush.msra.mxu0 0.0
      %2217 = vmatpush.msra.mxu0 0.0
      %2218 = vmatpush.msra.mxu0 0.0
      %2219 = vmatpush.msra.mxu0 0.0
      %2220 = vmatpush.msra.mxu0 0.0
      %2221 = vmatpush.msra.mxu0 %v2204
      %2222 = vmatmul.f32.gmra.mxu0 %v1015
      %v2223 = vpop.f32.mrf.mxu0
      %v2224 = vadd.f32 0.0, %v2223
      %2225 = vmatmul.f32.gmra.mxu0 %v1017
      %v2226 = vpop.f32.mrf.mxu0
      %v2227 = vadd.f32 0.0, %v2226
      %2228 = vmatmul.f32.gmra.mxu0 %v1019
      %v2229 = vpop.f32.mrf.mxu0
      %v2230 = vadd.f32 0.0, %v2229
      %2231 = vmatmul.f32.gmra.mxu0 %v1021
      %v2232 = vpop.f32.mrf.mxu0
      %v2233 = vadd.f32 0.0, %v2232
      %2234 = vmatmul.f32.gmra.mxu0 %v1023
      %v2235 = vpop.f32.mrf.mxu0
      %v2236 = vadd.f32 0.0, %v2235
      %2237 = vmatmul.f32.gmra.mxu0 %v1025
      %v2238 = vpop.f32.mrf.mxu0
      %v2239 = vadd.f32 0.0, %v2238
      %2240 = vmatmul.f32.gmra.mxu0 %v1027
      %v2241 = vpop.f32.mrf.mxu0
      %v2242 = vadd.f32 0.0, %v2241
      %2243 = vmatmul.f32.gmra.mxu0 %v1029
      %v2244 = vpop.f32.mrf.mxu0
      %v2245 = vadd.f32 0.0, %v2244
      %2246 = vmatmul.f32.gmra.mxu0 %v1031
      %v2247 = vpop.f32.mrf.mxu0
      %v2248 = vadd.f32 0.0, %v2247
      %2249 = vmatmul.f32.gmra.mxu0 %v1033
      %v2250 = vpop.f32.mrf.mxu0
      %v2251 = vadd.f32 0.0, %v2250
      %2252 = vmatmul.f32.gmra.mxu0 %v1035
      %v2253 = vpop.f32.mrf.mxu0
      %v2254 = vadd.f32 0.0, %v2253
      %2255 = vmatmul.f32.gmra.mxu0 %v1037
      %v2256 = vpop.f32.mrf.mxu0
      %v2257 = vadd.f32 0.0, %v2256
      %2258 = vmatmul.f32.gmra.mxu0 %v1039
      %v2259 = vpop.f32.mrf.mxu0
      %v2260 = vadd.f32 0.0, %v2259
      %2261 = vmatmul.f32.gmra.mxu0 %v1041
      %v2262 = vpop.f32.mrf.mxu0
      %v2263 = vadd.f32 0.0, %v2262
      %2264 = vmatmul.f32.gmra.mxu0 %v1043
      %v2265 = vpop.f32.mrf.mxu0
      %v2266 = vadd.f32 0.0, %v2265
      %2267 = vmatmul.f32.gmra.mxu0 %v1045
      %v2268 = vpop.f32.mrf.mxu0
      %v2269 = vadd.f32 0.0, %v2268
      %2270 = vmatmul.f32.gmra.mxu0 %v1047
      %v2271 = vpop.f32.mrf.mxu0
      %v2272 = vadd.f32 0.0, %v2271
      %2273 = vmatmul.f32.gmra.mxu0 %v1049
      %v2274 = vpop.f32.mrf.mxu0
      %v2275 = vadd.f32 0.0, %v2274
      %2276 = vmatmul.f32.gmra.mxu0 %v1051
      %v2277 = vpop.f32.mrf.mxu0
      %v2278 = vadd.f32 0.0, %v2277
      %2279 = vmatmul.f32.gmra.mxu0 %v1053
      %v2280 = vpop.f32.mrf.mxu0
      %v2281 = vadd.f32 0.0, %v2280
      %2282 = vmatmul.f32.gmra.mxu0 %v1055
      %v2283 = vpop.f32.mrf.mxu0
      %v2284 = vadd.f32 0.0, %v2283
      %2285 = vmatmul.f32.gmra.mxu0 %v1057
      %v2286 = vpop.f32.mrf.mxu0
      %v2287 = vadd.f32 0.0, %v2286
      %2288 = vmatmul.f32.gmra.mxu0 %v1059
      %v2289 = vpop.f32.mrf.mxu0
      %v2290 = vadd.f32 0.0, %v2289
      %2291 = vmatmul.f32.gmra.mxu0 %v1061
      %v2292 = vpop.f32.mrf.mxu0
      %v2293 = vadd.f32 0.0, %v2292
      %2294 = vmatmul.f32.gmra.mxu0 %v2195
      %v2295 = vpop.f32.mrf.mxu0
      %v2296 = vadd.f32 0.0, %v2295
      %2297 = vmatmul.f32.gmra.mxu0 %v2197
      %v2298 = vpop.f32.mrf.mxu0
      %v2299 = vadd.f32 0.0, %v2298
      %2300 = vmatmul.f32.gmra.mxu0 %v2199
      %v2301 = vpop.f32.mrf.mxu0
      %v2302 = vadd.f32 0.0, %v2301
      %2303 = vmatmul.f32.gmra.mxu0 %v2201
      %v2304 = vpop.f32.mrf.mxu0
      %v2305 = vadd.f32 0.0, %v2304
      %2306 = vdwg.mxu0
      %v2307 = vadd.f32 %v2155, %v2224
      %v2308 = vadd.f32 %v2156, %v2227
      %v2309 = vadd.f32 %v2157, %v2230
      %v2310 = vadd.f32 %v2158, %v2233
      %v2311 = vadd.f32 %v2159, %v2236
      %v2312 = vadd.f32 %v2160, %v2239
      %v2313 = vadd.f32 %v2161, %v2242
      %v2314 = vadd.f32 %v2162, %v2245
      %v2315 = vadd.f32 %v2163, %v2248
      %v2316 = vadd.f32 %v2164, %v2251
      %v2317 = vadd.f32 %v2165, %v2254
      %v2318 = vadd.f32 %v2166, %v2257
      %v2319 = vadd.f32 %v2167, %v2260
      %v2320 = vadd.f32 %v2168, %v2263
      %v2321 = vadd.f32 %v2169, %v2266
      %v2322 = vadd.f32 %v2170, %v2269
      %v2323 = vadd.f32 %v2171, %v2272
      %v2324 = vadd.f32 %v2172, %v2275
      %v2325 = vadd.f32 %v2173, %v2278
      %v2326 = vadd.f32 %v2174, %v2281
      %v2327 = vadd.f32 %v2175, %v2284
      %v2328 = vadd.f32 %v2176, %v2287
      %v2329 = vadd.f32 %v2177, %v2290
      %v2330 = vadd.f32 %v2178, %v2293
      %v2331 = vadd.f32 %v2179, %v2296
      %v2332 = vadd.f32 %v2180, %v2299
      %v2333 = vadd.f32 %v2181, %v2302
      %v2334 = vadd.f32 %v2182, %v2305
      %2335 = vmatpush.msra.mxu0 0.0
      %2336 = vmatpush.msra.mxu0 0.0
      %2337 = vmatpush.msra.mxu0 0.0
      %2338 = vmatpush.msra.mxu0 0.0
      %2339 = vmatpush.msra.mxu0 0.0
      %2340 = vmatpush.msra.mxu0 0.0
      %2341 = vmatpush.msra.mxu0 0.0
      %2342 = vmatpush.msra.mxu0 0.0
      %2343 = vmatpush.msra.mxu0 0.0
      %2344 = vmatpush.msra.mxu0 0.0
      %2345 = vmatpush.msra.mxu0 0.0
      %2346 = vmatpush.msra.mxu0 0.0
      %2347 = vmatpush.msra.mxu0 0.0
      %2348 = vmatpush.msra.mxu0 0.0
      %2349 = vmatpush.msra.mxu0 0.0
      %2350 = vmatpush.msra.mxu0 %v643
      %2351 = vmatmul.f32.gmra.mxu0 %v1007
      %v2352 = vpop.f32.mrf.mxu0
      %v2353 = vadd.f32 0.0, %v2352
      %2354 = vmatmul.f32.gmra.mxu0 %v1009
      %v2355 = vpop.f32.mrf.mxu0
      %v2356 = vadd.f32 0.0, %v2355
      %2357 = vmatmul.f32.gmra.mxu0 %v1011
      %v2358 = vpop.f32.mrf.mxu0
      %v2359 = vadd.f32 0.0, %v2358
      %2360 = vmatmul.f32.gmra.mxu0 %v1013
      %v2361 = vpop.f32.mrf.mxu0
      %v2362 = vadd.f32 0.0, %v2361
      %2363 = vmatmul.f32.gmra.mxu0 %v1015
      %v2364 = vpop.f32.mrf.mxu0
      %v2365 = vadd.f32 0.0, %v2364
      %2366 = vmatmul.f32.gmra.mxu0 %v1017
      %v2367 = vpop.f32.mrf.mxu0
      %v2368 = vadd.f32 0.0, %v2367
      %2369 = vmatmul.f32.gmra.mxu0 %v1019
      %v2370 = vpop.f32.mrf.mxu0
      %v2371 = vadd.f32 0.0, %v2370
      %2372 = vmatmul.f32.gmra.mxu0 %v1021
      %v2373 = vpop.f32.mrf.mxu0
      %v2374 = vadd.f32 0.0, %v2373
      %2375 = vmatmul.f32.gmra.mxu0 %v1023
      %v2376 = vpop.f32.mrf.mxu0
      %v2377 = vadd.f32 0.0, %v2376
      %2378 = vmatmul.f32.gmra.mxu0 %v1025
      %v2379 = vpop.f32.mrf.mxu0
      %v2380 = vadd.f32 0.0, %v2379
      %2381 = vmatmul.f32.gmra.mxu0 %v1027
      %v2382 = vpop.f32.mrf.mxu0
      %v2383 = vadd.f32 0.0, %v2382
      %2384 = vmatmul.f32.gmra.mxu0 %v1029
      %v2385 = vpop.f32.mrf.mxu0
      %v2386 = vadd.f32 0.0, %v2385
      %2387 = vmatmul.f32.gmra.mxu0 %v1031
      %v2388 = vpop.f32.mrf.mxu0
      %v2389 = vadd.f32 0.0, %v2388
      %2390 = vmatmul.f32.gmra.mxu0 %v1033
      %v2391 = vpop.f32.mrf.mxu0
      %v2392 = vadd.f32 0.0, %v2391
      %2393 = vmatmul.f32.gmra.mxu0 %v1035
      %v2394 = vpop.f32.mrf.mxu0
      %v2395 = vadd.f32 0.0, %v2394
      %2396 = vmatmul.f32.gmra.mxu0 %v1037
      %v2397 = vpop.f32.mrf.mxu0
      %v2398 = vadd.f32 0.0, %v2397
      %2399 = vmatmul.f32.gmra.mxu0 %v1039
      %v2400 = vpop.f32.mrf.mxu0
      %v2401 = vadd.f32 0.0, %v2400
      %2402 = vmatmul.f32.gmra.mxu0 %v1041
      %v2403 = vpop.f32.mrf.mxu0
      %v2404 = vadd.f32 0.0, %v2403
      %2405 = vmatmul.f32.gmra.mxu0 %v1043
      %v2406 = vpop.f32.mrf.mxu0
      %v2407 = vadd.f32 0.0, %v2406
      %2408 = vmatmul.f32.gmra.mxu0 %v1045
      %v2409 = vpop.f32.mrf.mxu0
      %v2410 = vadd.f32 0.0, %v2409
      %2411 = vmatmul.f32.gmra.mxu0 %v1047
      %v2412 = vpop.f32.mrf.mxu0
      %v2413 = vadd.f32 0.0, %v2412
      %2414 = vmatmul.f32.gmra.mxu0 %v1049
      %v2415 = vpop.f32.mrf.mxu0
      %v2416 = vadd.f32 0.0, %v2415
      %2417 = vmatmul.f32.gmra.mxu0 %v1051
      %v2418 = vpop.f32.mrf.mxu0
      %v2419 = vadd.f32 0.0, %v2418
      %2420 = vmatmul.f32.gmra.mxu0 %v1053
      %v2421 = vpop.f32.mrf.mxu0
      %v2422 = vadd.f32 0.0, %v2421
      %2423 = vmatmul.f32.gmra.mxu0 %v1055
      %v2424 = vpop.f32.mrf.mxu0
      %v2425 = vadd.f32 0.0, %v2424
      %2426 = vmatmul.f32.gmra.mxu0 %v1057
      %v2427 = vpop.f32.mrf.mxu0
      %v2428 = vadd.f32 0.0, %v2427
      %2429 = vmatmul.f32.gmra.mxu0 %v1059
      %v2430 = vpop.f32.mrf.mxu0
      %v2431 = vadd.f32 0.0, %v2430
      %2432 = vmatmul.f32.gmra.mxu0 %v1061
      %v2433 = vpop.f32.mrf.mxu0
      %v2434 = vadd.f32 0.0, %v2433
      %2435 = vdwg.mxu0
      %2436 = vmatpush.msra.mxu0 0.0
      %2437 = vmatpush.msra.mxu0 0.0
      %2438 = vmatpush.msra.mxu0 0.0
      %2439 = vmatpush.msra.mxu0 0.0
      %2440 = vmatpush.msra.mxu0 0.0
      %2441 = vmatpush.msra.mxu0 0.0
      %2442 = vmatpush.msra.mxu0 0.0
      %2443 = vmatpush.msra.mxu0 0.0
      %2444 = vmatpush.msra.mxu0 0.0
      %2445 = vmatpush.msra.mxu0 0.0
      %2446 = vmatpush.msra.mxu0 0.0
      %2447 = vmatpush.msra.mxu0 0.0
      %2448 = vmatpush.msra.mxu0 0.0
      %2449 = vmatpush.msra.mxu0 0.0
      %2450 = vmatpush.msra.mxu0 0.0
      %2451 = vmatpush.msra.mxu0 %v831
      %2452 = vmatmul.f32.gmra.mxu0 %v558
      %v2453 = vpop.f32.mrf.mxu0
      %v2454 = vadd.f32 %v2353, %v2453
      %2455 = vmatmul.f32.gmra.mxu0 %v561
      %v2456 = vpop.f32.mrf.mxu0
      %v2457 = vadd.f32 %v2356, %v2456
      %2458 = vmatmul.f32.gmra.mxu0 %v564
      %v2459 = vpop.f32.mrf.mxu0
      %v2460 = vadd.f32 %v2359, %v2459
      %2461 = vmatmul.f32.gmra.mxu0 %v567
      %v2462 = vpop.f32.mrf.mxu0
      %v2463 = vadd.f32 %v2362, %v2462
      %2464 = vmatmul.f32.gmra.mxu0 %v570
      %v2465 = vpop.f32.mrf.mxu0
      %v2466 = vadd.f32 %v2365, %v2465
      %2467 = vmatmul.f32.gmra.mxu0 %v573
      %v2468 = vpop.f32.mrf.mxu0
      %v2469 = vadd.f32 %v2368, %v2468
      %2470 = vmatmul.f32.gmra.mxu0 %v576
      %v2471 = vpop.f32.mrf.mxu0
      %v2472 = vadd.f32 %v2371, %v2471
      %2473 = vmatmul.f32.gmra.mxu0 %v579
      %v2474 = vpop.f32.mrf.mxu0
      %v2475 = vadd.f32 %v2374, %v2474
      %2476 = vmatmul.f32.gmra.mxu0 %v582
      %v2477 = vpop.f32.mrf.mxu0
      %v2478 = vadd.f32 %v2377, %v2477
      %2479 = vmatmul.f32.gmra.mxu0 %v585
      %v2480 = vpop.f32.mrf.mxu0
      %v2481 = vadd.f32 %v2380, %v2480
      %2482 = vmatmul.f32.gmra.mxu0 %v588
      %v2483 = vpop.f32.mrf.mxu0
      %v2484 = vadd.f32 %v2383, %v2483
      %2485 = vmatmul.f32.gmra.mxu0 %v591
      %v2486 = vpop.f32.mrf.mxu0
      %v2487 = vadd.f32 %v2386, %v2486
      %2488 = vmatmul.f32.gmra.mxu0 %v594
      %v2489 = vpop.f32.mrf.mxu0
      %v2490 = vadd.f32 %v2389, %v2489
      %2491 = vmatmul.f32.gmra.mxu0 %v597
      %v2492 = vpop.f32.mrf.mxu0
      %v2493 = vadd.f32 %v2392, %v2492
      %2494 = vmatmul.f32.gmra.mxu0 %v600
      %v2495 = vpop.f32.mrf.mxu0
      %v2496 = vadd.f32 %v2395, %v2495
      %2497 = vmatmul.f32.gmra.mxu0 %v603
      %v2498 = vpop.f32.mrf.mxu0
      %v2499 = vadd.f32 %v2398, %v2498
      %2500 = vmatmul.f32.gmra.mxu0 %v606
      %v2501 = vpop.f32.mrf.mxu0
      %v2502 = vadd.f32 %v2401, %v2501
      %2503 = vmatmul.f32.gmra.mxu0 %v609
      %v2504 = vpop.f32.mrf.mxu0
      %v2505 = vadd.f32 %v2404, %v2504
      %2506 = vmatmul.f32.gmra.mxu0 %v612
      %v2507 = vpop.f32.mrf.mxu0
      %v2508 = vadd.f32 %v2407, %v2507
      %2509 = vmatmul.f32.gmra.mxu0 %v615
      %v2510 = vpop.f32.mrf.mxu0
      %v2511 = vadd.f32 %v2410, %v2510
      %2512 = vmatmul.f32.gmra.mxu0 %v618
      %v2513 = vpop.f32.mrf.mxu0
      %v2514 = vadd.f32 %v2413, %v2513
      %2515 = vmatmul.f32.gmra.mxu0 %v621
      %v2516 = vpop.f32.mrf.mxu0
      %v2517 = vadd.f32 %v2416, %v2516
      %2518 = vmatmul.f32.gmra.mxu0 %v624
      %v2519 = vpop.f32.mrf.mxu0
      %v2520 = vadd.f32 %v2419, %v2519
      %2521 = vmatmul.f32.gmra.mxu0 %v627
      %v2522 = vpop.f32.mrf.mxu0
      %v2523 = vadd.f32 %v2422, %v2522
      %2524 = vmatmul.f32.gmra.mxu0 %v630
      %v2525 = vpop.f32.mrf.mxu0
      %v2526 = vadd.f32 %v2425, %v2525
      %2527 = vmatmul.f32.gmra.mxu0 %v633
      %v2528 = vpop.f32.mrf.mxu0
      %v2529 = vadd.f32 %v2428, %v2528
      %2530 = vmatmul.f32.gmra.mxu0 %v636
      %v2531 = vpop.f32.mrf.mxu0
      %v2532 = vadd.f32 %v2431, %v2531
      %2533 = vmatmul.f32.gmra.mxu0 %v639
      %v2534 = vpop.f32.mrf.mxu0
      %v2535 = vadd.f32 %v2434, %v2534
      %2536 = vdwg.mxu0
      %v2544 = vrot.slane %v433, 1
      %v2545 = vrot.slane %v434, 1
      %v2546 = vsel %vm941, %v2544, %v2545
      %v2547 = vrot.slane %v435, 1
      %v2548 = vsel %vm941, %v2545, %v2547
      %v2549 = vrot.slane %v436, 1
      %v2550 = vsel %vm941, %v2547, %v2549
      %v2551 = vrot.slane %v437, 1
      %v2552 = vsel %vm941, %v2549, %v2551
      %v2553 = vrot.slane %v438, 1
      %v2554 = vrot.slane %v439, 1
      %v2555 = vsel %vm941, %v2553, %v2554
      %v2556 = vrot.slane %v440, 1
      %v2557 = vsel %vm941, %v2554, %v2556
      %v2558 = vrot.slane %v441, 1
      %v2559 = vsel %vm941, %v2556, %v2558
      %v2560 = vrot.slane %v442, 1
      %v2561 = vsel %vm941, %v2558, %v2560
      %v2562 = vrot.slane %v443, 1
      %v2563 = vrot.slane %v444, 1
      %v2564 = vsel %vm941, %v2562, %v2563
      %v2565 = vrot.slane %v445, 1
      %v2566 = vsel %vm941, %v2563, %v2565
      %v2567 = vrot.slane %v446, 1
      %v2568 = vsel %vm941, %v2565, %v2567
      %v2569 = vrot.slane %v447, 1
      %v2570 = vsel %vm941, %v2567, %v2569
      %v2571 = vrot.slane %v448, 1
      %v2572 = vrot.slane %v449, 1
      %v2573 = vsel %vm941, %v2571, %v2572
      %v2574 = vrot.slane %v450, 1
      %v2575 = vsel %vm941, %v2572, %v2574
      %v2576 = vrot.slane %v451, 1
      %v2577 = vsel %vm941, %v2574, %v2576
      %v2578 = vrot.slane %v452, 1
      %v2579 = vsel %vm941, %v2576, %v2578
      %v2580 = vrot.slane %v453, 1
      %v2581 = vrot.slane %v454, 1
      %v2582 = vsel %vm941, %v2580, %v2581
      %v2583 = vrot.slane %v455, 1
      %v2584 = vsel %vm941, %v2581, %v2583
      %v2585 = vrot.slane %v456, 1
      %v2586 = vsel %vm941, %v2583, %v2585
      %v2587 = vrot.slane %v457, 1
      %v2588 = vsel %vm941, %v2585, %v2587
      %v2589 = vrot.slane %v458, 1
      %v2590 = vrot.slane %v459, 1
      %v2591 = vsel %vm941, %v2589, %v2590
      %v2592 = vrot.slane %v460, 1
      %v2593 = vsel %vm941, %v2590, %v2592
      %v2594 = vrot.slane %v461, 1
      %v2595 = vsel %vm941, %v2592, %v2594
      %v2596 = vrot.slane %v462, 1
      %v2597 = vsel %vm941, %v2594, %v2596
      %v2598 = vrot.slane %v463, 1
      %v2599 = vrot.slane %v464, 1
      %v2600 = vsel %vm941, %v2598, %v2599
      %v2601 = vrot.slane %v465, 1
      %v2602 = vsel %vm941, %v2599, %v2601
      %v2603 = vrot.slane %v466, 1
      %v2604 = vsel %vm941, %v2601, %v2603
      %v2605 = vrot.slane %v467, 1
      %v2606 = vsel %vm941, %v2603, %v2605
      %v2607 = vsel %vm556, %v2546, 0
      %v2609 = vsel %vm556, %v2548, 0
      %v2611 = vsel %vm556, %v2550, 0
      %v2613 = vsel %vm556, %v2552, 0
      %v2615 = vsel %vm556, %v2555, 0
      %v2617 = vsel %vm556, %v2557, 0
      %v2619 = vsel %vm556, %v2559, 0
      %v2621 = vsel %vm556, %v2561, 0
      %v2623 = vsel %vm556, %v2564, 0
      %v2625 = vsel %vm556, %v2566, 0
      %v2627 = vsel %vm556, %v2568, 0
      %v2629 = vsel %vm556, %v2570, 0
      %v2631 = vsel %vm556, %v2573, 0
      %v2633 = vsel %vm556, %v2575, 0
      %v2635 = vsel %vm556, %v2577, 0
      %v2637 = vsel %vm556, %v2579, 0
      %v2639 = vsel %vm556, %v2582, 0
      %v2641 = vsel %vm556, %v2584, 0
      %v2643 = vsel %vm556, %v2586, 0
      %v2645 = vsel %vm556, %v2588, 0
      %v2647 = vsel %vm556, %v2591, 0
      %v2649 = vsel %vm556, %v2593, 0
      %v2651 = vsel %vm556, %v2595, 0
      %v2653 = vsel %vm556, %v2597, 0
      %v2655 = vsel %vm556, %v2600, 0
      %v2657 = vsel %vm556, %v2602, 0
      %v2659 = vsel %vm556, %v2604, 0
      %v2661 = vsel %vm556, %v2606, 0
      %2663 = vmatpush.msra.mxu0 0.0
      %2664 = vmatpush.msra.mxu0 0.0
      %2665 = vmatpush.msra.mxu0 0.0
      %2666 = vmatpush.msra.mxu0 0.0
      %2667 = vmatpush.msra.mxu0 0.0
      %2668 = vmatpush.msra.mxu0 0.0
      %2669 = vmatpush.msra.mxu0 0.0
      %2670 = vmatpush.msra.mxu0 0.0
      %2671 = vmatpush.msra.mxu0 0.0
      %2672 = vmatpush.msra.mxu0 0.0
      %2673 = vmatpush.msra.mxu0 0.0
      %2674 = vmatpush.msra.mxu0 0.0
      %2675 = vmatpush.msra.mxu0 0.0
      %2676 = vmatpush.msra.mxu0 0.0
      %2677 = vmatpush.msra.mxu0 0.0
      %2678 = vmatpush.msra.mxu0 %v1064
      %2679 = vmatmul.f32.gmra.mxu0 %v2607
      %v2680 = vpop.f32.mrf.mxu0
      %v2681 = vadd.f32 0.0, %v2680
      %2682 = vmatmul.f32.gmra.mxu0 %v2609
      %v2683 = vpop.f32.mrf.mxu0
      %v2684 = vadd.f32 0.0, %v2683
      %2685 = vmatmul.f32.gmra.mxu0 %v2611
      %v2686 = vpop.f32.mrf.mxu0
      %v2687 = vadd.f32 0.0, %v2686
      %2688 = vmatmul.f32.gmra.mxu0 %v2613
      %v2689 = vpop.f32.mrf.mxu0
      %v2690 = vadd.f32 0.0, %v2689
      %2691 = vmatmul.f32.gmra.mxu0 %v2615
      %v2692 = vpop.f32.mrf.mxu0
      %v2693 = vadd.f32 0.0, %v2692
      %2694 = vmatmul.f32.gmra.mxu0 %v2617
      %v2695 = vpop.f32.mrf.mxu0
      %v2696 = vadd.f32 0.0, %v2695
      %2697 = vmatmul.f32.gmra.mxu0 %v2619
      %v2698 = vpop.f32.mrf.mxu0
      %v2699 = vadd.f32 0.0, %v2698
      %2700 = vmatmul.f32.gmra.mxu0 %v2621
      %v2701 = vpop.f32.mrf.mxu0
      %v2702 = vadd.f32 0.0, %v2701
      %2703 = vmatmul.f32.gmra.mxu0 %v2623
      %v2704 = vpop.f32.mrf.mxu0
      %v2705 = vadd.f32 0.0, %v2704
      %2706 = vmatmul.f32.gmra.mxu0 %v2625
      %v2707 = vpop.f32.mrf.mxu0
      %v2708 = vadd.f32 0.0, %v2707
      %2709 = vmatmul.f32.gmra.mxu0 %v2627
      %v2710 = vpop.f32.mrf.mxu0
      %v2711 = vadd.f32 0.0, %v2710
      %2712 = vmatmul.f32.gmra.mxu0 %v2629
      %v2713 = vpop.f32.mrf.mxu0
      %v2714 = vadd.f32 0.0, %v2713
      %2715 = vmatmul.f32.gmra.mxu0 %v2631
      %v2716 = vpop.f32.mrf.mxu0
      %v2717 = vadd.f32 0.0, %v2716
      %2718 = vmatmul.f32.gmra.mxu0 %v2633
      %v2719 = vpop.f32.mrf.mxu0
      %v2720 = vadd.f32 0.0, %v2719
      %2721 = vmatmul.f32.gmra.mxu0 %v2635
      %v2722 = vpop.f32.mrf.mxu0
      %v2723 = vadd.f32 0.0, %v2722
      %2724 = vmatmul.f32.gmra.mxu0 %v2637
      %v2725 = vpop.f32.mrf.mxu0
      %v2726 = vadd.f32 0.0, %v2725
      %2727 = vmatmul.f32.gmra.mxu0 %v2639
      %v2728 = vpop.f32.mrf.mxu0
      %v2729 = vadd.f32 0.0, %v2728
      %2730 = vmatmul.f32.gmra.mxu0 %v2641
      %v2731 = vpop.f32.mrf.mxu0
      %v2732 = vadd.f32 0.0, %v2731
      %2733 = vmatmul.f32.gmra.mxu0 %v2643
      %v2734 = vpop.f32.mrf.mxu0
      %v2735 = vadd.f32 0.0, %v2734
      %2736 = vmatmul.f32.gmra.mxu0 %v2645
      %v2737 = vpop.f32.mrf.mxu0
      %v2738 = vadd.f32 0.0, %v2737
      %2739 = vmatmul.f32.gmra.mxu0 %v2647
      %v2740 = vpop.f32.mrf.mxu0
      %v2741 = vadd.f32 0.0, %v2740
      %2742 = vmatmul.f32.gmra.mxu0 %v2649
      %v2743 = vpop.f32.mrf.mxu0
      %v2744 = vadd.f32 0.0, %v2743
      %2745 = vmatmul.f32.gmra.mxu0 %v2651
      %v2746 = vpop.f32.mrf.mxu0
      %v2747 = vadd.f32 0.0, %v2746
      %2748 = vmatmul.f32.gmra.mxu0 %v2653
      %v2749 = vpop.f32.mrf.mxu0
      %v2750 = vadd.f32 0.0, %v2749
      %2751 = vmatmul.f32.gmra.mxu0 %v2655
      %v2752 = vpop.f32.mrf.mxu0
      %v2753 = vadd.f32 0.0, %v2752
      %2754 = vmatmul.f32.gmra.mxu0 %v2657
      %v2755 = vpop.f32.mrf.mxu0
      %v2756 = vadd.f32 0.0, %v2755
      %2757 = vmatmul.f32.gmra.mxu0 %v2659
      %v2758 = vpop.f32.mrf.mxu0
      %v2759 = vadd.f32 0.0, %v2758
      %2760 = vmatmul.f32.gmra.mxu0 %v2661
      %v2761 = vpop.f32.mrf.mxu0
      %v2762 = vadd.f32 0.0, %v2761
      %2763 = vdwg.mxu0
      %v2764 = vadd.f32 %v2454, %v2681
      %v2765 = vadd.f32 %v2457, %v2684
      %v2766 = vadd.f32 %v2460, %v2687
      %v2767 = vadd.f32 %v2463, %v2690
      %v2768 = vadd.f32 %v2466, %v2693
      %v2769 = vadd.f32 %v2469, %v2696
      %v2770 = vadd.f32 %v2472, %v2699
      %v2771 = vadd.f32 %v2475, %v2702
      %v2772 = vadd.f32 %v2478, %v2705
      %v2773 = vadd.f32 %v2481, %v2708
      %v2774 = vadd.f32 %v2484, %v2711
      %v2775 = vadd.f32 %v2487, %v2714
      %v2776 = vadd.f32 %v2490, %v2717
      %v2777 = vadd.f32 %v2493, %v2720
      %v2778 = vadd.f32 %v2496, %v2723
      %v2779 = vadd.f32 %v2499, %v2726
      %v2780 = vadd.f32 %v2502, %v2729
      %v2781 = vadd.f32 %v2505, %v2732
      %v2782 = vadd.f32 %v2508, %v2735
      %v2783 = vadd.f32 %v2511, %v2738
      %v2784 = vadd.f32 %v2514, %v2741
      %v2785 = vadd.f32 %v2517, %v2744
      %v2786 = vadd.f32 %v2520, %v2747
      %v2787 = vadd.f32 %v2523, %v2750
      %v2788 = vadd.f32 %v2526, %v2753
      %v2789 = vadd.f32 %v2529, %v2756
      %v2790 = vadd.f32 %v2532, %v2759
      %v2791 = vadd.f32 %v2535, %v2762
      %2792 = vmatpush.msra.mxu0 0.0
      %2793 = vmatpush.msra.mxu0 0.0
      %2794 = vmatpush.msra.mxu0 0.0
      %2795 = vmatpush.msra.mxu0 0.0
      %2796 = vmatpush.msra.mxu0 0.0
      %2797 = vmatpush.msra.mxu0 0.0
      %2798 = vmatpush.msra.mxu0 0.0
      %2799 = vmatpush.msra.mxu0 0.0
      %2800 = vmatpush.msra.mxu0 0.0
      %2801 = vmatpush.msra.mxu0 0.0
      %2802 = vmatpush.msra.mxu0 0.0
      %2803 = vmatpush.msra.mxu0 0.0
      %2804 = vmatpush.msra.mxu0 0.0
      %2805 = vmatpush.msra.mxu0 0.0
      %2806 = vmatpush.msra.mxu0 0.0
      %2807 = vmatpush.msra.mxu0 %v1282
      %2808 = vmatmul.f32.gmra.mxu0 %v1416
      %v2809 = vpop.f32.mrf.mxu0
      %v2810 = vadd.f32 0.0, %v2809
      %2811 = vmatmul.f32.gmra.mxu0 %v1419
      %v2812 = vpop.f32.mrf.mxu0
      %v2813 = vadd.f32 0.0, %v2812
      %2814 = vmatmul.f32.gmra.mxu0 %v1422
      %v2815 = vpop.f32.mrf.mxu0
      %v2816 = vadd.f32 0.0, %v2815
      %2817 = vmatmul.f32.gmra.mxu0 %v1425
      %v2818 = vpop.f32.mrf.mxu0
      %v2819 = vadd.f32 0.0, %v2818
      %2820 = vmatmul.f32.gmra.mxu0 %v1428
      %v2821 = vpop.f32.mrf.mxu0
      %v2822 = vadd.f32 0.0, %v2821
      %2823 = vmatmul.f32.gmra.mxu0 %v1431
      %v2824 = vpop.f32.mrf.mxu0
      %v2825 = vadd.f32 0.0, %v2824
      %2826 = vmatmul.f32.gmra.mxu0 %v1434
      %v2827 = vpop.f32.mrf.mxu0
      %v2828 = vadd.f32 0.0, %v2827
      %2829 = vmatmul.f32.gmra.mxu0 %v1437
      %v2830 = vpop.f32.mrf.mxu0
      %v2831 = vadd.f32 0.0, %v2830
      %2832 = vmatmul.f32.gmra.mxu0 %v1440
      %v2833 = vpop.f32.mrf.mxu0
      %v2834 = vadd.f32 0.0, %v2833
      %2835 = vmatmul.f32.gmra.mxu0 %v1443
      %v2836 = vpop.f32.mrf.mxu0
      %v2837 = vadd.f32 0.0, %v2836
      %2838 = vmatmul.f32.gmra.mxu0 %v1446
      %v2839 = vpop.f32.mrf.mxu0
      %v2840 = vadd.f32 0.0, %v2839
      %2841 = vmatmul.f32.gmra.mxu0 %v1449
      %v2842 = vpop.f32.mrf.mxu0
      %v2843 = vadd.f32 0.0, %v2842
      %2844 = vmatmul.f32.gmra.mxu0 %v1452
      %v2845 = vpop.f32.mrf.mxu0
      %v2846 = vadd.f32 0.0, %v2845
      %2847 = vmatmul.f32.gmra.mxu0 %v1455
      %v2848 = vpop.f32.mrf.mxu0
      %v2849 = vadd.f32 0.0, %v2848
      %2850 = vmatmul.f32.gmra.mxu0 %v1458
      %v2851 = vpop.f32.mrf.mxu0
      %v2852 = vadd.f32 0.0, %v2851
      %2853 = vmatmul.f32.gmra.mxu0 %v1461
      %v2854 = vpop.f32.mrf.mxu0
      %v2855 = vadd.f32 0.0, %v2854
      %2856 = vmatmul.f32.gmra.mxu0 %v1464
      %v2857 = vpop.f32.mrf.mxu0
      %v2858 = vadd.f32 0.0, %v2857
      %2859 = vmatmul.f32.gmra.mxu0 %v1467
      %v2860 = vpop.f32.mrf.mxu0
      %v2861 = vadd.f32 0.0, %v2860
      %2862 = vmatmul.f32.gmra.mxu0 %v1470
      %v2863 = vpop.f32.mrf.mxu0
      %v2864 = vadd.f32 0.0, %v2863
      %2865 = vmatmul.f32.gmra.mxu0 %v1473
      %v2866 = vpop.f32.mrf.mxu0
      %v2867 = vadd.f32 0.0, %v2866
      %2868 = vmatmul.f32.gmra.mxu0 %v1476
      %v2869 = vpop.f32.mrf.mxu0
      %v2870 = vadd.f32 0.0, %v2869
      %2871 = vmatmul.f32.gmra.mxu0 %v1479
      %v2872 = vpop.f32.mrf.mxu0
      %v2873 = vadd.f32 0.0, %v2872
      %2874 = vmatmul.f32.gmra.mxu0 %v1482
      %v2875 = vpop.f32.mrf.mxu0
      %v2876 = vadd.f32 0.0, %v2875
      %2877 = vmatmul.f32.gmra.mxu0 %v1485
      %v2878 = vpop.f32.mrf.mxu0
      %v2879 = vadd.f32 0.0, %v2878
      %2880 = vmatmul.f32.gmra.mxu0 %v1488
      %v2881 = vpop.f32.mrf.mxu0
      %v2882 = vadd.f32 0.0, %v2881
      %2883 = vmatmul.f32.gmra.mxu0 %v1491
      %v2884 = vpop.f32.mrf.mxu0
      %v2885 = vadd.f32 0.0, %v2884
      %2886 = vmatmul.f32.gmra.mxu0 %v1494
      %v2887 = vpop.f32.mrf.mxu0
      %v2888 = vadd.f32 0.0, %v2887
      %2889 = vmatmul.f32.gmra.mxu0 %v1497
      %v2890 = vpop.f32.mrf.mxu0
      %v2891 = vadd.f32 0.0, %v2890
      %2892 = vdwg.mxu0
      %v2893 = vadd.f32 %v2764, %v2810
      %v2894 = vadd.f32 %v2765, %v2813
      %v2895 = vadd.f32 %v2766, %v2816
      %v2896 = vadd.f32 %v2767, %v2819
      %v2897 = vadd.f32 %v2768, %v2822
      %v2898 = vadd.f32 %v2769, %v2825
      %v2899 = vadd.f32 %v2770, %v2828
      %v2900 = vadd.f32 %v2771, %v2831
      %v2901 = vadd.f32 %v2772, %v2834
      %v2902 = vadd.f32 %v2773, %v2837
      %v2903 = vadd.f32 %v2774, %v2840
      %v2904 = vadd.f32 %v2775, %v2843
      %v2905 = vadd.f32 %v2776, %v2846
      %v2906 = vadd.f32 %v2777, %v2849
      %v2907 = vadd.f32 %v2778, %v2852
      %v2908 = vadd.f32 %v2779, %v2855
      %v2909 = vadd.f32 %v2780, %v2858
      %v2910 = vadd.f32 %v2781, %v2861
      %v2911 = vadd.f32 %v2782, %v2864
      %v2912 = vadd.f32 %v2783, %v2867
      %v2913 = vadd.f32 %v2784, %v2870
      %v2914 = vadd.f32 %v2785, %v2873
      %v2915 = vadd.f32 %v2786, %v2876
      %v2916 = vadd.f32 %v2787, %v2879
      %v2917 = vadd.f32 %v2788, %v2882
      %v2918 = vadd.f32 %v2789, %v2885
      %v2919 = vadd.f32 %v2790, %v2888
      %v2920 = vadd.f32 %v2791, %v2891
      %2921 = vmatpush.msra.mxu0 0.0
      %2922 = vmatpush.msra.mxu0 0.0
      %2923 = vmatpush.msra.mxu0 0.0
      %2924 = vmatpush.msra.mxu0 0.0
      %2925 = vmatpush.msra.mxu0 0.0
      %2926 = vmatpush.msra.mxu0 0.0
      %2927 = vmatpush.msra.mxu0 0.0
      %2928 = vmatpush.msra.mxu0 0.0
      %2929 = vmatpush.msra.mxu0 0.0
      %2930 = vmatpush.msra.mxu0 0.0
      %2931 = vmatpush.msra.mxu0 0.0
      %2932 = vmatpush.msra.mxu0 0.0
      %2933 = vmatpush.msra.mxu0 0.0
      %2934 = vmatpush.msra.mxu0 0.0
      %2935 = vmatpush.msra.mxu0 0.0
      %2936 = vmatpush.msra.mxu0 %v1500
      %2937 = vmatmul.f32.gmra.mxu0 %v1703
      %v2938 = vpop.f32.mrf.mxu0
      %v2939 = vadd.f32 0.0, %v2938
      %2940 = vmatmul.f32.gmra.mxu0 %v1705
      %v2941 = vpop.f32.mrf.mxu0
      %v2942 = vadd.f32 0.0, %v2941
      %2943 = vmatmul.f32.gmra.mxu0 %v1707
      %v2944 = vpop.f32.mrf.mxu0
      %v2945 = vadd.f32 0.0, %v2944
      %2946 = vmatmul.f32.gmra.mxu0 %v1709
      %v2947 = vpop.f32.mrf.mxu0
      %v2948 = vadd.f32 0.0, %v2947
      %2949 = vmatmul.f32.gmra.mxu0 %v1711
      %v2950 = vpop.f32.mrf.mxu0
      %v2951 = vadd.f32 0.0, %v2950
      %2952 = vmatmul.f32.gmra.mxu0 %v1713
      %v2953 = vpop.f32.mrf.mxu0
      %v2954 = vadd.f32 0.0, %v2953
      %2955 = vmatmul.f32.gmra.mxu0 %v1715
      %v2956 = vpop.f32.mrf.mxu0
      %v2957 = vadd.f32 0.0, %v2956
      %2958 = vmatmul.f32.gmra.mxu0 %v1717
      %v2959 = vpop.f32.mrf.mxu0
      %v2960 = vadd.f32 0.0, %v2959
      %2961 = vmatmul.f32.gmra.mxu0 %v1719
      %v2962 = vpop.f32.mrf.mxu0
      %v2963 = vadd.f32 0.0, %v2962
      %2964 = vmatmul.f32.gmra.mxu0 %v1721
      %v2965 = vpop.f32.mrf.mxu0
      %v2966 = vadd.f32 0.0, %v2965
      %2967 = vmatmul.f32.gmra.mxu0 %v1723
      %v2968 = vpop.f32.mrf.mxu0
      %v2969 = vadd.f32 0.0, %v2968
      %2970 = vmatmul.f32.gmra.mxu0 %v1725
      %v2971 = vpop.f32.mrf.mxu0
      %v2972 = vadd.f32 0.0, %v2971
      %2973 = vmatmul.f32.gmra.mxu0 %v1727
      %v2974 = vpop.f32.mrf.mxu0
      %v2975 = vadd.f32 0.0, %v2974
      %2976 = vmatmul.f32.gmra.mxu0 %v1729
      %v2977 = vpop.f32.mrf.mxu0
      %v2978 = vadd.f32 0.0, %v2977
      %2979 = vmatmul.f32.gmra.mxu0 %v1731
      %v2980 = vpop.f32.mrf.mxu0
      %v2981 = vadd.f32 0.0, %v2980
      %2982 = vmatmul.f32.gmra.mxu0 %v1733
      %v2983 = vpop.f32.mrf.mxu0
      %v2984 = vadd.f32 0.0, %v2983
      %2985 = vmatmul.f32.gmra.mxu0 %v1735
      %v2986 = vpop.f32.mrf.mxu0
      %v2987 = vadd.f32 0.0, %v2986
      %2988 = vmatmul.f32.gmra.mxu0 %v1737
      %v2989 = vpop.f32.mrf.mxu0
      %v2990 = vadd.f32 0.0, %v2989
      %2991 = vmatmul.f32.gmra.mxu0 %v1739
      %v2992 = vpop.f32.mrf.mxu0
      %v2993 = vadd.f32 0.0, %v2992
      %2994 = vmatmul.f32.gmra.mxu0 %v1741
      %v2995 = vpop.f32.mrf.mxu0
      %v2996 = vadd.f32 0.0, %v2995
      %2997 = vmatmul.f32.gmra.mxu0 %v1743
      %v2998 = vpop.f32.mrf.mxu0
      %v2999 = vadd.f32 0.0, %v2998
      %3000 = vmatmul.f32.gmra.mxu0 %v1745
      %v3001 = vpop.f32.mrf.mxu0
      %v3002 = vadd.f32 0.0, %v3001
      %3003 = vmatmul.f32.gmra.mxu0 %v1747
      %v3004 = vpop.f32.mrf.mxu0
      %v3005 = vadd.f32 0.0, %v3004
      %3006 = vmatmul.f32.gmra.mxu0 %v1749
      %v3007 = vpop.f32.mrf.mxu0
      %v3008 = vadd.f32 0.0, %v3007
      %3009 = vmatmul.f32.gmra.mxu0 %v1751
      %v3010 = vpop.f32.mrf.mxu0
      %v3011 = vadd.f32 0.0, %v3010
      %3012 = vmatmul.f32.gmra.mxu0 %v1753
      %v3013 = vpop.f32.mrf.mxu0
      %v3014 = vadd.f32 0.0, %v3013
      %3015 = vmatmul.f32.gmra.mxu0 %v1755
      %v3016 = vpop.f32.mrf.mxu0
      %v3017 = vadd.f32 0.0, %v3016
      %3018 = vmatmul.f32.gmra.mxu0 %v1757
      %v3019 = vpop.f32.mrf.mxu0
      %v3020 = vadd.f32 0.0, %v3019
      %3021 = vdwg.mxu0
      %v3022 = vadd.f32 %v2893, %v2939
      %v3023 = vadd.f32 %v2894, %v2942
      %v3024 = vadd.f32 %v2895, %v2945
      %v3025 = vadd.f32 %v2896, %v2948
      %v3026 = vadd.f32 %v2897, %v2951
      %v3027 = vadd.f32 %v2898, %v2954
      %v3028 = vadd.f32 %v2899, %v2957
      %v3029 = vadd.f32 %v2900, %v2960
      %v3030 = vadd.f32 %v2901, %v2963
      %v3031 = vadd.f32 %v2902, %v2966
      %v3032 = vadd.f32 %v2903, %v2969
      %v3033 = vadd.f32 %v2904, %v2972
      %v3034 = vadd.f32 %v2905, %v2975
      %v3035 = vadd.f32 %v2906, %v2978
      %v3036 = vadd.f32 %v2907, %v2981
      %v3037 = vadd.f32 %v2908, %v2984
      %v3038 = vadd.f32 %v2909, %v2987
      %v3039 = vadd.f32 %v2910, %v2990
      %v3040 = vadd.f32 %v2911, %v2993
      %v3041 = vadd.f32 %v2912, %v2996
      %v3042 = vadd.f32 %v2913, %v2999
      %v3043 = vadd.f32 %v2914, %v3002
      %v3044 = vadd.f32 %v2915, %v3005
      %v3045 = vadd.f32 %v2916, %v3008
      %v3046 = vadd.f32 %v2917, %v3011
      %v3047 = vadd.f32 %v2918, %v3014
      %v3048 = vadd.f32 %v2919, %v3017
      %v3049 = vadd.f32 %v2920, %v3020
      %v3057 = vrot.slane %v513, 1
      %v3058 = vrot.slane %v514, 1
      %v3059 = vsel %vm941, %v3057, %v3058
      %v3060 = vrot.slane %v515, 1
      %v3061 = vsel %vm941, %v3058, %v3060
      %v3062 = vrot.slane %v516, 1
      %v3063 = vsel %vm941, %v3060, %v3062
      %v3064 = vrot.slane %v517, 1
      %v3065 = vsel %vm941, %v3062, %v3064
      %v3066 = vrot.slane %v518, 1
      %v3067 = vrot.slane %v519, 1
      %v3068 = vsel %vm941, %v3066, %v3067
      %v3069 = vrot.slane %v520, 1
      %v3070 = vsel %vm941, %v3067, %v3069
      %v3071 = vrot.slane %v521, 1
      %v3072 = vsel %vm941, %v3069, %v3071
      %v3073 = vrot.slane %v522, 1
      %v3074 = vsel %vm941, %v3071, %v3073
      %v3075 = vrot.slane %v523, 1
      %v3076 = vrot.slane %v524, 1
      %v3077 = vsel %vm941, %v3075, %v3076
      %v3078 = vrot.slane %v525, 1
      %v3079 = vsel %vm941, %v3076, %v3078
      %v3080 = vrot.slane %v526, 1
      %v3081 = vsel %vm941, %v3078, %v3080
      %v3082 = vrot.slane %v527, 1
      %v3083 = vsel %vm941, %v3080, %v3082
      %v3084 = vrot.slane %v528, 1
      %v3085 = vrot.slane %v529, 1
      %v3086 = vsel %vm941, %v3084, %v3085
      %v3087 = vrot.slane %v530, 1
      %v3088 = vsel %vm941, %v3085, %v3087
      %v3089 = vrot.slane %v531, 1
      %v3090 = vsel %vm941, %v3087, %v3089
      %v3091 = vrot.slane %v532, 1
      %v3092 = vsel %vm941, %v3089, %v3091
      %v3093 = vrot.slane %v533, 1
      %v3094 = vrot.slane %v534, 1
      %v3095 = vsel %vm941, %v3093, %v3094
      %v3096 = vrot.slane %v535, 1
      %v3097 = vsel %vm941, %v3094, %v3096
      %v3098 = vrot.slane %v536, 1
      %v3099 = vsel %vm941, %v3096, %v3098
      %v3100 = vrot.slane %v537, 1
      %v3101 = vsel %vm941, %v3098, %v3100
      %v3102 = vrot.slane %v538, 1
      %v3103 = vrot.slane %v539, 1
      %v3104 = vsel %vm941, %v3102, %v3103
      %v3105 = vrot.slane %v540, 1
      %v3106 = vsel %vm941, %v3103, %v3105
      %v3107 = vrot.slane %v541, 1
      %v3108 = vsel %vm941, %v3105, %v3107
      %v3109 = vrot.slane %v542, 1
      %v3110 = vsel %vm941, %v3107, %v3109
      %v3111 = vrot.slane %v543, 1
      %v3112 = vrot.slane %v544, 1
      %v3113 = vsel %vm941, %v3111, %v3112
      %v3114 = vrot.slane %v545, 1
      %v3115 = vsel %vm941, %v3112, %v3114
      %v3116 = vrot.slane %v546, 1
      %v3117 = vsel %vm941, %v3114, %v3116
      %v3118 = vrot.slane %v547, 1
      %v3119 = vsel %vm941, %v3116, %v3118
      %v3120 = vsel %vm556, %v3059, 0
      %v3122 = vsel %vm556, %v3061, 0
      %v3124 = vsel %vm556, %v3063, 0
      %v3126 = vsel %vm556, %v3065, 0
      %v3128 = vsel %vm556, %v3068, 0
      %v3130 = vsel %vm556, %v3070, 0
      %v3132 = vsel %vm556, %v3072, 0
      %v3134 = vsel %vm556, %v3074, 0
      %v3136 = vsel %vm556, %v3077, 0
      %v3138 = vsel %vm556, %v3079, 0
      %v3140 = vsel %vm556, %v3081, 0
      %v3142 = vsel %vm556, %v3083, 0
      %v3144 = vsel %vm556, %v3086, 0
      %v3146 = vsel %vm556, %v3088, 0
      %v3148 = vsel %vm556, %v3090, 0
      %v3150 = vsel %vm556, %v3092, 0
      %v3152 = vsel %vm556, %v3095, 0
      %v3154 = vsel %vm556, %v3097, 0
      %v3156 = vsel %vm556, %v3099, 0
      %v3158 = vsel %vm556, %v3101, 0
      %v3160 = vsel %vm556, %v3104, 0
      %v3162 = vsel %vm556, %v3106, 0
      %v3164 = vsel %vm556, %v3108, 0
      %v3166 = vsel %vm556, %v3110, 0
      %v3168 = vsel %vm556, %v3113, 0
      %v3170 = vsel %vm556, %v3115, 0
      %v3172 = vsel %vm556, %v3117, 0
      %v3174 = vsel %vm556, %v3119, 0
      %3176 = vmatpush.msra.mxu0 0.0
      %3177 = vmatpush.msra.mxu0 0.0
      %3178 = vmatpush.msra.mxu0 0.0
      %3179 = vmatpush.msra.mxu0 0.0
      %3180 = vmatpush.msra.mxu0 0.0
      %3181 = vmatpush.msra.mxu0 0.0
      %3182 = vmatpush.msra.mxu0 0.0
      %3183 = vmatpush.msra.mxu0 0.0
      %3184 = vmatpush.msra.mxu0 0.0
      %3185 = vmatpush.msra.mxu0 0.0
      %3186 = vmatpush.msra.mxu0 0.0
      %3187 = vmatpush.msra.mxu0 0.0
      %3188 = vmatpush.msra.mxu0 0.0
      %3189 = vmatpush.msra.mxu0 0.0
      %3190 = vmatpush.msra.mxu0 0.0
      %3191 = vmatpush.msra.mxu0 %v1760
      %3192 = vmatmul.f32.gmra.mxu0 %v3120
      %v3193 = vpop.f32.mrf.mxu0
      %v3194 = vadd.f32 0.0, %v3193
      %3195 = vmatmul.f32.gmra.mxu0 %v3122
      %v3196 = vpop.f32.mrf.mxu0
      %v3197 = vadd.f32 0.0, %v3196
      %3198 = vmatmul.f32.gmra.mxu0 %v3124
      %v3199 = vpop.f32.mrf.mxu0
      %v3200 = vadd.f32 0.0, %v3199
      %3201 = vmatmul.f32.gmra.mxu0 %v3126
      %v3202 = vpop.f32.mrf.mxu0
      %v3203 = vadd.f32 0.0, %v3202
      %3204 = vmatmul.f32.gmra.mxu0 %v3128
      %v3205 = vpop.f32.mrf.mxu0
      %v3206 = vadd.f32 0.0, %v3205
      %3207 = vmatmul.f32.gmra.mxu0 %v3130
      %v3208 = vpop.f32.mrf.mxu0
      %v3209 = vadd.f32 0.0, %v3208
      %3210 = vmatmul.f32.gmra.mxu0 %v3132
      %v3211 = vpop.f32.mrf.mxu0
      %v3212 = vadd.f32 0.0, %v3211
      %3213 = vmatmul.f32.gmra.mxu0 %v3134
      %v3214 = vpop.f32.mrf.mxu0
      %v3215 = vadd.f32 0.0, %v3214
      %3216 = vmatmul.f32.gmra.mxu0 %v3136
      %v3217 = vpop.f32.mrf.mxu0
      %v3218 = vadd.f32 0.0, %v3217
      %3219 = vmatmul.f32.gmra.mxu0 %v3138
      %v3220 = vpop.f32.mrf.mxu0
      %v3221 = vadd.f32 0.0, %v3220
      %3222 = vmatmul.f32.gmra.mxu0 %v3140
      %v3223 = vpop.f32.mrf.mxu0
      %v3224 = vadd.f32 0.0, %v3223
      %3225 = vmatmul.f32.gmra.mxu0 %v3142
      %v3226 = vpop.f32.mrf.mxu0
      %v3227 = vadd.f32 0.0, %v3226
      %3228 = vmatmul.f32.gmra.mxu0 %v3144
      %v3229 = vpop.f32.mrf.mxu0
      %v3230 = vadd.f32 0.0, %v3229
      %3231 = vmatmul.f32.gmra.mxu0 %v3146
      %v3232 = vpop.f32.mrf.mxu0
      %v3233 = vadd.f32 0.0, %v3232
      %3234 = vmatmul.f32.gmra.mxu0 %v3148
      %v3235 = vpop.f32.mrf.mxu0
      %v3236 = vadd.f32 0.0, %v3235
      %3237 = vmatmul.f32.gmra.mxu0 %v3150
      %v3238 = vpop.f32.mrf.mxu0
      %v3239 = vadd.f32 0.0, %v3238
      %3240 = vmatmul.f32.gmra.mxu0 %v3152
      %v3241 = vpop.f32.mrf.mxu0
      %v3242 = vadd.f32 0.0, %v3241
      %3243 = vmatmul.f32.gmra.mxu0 %v3154
      %v3244 = vpop.f32.mrf.mxu0
      %v3245 = vadd.f32 0.0, %v3244
      %3246 = vmatmul.f32.gmra.mxu0 %v3156
      %v3247 = vpop.f32.mrf.mxu0
      %v3248 = vadd.f32 0.0, %v3247
      %3249 = vmatmul.f32.gmra.mxu0 %v3158
      %v3250 = vpop.f32.mrf.mxu0
      %v3251 = vadd.f32 0.0, %v3250
      %3252 = vmatmul.f32.gmra.mxu0 %v3160
      %v3253 = vpop.f32.mrf.mxu0
      %v3254 = vadd.f32 0.0, %v3253
      %3255 = vmatmul.f32.gmra.mxu0 %v3162
      %v3256 = vpop.f32.mrf.mxu0
      %v3257 = vadd.f32 0.0, %v3256
      %3258 = vmatmul.f32.gmra.mxu0 %v3164
      %v3259 = vpop.f32.mrf.mxu0
      %v3260 = vadd.f32 0.0, %v3259
      %3261 = vmatmul.f32.gmra.mxu0 %v3166
      %v3262 = vpop.f32.mrf.mxu0
      %v3263 = vadd.f32 0.0, %v3262
      %3264 = vmatmul.f32.gmra.mxu0 %v3168
      %v3265 = vpop.f32.mrf.mxu0
      %v3266 = vadd.f32 0.0, %v3265
      %3267 = vmatmul.f32.gmra.mxu0 %v3170
      %v3268 = vpop.f32.mrf.mxu0
      %v3269 = vadd.f32 0.0, %v3268
      %3270 = vmatmul.f32.gmra.mxu0 %v3172
      %v3271 = vpop.f32.mrf.mxu0
      %v3272 = vadd.f32 0.0, %v3271
      %3273 = vmatmul.f32.gmra.mxu0 %v3174
      %v3274 = vpop.f32.mrf.mxu0
      %v3275 = vadd.f32 0.0, %v3274
      %3276 = vdwg.mxu0
      %v3277 = vadd.f32 %v3022, %v3194
      %v3278 = vadd.f32 %v3023, %v3197
      %v3279 = vadd.f32 %v3024, %v3200
      %v3280 = vadd.f32 %v3025, %v3203
      %v3281 = vadd.f32 %v3026, %v3206
      %v3282 = vadd.f32 %v3027, %v3209
      %v3283 = vadd.f32 %v3028, %v3212
      %v3284 = vadd.f32 %v3029, %v3215
      %v3285 = vadd.f32 %v3030, %v3218
      %v3286 = vadd.f32 %v3031, %v3221
      %v3287 = vadd.f32 %v3032, %v3224
      %v3288 = vadd.f32 %v3033, %v3227
      %v3289 = vadd.f32 %v3034, %v3230
      %v3290 = vadd.f32 %v3035, %v3233
      %v3291 = vadd.f32 %v3036, %v3236
      %v3292 = vadd.f32 %v3037, %v3239
      %v3293 = vadd.f32 %v3038, %v3242
      %v3294 = vadd.f32 %v3039, %v3245
      %v3295 = vadd.f32 %v3040, %v3248
      %v3296 = vadd.f32 %v3041, %v3251
      %v3297 = vadd.f32 %v3042, %v3254
      %v3298 = vadd.f32 %v3043, %v3257
      %v3299 = vadd.f32 %v3044, %v3260
      %v3300 = vadd.f32 %v3045, %v3263
      %v3301 = vadd.f32 %v3046, %v3266
      %v3302 = vadd.f32 %v3047, %v3269
      %v3303 = vadd.f32 %v3048, %v3272
      %v3304 = vadd.f32 %v3049, %v3275
      %3305 = vmatpush.msra.mxu0 0.0
      %3306 = vmatpush.msra.mxu0 0.0
      %3307 = vmatpush.msra.mxu0 0.0
      %3308 = vmatpush.msra.mxu0 0.0
      %3309 = vmatpush.msra.mxu0 0.0
      %3310 = vmatpush.msra.mxu0 0.0
      %3311 = vmatpush.msra.mxu0 0.0
      %3312 = vmatpush.msra.mxu0 0.0
      %3313 = vmatpush.msra.mxu0 0.0
      %3314 = vmatpush.msra.mxu0 0.0
      %3315 = vmatpush.msra.mxu0 0.0
      %3316 = vmatpush.msra.mxu0 0.0
      %3317 = vmatpush.msra.mxu0 0.0
      %3318 = vmatpush.msra.mxu0 0.0
      %3319 = vmatpush.msra.mxu0 0.0
      %3320 = vmatpush.msra.mxu0 %v1906
      %3321 = vmatmul.f32.gmra.mxu0 %v570
      %v3322 = vpop.f32.mrf.mxu0
      %v3323 = vadd.f32 0.0, %v3322
      %3324 = vmatmul.f32.gmra.mxu0 %v573
      %v3325 = vpop.f32.mrf.mxu0
      %v3326 = vadd.f32 0.0, %v3325
      %3327 = vmatmul.f32.gmra.mxu0 %v576
      %v3328 = vpop.f32.mrf.mxu0
      %v3329 = vadd.f32 0.0, %v3328
      %3330 = vmatmul.f32.gmra.mxu0 %v579
      %v3331 = vpop.f32.mrf.mxu0
      %v3332 = vadd.f32 0.0, %v3331
      %3333 = vmatmul.f32.gmra.mxu0 %v582
      %v3334 = vpop.f32.mrf.mxu0
      %v3335 = vadd.f32 0.0, %v3334
      %3336 = vmatmul.f32.gmra.mxu0 %v585
      %v3337 = vpop.f32.mrf.mxu0
      %v3338 = vadd.f32 0.0, %v3337
      %3339 = vmatmul.f32.gmra.mxu0 %v588
      %v3340 = vpop.f32.mrf.mxu0
      %v3341 = vadd.f32 0.0, %v3340
      %3342 = vmatmul.f32.gmra.mxu0 %v591
      %v3343 = vpop.f32.mrf.mxu0
      %v3344 = vadd.f32 0.0, %v3343
      %3345 = vmatmul.f32.gmra.mxu0 %v594
      %v3346 = vpop.f32.mrf.mxu0
      %v3347 = vadd.f32 0.0, %v3346
      %3348 = vmatmul.f32.gmra.mxu0 %v597
      %v3349 = vpop.f32.mrf.mxu0
      %v3350 = vadd.f32 0.0, %v3349
      %3351 = vmatmul.f32.gmra.mxu0 %v600
      %v3352 = vpop.f32.mrf.mxu0
      %v3353 = vadd.f32 0.0, %v3352
      %3354 = vmatmul.f32.gmra.mxu0 %v603
      %v3355 = vpop.f32.mrf.mxu0
      %v3356 = vadd.f32 0.0, %v3355
      %3357 = vmatmul.f32.gmra.mxu0 %v606
      %v3358 = vpop.f32.mrf.mxu0
      %v3359 = vadd.f32 0.0, %v3358
      %3360 = vmatmul.f32.gmra.mxu0 %v609
      %v3361 = vpop.f32.mrf.mxu0
      %v3362 = vadd.f32 0.0, %v3361
      %3363 = vmatmul.f32.gmra.mxu0 %v612
      %v3364 = vpop.f32.mrf.mxu0
      %v3365 = vadd.f32 0.0, %v3364
      %3366 = vmatmul.f32.gmra.mxu0 %v615
      %v3367 = vpop.f32.mrf.mxu0
      %v3368 = vadd.f32 0.0, %v3367
      %3369 = vmatmul.f32.gmra.mxu0 %v618
      %v3370 = vpop.f32.mrf.mxu0
      %v3371 = vadd.f32 0.0, %v3370
      %3372 = vmatmul.f32.gmra.mxu0 %v621
      %v3373 = vpop.f32.mrf.mxu0
      %v3374 = vadd.f32 0.0, %v3373
      %3375 = vmatmul.f32.gmra.mxu0 %v624
      %v3376 = vpop.f32.mrf.mxu0
      %v3377 = vadd.f32 0.0, %v3376
      %3378 = vmatmul.f32.gmra.mxu0 %v627
      %v3379 = vpop.f32.mrf.mxu0
      %v3380 = vadd.f32 0.0, %v3379
      %3381 = vmatmul.f32.gmra.mxu0 %v630
      %v3382 = vpop.f32.mrf.mxu0
      %v3383 = vadd.f32 0.0, %v3382
      %3384 = vmatmul.f32.gmra.mxu0 %v633
      %v3385 = vpop.f32.mrf.mxu0
      %v3386 = vadd.f32 0.0, %v3385
      %3387 = vmatmul.f32.gmra.mxu0 %v636
      %v3388 = vpop.f32.mrf.mxu0
      %v3389 = vadd.f32 0.0, %v3388
      %3390 = vmatmul.f32.gmra.mxu0 %v639
      %v3391 = vpop.f32.mrf.mxu0
      %v3392 = vadd.f32 0.0, %v3391
      %3393 = vmatmul.f32.gmra.mxu0 %v2040
      %v3394 = vpop.f32.mrf.mxu0
      %v3395 = vadd.f32 0.0, %v3394
      %3396 = vmatmul.f32.gmra.mxu0 %v2043
      %v3397 = vpop.f32.mrf.mxu0
      %v3398 = vadd.f32 0.0, %v3397
      %3399 = vmatmul.f32.gmra.mxu0 %v2046
      %v3400 = vpop.f32.mrf.mxu0
      %v3401 = vadd.f32 0.0, %v3400
      %3402 = vmatmul.f32.gmra.mxu0 %v2049
      %v3403 = vpop.f32.mrf.mxu0
      %v3404 = vadd.f32 0.0, %v3403
      %3405 = vdwg.mxu0
      %v3406 = vadd.f32 %v3277, %v3323
      %v3407 = vadd.f32 %v3278, %v3326
      %v3408 = vadd.f32 %v3279, %v3329
      %v3409 = vadd.f32 %v3280, %v3332
      %v3410 = vadd.f32 %v3281, %v3335
      %v3411 = vadd.f32 %v3282, %v3338
      %v3412 = vadd.f32 %v3283, %v3341
      %v3413 = vadd.f32 %v3284, %v3344
      %v3414 = vadd.f32 %v3285, %v3347
      %v3415 = vadd.f32 %v3286, %v3350
      %v3416 = vadd.f32 %v3287, %v3353
      %v3417 = vadd.f32 %v3288, %v3356
      %v3418 = vadd.f32 %v3289, %v3359
      %v3419 = vadd.f32 %v3290, %v3362
      %v3420 = vadd.f32 %v3291, %v3365
      %v3421 = vadd.f32 %v3292, %v3368
      %v3422 = vadd.f32 %v3293, %v3371
      %v3423 = vadd.f32 %v3294, %v3374
      %v3424 = vadd.f32 %v3295, %v3377
      %v3425 = vadd.f32 %v3296, %v3380
      %v3426 = vadd.f32 %v3297, %v3383
      %v3427 = vadd.f32 %v3298, %v3386
      %v3428 = vadd.f32 %v3299, %v3389
      %v3429 = vadd.f32 %v3300, %v3392
      %v3430 = vadd.f32 %v3301, %v3395
      %v3431 = vadd.f32 %v3302, %v3398
      %v3432 = vadd.f32 %v3303, %v3401
      %v3433 = vadd.f32 %v3304, %v3404
      %3434 = vmatpush.msra.mxu0 0.0
      %3435 = vmatpush.msra.mxu0 0.0
      %3436 = vmatpush.msra.mxu0 0.0
      %3437 = vmatpush.msra.mxu0 0.0
      %3438 = vmatpush.msra.mxu0 0.0
      %3439 = vmatpush.msra.mxu0 0.0
      %3440 = vmatpush.msra.mxu0 0.0
      %3441 = vmatpush.msra.mxu0 0.0
      %3442 = vmatpush.msra.mxu0 0.0
      %3443 = vmatpush.msra.mxu0 0.0
      %3444 = vmatpush.msra.mxu0 0.0
      %3445 = vmatpush.msra.mxu0 0.0
      %3446 = vmatpush.msra.mxu0 0.0
      %3447 = vmatpush.msra.mxu0 0.0
      %3448 = vmatpush.msra.mxu0 0.0
      %3449 = vmatpush.msra.mxu0 %v2052
      %3450 = vmatmul.f32.gmra.mxu0 %v1015
      %v3451 = vpop.f32.mrf.mxu0
      %v3452 = vadd.f32 0.0, %v3451
      %3453 = vmatmul.f32.gmra.mxu0 %v1017
      %v3454 = vpop.f32.mrf.mxu0
      %v3455 = vadd.f32 0.0, %v3454
      %3456 = vmatmul.f32.gmra.mxu0 %v1019
      %v3457 = vpop.f32.mrf.mxu0
      %v3458 = vadd.f32 0.0, %v3457
      %3459 = vmatmul.f32.gmra.mxu0 %v1021
      %v3460 = vpop.f32.mrf.mxu0
      %v3461 = vadd.f32 0.0, %v3460
      %3462 = vmatmul.f32.gmra.mxu0 %v1023
      %v3463 = vpop.f32.mrf.mxu0
      %v3464 = vadd.f32 0.0, %v3463
      %3465 = vmatmul.f32.gmra.mxu0 %v1025
      %v3466 = vpop.f32.mrf.mxu0
      %v3467 = vadd.f32 0.0, %v3466
      %3468 = vmatmul.f32.gmra.mxu0 %v1027
      %v3469 = vpop.f32.mrf.mxu0
      %v3470 = vadd.f32 0.0, %v3469
      %3471 = vmatmul.f32.gmra.mxu0 %v1029
      %v3472 = vpop.f32.mrf.mxu0
      %v3473 = vadd.f32 0.0, %v3472
      %3474 = vmatmul.f32.gmra.mxu0 %v1031
      %v3475 = vpop.f32.mrf.mxu0
      %v3476 = vadd.f32 0.0, %v3475
      %3477 = vmatmul.f32.gmra.mxu0 %v1033
      %v3478 = vpop.f32.mrf.mxu0
      %v3479 = vadd.f32 0.0, %v3478
      %3480 = vmatmul.f32.gmra.mxu0 %v1035
      %v3481 = vpop.f32.mrf.mxu0
      %v3482 = vadd.f32 0.0, %v3481
      %3483 = vmatmul.f32.gmra.mxu0 %v1037
      %v3484 = vpop.f32.mrf.mxu0
      %v3485 = vadd.f32 0.0, %v3484
      %3486 = vmatmul.f32.gmra.mxu0 %v1039
      %v3487 = vpop.f32.mrf.mxu0
      %v3488 = vadd.f32 0.0, %v3487
      %3489 = vmatmul.f32.gmra.mxu0 %v1041
      %v3490 = vpop.f32.mrf.mxu0
      %v3491 = vadd.f32 0.0, %v3490
      %3492 = vmatmul.f32.gmra.mxu0 %v1043
      %v3493 = vpop.f32.mrf.mxu0
      %v3494 = vadd.f32 0.0, %v3493
      %3495 = vmatmul.f32.gmra.mxu0 %v1045
      %v3496 = vpop.f32.mrf.mxu0
      %v3497 = vadd.f32 0.0, %v3496
      %3498 = vmatmul.f32.gmra.mxu0 %v1047
      %v3499 = vpop.f32.mrf.mxu0
      %v3500 = vadd.f32 0.0, %v3499
      %3501 = vmatmul.f32.gmra.mxu0 %v1049
      %v3502 = vpop.f32.mrf.mxu0
      %v3503 = vadd.f32 0.0, %v3502
      %3504 = vmatmul.f32.gmra.mxu0 %v1051
      %v3505 = vpop.f32.mrf.mxu0
      %v3506 = vadd.f32 0.0, %v3505
      %3507 = vmatmul.f32.gmra.mxu0 %v1053
      %v3508 = vpop.f32.mrf.mxu0
      %v3509 = vadd.f32 0.0, %v3508
      %3510 = vmatmul.f32.gmra.mxu0 %v1055
      %v3511 = vpop.f32.mrf.mxu0
      %v3512 = vadd.f32 0.0, %v3511
      %3513 = vmatmul.f32.gmra.mxu0 %v1057
      %v3514 = vpop.f32.mrf.mxu0
      %v3515 = vadd.f32 0.0, %v3514
      %3516 = vmatmul.f32.gmra.mxu0 %v1059
      %v3517 = vpop.f32.mrf.mxu0
      %v3518 = vadd.f32 0.0, %v3517
      %3519 = vmatmul.f32.gmra.mxu0 %v1061
      %v3520 = vpop.f32.mrf.mxu0
      %v3521 = vadd.f32 0.0, %v3520
      %3522 = vmatmul.f32.gmra.mxu0 %v2195
      %v3523 = vpop.f32.mrf.mxu0
      %v3524 = vadd.f32 0.0, %v3523
      %3525 = vmatmul.f32.gmra.mxu0 %v2197
      %v3526 = vpop.f32.mrf.mxu0
      %v3527 = vadd.f32 0.0, %v3526
      %3528 = vmatmul.f32.gmra.mxu0 %v2199
      %v3529 = vpop.f32.mrf.mxu0
      %v3530 = vadd.f32 0.0, %v3529
      %3531 = vmatmul.f32.gmra.mxu0 %v2201
      %v3532 = vpop.f32.mrf.mxu0
      %v3533 = vadd.f32 0.0, %v3532
      %3534 = vdwg.mxu0
      %v3535 = vadd.f32 %v3406, %v3452
      %v3536 = vadd.f32 %v3407, %v3455
      %v3537 = vadd.f32 %v3408, %v3458
      %v3538 = vadd.f32 %v3409, %v3461
      %v3539 = vadd.f32 %v3410, %v3464
      %v3540 = vadd.f32 %v3411, %v3467
      %v3541 = vadd.f32 %v3412, %v3470
      %v3542 = vadd.f32 %v3413, %v3473
      %v3543 = vadd.f32 %v3414, %v3476
      %v3544 = vadd.f32 %v3415, %v3479
      %v3545 = vadd.f32 %v3416, %v3482
      %v3546 = vadd.f32 %v3417, %v3485
      %v3547 = vadd.f32 %v3418, %v3488
      %v3548 = vadd.f32 %v3419, %v3491
      %v3549 = vadd.f32 %v3420, %v3494
      %v3550 = vadd.f32 %v3421, %v3497
      %v3551 = vadd.f32 %v3422, %v3500
      %v3552 = vadd.f32 %v3423, %v3503
      %v3553 = vadd.f32 %v3424, %v3506
      %v3554 = vadd.f32 %v3425, %v3509
      %v3555 = vadd.f32 %v3426, %v3512
      %v3556 = vadd.f32 %v3427, %v3515
      %v3557 = vadd.f32 %v3428, %v3518
      %v3558 = vadd.f32 %v3429, %v3521
      %v3559 = vadd.f32 %v3430, %v3524
      %v3560 = vadd.f32 %v3431, %v3527
      %v3561 = vadd.f32 %v3432, %v3530
      %v3562 = vadd.f32 %v3433, %v3533
      %v3564 = vrot.slane %v468, 1
      %v3565 = vrot.slane %v469, 1
      %v3566 = vsel %vm941, %v3564, %v3565
      %v3567 = vrot.slane %v470, 1
      %v3568 = vsel %vm941, %v3565, %v3567
      %v3569 = vrot.slane %v471, 1
      %v3570 = vsel %vm941, %v3567, %v3569
      %v3571 = vrot.slane %v472, 1
      %v3572 = vsel %vm941, %v3569, %v3571
      %v3573 = vsel %vm556, %v3566, 0
      %v3575 = vsel %vm556, %v3568, 0
      %v3577 = vsel %vm556, %v3570, 0
      %v3579 = vsel %vm556, %v3572, 0
      %3581 = vmatpush.msra.mxu0 0.0
      %3582 = vmatpush.msra.mxu0 0.0
      %3583 = vmatpush.msra.mxu0 0.0
      %3584 = vmatpush.msra.mxu0 0.0
      %3585 = vmatpush.msra.mxu0 0.0
      %3586 = vmatpush.msra.mxu0 0.0
      %3587 = vmatpush.msra.mxu0 0.0
      %3588 = vmatpush.msra.mxu0 0.0
      %3589 = vmatpush.msra.mxu0 0.0
      %3590 = vmatpush.msra.mxu0 0.0
      %3591 = vmatpush.msra.mxu0 0.0
      %3592 = vmatpush.msra.mxu0 0.0
      %3593 = vmatpush.msra.mxu0 0.0
      %3594 = vmatpush.msra.mxu0 0.0
      %3595 = vmatpush.msra.mxu0 0.0
      %3596 = vmatpush.msra.mxu0 %v2204
      %3597 = vmatmul.f32.gmra.mxu0 %v2615
      %v3598 = vpop.f32.mrf.mxu0
      %v3599 = vadd.f32 0.0, %v3598
      %3600 = vmatmul.f32.gmra.mxu0 %v2617
      %v3601 = vpop.f32.mrf.mxu0
      %v3602 = vadd.f32 0.0, %v3601
      %3603 = vmatmul.f32.gmra.mxu0 %v2619
      %v3604 = vpop.f32.mrf.mxu0
      %v3605 = vadd.f32 0.0, %v3604
      %3606 = vmatmul.f32.gmra.mxu0 %v2621
      %v3607 = vpop.f32.mrf.mxu0
      %v3608 = vadd.f32 0.0, %v3607
      %3609 = vmatmul.f32.gmra.mxu0 %v2623
      %v3610 = vpop.f32.mrf.mxu0
      %v3611 = vadd.f32 0.0, %v3610
      %3612 = vmatmul.f32.gmra.mxu0 %v2625
      %v3613 = vpop.f32.mrf.mxu0
      %v3614 = vadd.f32 0.0, %v3613
      %3615 = vmatmul.f32.gmra.mxu0 %v2627
      %v3616 = vpop.f32.mrf.mxu0
      %v3617 = vadd.f32 0.0, %v3616
      %3618 = vmatmul.f32.gmra.mxu0 %v2629
      %v3619 = vpop.f32.mrf.mxu0
      %v3620 = vadd.f32 0.0, %v3619
      %3621 = vmatmul.f32.gmra.mxu0 %v2631
      %v3622 = vpop.f32.mrf.mxu0
      %v3623 = vadd.f32 0.0, %v3622
      %3624 = vmatmul.f32.gmra.mxu0 %v2633
      %v3625 = vpop.f32.mrf.mxu0
      %v3626 = vadd.f32 0.0, %v3625
      %3627 = vmatmul.f32.gmra.mxu0 %v2635
      %v3628 = vpop.f32.mrf.mxu0
      %v3629 = vadd.f32 0.0, %v3628
      %3630 = vmatmul.f32.gmra.mxu0 %v2637
      %v3631 = vpop.f32.mrf.mxu0
      %v3632 = vadd.f32 0.0, %v3631
      %3633 = vmatmul.f32.gmra.mxu0 %v2639
      %v3634 = vpop.f32.mrf.mxu0
      %v3635 = vadd.f32 0.0, %v3634
      %3636 = vmatmul.f32.gmra.mxu0 %v2641
      %v3637 = vpop.f32.mrf.mxu0
      %v3638 = vadd.f32 0.0, %v3637
      %3639 = vmatmul.f32.gmra.mxu0 %v2643
      %v3640 = vpop.f32.mrf.mxu0
      %v3641 = vadd.f32 0.0, %v3640
      %3642 = vmatmul.f32.gmra.mxu0 %v2645
      %v3643 = vpop.f32.mrf.mxu0
      %v3644 = vadd.f32 0.0, %v3643
      %3645 = vmatmul.f32.gmra.mxu0 %v2647
      %v3646 = vpop.f32.mrf.mxu0
      %v3647 = vadd.f32 0.0, %v3646
      %3648 = vmatmul.f32.gmra.mxu0 %v2649
      %v3649 = vpop.f32.mrf.mxu0
      %v3650 = vadd.f32 0.0, %v3649
      %3651 = vmatmul.f32.gmra.mxu0 %v2651
      %v3652 = vpop.f32.mrf.mxu0
      %v3653 = vadd.f32 0.0, %v3652
      %3654 = vmatmul.f32.gmra.mxu0 %v2653
      %v3655 = vpop.f32.mrf.mxu0
      %v3656 = vadd.f32 0.0, %v3655
      %3657 = vmatmul.f32.gmra.mxu0 %v2655
      %v3658 = vpop.f32.mrf.mxu0
      %v3659 = vadd.f32 0.0, %v3658
      %3660 = vmatmul.f32.gmra.mxu0 %v2657
      %v3661 = vpop.f32.mrf.mxu0
      %v3662 = vadd.f32 0.0, %v3661
      %3663 = vmatmul.f32.gmra.mxu0 %v2659
      %v3664 = vpop.f32.mrf.mxu0
      %v3665 = vadd.f32 0.0, %v3664
      %3666 = vmatmul.f32.gmra.mxu0 %v2661
      %v3667 = vpop.f32.mrf.mxu0
      %v3668 = vadd.f32 0.0, %v3667
      %3669 = vmatmul.f32.gmra.mxu0 %v3573
      %v3670 = vpop.f32.mrf.mxu0
      %v3671 = vadd.f32 0.0, %v3670
      %3672 = vmatmul.f32.gmra.mxu0 %v3575
      %v3673 = vpop.f32.mrf.mxu0
      %v3674 = vadd.f32 0.0, %v3673
      %3675 = vmatmul.f32.gmra.mxu0 %v3577
      %v3676 = vpop.f32.mrf.mxu0
      %v3677 = vadd.f32 0.0, %v3676
      %3678 = vmatmul.f32.gmra.mxu0 %v3579
      %v3679 = vpop.f32.mrf.mxu0
      %v3680 = vadd.f32 0.0, %v3679
      %3681 = vdwg.mxu0
      %v3682 = vadd.f32 %v3535, %v3599
      %v3683 = vadd.f32 %v3536, %v3602
      %v3684 = vadd.f32 %v3537, %v3605
      %v3685 = vadd.f32 %v3538, %v3608
      %v3686 = vadd.f32 %v3539, %v3611
      %v3687 = vadd.f32 %v3540, %v3614
      %v3688 = vadd.f32 %v3541, %v3617
      %v3689 = vadd.f32 %v3542, %v3620
      %v3690 = vadd.f32 %v3543, %v3623
      %v3691 = vadd.f32 %v3544, %v3626
      %v3692 = vadd.f32 %v3545, %v3629
      %v3693 = vadd.f32 %v3546, %v3632
      %v3694 = vadd.f32 %v3547, %v3635
      %v3695 = vadd.f32 %v3548, %v3638
      %v3696 = vadd.f32 %v3549, %v3641
      %v3697 = vadd.f32 %v3550, %v3644
      %v3698 = vadd.f32 %v3551, %v3647
      %v3699 = vadd.f32 %v3552, %v3650
      %v3700 = vadd.f32 %v3553, %v3653
      %v3701 = vadd.f32 %v3554, %v3656
      %v3702 = vadd.f32 %v3555, %v3659
      %v3703 = vadd.f32 %v3556, %v3662
      %v3704 = vadd.f32 %v3557, %v3665
      %v3705 = vadd.f32 %v3558, %v3668
      %v3706 = vadd.f32 %v3559, %v3671
      %v3707 = vadd.f32 %v3560, %v3674
      %v3708 = vadd.f32 %v3561, %v3677
      %v3709 = vadd.f32 %v3562, %v3680
      %v3710 = vmax.f32 %v2307, %v3682
      %v3711 = vmax.f32 %v2308, %v3683
      %v3712 = vmax.f32 %v2309, %v3684
      %v3713 = vmax.f32 %v2310, %v3685
      %v3714 = vmax.f32 %v2311, %v3686
      %v3715 = vmax.f32 %v2312, %v3687
      %v3716 = vmax.f32 %v2313, %v3688
      %v3717 = vmax.f32 %v2314, %v3689
      %v3718 = vmax.f32 %v2315, %v3690
      %v3719 = vmax.f32 %v2316, %v3691
      %v3720 = vmax.f32 %v2317, %v3692
      %v3721 = vmax.f32 %v2318, %v3693
      %v3722 = vmax.f32 %v2319, %v3694
      %v3723 = vmax.f32 %v2320, %v3695
      %v3724 = vmax.f32 %v2321, %v3696
      %v3725 = vmax.f32 %v2322, %v3697
      %v3726 = vmax.f32 %v2323, %v3698
      %v3727 = vmax.f32 %v2324, %v3699
      %v3728 = vmax.f32 %v2325, %v3700
      %v3729 = vmax.f32 %v2326, %v3701
      %v3730 = vmax.f32 %v2327, %v3702
      %v3731 = vmax.f32 %v2328, %v3703
      %v3732 = vmax.f32 %v2329, %v3704
      %v3733 = vmax.f32 %v2330, %v3705
      %v3734 = vmax.f32 %v2331, %v3706
      %v3735 = vmax.f32 %v2332, %v3707
      %v3736 = vmax.f32 %v2333, %v3708
      %v3737 = vmax.f32 %v2334, %v3709
      %3738 = vmatpush.msra.mxu0 0.0
      %3739 = vmatpush.msra.mxu0 0.0
      %3740 = vmatpush.msra.mxu0 0.0
      %3741 = vmatpush.msra.mxu0 0.0
      %3742 = vmatpush.msra.mxu0 0.0
      %3743 = vmatpush.msra.mxu0 0.0
      %3744 = vmatpush.msra.mxu0 0.0
      %3745 = vmatpush.msra.mxu0 0.0
      %3746 = vmatpush.msra.mxu0 0.0
      %3747 = vmatpush.msra.mxu0 0.0
      %3748 = vmatpush.msra.mxu0 0.0
      %3749 = vmatpush.msra.mxu0 0.0
      %3750 = vmatpush.msra.mxu0 0.0
      %3751 = vmatpush.msra.mxu0 0.0
      %3752 = vmatpush.msra.mxu0 0.0
      %3753 = vmatpush.msra.mxu0 %v643
      %3754 = vmatmul.f32.gmra.mxu0 %v1416
      %v3755 = vpop.f32.mrf.mxu0
      %v3756 = vadd.f32 0.0, %v3755
      %3757 = vmatmul.f32.gmra.mxu0 %v1419
      %v3758 = vpop.f32.mrf.mxu0
      %v3759 = vadd.f32 0.0, %v3758
      %3760 = vmatmul.f32.gmra.mxu0 %v1422
      %v3761 = vpop.f32.mrf.mxu0
      %v3762 = vadd.f32 0.0, %v3761
      %3763 = vmatmul.f32.gmra.mxu0 %v1425
      %v3764 = vpop.f32.mrf.mxu0
      %v3765 = vadd.f32 0.0, %v3764
      %3766 = vmatmul.f32.gmra.mxu0 %v1428
      %v3767 = vpop.f32.mrf.mxu0
      %v3768 = vadd.f32 0.0, %v3767
      %3769 = vmatmul.f32.gmra.mxu0 %v1431
      %v3770 = vpop.f32.mrf.mxu0
      %v3771 = vadd.f32 0.0, %v3770
      %3772 = vmatmul.f32.gmra.mxu0 %v1434
      %v3773 = vpop.f32.mrf.mxu0
      %v3774 = vadd.f32 0.0, %v3773
      %3775 = vmatmul.f32.gmra.mxu0 %v1437
      %v3776 = vpop.f32.mrf.mxu0
      %v3777 = vadd.f32 0.0, %v3776
      %3778 = vmatmul.f32.gmra.mxu0 %v1440
      %v3779 = vpop.f32.mrf.mxu0
      %v3780 = vadd.f32 0.0, %v3779
      %3781 = vmatmul.f32.gmra.mxu0 %v1443
      %v3782 = vpop.f32.mrf.mxu0
      %v3783 = vadd.f32 0.0, %v3782
      %3784 = vmatmul.f32.gmra.mxu0 %v1446
      %v3785 = vpop.f32.mrf.mxu0
      %v3786 = vadd.f32 0.0, %v3785
      %3787 = vmatmul.f32.gmra.mxu0 %v1449
      %v3788 = vpop.f32.mrf.mxu0
      %v3789 = vadd.f32 0.0, %v3788
      %3790 = vmatmul.f32.gmra.mxu0 %v1452
      %v3791 = vpop.f32.mrf.mxu0
      %v3792 = vadd.f32 0.0, %v3791
      %3793 = vmatmul.f32.gmra.mxu0 %v1455
      %v3794 = vpop.f32.mrf.mxu0
      %v3795 = vadd.f32 0.0, %v3794
      %3796 = vmatmul.f32.gmra.mxu0 %v1458
      %v3797 = vpop.f32.mrf.mxu0
      %v3798 = vadd.f32 0.0, %v3797
      %3799 = vmatmul.f32.gmra.mxu0 %v1461
      %v3800 = vpop.f32.mrf.mxu0
      %v3801 = vadd.f32 0.0, %v3800
      %3802 = vmatmul.f32.gmra.mxu0 %v1464
      %v3803 = vpop.f32.mrf.mxu0
      %v3804 = vadd.f32 0.0, %v3803
      %3805 = vmatmul.f32.gmra.mxu0 %v1467
      %v3806 = vpop.f32.mrf.mxu0
      %v3807 = vadd.f32 0.0, %v3806
      %3808 = vmatmul.f32.gmra.mxu0 %v1470
      %v3809 = vpop.f32.mrf.mxu0
      %v3810 = vadd.f32 0.0, %v3809
      %3811 = vmatmul.f32.gmra.mxu0 %v1473
      %v3812 = vpop.f32.mrf.mxu0
      %v3813 = vadd.f32 0.0, %v3812
      %3814 = vmatmul.f32.gmra.mxu0 %v1476
      %v3815 = vpop.f32.mrf.mxu0
      %v3816 = vadd.f32 0.0, %v3815
      %3817 = vmatmul.f32.gmra.mxu0 %v1479
      %v3818 = vpop.f32.mrf.mxu0
      %v3819 = vadd.f32 0.0, %v3818
      %3820 = vmatmul.f32.gmra.mxu0 %v1482
      %v3821 = vpop.f32.mrf.mxu0
      %v3822 = vadd.f32 0.0, %v3821
      %3823 = vmatmul.f32.gmra.mxu0 %v1485
      %v3824 = vpop.f32.mrf.mxu0
      %v3825 = vadd.f32 0.0, %v3824
      %3826 = vmatmul.f32.gmra.mxu0 %v1488
      %v3827 = vpop.f32.mrf.mxu0
      %v3828 = vadd.f32 0.0, %v3827
      %3829 = vmatmul.f32.gmra.mxu0 %v1491
      %v3830 = vpop.f32.mrf.mxu0
      %v3831 = vadd.f32 0.0, %v3830
      %3832 = vmatmul.f32.gmra.mxu0 %v1494
      %v3833 = vpop.f32.mrf.mxu0
      %v3834 = vadd.f32 0.0, %v3833
      %3835 = vmatmul.f32.gmra.mxu0 %v1497
      %v3836 = vpop.f32.mrf.mxu0
      %v3837 = vadd.f32 0.0, %v3836
      %3838 = vdwg.mxu0
      %3839 = vmatpush.msra.mxu0 0.0
      %3840 = vmatpush.msra.mxu0 0.0
      %3841 = vmatpush.msra.mxu0 0.0
      %3842 = vmatpush.msra.mxu0 0.0
      %3843 = vmatpush.msra.mxu0 0.0
      %3844 = vmatpush.msra.mxu0 0.0
      %3845 = vmatpush.msra.mxu0 0.0
      %3846 = vmatpush.msra.mxu0 0.0
      %3847 = vmatpush.msra.mxu0 0.0
      %3848 = vmatpush.msra.mxu0 0.0
      %3849 = vmatpush.msra.mxu0 0.0
      %3850 = vmatpush.msra.mxu0 0.0
      %3851 = vmatpush.msra.mxu0 0.0
      %3852 = vmatpush.msra.mxu0 0.0
      %3853 = vmatpush.msra.mxu0 0.0
      %3854 = vmatpush.msra.mxu0 %v831
      %3855 = vmatmul.f32.gmra.mxu0 %v1198
      %v3856 = vpop.f32.mrf.mxu0
      %v3857 = vadd.f32 %v3756, %v3856
      %3858 = vmatmul.f32.gmra.mxu0 %v1201
      %v3859 = vpop.f32.mrf.mxu0
      %v3860 = vadd.f32 %v3759, %v3859
      %3861 = vmatmul.f32.gmra.mxu0 %v1204
      %v3862 = vpop.f32.mrf.mxu0
      %v3863 = vadd.f32 %v3762, %v3862
      %3864 = vmatmul.f32.gmra.mxu0 %v1207
      %v3865 = vpop.f32.mrf.mxu0
      %v3866 = vadd.f32 %v3765, %v3865
      %3867 = vmatmul.f32.gmra.mxu0 %v1210
      %v3868 = vpop.f32.mrf.mxu0
      %v3869 = vadd.f32 %v3768, %v3868
      %3870 = vmatmul.f32.gmra.mxu0 %v1213
      %v3871 = vpop.f32.mrf.mxu0
      %v3872 = vadd.f32 %v3771, %v3871
      %3873 = vmatmul.f32.gmra.mxu0 %v1216
      %v3874 = vpop.f32.mrf.mxu0
      %v3875 = vadd.f32 %v3774, %v3874
      %3876 = vmatmul.f32.gmra.mxu0 %v1219
      %v3877 = vpop.f32.mrf.mxu0
      %v3878 = vadd.f32 %v3777, %v3877
      %3879 = vmatmul.f32.gmra.mxu0 %v1222
      %v3880 = vpop.f32.mrf.mxu0
      %v3881 = vadd.f32 %v3780, %v3880
      %3882 = vmatmul.f32.gmra.mxu0 %v1225
      %v3883 = vpop.f32.mrf.mxu0
      %v3884 = vadd.f32 %v3783, %v3883
      %3885 = vmatmul.f32.gmra.mxu0 %v1228
      %v3886 = vpop.f32.mrf.mxu0
      %v3887 = vadd.f32 %v3786, %v3886
      %3888 = vmatmul.f32.gmra.mxu0 %v1231
      %v3889 = vpop.f32.mrf.mxu0
      %v3890 = vadd.f32 %v3789, %v3889
      %3891 = vmatmul.f32.gmra.mxu0 %v1234
      %v3892 = vpop.f32.mrf.mxu0
      %v3893 = vadd.f32 %v3792, %v3892
      %3894 = vmatmul.f32.gmra.mxu0 %v1237
      %v3895 = vpop.f32.mrf.mxu0
      %v3896 = vadd.f32 %v3795, %v3895
      %3897 = vmatmul.f32.gmra.mxu0 %v1240
      %v3898 = vpop.f32.mrf.mxu0
      %v3899 = vadd.f32 %v3798, %v3898
      %3900 = vmatmul.f32.gmra.mxu0 %v1243
      %v3901 = vpop.f32.mrf.mxu0
      %v3902 = vadd.f32 %v3801, %v3901
      %3903 = vmatmul.f32.gmra.mxu0 %v1246
      %v3904 = vpop.f32.mrf.mxu0
      %v3905 = vadd.f32 %v3804, %v3904
      %3906 = vmatmul.f32.gmra.mxu0 %v1249
      %v3907 = vpop.f32.mrf.mxu0
      %v3908 = vadd.f32 %v3807, %v3907
      %3909 = vmatmul.f32.gmra.mxu0 %v1252
      %v3910 = vpop.f32.mrf.mxu0
      %v3911 = vadd.f32 %v3810, %v3910
      %3912 = vmatmul.f32.gmra.mxu0 %v1255
      %v3913 = vpop.f32.mrf.mxu0
      %v3914 = vadd.f32 %v3813, %v3913
      %3915 = vmatmul.f32.gmra.mxu0 %v1258
      %v3916 = vpop.f32.mrf.mxu0
      %v3917 = vadd.f32 %v3816, %v3916
      %3918 = vmatmul.f32.gmra.mxu0 %v1261
      %v3919 = vpop.f32.mrf.mxu0
      %v3920 = vadd.f32 %v3819, %v3919
      %3921 = vmatmul.f32.gmra.mxu0 %v1264
      %v3922 = vpop.f32.mrf.mxu0
      %v3923 = vadd.f32 %v3822, %v3922
      %3924 = vmatmul.f32.gmra.mxu0 %v1267
      %v3925 = vpop.f32.mrf.mxu0
      %v3926 = vadd.f32 %v3825, %v3925
      %3927 = vmatmul.f32.gmra.mxu0 %v1270
      %v3928 = vpop.f32.mrf.mxu0
      %v3929 = vadd.f32 %v3828, %v3928
      %3930 = vmatmul.f32.gmra.mxu0 %v1273
      %v3931 = vpop.f32.mrf.mxu0
      %v3932 = vadd.f32 %v3831, %v3931
      %3933 = vmatmul.f32.gmra.mxu0 %v1276
      %v3934 = vpop.f32.mrf.mxu0
      %v3935 = vadd.f32 %v3834, %v3934
      %3936 = vmatmul.f32.gmra.mxu0 %v1279
      %v3937 = vpop.f32.mrf.mxu0
      %v3938 = vadd.f32 %v3837, %v3937
      %3939 = vdwg.mxu0
      %3940 = vmatpush.msra.mxu0 0.0
      %3941 = vmatpush.msra.mxu0 0.0
      %3942 = vmatpush.msra.mxu0 0.0
      %3943 = vmatpush.msra.mxu0 0.0
      %3944 = vmatpush.msra.mxu0 0.0
      %3945 = vmatpush.msra.mxu0 0.0
      %3946 = vmatpush.msra.mxu0 0.0
      %3947 = vmatpush.msra.mxu0 0.0
      %3948 = vmatpush.msra.mxu0 0.0
      %3949 = vmatpush.msra.mxu0 0.0
      %3950 = vmatpush.msra.mxu0 0.0
      %3951 = vmatpush.msra.mxu0 0.0
      %3952 = vmatpush.msra.mxu0 0.0
      %3953 = vmatpush.msra.mxu0 0.0
      %3954 = vmatpush.msra.mxu0 0.0
      %3955 = vmatpush.msra.mxu0 %v1064
      %3956 = vmatmul.f32.gmra.mxu0 %v1703
      %v3957 = vpop.f32.mrf.mxu0
      %v3958 = vadd.f32 0.0, %v3957
      %3959 = vmatmul.f32.gmra.mxu0 %v1705
      %v3960 = vpop.f32.mrf.mxu0
      %v3961 = vadd.f32 0.0, %v3960
      %3962 = vmatmul.f32.gmra.mxu0 %v1707
      %v3963 = vpop.f32.mrf.mxu0
      %v3964 = vadd.f32 0.0, %v3963
      %3965 = vmatmul.f32.gmra.mxu0 %v1709
      %v3966 = vpop.f32.mrf.mxu0
      %v3967 = vadd.f32 0.0, %v3966
      %3968 = vmatmul.f32.gmra.mxu0 %v1711
      %v3969 = vpop.f32.mrf.mxu0
      %v3970 = vadd.f32 0.0, %v3969
      %3971 = vmatmul.f32.gmra.mxu0 %v1713
      %v3972 = vpop.f32.mrf.mxu0
      %v3973 = vadd.f32 0.0, %v3972
      %3974 = vmatmul.f32.gmra.mxu0 %v1715
      %v3975 = vpop.f32.mrf.mxu0
      %v3976 = vadd.f32 0.0, %v3975
      %3977 = vmatmul.f32.gmra.mxu0 %v1717
      %v3978 = vpop.f32.mrf.mxu0
      %v3979 = vadd.f32 0.0, %v3978
      %3980 = vmatmul.f32.gmra.mxu0 %v1719
      %v3981 = vpop.f32.mrf.mxu0
      %v3982 = vadd.f32 0.0, %v3981
      %3983 = vmatmul.f32.gmra.mxu0 %v1721
      %v3984 = vpop.f32.mrf.mxu0
      %v3985 = vadd.f32 0.0, %v3984
      %3986 = vmatmul.f32.gmra.mxu0 %v1723
      %v3987 = vpop.f32.mrf.mxu0
      %v3988 = vadd.f32 0.0, %v3987
      %3989 = vmatmul.f32.gmra.mxu0 %v1725
      %v3990 = vpop.f32.mrf.mxu0
      %v3991 = vadd.f32 0.0, %v3990
      %3992 = vmatmul.f32.gmra.mxu0 %v1727
      %v3993 = vpop.f32.mrf.mxu0
      %v3994 = vadd.f32 0.0, %v3993
      %3995 = vmatmul.f32.gmra.mxu0 %v1729
      %v3996 = vpop.f32.mrf.mxu0
      %v3997 = vadd.f32 0.0, %v3996
      %3998 = vmatmul.f32.gmra.mxu0 %v1731
      %v3999 = vpop.f32.mrf.mxu0
      %v4000 = vadd.f32 0.0, %v3999
      %4001 = vmatmul.f32.gmra.mxu0 %v1733
      %v4002 = vpop.f32.mrf.mxu0
      %v4003 = vadd.f32 0.0, %v4002
      %4004 = vmatmul.f32.gmra.mxu0 %v1735
      %v4005 = vpop.f32.mrf.mxu0
      %v4006 = vadd.f32 0.0, %v4005
      %4007 = vmatmul.f32.gmra.mxu0 %v1737
      %v4008 = vpop.f32.mrf.mxu0
      %v4009 = vadd.f32 0.0, %v4008
      %4010 = vmatmul.f32.gmra.mxu0 %v1739
      %v4011 = vpop.f32.mrf.mxu0
      %v4012 = vadd.f32 0.0, %v4011
      %4013 = vmatmul.f32.gmra.mxu0 %v1741
      %v4014 = vpop.f32.mrf.mxu0
      %v4015 = vadd.f32 0.0, %v4014
      %4016 = vmatmul.f32.gmra.mxu0 %v1743
      %v4017 = vpop.f32.mrf.mxu0
      %v4018 = vadd.f32 0.0, %v4017
      %4019 = vmatmul.f32.gmra.mxu0 %v1745
      %v4020 = vpop.f32.mrf.mxu0
      %v4021 = vadd.f32 0.0, %v4020
      %4022 = vmatmul.f32.gmra.mxu0 %v1747
      %v4023 = vpop.f32.mrf.mxu0
      %v4024 = vadd.f32 0.0, %v4023
      %4025 = vmatmul.f32.gmra.mxu0 %v1749
      %v4026 = vpop.f32.mrf.mxu0
      %v4027 = vadd.f32 0.0, %v4026
      %4028 = vmatmul.f32.gmra.mxu0 %v1751
      %v4029 = vpop.f32.mrf.mxu0
      %v4030 = vadd.f32 0.0, %v4029
      %4031 = vmatmul.f32.gmra.mxu0 %v1753
      %v4032 = vpop.f32.mrf.mxu0
      %v4033 = vadd.f32 0.0, %v4032
      %4034 = vmatmul.f32.gmra.mxu0 %v1755
      %v4035 = vpop.f32.mrf.mxu0
      %v4036 = vadd.f32 0.0, %v4035
      %4037 = vmatmul.f32.gmra.mxu0 %v1757
      %v4038 = vpop.f32.mrf.mxu0
      %v4039 = vadd.f32 0.0, %v4038
      %4040 = vdwg.mxu0
      %v4041 = vadd.f32 %v3857, %v3958
      %v4042 = vadd.f32 %v3860, %v3961
      %v4043 = vadd.f32 %v3863, %v3964
      %v4044 = vadd.f32 %v3866, %v3967
      %v4045 = vadd.f32 %v3869, %v3970
      %v4046 = vadd.f32 %v3872, %v3973
      %v4047 = vadd.f32 %v3875, %v3976
      %v4048 = vadd.f32 %v3878, %v3979
      %v4049 = vadd.f32 %v3881, %v3982
      %v4050 = vadd.f32 %v3884, %v3985
      %v4051 = vadd.f32 %v3887, %v3988
      %v4052 = vadd.f32 %v3890, %v3991
      %v4053 = vadd.f32 %v3893, %v3994
      %v4054 = vadd.f32 %v3896, %v3997
      %v4055 = vadd.f32 %v3899, %v4000
      %v4056 = vadd.f32 %v3902, %v4003
      %v4057 = vadd.f32 %v3905, %v4006
      %v4058 = vadd.f32 %v3908, %v4009
      %v4059 = vadd.f32 %v3911, %v4012
      %v4060 = vadd.f32 %v3914, %v4015
      %v4061 = vadd.f32 %v3917, %v4018
      %v4062 = vadd.f32 %v3920, %v4021
      %v4063 = vadd.f32 %v3923, %v4024
      %v4064 = vadd.f32 %v3926, %v4027
      %v4065 = vadd.f32 %v3929, %v4030
      %v4066 = vadd.f32 %v3932, %v4033
      %v4067 = vadd.f32 %v3935, %v4036
      %v4068 = vadd.f32 %v3938, %v4039
      %4069 = vmatpush.msra.mxu0 0.0
      %4070 = vmatpush.msra.mxu0 0.0
      %4071 = vmatpush.msra.mxu0 0.0
      %4072 = vmatpush.msra.mxu0 0.0
      %4073 = vmatpush.msra.mxu0 0.0
      %4074 = vmatpush.msra.mxu0 0.0
      %4075 = vmatpush.msra.mxu0 0.0
      %4076 = vmatpush.msra.mxu0 0.0
      %4077 = vmatpush.msra.mxu0 0.0
      %4078 = vmatpush.msra.mxu0 0.0
      %4079 = vmatpush.msra.mxu0 0.0
      %4080 = vmatpush.msra.mxu0 0.0
      %4081 = vmatpush.msra.mxu0 0.0
      %4082 = vmatpush.msra.mxu0 0.0
      %4083 = vmatpush.msra.mxu0 0.0
      %4084 = vmatpush.msra.mxu0 %v1282
      %4085 = vmatmul.f32.gmra.mxu0 %v759
      %v4086 = vpop.f32.mrf.mxu0
      %v4087 = vadd.f32 0.0, %v4086
      %4088 = vmatmul.f32.gmra.mxu0 %v762
      %v4089 = vpop.f32.mrf.mxu0
      %v4090 = vadd.f32 0.0, %v4089
      %4091 = vmatmul.f32.gmra.mxu0 %v765
      %v4092 = vpop.f32.mrf.mxu0
      %v4093 = vadd.f32 0.0, %v4092
      %4094 = vmatmul.f32.gmra.mxu0 %v768
      %v4095 = vpop.f32.mrf.mxu0
      %v4096 = vadd.f32 0.0, %v4095
      %4097 = vmatmul.f32.gmra.mxu0 %v771
      %v4098 = vpop.f32.mrf.mxu0
      %v4099 = vadd.f32 0.0, %v4098
      %4100 = vmatmul.f32.gmra.mxu0 %v774
      %v4101 = vpop.f32.mrf.mxu0
      %v4102 = vadd.f32 0.0, %v4101
      %4103 = vmatmul.f32.gmra.mxu0 %v777
      %v4104 = vpop.f32.mrf.mxu0
      %v4105 = vadd.f32 0.0, %v4104
      %4106 = vmatmul.f32.gmra.mxu0 %v780
      %v4107 = vpop.f32.mrf.mxu0
      %v4108 = vadd.f32 0.0, %v4107
      %4109 = vmatmul.f32.gmra.mxu0 %v783
      %v4110 = vpop.f32.mrf.mxu0
      %v4111 = vadd.f32 0.0, %v4110
      %4112 = vmatmul.f32.gmra.mxu0 %v786
      %v4113 = vpop.f32.mrf.mxu0
      %v4114 = vadd.f32 0.0, %v4113
      %4115 = vmatmul.f32.gmra.mxu0 %v789
      %v4116 = vpop.f32.mrf.mxu0
      %v4117 = vadd.f32 0.0, %v4116
      %4118 = vmatmul.f32.gmra.mxu0 %v792
      %v4119 = vpop.f32.mrf.mxu0
      %v4120 = vadd.f32 0.0, %v4119
      %4121 = vmatmul.f32.gmra.mxu0 %v795
      %v4122 = vpop.f32.mrf.mxu0
      %v4123 = vadd.f32 0.0, %v4122
      %4124 = vmatmul.f32.gmra.mxu0 %v798
      %v4125 = vpop.f32.mrf.mxu0
      %v4126 = vadd.f32 0.0, %v4125
      %4127 = vmatmul.f32.gmra.mxu0 %v801
      %v4128 = vpop.f32.mrf.mxu0
      %v4129 = vadd.f32 0.0, %v4128
      %4130 = vmatmul.f32.gmra.mxu0 %v804
      %v4131 = vpop.f32.mrf.mxu0
      %v4132 = vadd.f32 0.0, %v4131
      %4133 = vmatmul.f32.gmra.mxu0 %v807
      %v4134 = vpop.f32.mrf.mxu0
      %v4135 = vadd.f32 0.0, %v4134
      %4136 = vmatmul.f32.gmra.mxu0 %v810
      %v4137 = vpop.f32.mrf.mxu0
      %v4138 = vadd.f32 0.0, %v4137
      %4139 = vmatmul.f32.gmra.mxu0 %v813
      %v4140 = vpop.f32.mrf.mxu0
      %v4141 = vadd.f32 0.0, %v4140
      %4142 = vmatmul.f32.gmra.mxu0 %v816
      %v4143 = vpop.f32.mrf.mxu0
      %v4144 = vadd.f32 0.0, %v4143
      %4145 = vmatmul.f32.gmra.mxu0 %v819
      %v4146 = vpop.f32.mrf.mxu0
      %v4147 = vadd.f32 0.0, %v4146
      %4148 = vmatmul.f32.gmra.mxu0 %v822
      %v4149 = vpop.f32.mrf.mxu0
      %v4150 = vadd.f32 0.0, %v4149
      %4151 = vmatmul.f32.gmra.mxu0 %v825
      %v4152 = vpop.f32.mrf.mxu0
      %v4153 = vadd.f32 0.0, %v4152
      %4154 = vmatmul.f32.gmra.mxu0 %v828
      %v4155 = vpop.f32.mrf.mxu0
      %v4156 = vadd.f32 0.0, %v4155
      %4157 = vmatmul.f32.gmra.mxu0 %v1894
      %v4158 = vpop.f32.mrf.mxu0
      %v4159 = vadd.f32 0.0, %v4158
      %4160 = vmatmul.f32.gmra.mxu0 %v1897
      %v4161 = vpop.f32.mrf.mxu0
      %v4162 = vadd.f32 0.0, %v4161
      %4163 = vmatmul.f32.gmra.mxu0 %v1900
      %v4164 = vpop.f32.mrf.mxu0
      %v4165 = vadd.f32 0.0, %v4164
      %4166 = vmatmul.f32.gmra.mxu0 %v1903
      %v4167 = vpop.f32.mrf.mxu0
      %v4168 = vadd.f32 0.0, %v4167
      %4169 = vdwg.mxu0
      %v4170 = vadd.f32 %v4041, %v4087
      %v4171 = vadd.f32 %v4042, %v4090
      %v4172 = vadd.f32 %v4043, %v4093
      %v4173 = vadd.f32 %v4044, %v4096
      %v4174 = vadd.f32 %v4045, %v4099
      %v4175 = vadd.f32 %v4046, %v4102
      %v4176 = vadd.f32 %v4047, %v4105
      %v4177 = vadd.f32 %v4048, %v4108
      %v4178 = vadd.f32 %v4049, %v4111
      %v4179 = vadd.f32 %v4050, %v4114
      %v4180 = vadd.f32 %v4051, %v4117
      %v4181 = vadd.f32 %v4052, %v4120
      %v4182 = vadd.f32 %v4053, %v4123
      %v4183 = vadd.f32 %v4054, %v4126
      %v4184 = vadd.f32 %v4055, %v4129
      %v4185 = vadd.f32 %v4056, %v4132
      %v4186 = vadd.f32 %v4057, %v4135
      %v4187 = vadd.f32 %v4058, %v4138
      %v4188 = vadd.f32 %v4059, %v4141
      %v4189 = vadd.f32 %v4060, %v4144
      %v4190 = vadd.f32 %v4061, %v4147
      %v4191 = vadd.f32 %v4062, %v4150
      %v4192 = vadd.f32 %v4063, %v4153
      %v4193 = vadd.f32 %v4064, %v4156
      %v4194 = vadd.f32 %v4065, %v4159
      %v4195 = vadd.f32 %v4066, %v4162
      %v4196 = vadd.f32 %v4067, %v4165
      %v4197 = vadd.f32 %v4068, %v4168
      %4198 = vmatpush.msra.mxu0 0.0
      %4199 = vmatpush.msra.mxu0 0.0
      %4200 = vmatpush.msra.mxu0 0.0
      %4201 = vmatpush.msra.mxu0 0.0
      %4202 = vmatpush.msra.mxu0 0.0
      %4203 = vmatpush.msra.mxu0 0.0
      %4204 = vmatpush.msra.mxu0 0.0
      %4205 = vmatpush.msra.mxu0 0.0
      %4206 = vmatpush.msra.mxu0 0.0
      %4207 = vmatpush.msra.mxu0 0.0
      %4208 = vmatpush.msra.mxu0 0.0
      %4209 = vmatpush.msra.mxu0 0.0
      %4210 = vmatpush.msra.mxu0 0.0
      %4211 = vmatpush.msra.mxu0 0.0
      %4212 = vmatpush.msra.mxu0 0.0
      %4213 = vmatpush.msra.mxu0 %v1500
      %4214 = vmatmul.f32.gmra.mxu0 %v570
      %v4215 = vpop.f32.mrf.mxu0
      %v4216 = vadd.f32 0.0, %v4215
      %4217 = vmatmul.f32.gmra.mxu0 %v573
      %v4218 = vpop.f32.mrf.mxu0
      %v4219 = vadd.f32 0.0, %v4218
      %4220 = vmatmul.f32.gmra.mxu0 %v576
      %v4221 = vpop.f32.mrf.mxu0
      %v4222 = vadd.f32 0.0, %v4221
      %4223 = vmatmul.f32.gmra.mxu0 %v579
      %v4224 = vpop.f32.mrf.mxu0
      %v4225 = vadd.f32 0.0, %v4224
      %4226 = vmatmul.f32.gmra.mxu0 %v582
      %v4227 = vpop.f32.mrf.mxu0
      %v4228 = vadd.f32 0.0, %v4227
      %4229 = vmatmul.f32.gmra.mxu0 %v585
      %v4230 = vpop.f32.mrf.mxu0
      %v4231 = vadd.f32 0.0, %v4230
      %4232 = vmatmul.f32.gmra.mxu0 %v588
      %v4233 = vpop.f32.mrf.mxu0
      %v4234 = vadd.f32 0.0, %v4233
      %4235 = vmatmul.f32.gmra.mxu0 %v591
      %v4236 = vpop.f32.mrf.mxu0
      %v4237 = vadd.f32 0.0, %v4236
      %4238 = vmatmul.f32.gmra.mxu0 %v594
      %v4239 = vpop.f32.mrf.mxu0
      %v4240 = vadd.f32 0.0, %v4239
      %4241 = vmatmul.f32.gmra.mxu0 %v597
      %v4242 = vpop.f32.mrf.mxu0
      %v4243 = vadd.f32 0.0, %v4242
      %4244 = vmatmul.f32.gmra.mxu0 %v600
      %v4245 = vpop.f32.mrf.mxu0
      %v4246 = vadd.f32 0.0, %v4245
      %4247 = vmatmul.f32.gmra.mxu0 %v603
      %v4248 = vpop.f32.mrf.mxu0
      %v4249 = vadd.f32 0.0, %v4248
      %4250 = vmatmul.f32.gmra.mxu0 %v606
      %v4251 = vpop.f32.mrf.mxu0
      %v4252 = vadd.f32 0.0, %v4251
      %4253 = vmatmul.f32.gmra.mxu0 %v609
      %v4254 = vpop.f32.mrf.mxu0
      %v4255 = vadd.f32 0.0, %v4254
      %4256 = vmatmul.f32.gmra.mxu0 %v612
      %v4257 = vpop.f32.mrf.mxu0
      %v4258 = vadd.f32 0.0, %v4257
      %4259 = vmatmul.f32.gmra.mxu0 %v615
      %v4260 = vpop.f32.mrf.mxu0
      %v4261 = vadd.f32 0.0, %v4260
      %4262 = vmatmul.f32.gmra.mxu0 %v618
      %v4263 = vpop.f32.mrf.mxu0
      %v4264 = vadd.f32 0.0, %v4263
      %4265 = vmatmul.f32.gmra.mxu0 %v621
      %v4266 = vpop.f32.mrf.mxu0
      %v4267 = vadd.f32 0.0, %v4266
      %4268 = vmatmul.f32.gmra.mxu0 %v624
      %v4269 = vpop.f32.mrf.mxu0
      %v4270 = vadd.f32 0.0, %v4269
      %4271 = vmatmul.f32.gmra.mxu0 %v627
      %v4272 = vpop.f32.mrf.mxu0
      %v4273 = vadd.f32 0.0, %v4272
      %4274 = vmatmul.f32.gmra.mxu0 %v630
      %v4275 = vpop.f32.mrf.mxu0
      %v4276 = vadd.f32 0.0, %v4275
      %4277 = vmatmul.f32.gmra.mxu0 %v633
      %v4278 = vpop.f32.mrf.mxu0
      %v4279 = vadd.f32 0.0, %v4278
      %4280 = vmatmul.f32.gmra.mxu0 %v636
      %v4281 = vpop.f32.mrf.mxu0
      %v4282 = vadd.f32 0.0, %v4281
      %4283 = vmatmul.f32.gmra.mxu0 %v639
      %v4284 = vpop.f32.mrf.mxu0
      %v4285 = vadd.f32 0.0, %v4284
      %4286 = vmatmul.f32.gmra.mxu0 %v2040
      %v4287 = vpop.f32.mrf.mxu0
      %v4288 = vadd.f32 0.0, %v4287
      %4289 = vmatmul.f32.gmra.mxu0 %v2043
      %v4290 = vpop.f32.mrf.mxu0
      %v4291 = vadd.f32 0.0, %v4290
      %4292 = vmatmul.f32.gmra.mxu0 %v2046
      %v4293 = vpop.f32.mrf.mxu0
      %v4294 = vadd.f32 0.0, %v4293
      %4295 = vmatmul.f32.gmra.mxu0 %v2049
      %v4296 = vpop.f32.mrf.mxu0
      %v4297 = vadd.f32 0.0, %v4296
      %4298 = vdwg.mxu0
      %v4299 = vadd.f32 %v4170, %v4216
      %v4300 = vadd.f32 %v4171, %v4219
      %v4301 = vadd.f32 %v4172, %v4222
      %v4302 = vadd.f32 %v4173, %v4225
      %v4303 = vadd.f32 %v4174, %v4228
      %v4304 = vadd.f32 %v4175, %v4231
      %v4305 = vadd.f32 %v4176, %v4234
      %v4306 = vadd.f32 %v4177, %v4237
      %v4307 = vadd.f32 %v4178, %v4240
      %v4308 = vadd.f32 %v4179, %v4243
      %v4309 = vadd.f32 %v4180, %v4246
      %v4310 = vadd.f32 %v4181, %v4249
      %v4311 = vadd.f32 %v4182, %v4252
      %v4312 = vadd.f32 %v4183, %v4255
      %v4313 = vadd.f32 %v4184, %v4258
      %v4314 = vadd.f32 %v4185, %v4261
      %v4315 = vadd.f32 %v4186, %v4264
      %v4316 = vadd.f32 %v4187, %v4267
      %v4317 = vadd.f32 %v4188, %v4270
      %v4318 = vadd.f32 %v4189, %v4273
      %v4319 = vadd.f32 %v4190, %v4276
      %v4320 = vadd.f32 %v4191, %v4279
      %v4321 = vadd.f32 %v4192, %v4282
      %v4322 = vadd.f32 %v4193, %v4285
      %v4323 = vadd.f32 %v4194, %v4288
      %v4324 = vadd.f32 %v4195, %v4291
      %v4325 = vadd.f32 %v4196, %v4294
      %v4326 = vadd.f32 %v4197, %v4297
      %4327 = vmatpush.msra.mxu0 0.0
      %4328 = vmatpush.msra.mxu0 0.0
      %4329 = vmatpush.msra.mxu0 0.0
      %4330 = vmatpush.msra.mxu0 0.0
      %4331 = vmatpush.msra.mxu0 0.0
      %4332 = vmatpush.msra.mxu0 0.0
      %4333 = vmatpush.msra.mxu0 0.0
      %4334 = vmatpush.msra.mxu0 0.0
      %4335 = vmatpush.msra.mxu0 0.0
      %4336 = vmatpush.msra.mxu0 0.0
      %4337 = vmatpush.msra.mxu0 0.0
      %4338 = vmatpush.msra.mxu0 0.0
      %4339 = vmatpush.msra.mxu0 0.0
      %4340 = vmatpush.msra.mxu0 0.0
      %4341 = vmatpush.msra.mxu0 0.0
      %4342 = vmatpush.msra.mxu0 %v1760
      %4343 = vmatmul.f32.gmra.mxu0 %v1015
      %v4344 = vpop.f32.mrf.mxu0
      %v4345 = vadd.f32 0.0, %v4344
      %4346 = vmatmul.f32.gmra.mxu0 %v1017
      %v4347 = vpop.f32.mrf.mxu0
      %v4348 = vadd.f32 0.0, %v4347
      %4349 = vmatmul.f32.gmra.mxu0 %v1019
      %v4350 = vpop.f32.mrf.mxu0
      %v4351 = vadd.f32 0.0, %v4350
      %4352 = vmatmul.f32.gmra.mxu0 %v1021
      %v4353 = vpop.f32.mrf.mxu0
      %v4354 = vadd.f32 0.0, %v4353
      %4355 = vmatmul.f32.gmra.mxu0 %v1023
      %v4356 = vpop.f32.mrf.mxu0
      %v4357 = vadd.f32 0.0, %v4356
      %4358 = vmatmul.f32.gmra.mxu0 %v1025
      %v4359 = vpop.f32.mrf.mxu0
      %v4360 = vadd.f32 0.0, %v4359
      %4361 = vmatmul.f32.gmra.mxu0 %v1027
      %v4362 = vpop.f32.mrf.mxu0
      %v4363 = vadd.f32 0.0, %v4362
      %4364 = vmatmul.f32.gmra.mxu0 %v1029
      %v4365 = vpop.f32.mrf.mxu0
      %v4366 = vadd.f32 0.0, %v4365
      %4367 = vmatmul.f32.gmra.mxu0 %v1031
      %v4368 = vpop.f32.mrf.mxu0
      %v4369 = vadd.f32 0.0, %v4368
      %4370 = vmatmul.f32.gmra.mxu0 %v1033
      %v4371 = vpop.f32.mrf.mxu0
      %v4372 = vadd.f32 0.0, %v4371
      %4373 = vmatmul.f32.gmra.mxu0 %v1035
      %v4374 = vpop.f32.mrf.mxu0
      %v4375 = vadd.f32 0.0, %v4374
      %4376 = vmatmul.f32.gmra.mxu0 %v1037
      %v4377 = vpop.f32.mrf.mxu0
      %v4378 = vadd.f32 0.0, %v4377
      %4379 = vmatmul.f32.gmra.mxu0 %v1039
      %v4380 = vpop.f32.mrf.mxu0
      %v4381 = vadd.f32 0.0, %v4380
      %4382 = vmatmul.f32.gmra.mxu0 %v1041
      %v4383 = vpop.f32.mrf.mxu0
      %v4384 = vadd.f32 0.0, %v4383
      %4385 = vmatmul.f32.gmra.mxu0 %v1043
      %v4386 = vpop.f32.mrf.mxu0
      %v4387 = vadd.f32 0.0, %v4386
      %4388 = vmatmul.f32.gmra.mxu0 %v1045
      %v4389 = vpop.f32.mrf.mxu0
      %v4390 = vadd.f32 0.0, %v4389
      %4391 = vmatmul.f32.gmra.mxu0 %v1047
      %v4392 = vpop.f32.mrf.mxu0
      %v4393 = vadd.f32 0.0, %v4392
      %4394 = vmatmul.f32.gmra.mxu0 %v1049
      %v4395 = vpop.f32.mrf.mxu0
      %v4396 = vadd.f32 0.0, %v4395
      %4397 = vmatmul.f32.gmra.mxu0 %v1051
      %v4398 = vpop.f32.mrf.mxu0
      %v4399 = vadd.f32 0.0, %v4398
      %4400 = vmatmul.f32.gmra.mxu0 %v1053
      %v4401 = vpop.f32.mrf.mxu0
      %v4402 = vadd.f32 0.0, %v4401
      %4403 = vmatmul.f32.gmra.mxu0 %v1055
      %v4404 = vpop.f32.mrf.mxu0
      %v4405 = vadd.f32 0.0, %v4404
      %4406 = vmatmul.f32.gmra.mxu0 %v1057
      %v4407 = vpop.f32.mrf.mxu0
      %v4408 = vadd.f32 0.0, %v4407
      %4409 = vmatmul.f32.gmra.mxu0 %v1059
      %v4410 = vpop.f32.mrf.mxu0
      %v4411 = vadd.f32 0.0, %v4410
      %4412 = vmatmul.f32.gmra.mxu0 %v1061
      %v4413 = vpop.f32.mrf.mxu0
      %v4414 = vadd.f32 0.0, %v4413
      %4415 = vmatmul.f32.gmra.mxu0 %v2195
      %v4416 = vpop.f32.mrf.mxu0
      %v4417 = vadd.f32 0.0, %v4416
      %4418 = vmatmul.f32.gmra.mxu0 %v2197
      %v4419 = vpop.f32.mrf.mxu0
      %v4420 = vadd.f32 0.0, %v4419
      %4421 = vmatmul.f32.gmra.mxu0 %v2199
      %v4422 = vpop.f32.mrf.mxu0
      %v4423 = vadd.f32 0.0, %v4422
      %4424 = vmatmul.f32.gmra.mxu0 %v2201
      %v4425 = vpop.f32.mrf.mxu0
      %v4426 = vadd.f32 0.0, %v4425
      %4427 = vdwg.mxu0
      %v4428 = vadd.f32 %v4299, %v4345
      %v4429 = vadd.f32 %v4300, %v4348
      %v4430 = vadd.f32 %v4301, %v4351
      %v4431 = vadd.f32 %v4302, %v4354
      %v4432 = vadd.f32 %v4303, %v4357
      %v4433 = vadd.f32 %v4304, %v4360
      %v4434 = vadd.f32 %v4305, %v4363
      %v4435 = vadd.f32 %v4306, %v4366
      %v4436 = vadd.f32 %v4307, %v4369
      %v4437 = vadd.f32 %v4308, %v4372
      %v4438 = vadd.f32 %v4309, %v4375
      %v4439 = vadd.f32 %v4310, %v4378
      %v4440 = vadd.f32 %v4311, %v4381
      %v4441 = vadd.f32 %v4312, %v4384
      %v4442 = vadd.f32 %v4313, %v4387
      %v4443 = vadd.f32 %v4314, %v4390
      %v4444 = vadd.f32 %v4315, %v4393
      %v4445 = vadd.f32 %v4316, %v4396
      %v4446 = vadd.f32 %v4317, %v4399
      %v4447 = vadd.f32 %v4318, %v4402
      %v4448 = vadd.f32 %v4319, %v4405
      %v4449 = vadd.f32 %v4320, %v4408
      %v4450 = vadd.f32 %v4321, %v4411
      %v4451 = vadd.f32 %v4322, %v4414
      %v4452 = vadd.f32 %v4323, %v4417
      %v4453 = vadd.f32 %v4324, %v4420
      %v4454 = vadd.f32 %v4325, %v4423
      %v4455 = vadd.f32 %v4326, %v4426
      %v4457 = vsel %vm556, %v508, 0
      %v4460 = vsel %vm556, %v509, 0
      %v4463 = vsel %vm556, %v510, 0
      %v4466 = vsel %vm556, %v511, 0
      %4468 = vmatpush.msra.mxu0 0.0
      %4469 = vmatpush.msra.mxu0 0.0
      %4470 = vmatpush.msra.mxu0 0.0
      %4471 = vmatpush.msra.mxu0 0.0
      %4472 = vmatpush.msra.mxu0 0.0
      %4473 = vmatpush.msra.mxu0 0.0
      %4474 = vmatpush.msra.mxu0 0.0
      %4475 = vmatpush.msra.mxu0 0.0
      %4476 = vmatpush.msra.mxu0 0.0
      %4477 = vmatpush.msra.mxu0 0.0
      %4478 = vmatpush.msra.mxu0 0.0
      %4479 = vmatpush.msra.mxu0 0.0
      %4480 = vmatpush.msra.mxu0 0.0
      %4481 = vmatpush.msra.mxu0 0.0
      %4482 = vmatpush.msra.mxu0 0.0
      %4483 = vmatpush.msra.mxu0 %v1906
      %4484 = vmatmul.f32.gmra.mxu0 %v1210
      %v4485 = vpop.f32.mrf.mxu0
      %v4486 = vadd.f32 0.0, %v4485
      %4487 = vmatmul.f32.gmra.mxu0 %v1213
      %v4488 = vpop.f32.mrf.mxu0
      %v4489 = vadd.f32 0.0, %v4488
      %4490 = vmatmul.f32.gmra.mxu0 %v1216
      %v4491 = vpop.f32.mrf.mxu0
      %v4492 = vadd.f32 0.0, %v4491
      %4493 = vmatmul.f32.gmra.mxu0 %v1219
      %v4494 = vpop.f32.mrf.mxu0
      %v4495 = vadd.f32 0.0, %v4494
      %4496 = vmatmul.f32.gmra.mxu0 %v1222
      %v4497 = vpop.f32.mrf.mxu0
      %v4498 = vadd.f32 0.0, %v4497
      %4499 = vmatmul.f32.gmra.mxu0 %v1225
      %v4500 = vpop.f32.mrf.mxu0
      %v4501 = vadd.f32 0.0, %v4500
      %4502 = vmatmul.f32.gmra.mxu0 %v1228
      %v4503 = vpop.f32.mrf.mxu0
      %v4504 = vadd.f32 0.0, %v4503
      %4505 = vmatmul.f32.gmra.mxu0 %v1231
      %v4506 = vpop.f32.mrf.mxu0
      %v4507 = vadd.f32 0.0, %v4506
      %4508 = vmatmul.f32.gmra.mxu0 %v1234
      %v4509 = vpop.f32.mrf.mxu0
      %v4510 = vadd.f32 0.0, %v4509
      %4511 = vmatmul.f32.gmra.mxu0 %v1237
      %v4512 = vpop.f32.mrf.mxu0
      %v4513 = vadd.f32 0.0, %v4512
      %4514 = vmatmul.f32.gmra.mxu0 %v1240
      %v4515 = vpop.f32.mrf.mxu0
      %v4516 = vadd.f32 0.0, %v4515
      %4517 = vmatmul.f32.gmra.mxu0 %v1243
      %v4518 = vpop.f32.mrf.mxu0
      %v4519 = vadd.f32 0.0, %v4518
      %4520 = vmatmul.f32.gmra.mxu0 %v1246
      %v4521 = vpop.f32.mrf.mxu0
      %v4522 = vadd.f32 0.0, %v4521
      %4523 = vmatmul.f32.gmra.mxu0 %v1249
      %v4524 = vpop.f32.mrf.mxu0
      %v4525 = vadd.f32 0.0, %v4524
      %4526 = vmatmul.f32.gmra.mxu0 %v1252
      %v4527 = vpop.f32.mrf.mxu0
      %v4528 = vadd.f32 0.0, %v4527
      %4529 = vmatmul.f32.gmra.mxu0 %v1255
      %v4530 = vpop.f32.mrf.mxu0
      %v4531 = vadd.f32 0.0, %v4530
      %4532 = vmatmul.f32.gmra.mxu0 %v1258
      %v4533 = vpop.f32.mrf.mxu0
      %v4534 = vadd.f32 0.0, %v4533
      %4535 = vmatmul.f32.gmra.mxu0 %v1261
      %v4536 = vpop.f32.mrf.mxu0
      %v4537 = vadd.f32 0.0, %v4536
      %4538 = vmatmul.f32.gmra.mxu0 %v1264
      %v4539 = vpop.f32.mrf.mxu0
      %v4540 = vadd.f32 0.0, %v4539
      %4541 = vmatmul.f32.gmra.mxu0 %v1267
      %v4542 = vpop.f32.mrf.mxu0
      %v4543 = vadd.f32 0.0, %v4542
      %4544 = vmatmul.f32.gmra.mxu0 %v1270
      %v4545 = vpop.f32.mrf.mxu0
      %v4546 = vadd.f32 0.0, %v4545
      %4547 = vmatmul.f32.gmra.mxu0 %v1273
      %v4548 = vpop.f32.mrf.mxu0
      %v4549 = vadd.f32 0.0, %v4548
      %4550 = vmatmul.f32.gmra.mxu0 %v1276
      %v4551 = vpop.f32.mrf.mxu0
      %v4552 = vadd.f32 0.0, %v4551
      %4553 = vmatmul.f32.gmra.mxu0 %v1279
      %v4554 = vpop.f32.mrf.mxu0
      %v4555 = vadd.f32 0.0, %v4554
      %4556 = vmatmul.f32.gmra.mxu0 %v4457
      %v4557 = vpop.f32.mrf.mxu0
      %v4558 = vadd.f32 0.0, %v4557
      %4559 = vmatmul.f32.gmra.mxu0 %v4460
      %v4560 = vpop.f32.mrf.mxu0
      %v4561 = vadd.f32 0.0, %v4560
      %4562 = vmatmul.f32.gmra.mxu0 %v4463
      %v4563 = vpop.f32.mrf.mxu0
      %v4564 = vadd.f32 0.0, %v4563
      %4565 = vmatmul.f32.gmra.mxu0 %v4466
      %v4566 = vpop.f32.mrf.mxu0
      %v4567 = vadd.f32 0.0, %v4566
      %4568 = vdwg.mxu0
      %v4569 = vadd.f32 %v4428, %v4486
      %v4570 = vadd.f32 %v4429, %v4489
      %v4571 = vadd.f32 %v4430, %v4492
      %v4572 = vadd.f32 %v4431, %v4495
      %v4573 = vadd.f32 %v4432, %v4498
      %v4574 = vadd.f32 %v4433, %v4501
      %v4575 = vadd.f32 %v4434, %v4504
      %v4576 = vadd.f32 %v4435, %v4507
      %v4577 = vadd.f32 %v4436, %v4510
      %v4578 = vadd.f32 %v4437, %v4513
      %v4579 = vadd.f32 %v4438, %v4516
      %v4580 = vadd.f32 %v4439, %v4519
      %v4581 = vadd.f32 %v4440, %v4522
      %v4582 = vadd.f32 %v4441, %v4525
      %v4583 = vadd.f32 %v4442, %v4528
      %v4584 = vadd.f32 %v4443, %v4531
      %v4585 = vadd.f32 %v4444, %v4534
      %v4586 = vadd.f32 %v4445, %v4537
      %v4587 = vadd.f32 %v4446, %v4540
      %v4588 = vadd.f32 %v4447, %v4543
      %v4589 = vadd.f32 %v4448, %v4546
      %v4590 = vadd.f32 %v4449, %v4549
      %v4591 = vadd.f32 %v4450, %v4552
      %v4592 = vadd.f32 %v4451, %v4555
      %v4593 = vadd.f32 %v4452, %v4558
      %v4594 = vadd.f32 %v4453, %v4561
      %v4595 = vadd.f32 %v4454, %v4564
      %v4596 = vadd.f32 %v4455, %v4567
      %v4598 = vsel %vm556, %v548, 0
      %v4601 = vsel %vm556, %v549, 0
      %v4604 = vsel %vm556, %v550, 0
      %v4607 = vsel %vm556, %v551, 0
      %4609 = vmatpush.msra.mxu0 0.0
      %4610 = vmatpush.msra.mxu0 0.0
      %4611 = vmatpush.msra.mxu0 0.0
      %4612 = vmatpush.msra.mxu0 0.0
      %4613 = vmatpush.msra.mxu0 0.0
      %4614 = vmatpush.msra.mxu0 0.0
      %4615 = vmatpush.msra.mxu0 0.0
      %4616 = vmatpush.msra.mxu0 0.0
      %4617 = vmatpush.msra.mxu0 0.0
      %4618 = vmatpush.msra.mxu0 0.0
      %4619 = vmatpush.msra.mxu0 0.0
      %4620 = vmatpush.msra.mxu0 0.0
      %4621 = vmatpush.msra.mxu0 0.0
      %4622 = vmatpush.msra.mxu0 0.0
      %4623 = vmatpush.msra.mxu0 0.0
      %4624 = vmatpush.msra.mxu0 %v2052
      %4625 = vmatmul.f32.gmra.mxu0 %v1428
      %v4626 = vpop.f32.mrf.mxu0
      %v4627 = vadd.f32 0.0, %v4626
      %4628 = vmatmul.f32.gmra.mxu0 %v1431
      %v4629 = vpop.f32.mrf.mxu0
      %v4630 = vadd.f32 0.0, %v4629
      %4631 = vmatmul.f32.gmra.mxu0 %v1434
      %v4632 = vpop.f32.mrf.mxu0
      %v4633 = vadd.f32 0.0, %v4632
      %4634 = vmatmul.f32.gmra.mxu0 %v1437
      %v4635 = vpop.f32.mrf.mxu0
      %v4636 = vadd.f32 0.0, %v4635
      %4637 = vmatmul.f32.gmra.mxu0 %v1440
      %v4638 = vpop.f32.mrf.mxu0
      %v4639 = vadd.f32 0.0, %v4638
      %4640 = vmatmul.f32.gmra.mxu0 %v1443
      %v4641 = vpop.f32.mrf.mxu0
      %v4642 = vadd.f32 0.0, %v4641
      %4643 = vmatmul.f32.gmra.mxu0 %v1446
      %v4644 = vpop.f32.mrf.mxu0
      %v4645 = vadd.f32 0.0, %v4644
      %4646 = vmatmul.f32.gmra.mxu0 %v1449
      %v4647 = vpop.f32.mrf.mxu0
      %v4648 = vadd.f32 0.0, %v4647
      %4649 = vmatmul.f32.gmra.mxu0 %v1452
      %v4650 = vpop.f32.mrf.mxu0
      %v4651 = vadd.f32 0.0, %v4650
      %4652 = vmatmul.f32.gmra.mxu0 %v1455
      %v4653 = vpop.f32.mrf.mxu0
      %v4654 = vadd.f32 0.0, %v4653
      %4655 = vmatmul.f32.gmra.mxu0 %v1458
      %v4656 = vpop.f32.mrf.mxu0
      %v4657 = vadd.f32 0.0, %v4656
      %4658 = vmatmul.f32.gmra.mxu0 %v1461
      %v4659 = vpop.f32.mrf.mxu0
      %v4660 = vadd.f32 0.0, %v4659
      %4661 = vmatmul.f32.gmra.mxu0 %v1464
      %v4662 = vpop.f32.mrf.mxu0
      %v4663 = vadd.f32 0.0, %v4662
      %4664 = vmatmul.f32.gmra.mxu0 %v1467
      %v4665 = vpop.f32.mrf.mxu0
      %v4666 = vadd.f32 0.0, %v4665
      %4667 = vmatmul.f32.gmra.mxu0 %v1470
      %v4668 = vpop.f32.mrf.mxu0
      %v4669 = vadd.f32 0.0, %v4668
      %4670 = vmatmul.f32.gmra.mxu0 %v1473
      %v4671 = vpop.f32.mrf.mxu0
      %v4672 = vadd.f32 0.0, %v4671
      %4673 = vmatmul.f32.gmra.mxu0 %v1476
      %v4674 = vpop.f32.mrf.mxu0
      %v4675 = vadd.f32 0.0, %v4674
      %4676 = vmatmul.f32.gmra.mxu0 %v1479
      %v4677 = vpop.f32.mrf.mxu0
      %v4678 = vadd.f32 0.0, %v4677
      %4679 = vmatmul.f32.gmra.mxu0 %v1482
      %v4680 = vpop.f32.mrf.mxu0
      %v4681 = vadd.f32 0.0, %v4680
      %4682 = vmatmul.f32.gmra.mxu0 %v1485
      %v4683 = vpop.f32.mrf.mxu0
      %v4684 = vadd.f32 0.0, %v4683
      %4685 = vmatmul.f32.gmra.mxu0 %v1488
      %v4686 = vpop.f32.mrf.mxu0
      %v4687 = vadd.f32 0.0, %v4686
      %4688 = vmatmul.f32.gmra.mxu0 %v1491
      %v4689 = vpop.f32.mrf.mxu0
      %v4690 = vadd.f32 0.0, %v4689
      %4691 = vmatmul.f32.gmra.mxu0 %v1494
      %v4692 = vpop.f32.mrf.mxu0
      %v4693 = vadd.f32 0.0, %v4692
      %4694 = vmatmul.f32.gmra.mxu0 %v1497
      %v4695 = vpop.f32.mrf.mxu0
      %v4696 = vadd.f32 0.0, %v4695
      %4697 = vmatmul.f32.gmra.mxu0 %v4598
      %v4698 = vpop.f32.mrf.mxu0
      %v4699 = vadd.f32 0.0, %v4698
      %4700 = vmatmul.f32.gmra.mxu0 %v4601
      %v4701 = vpop.f32.mrf.mxu0
      %v4702 = vadd.f32 0.0, %v4701
      %4703 = vmatmul.f32.gmra.mxu0 %v4604
      %v4704 = vpop.f32.mrf.mxu0
      %v4705 = vadd.f32 0.0, %v4704
      %4706 = vmatmul.f32.gmra.mxu0 %v4607
      %v4707 = vpop.f32.mrf.mxu0
      %v4708 = vadd.f32 0.0, %v4707
      %4709 = vdwg.mxu0
      %v4710 = vadd.f32 %v4569, %v4627
      %v4711 = vadd.f32 %v4570, %v4630
      %v4712 = vadd.f32 %v4571, %v4633
      %v4713 = vadd.f32 %v4572, %v4636
      %v4714 = vadd.f32 %v4573, %v4639
      %v4715 = vadd.f32 %v4574, %v4642
      %v4716 = vadd.f32 %v4575, %v4645
      %v4717 = vadd.f32 %v4576, %v4648
      %v4718 = vadd.f32 %v4577, %v4651
      %v4719 = vadd.f32 %v4578, %v4654
      %v4720 = vadd.f32 %v4579, %v4657
      %v4721 = vadd.f32 %v4580, %v4660
      %v4722 = vadd.f32 %v4581, %v4663
      %v4723 = vadd.f32 %v4582, %v4666
      %v4724 = vadd.f32 %v4583, %v4669
      %v4725 = vadd.f32 %v4584, %v4672
      %v4726 = vadd.f32 %v4585, %v4675
      %v4727 = vadd.f32 %v4586, %v4678
      %v4728 = vadd.f32 %v4587, %v4681
      %v4729 = vadd.f32 %v4588, %v4684
      %v4730 = vadd.f32 %v4589, %v4687
      %v4731 = vadd.f32 %v4590, %v4690
      %v4732 = vadd.f32 %v4591, %v4693
      %v4733 = vadd.f32 %v4592, %v4696
      %v4734 = vadd.f32 %v4593, %v4699
      %v4735 = vadd.f32 %v4594, %v4702
      %v4736 = vadd.f32 %v4595, %v4705
      %v4737 = vadd.f32 %v4596, %v4708
      %v4739 = vrot.slane %v508, 1
      %v4740 = vrot.slane %v509, 1
      %v4741 = vsel %vm941, %v4739, %v4740
      %v4742 = vrot.slane %v510, 1
      %v4743 = vsel %vm941, %v4740, %v4742
      %v4744 = vrot.slane %v511, 1
      %v4745 = vsel %vm941, %v4742, %v4744
      %v4746 = vrot.slane %v512, 1
      %v4747 = vsel %vm941, %v4744, %v4746
      %v4748 = vsel %vm556, %v4741, 0
      %v4750 = vsel %vm556, %v4743, 0
      %v4752 = vsel %vm556, %v4745, 0
      %v4754 = vsel %vm556, %v4747, 0
      %4756 = vmatpush.msra.mxu0 0.0
      %4757 = vmatpush.msra.mxu0 0.0
      %4758 = vmatpush.msra.mxu0 0.0
      %4759 = vmatpush.msra.mxu0 0.0
      %4760 = vmatpush.msra.mxu0 0.0
      %4761 = vmatpush.msra.mxu0 0.0
      %4762 = vmatpush.msra.mxu0 0.0
      %4763 = vmatpush.msra.mxu0 0.0
      %4764 = vmatpush.msra.mxu0 0.0
      %4765 = vmatpush.msra.mxu0 0.0
      %4766 = vmatpush.msra.mxu0 0.0
      %4767 = vmatpush.msra.mxu0 0.0
      %4768 = vmatpush.msra.mxu0 0.0
      %4769 = vmatpush.msra.mxu0 0.0
      %4770 = vmatpush.msra.mxu0 0.0
      %4771 = vmatpush.msra.mxu0 %v2204
      %4772 = vmatmul.f32.gmra.mxu0 %v1711
      %v4773 = vpop.f32.mrf.mxu0
      %v4774 = vadd.f32 0.0, %v4773
      %4775 = vmatmul.f32.gmra.mxu0 %v1713
      %v4776 = vpop.f32.mrf.mxu0
      %v4777 = vadd.f32 0.0, %v4776
      %4778 = vmatmul.f32.gmra.mxu0 %v1715
      %v4779 = vpop.f32.mrf.mxu0
      %v4780 = vadd.f32 0.0, %v4779
      %4781 = vmatmul.f32.gmra.mxu0 %v1717
      %v4782 = vpop.f32.mrf.mxu0
      %v4783 = vadd.f32 0.0, %v4782
      %4784 = vmatmul.f32.gmra.mxu0 %v1719
      %v4785 = vpop.f32.mrf.mxu0
      %v4786 = vadd.f32 0.0, %v4785
      %4787 = vmatmul.f32.gmra.mxu0 %v1721
      %v4788 = vpop.f32.mrf.mxu0
      %v4789 = vadd.f32 0.0, %v4788
      %4790 = vmatmul.f32.gmra.mxu0 %v1723
      %v4791 = vpop.f32.mrf.mxu0
      %v4792 = vadd.f32 0.0, %v4791
      %4793 = vmatmul.f32.gmra.mxu0 %v1725
      %v4794 = vpop.f32.mrf.mxu0
      %v4795 = vadd.f32 0.0, %v4794
      %4796 = vmatmul.f32.gmra.mxu0 %v1727
      %v4797 = vpop.f32.mrf.mxu0
      %v4798 = vadd.f32 0.0, %v4797
      %4799 = vmatmul.f32.gmra.mxu0 %v1729
      %v4800 = vpop.f32.mrf.mxu0
      %v4801 = vadd.f32 0.0, %v4800
      %4802 = vmatmul.f32.gmra.mxu0 %v1731
      %v4803 = vpop.f32.mrf.mxu0
      %v4804 = vadd.f32 0.0, %v4803
      %4805 = vmatmul.f32.gmra.mxu0 %v1733
      %v4806 = vpop.f32.mrf.mxu0
      %v4807 = vadd.f32 0.0, %v4806
      %4808 = vmatmul.f32.gmra.mxu0 %v1735
      %v4809 = vpop.f32.mrf.mxu0
      %v4810 = vadd.f32 0.0, %v4809
      %4811 = vmatmul.f32.gmra.mxu0 %v1737
      %v4812 = vpop.f32.mrf.mxu0
      %v4813 = vadd.f32 0.0, %v4812
      %4814 = vmatmul.f32.gmra.mxu0 %v1739
      %v4815 = vpop.f32.mrf.mxu0
      %v4816 = vadd.f32 0.0, %v4815
      %4817 = vmatmul.f32.gmra.mxu0 %v1741
      %v4818 = vpop.f32.mrf.mxu0
      %v4819 = vadd.f32 0.0, %v4818
      %4820 = vmatmul.f32.gmra.mxu0 %v1743
      %v4821 = vpop.f32.mrf.mxu0
      %v4822 = vadd.f32 0.0, %v4821
      %4823 = vmatmul.f32.gmra.mxu0 %v1745
      %v4824 = vpop.f32.mrf.mxu0
      %v4825 = vadd.f32 0.0, %v4824
      %4826 = vmatmul.f32.gmra.mxu0 %v1747
      %v4827 = vpop.f32.mrf.mxu0
      %v4828 = vadd.f32 0.0, %v4827
      %4829 = vmatmul.f32.gmra.mxu0 %v1749
      %v4830 = vpop.f32.mrf.mxu0
      %v4831 = vadd.f32 0.0, %v4830
      %4832 = vmatmul.f32.gmra.mxu0 %v1751
      %v4833 = vpop.f32.mrf.mxu0
      %v4834 = vadd.f32 0.0, %v4833
      %4835 = vmatmul.f32.gmra.mxu0 %v1753
      %v4836 = vpop.f32.mrf.mxu0
      %v4837 = vadd.f32 0.0, %v4836
      %4838 = vmatmul.f32.gmra.mxu0 %v1755
      %v4839 = vpop.f32.mrf.mxu0
      %v4840 = vadd.f32 0.0, %v4839
      %4841 = vmatmul.f32.gmra.mxu0 %v1757
      %v4842 = vpop.f32.mrf.mxu0
      %v4843 = vadd.f32 0.0, %v4842
      %4844 = vmatmul.f32.gmra.mxu0 %v4748
      %v4845 = vpop.f32.mrf.mxu0
      %v4846 = vadd.f32 0.0, %v4845
      %4847 = vmatmul.f32.gmra.mxu0 %v4750
      %v4848 = vpop.f32.mrf.mxu0
      %v4849 = vadd.f32 0.0, %v4848
      %4850 = vmatmul.f32.gmra.mxu0 %v4752
      %v4851 = vpop.f32.mrf.mxu0
      %v4852 = vadd.f32 0.0, %v4851
      %4853 = vmatmul.f32.gmra.mxu0 %v4754
      %v4854 = vpop.f32.mrf.mxu0
      %v4855 = vadd.f32 0.0, %v4854
      %4856 = vdwg.mxu0
      %v4857 = vadd.f32 %v4710, %v4774
      %v4858 = vadd.f32 %v4711, %v4777
      %v4859 = vadd.f32 %v4712, %v4780
      %v4860 = vadd.f32 %v4713, %v4783
      %v4861 = vadd.f32 %v4714, %v4786
      %v4862 = vadd.f32 %v4715, %v4789
      %v4863 = vadd.f32 %v4716, %v4792
      %v4864 = vadd.f32 %v4717, %v4795
      %v4865 = vadd.f32 %v4718, %v4798
      %v4866 = vadd.f32 %v4719, %v4801
      %v4867 = vadd.f32 %v4720, %v4804
      %v4868 = vadd.f32 %v4721, %v4807
      %v4869 = vadd.f32 %v4722, %v4810
      %v4870 = vadd.f32 %v4723, %v4813
      %v4871 = vadd.f32 %v4724, %v4816
      %v4872 = vadd.f32 %v4725, %v4819
      %v4873 = vadd.f32 %v4726, %v4822
      %v4874 = vadd.f32 %v4727, %v4825
      %v4875 = vadd.f32 %v4728, %v4828
      %v4876 = vadd.f32 %v4729, %v4831
      %v4877 = vadd.f32 %v4730, %v4834
      %v4878 = vadd.f32 %v4731, %v4837
      %v4879 = vadd.f32 %v4732, %v4840
      %v4880 = vadd.f32 %v4733, %v4843
      %v4881 = vadd.f32 %v4734, %v4846
      %v4882 = vadd.f32 %v4735, %v4849
      %v4883 = vadd.f32 %v4736, %v4852
      %v4884 = vadd.f32 %v4737, %v4855
      %v4885 = vmax.f32 %v3710, %v4857
      %v4886 = vmax.f32 %v3711, %v4858
      %v4887 = vmax.f32 %v3712, %v4859
      %v4888 = vmax.f32 %v3713, %v4860
      %v4889 = vmax.f32 %v3714, %v4861
      %v4890 = vmax.f32 %v3715, %v4862
      %v4891 = vmax.f32 %v3716, %v4863
      %v4892 = vmax.f32 %v3717, %v4864
      %v4893 = vmax.f32 %v3718, %v4865
      %v4894 = vmax.f32 %v3719, %v4866
      %v4895 = vmax.f32 %v3720, %v4867
      %v4896 = vmax.f32 %v3721, %v4868
      %v4897 = vmax.f32 %v3722, %v4869
      %v4898 = vmax.f32 %v3723, %v4870
      %v4899 = vmax.f32 %v3724, %v4871
      %v4900 = vmax.f32 %v3725, %v4872
      %v4901 = vmax.f32 %v3726, %v4873
      %v4902 = vmax.f32 %v3727, %v4874
      %v4903 = vmax.f32 %v3728, %v4875
      %v4904 = vmax.f32 %v3729, %v4876
      %v4905 = vmax.f32 %v3730, %v4877
      %v4906 = vmax.f32 %v3731, %v4878
      %v4907 = vmax.f32 %v3732, %v4879
      %v4908 = vmax.f32 %v3733, %v4880
      %v4909 = vmax.f32 %v3734, %v4881
      %v4910 = vmax.f32 %v3735, %v4882
      %v4911 = vmax.f32 %v3736, %v4883
      %v4912 = vmax.f32 %v3737, %v4884
      %4913 = vmatpush.msra.mxu0 0.0
      %4914 = vmatpush.msra.mxu0 0.0
      %4915 = vmatpush.msra.mxu0 0.0
      %4916 = vmatpush.msra.mxu0 0.0
      %4917 = vmatpush.msra.mxu0 0.0
      %4918 = vmatpush.msra.mxu0 0.0
      %4919 = vmatpush.msra.mxu0 0.0
      %4920 = vmatpush.msra.mxu0 0.0
      %4921 = vmatpush.msra.mxu0 0.0
      %4922 = vmatpush.msra.mxu0 0.0
      %4923 = vmatpush.msra.mxu0 0.0
      %4924 = vmatpush.msra.mxu0 0.0
      %4925 = vmatpush.msra.mxu0 0.0
      %4926 = vmatpush.msra.mxu0 0.0
      %4927 = vmatpush.msra.mxu0 0.0
      %4928 = vmatpush.msra.mxu0 %v643
      %4929 = vmatmul.f32.gmra.mxu0 %v1703
      %v4930 = vpop.f32.mrf.mxu0
      %v4931 = vadd.f32 0.0, %v4930
      %4932 = vmatmul.f32.gmra.mxu0 %v1705
      %v4933 = vpop.f32.mrf.mxu0
      %v4934 = vadd.f32 0.0, %v4933
      %4935 = vmatmul.f32.gmra.mxu0 %v1707
      %v4936 = vpop.f32.mrf.mxu0
      %v4937 = vadd.f32 0.0, %v4936
      %4938 = vmatmul.f32.gmra.mxu0 %v1709
      %v4939 = vpop.f32.mrf.mxu0
      %v4940 = vadd.f32 0.0, %v4939
      %4941 = vmatmul.f32.gmra.mxu0 %v1711
      %v4942 = vpop.f32.mrf.mxu0
      %v4943 = vadd.f32 0.0, %v4942
      %4944 = vmatmul.f32.gmra.mxu0 %v1713
      %v4945 = vpop.f32.mrf.mxu0
      %v4946 = vadd.f32 0.0, %v4945
      %4947 = vmatmul.f32.gmra.mxu0 %v1715
      %v4948 = vpop.f32.mrf.mxu0
      %v4949 = vadd.f32 0.0, %v4948
      %4950 = vmatmul.f32.gmra.mxu0 %v1717
      %v4951 = vpop.f32.mrf.mxu0
      %v4952 = vadd.f32 0.0, %v4951
      %4953 = vmatmul.f32.gmra.mxu0 %v1719
      %v4954 = vpop.f32.mrf.mxu0
      %v4955 = vadd.f32 0.0, %v4954
      %4956 = vmatmul.f32.gmra.mxu0 %v1721
      %v4957 = vpop.f32.mrf.mxu0
      %v4958 = vadd.f32 0.0, %v4957
      %4959 = vmatmul.f32.gmra.mxu0 %v1723
      %v4960 = vpop.f32.mrf.mxu0
      %v4961 = vadd.f32 0.0, %v4960
      %4962 = vmatmul.f32.gmra.mxu0 %v1725
      %v4963 = vpop.f32.mrf.mxu0
      %v4964 = vadd.f32 0.0, %v4963
      %4965 = vmatmul.f32.gmra.mxu0 %v1727
      %v4966 = vpop.f32.mrf.mxu0
      %v4967 = vadd.f32 0.0, %v4966
      %4968 = vmatmul.f32.gmra.mxu0 %v1729
      %v4969 = vpop.f32.mrf.mxu0
      %v4970 = vadd.f32 0.0, %v4969
      %4971 = vmatmul.f32.gmra.mxu0 %v1731
      %v4972 = vpop.f32.mrf.mxu0
      %v4973 = vadd.f32 0.0, %v4972
      %4974 = vmatmul.f32.gmra.mxu0 %v1733
      %v4975 = vpop.f32.mrf.mxu0
      %v4976 = vadd.f32 0.0, %v4975
      %4977 = vmatmul.f32.gmra.mxu0 %v1735
      %v4978 = vpop.f32.mrf.mxu0
      %v4979 = vadd.f32 0.0, %v4978
      %4980 = vmatmul.f32.gmra.mxu0 %v1737
      %v4981 = vpop.f32.mrf.mxu0
      %v4982 = vadd.f32 0.0, %v4981
      %4983 = vmatmul.f32.gmra.mxu0 %v1739
      %v4984 = vpop.f32.mrf.mxu0
      %v4985 = vadd.f32 0.0, %v4984
      %4986 = vmatmul.f32.gmra.mxu0 %v1741
      %v4987 = vpop.f32.mrf.mxu0
      %v4988 = vadd.f32 0.0, %v4987
      %4989 = vmatmul.f32.gmra.mxu0 %v1743
      %v4990 = vpop.f32.mrf.mxu0
      %v4991 = vadd.f32 0.0, %v4990
      %4992 = vmatmul.f32.gmra.mxu0 %v1745
      %v4993 = vpop.f32.mrf.mxu0
      %v4994 = vadd.f32 0.0, %v4993
      %4995 = vmatmul.f32.gmra.mxu0 %v1747
      %v4996 = vpop.f32.mrf.mxu0
      %v4997 = vadd.f32 0.0, %v4996
      %4998 = vmatmul.f32.gmra.mxu0 %v1749
      %v4999 = vpop.f32.mrf.mxu0
      %v5000 = vadd.f32 0.0, %v4999
      %5001 = vmatmul.f32.gmra.mxu0 %v1751
      %v5002 = vpop.f32.mrf.mxu0
      %v5003 = vadd.f32 0.0, %v5002
      %5004 = vmatmul.f32.gmra.mxu0 %v1753
      %v5005 = vpop.f32.mrf.mxu0
      %v5006 = vadd.f32 0.0, %v5005
      %5007 = vmatmul.f32.gmra.mxu0 %v1755
      %v5008 = vpop.f32.mrf.mxu0
      %v5009 = vadd.f32 0.0, %v5008
      %5010 = vmatmul.f32.gmra.mxu0 %v1757
      %v5011 = vpop.f32.mrf.mxu0
      %v5012 = vadd.f32 0.0, %v5011
      %5013 = vdwg.mxu0
      %5014 = vmatpush.msra.mxu0 0.0
      %5015 = vmatpush.msra.mxu0 0.0
      %5016 = vmatpush.msra.mxu0 0.0
      %5017 = vmatpush.msra.mxu0 0.0
      %5018 = vmatpush.msra.mxu0 0.0
      %5019 = vmatpush.msra.mxu0 0.0
      %5020 = vmatpush.msra.mxu0 0.0
      %5021 = vmatpush.msra.mxu0 0.0
      %5022 = vmatpush.msra.mxu0 0.0
      %5023 = vmatpush.msra.mxu0 0.0
      %5024 = vmatpush.msra.mxu0 0.0
      %5025 = vmatpush.msra.mxu0 0.0
      %5026 = vmatpush.msra.mxu0 0.0
      %5027 = vmatpush.msra.mxu0 0.0
      %5028 = vmatpush.msra.mxu0 0.0
      %5029 = vmatpush.msra.mxu0 %v831
      %5030 = vmatmul.f32.gmra.mxu0 %v1416
      %v5031 = vpop.f32.mrf.mxu0
      %v5032 = vadd.f32 %v4931, %v5031
      %5033 = vmatmul.f32.gmra.mxu0 %v1419
      %v5034 = vpop.f32.mrf.mxu0
      %v5035 = vadd.f32 %v4934, %v5034
      %5036 = vmatmul.f32.gmra.mxu0 %v1422
      %v5037 = vpop.f32.mrf.mxu0
      %v5038 = vadd.f32 %v4937, %v5037
      %5039 = vmatmul.f32.gmra.mxu0 %v1425
      %v5040 = vpop.f32.mrf.mxu0
      %v5041 = vadd.f32 %v4940, %v5040
      %5042 = vmatmul.f32.gmra.mxu0 %v1428
      %v5043 = vpop.f32.mrf.mxu0
      %v5044 = vadd.f32 %v4943, %v5043
      %5045 = vmatmul.f32.gmra.mxu0 %v1431
      %v5046 = vpop.f32.mrf.mxu0
      %v5047 = vadd.f32 %v4946, %v5046
      %5048 = vmatmul.f32.gmra.mxu0 %v1434
      %v5049 = vpop.f32.mrf.mxu0
      %v5050 = vadd.f32 %v4949, %v5049
      %5051 = vmatmul.f32.gmra.mxu0 %v1437
      %v5052 = vpop.f32.mrf.mxu0
      %v5053 = vadd.f32 %v4952, %v5052
      %5054 = vmatmul.f32.gmra.mxu0 %v1440
      %v5055 = vpop.f32.mrf.mxu0
      %v5056 = vadd.f32 %v4955, %v5055
      %5057 = vmatmul.f32.gmra.mxu0 %v1443
      %v5058 = vpop.f32.mrf.mxu0
      %v5059 = vadd.f32 %v4958, %v5058
      %5060 = vmatmul.f32.gmra.mxu0 %v1446
      %v5061 = vpop.f32.mrf.mxu0
      %v5062 = vadd.f32 %v4961, %v5061
      %5063 = vmatmul.f32.gmra.mxu0 %v1449
      %v5064 = vpop.f32.mrf.mxu0
      %v5065 = vadd.f32 %v4964, %v5064
      %5066 = vmatmul.f32.gmra.mxu0 %v1452
      %v5067 = vpop.f32.mrf.mxu0
      %v5068 = vadd.f32 %v4967, %v5067
      %5069 = vmatmul.f32.gmra.mxu0 %v1455
      %v5070 = vpop.f32.mrf.mxu0
      %v5071 = vadd.f32 %v4970, %v5070
      %5072 = vmatmul.f32.gmra.mxu0 %v1458
      %v5073 = vpop.f32.mrf.mxu0
      %v5074 = vadd.f32 %v4973, %v5073
      %5075 = vmatmul.f32.gmra.mxu0 %v1461
      %v5076 = vpop.f32.mrf.mxu0
      %v5077 = vadd.f32 %v4976, %v5076
      %5078 = vmatmul.f32.gmra.mxu0 %v1464
      %v5079 = vpop.f32.mrf.mxu0
      %v5080 = vadd.f32 %v4979, %v5079
      %5081 = vmatmul.f32.gmra.mxu0 %v1467
      %v5082 = vpop.f32.mrf.mxu0
      %v5083 = vadd.f32 %v4982, %v5082
      %5084 = vmatmul.f32.gmra.mxu0 %v1470
      %v5085 = vpop.f32.mrf.mxu0
      %v5086 = vadd.f32 %v4985, %v5085
      %5087 = vmatmul.f32.gmra.mxu0 %v1473
      %v5088 = vpop.f32.mrf.mxu0
      %v5089 = vadd.f32 %v4988, %v5088
      %5090 = vmatmul.f32.gmra.mxu0 %v1476
      %v5091 = vpop.f32.mrf.mxu0
      %v5092 = vadd.f32 %v4991, %v5091
      %5093 = vmatmul.f32.gmra.mxu0 %v1479
      %v5094 = vpop.f32.mrf.mxu0
      %v5095 = vadd.f32 %v4994, %v5094
      %5096 = vmatmul.f32.gmra.mxu0 %v1482
      %v5097 = vpop.f32.mrf.mxu0
      %v5098 = vadd.f32 %v4997, %v5097
      %5099 = vmatmul.f32.gmra.mxu0 %v1485
      %v5100 = vpop.f32.mrf.mxu0
      %v5101 = vadd.f32 %v5000, %v5100
      %5102 = vmatmul.f32.gmra.mxu0 %v1488
      %v5103 = vpop.f32.mrf.mxu0
      %v5104 = vadd.f32 %v5003, %v5103
      %5105 = vmatmul.f32.gmra.mxu0 %v1491
      %v5106 = vpop.f32.mrf.mxu0
      %v5107 = vadd.f32 %v5006, %v5106
      %5108 = vmatmul.f32.gmra.mxu0 %v1494
      %v5109 = vpop.f32.mrf.mxu0
      %v5110 = vadd.f32 %v5009, %v5109
      %5111 = vmatmul.f32.gmra.mxu0 %v1497
      %v5112 = vpop.f32.mrf.mxu0
      %v5113 = vadd.f32 %v5012, %v5112
      %5114 = vdwg.mxu0
      %5115 = vmatpush.msra.mxu0 0.0
      %5116 = vmatpush.msra.mxu0 0.0
      %5117 = vmatpush.msra.mxu0 0.0
      %5118 = vmatpush.msra.mxu0 0.0
      %5119 = vmatpush.msra.mxu0 0.0
      %5120 = vmatpush.msra.mxu0 0.0
      %5121 = vmatpush.msra.mxu0 0.0
      %5122 = vmatpush.msra.mxu0 0.0
      %5123 = vmatpush.msra.mxu0 0.0
      %5124 = vmatpush.msra.mxu0 0.0
      %5125 = vmatpush.msra.mxu0 0.0
      %5126 = vmatpush.msra.mxu0 0.0
      %5127 = vmatpush.msra.mxu0 0.0
      %5128 = vmatpush.msra.mxu0 0.0
      %5129 = vmatpush.msra.mxu0 0.0
      %5130 = vmatpush.msra.mxu0 %v1064
      %5131 = vmatmul.f32.gmra.mxu0 %v3120
      %v5132 = vpop.f32.mrf.mxu0
      %v5133 = vadd.f32 0.0, %v5132
      %5134 = vmatmul.f32.gmra.mxu0 %v3122
      %v5135 = vpop.f32.mrf.mxu0
      %v5136 = vadd.f32 0.0, %v5135
      %5137 = vmatmul.f32.gmra.mxu0 %v3124
      %v5138 = vpop.f32.mrf.mxu0
      %v5139 = vadd.f32 0.0, %v5138
      %5140 = vmatmul.f32.gmra.mxu0 %v3126
      %v5141 = vpop.f32.mrf.mxu0
      %v5142 = vadd.f32 0.0, %v5141
      %5143 = vmatmul.f32.gmra.mxu0 %v3128
      %v5144 = vpop.f32.mrf.mxu0
      %v5145 = vadd.f32 0.0, %v5144
      %5146 = vmatmul.f32.gmra.mxu0 %v3130
      %v5147 = vpop.f32.mrf.mxu0
      %v5148 = vadd.f32 0.0, %v5147
      %5149 = vmatmul.f32.gmra.mxu0 %v3132
      %v5150 = vpop.f32.mrf.mxu0
      %v5151 = vadd.f32 0.0, %v5150
      %5152 = vmatmul.f32.gmra.mxu0 %v3134
      %v5153 = vpop.f32.mrf.mxu0
      %v5154 = vadd.f32 0.0, %v5153
      %5155 = vmatmul.f32.gmra.mxu0 %v3136
      %v5156 = vpop.f32.mrf.mxu0
      %v5157 = vadd.f32 0.0, %v5156
      %5158 = vmatmul.f32.gmra.mxu0 %v3138
      %v5159 = vpop.f32.mrf.mxu0
      %v5160 = vadd.f32 0.0, %v5159
      %5161 = vmatmul.f32.gmra.mxu0 %v3140
      %v5162 = vpop.f32.mrf.mxu0
      %v5163 = vadd.f32 0.0, %v5162
      %5164 = vmatmul.f32.gmra.mxu0 %v3142
      %v5165 = vpop.f32.mrf.mxu0
      %v5166 = vadd.f32 0.0, %v5165
      %5167 = vmatmul.f32.gmra.mxu0 %v3144
      %v5168 = vpop.f32.mrf.mxu0
      %v5169 = vadd.f32 0.0, %v5168
      %5170 = vmatmul.f32.gmra.mxu0 %v3146
      %v5171 = vpop.f32.mrf.mxu0
      %v5172 = vadd.f32 0.0, %v5171
      %5173 = vmatmul.f32.gmra.mxu0 %v3148
      %v5174 = vpop.f32.mrf.mxu0
      %v5175 = vadd.f32 0.0, %v5174
      %5176 = vmatmul.f32.gmra.mxu0 %v3150
      %v5177 = vpop.f32.mrf.mxu0
      %v5178 = vadd.f32 0.0, %v5177
      %5179 = vmatmul.f32.gmra.mxu0 %v3152
      %v5180 = vpop.f32.mrf.mxu0
      %v5181 = vadd.f32 0.0, %v5180
      %5182 = vmatmul.f32.gmra.mxu0 %v3154
      %v5183 = vpop.f32.mrf.mxu0
      %v5184 = vadd.f32 0.0, %v5183
      %5185 = vmatmul.f32.gmra.mxu0 %v3156
      %v5186 = vpop.f32.mrf.mxu0
      %v5187 = vadd.f32 0.0, %v5186
      %5188 = vmatmul.f32.gmra.mxu0 %v3158
      %v5189 = vpop.f32.mrf.mxu0
      %v5190 = vadd.f32 0.0, %v5189
      %5191 = vmatmul.f32.gmra.mxu0 %v3160
      %v5192 = vpop.f32.mrf.mxu0
      %v5193 = vadd.f32 0.0, %v5192
      %5194 = vmatmul.f32.gmra.mxu0 %v3162
      %v5195 = vpop.f32.mrf.mxu0
      %v5196 = vadd.f32 0.0, %v5195
      %5197 = vmatmul.f32.gmra.mxu0 %v3164
      %v5198 = vpop.f32.mrf.mxu0
      %v5199 = vadd.f32 0.0, %v5198
      %5200 = vmatmul.f32.gmra.mxu0 %v3166
      %v5201 = vpop.f32.mrf.mxu0
      %v5202 = vadd.f32 0.0, %v5201
      %5203 = vmatmul.f32.gmra.mxu0 %v3168
      %v5204 = vpop.f32.mrf.mxu0
      %v5205 = vadd.f32 0.0, %v5204
      %5206 = vmatmul.f32.gmra.mxu0 %v3170
      %v5207 = vpop.f32.mrf.mxu0
      %v5208 = vadd.f32 0.0, %v5207
      %5209 = vmatmul.f32.gmra.mxu0 %v3172
      %v5210 = vpop.f32.mrf.mxu0
      %v5211 = vadd.f32 0.0, %v5210
      %5212 = vmatmul.f32.gmra.mxu0 %v3174
      %v5213 = vpop.f32.mrf.mxu0
      %v5214 = vadd.f32 0.0, %v5213
      %5215 = vdwg.mxu0
      %v5216 = vadd.f32 %v5032, %v5133
      %v5217 = vadd.f32 %v5035, %v5136
      %v5218 = vadd.f32 %v5038, %v5139
      %v5219 = vadd.f32 %v5041, %v5142
      %v5220 = vadd.f32 %v5044, %v5145
      %v5221 = vadd.f32 %v5047, %v5148
      %v5222 = vadd.f32 %v5050, %v5151
      %v5223 = vadd.f32 %v5053, %v5154
      %v5224 = vadd.f32 %v5056, %v5157
      %v5225 = vadd.f32 %v5059, %v5160
      %v5226 = vadd.f32 %v5062, %v5163
      %v5227 = vadd.f32 %v5065, %v5166
      %v5228 = vadd.f32 %v5068, %v5169
      %v5229 = vadd.f32 %v5071, %v5172
      %v5230 = vadd.f32 %v5074, %v5175
      %v5231 = vadd.f32 %v5077, %v5178
      %v5232 = vadd.f32 %v5080, %v5181
      %v5233 = vadd.f32 %v5083, %v5184
      %v5234 = vadd.f32 %v5086, %v5187
      %v5235 = vadd.f32 %v5089, %v5190
      %v5236 = vadd.f32 %v5092, %v5193
      %v5237 = vadd.f32 %v5095, %v5196
      %v5238 = vadd.f32 %v5098, %v5199
      %v5239 = vadd.f32 %v5101, %v5202
      %v5240 = vadd.f32 %v5104, %v5205
      %v5241 = vadd.f32 %v5107, %v5208
      %v5242 = vadd.f32 %v5110, %v5211
      %v5243 = vadd.f32 %v5113, %v5214
      %5244 = vmatpush.msra.mxu0 0.0
      %5245 = vmatpush.msra.mxu0 0.0
      %5246 = vmatpush.msra.mxu0 0.0
      %5247 = vmatpush.msra.mxu0 0.0
      %5248 = vmatpush.msra.mxu0 0.0
      %5249 = vmatpush.msra.mxu0 0.0
      %5250 = vmatpush.msra.mxu0 0.0
      %5251 = vmatpush.msra.mxu0 0.0
      %5252 = vmatpush.msra.mxu0 0.0
      %5253 = vmatpush.msra.mxu0 0.0
      %5254 = vmatpush.msra.mxu0 0.0
      %5255 = vmatpush.msra.mxu0 0.0
      %5256 = vmatpush.msra.mxu0 0.0
      %5257 = vmatpush.msra.mxu0 0.0
      %5258 = vmatpush.msra.mxu0 0.0
      %5259 = vmatpush.msra.mxu0 %v1282
      %5260 = vmatmul.f32.gmra.mxu0 %v570
      %v5261 = vpop.f32.mrf.mxu0
      %v5262 = vadd.f32 0.0, %v5261
      %5263 = vmatmul.f32.gmra.mxu0 %v573
      %v5264 = vpop.f32.mrf.mxu0
      %v5265 = vadd.f32 0.0, %v5264
      %5266 = vmatmul.f32.gmra.mxu0 %v576
      %v5267 = vpop.f32.mrf.mxu0
      %v5268 = vadd.f32 0.0, %v5267
      %5269 = vmatmul.f32.gmra.mxu0 %v579
      %v5270 = vpop.f32.mrf.mxu0
      %v5271 = vadd.f32 0.0, %v5270
      %5272 = vmatmul.f32.gmra.mxu0 %v582
      %v5273 = vpop.f32.mrf.mxu0
      %v5274 = vadd.f32 0.0, %v5273
      %5275 = vmatmul.f32.gmra.mxu0 %v585
      %v5276 = vpop.f32.mrf.mxu0
      %v5277 = vadd.f32 0.0, %v5276
      %5278 = vmatmul.f32.gmra.mxu0 %v588
      %v5279 = vpop.f32.mrf.mxu0
      %v5280 = vadd.f32 0.0, %v5279
      %5281 = vmatmul.f32.gmra.mxu0 %v591
      %v5282 = vpop.f32.mrf.mxu0
      %v5283 = vadd.f32 0.0, %v5282
      %5284 = vmatmul.f32.gmra.mxu0 %v594
      %v5285 = vpop.f32.mrf.mxu0
      %v5286 = vadd.f32 0.0, %v5285
      %5287 = vmatmul.f32.gmra.mxu0 %v597
      %v5288 = vpop.f32.mrf.mxu0
      %v5289 = vadd.f32 0.0, %v5288
      %5290 = vmatmul.f32.gmra.mxu0 %v600
      %v5291 = vpop.f32.mrf.mxu0
      %v5292 = vadd.f32 0.0, %v5291
      %5293 = vmatmul.f32.gmra.mxu0 %v603
      %v5294 = vpop.f32.mrf.mxu0
      %v5295 = vadd.f32 0.0, %v5294
      %5296 = vmatmul.f32.gmra.mxu0 %v606
      %v5297 = vpop.f32.mrf.mxu0
      %v5298 = vadd.f32 0.0, %v5297
      %5299 = vmatmul.f32.gmra.mxu0 %v609
      %v5300 = vpop.f32.mrf.mxu0
      %v5301 = vadd.f32 0.0, %v5300
      %5302 = vmatmul.f32.gmra.mxu0 %v612
      %v5303 = vpop.f32.mrf.mxu0
      %v5304 = vadd.f32 0.0, %v5303
      %5305 = vmatmul.f32.gmra.mxu0 %v615
      %v5306 = vpop.f32.mrf.mxu0
      %v5307 = vadd.f32 0.0, %v5306
      %5308 = vmatmul.f32.gmra.mxu0 %v618
      %v5309 = vpop.f32.mrf.mxu0
      %v5310 = vadd.f32 0.0, %v5309
      %5311 = vmatmul.f32.gmra.mxu0 %v621
      %v5312 = vpop.f32.mrf.mxu0
      %v5313 = vadd.f32 0.0, %v5312
      %5314 = vmatmul.f32.gmra.mxu0 %v624
      %v5315 = vpop.f32.mrf.mxu0
      %v5316 = vadd.f32 0.0, %v5315
      %5317 = vmatmul.f32.gmra.mxu0 %v627
      %v5318 = vpop.f32.mrf.mxu0
      %v5319 = vadd.f32 0.0, %v5318
      %5320 = vmatmul.f32.gmra.mxu0 %v630
      %v5321 = vpop.f32.mrf.mxu0
      %v5322 = vadd.f32 0.0, %v5321
      %5323 = vmatmul.f32.gmra.mxu0 %v633
      %v5324 = vpop.f32.mrf.mxu0
      %v5325 = vadd.f32 0.0, %v5324
      %5326 = vmatmul.f32.gmra.mxu0 %v636
      %v5327 = vpop.f32.mrf.mxu0
      %v5328 = vadd.f32 0.0, %v5327
      %5329 = vmatmul.f32.gmra.mxu0 %v639
      %v5330 = vpop.f32.mrf.mxu0
      %v5331 = vadd.f32 0.0, %v5330
      %5332 = vmatmul.f32.gmra.mxu0 %v2040
      %v5333 = vpop.f32.mrf.mxu0
      %v5334 = vadd.f32 0.0, %v5333
      %5335 = vmatmul.f32.gmra.mxu0 %v2043
      %v5336 = vpop.f32.mrf.mxu0
      %v5337 = vadd.f32 0.0, %v5336
      %5338 = vmatmul.f32.gmra.mxu0 %v2046
      %v5339 = vpop.f32.mrf.mxu0
      %v5340 = vadd.f32 0.0, %v5339
      %5341 = vmatmul.f32.gmra.mxu0 %v2049
      %v5342 = vpop.f32.mrf.mxu0
      %v5343 = vadd.f32 0.0, %v5342
      %5344 = vdwg.mxu0
      %v5345 = vadd.f32 %v5216, %v5262
      %v5346 = vadd.f32 %v5217, %v5265
      %v5347 = vadd.f32 %v5218, %v5268
      %v5348 = vadd.f32 %v5219, %v5271
      %v5349 = vadd.f32 %v5220, %v5274
      %v5350 = vadd.f32 %v5221, %v5277
      %v5351 = vadd.f32 %v5222, %v5280
      %v5352 = vadd.f32 %v5223, %v5283
      %v5353 = vadd.f32 %v5224, %v5286
      %v5354 = vadd.f32 %v5225, %v5289
      %v5355 = vadd.f32 %v5226, %v5292
      %v5356 = vadd.f32 %v5227, %v5295
      %v5357 = vadd.f32 %v5228, %v5298
      %v5358 = vadd.f32 %v5229, %v5301
      %v5359 = vadd.f32 %v5230, %v5304
      %v5360 = vadd.f32 %v5231, %v5307
      %v5361 = vadd.f32 %v5232, %v5310
      %v5362 = vadd.f32 %v5233, %v5313
      %v5363 = vadd.f32 %v5234, %v5316
      %v5364 = vadd.f32 %v5235, %v5319
      %v5365 = vadd.f32 %v5236, %v5322
      %v5366 = vadd.f32 %v5237, %v5325
      %v5367 = vadd.f32 %v5238, %v5328
      %v5368 = vadd.f32 %v5239, %v5331
      %v5369 = vadd.f32 %v5240, %v5334
      %v5370 = vadd.f32 %v5241, %v5337
      %v5371 = vadd.f32 %v5242, %v5340
      %v5372 = vadd.f32 %v5243, %v5343
      %5373 = vmatpush.msra.mxu0 0.0
      %5374 = vmatpush.msra.mxu0 0.0
      %5375 = vmatpush.msra.mxu0 0.0
      %5376 = vmatpush.msra.mxu0 0.0
      %5377 = vmatpush.msra.mxu0 0.0
      %5378 = vmatpush.msra.mxu0 0.0
      %5379 = vmatpush.msra.mxu0 0.0
      %5380 = vmatpush.msra.mxu0 0.0
      %5381 = vmatpush.msra.mxu0 0.0
      %5382 = vmatpush.msra.mxu0 0.0
      %5383 = vmatpush.msra.mxu0 0.0
      %5384 = vmatpush.msra.mxu0 0.0
      %5385 = vmatpush.msra.mxu0 0.0
      %5386 = vmatpush.msra.mxu0 0.0
      %5387 = vmatpush.msra.mxu0 0.0
      %5388 = vmatpush.msra.mxu0 %v1500
      %5389 = vmatmul.f32.gmra.mxu0 %v1015
      %v5390 = vpop.f32.mrf.mxu0
      %v5391 = vadd.f32 0.0, %v5390
      %5392 = vmatmul.f32.gmra.mxu0 %v1017
      %v5393 = vpop.f32.mrf.mxu0
      %v5394 = vadd.f32 0.0, %v5393
      %5395 = vmatmul.f32.gmra.mxu0 %v1019
      %v5396 = vpop.f32.mrf.mxu0
      %v5397 = vadd.f32 0.0, %v5396
      %5398 = vmatmul.f32.gmra.mxu0 %v1021
      %v5399 = vpop.f32.mrf.mxu0
      %v5400 = vadd.f32 0.0, %v5399
      %5401 = vmatmul.f32.gmra.mxu0 %v1023
      %v5402 = vpop.f32.mrf.mxu0
      %v5403 = vadd.f32 0.0, %v5402
      %5404 = vmatmul.f32.gmra.mxu0 %v1025
      %v5405 = vpop.f32.mrf.mxu0
      %v5406 = vadd.f32 0.0, %v5405
      %5407 = vmatmul.f32.gmra.mxu0 %v1027
      %v5408 = vpop.f32.mrf.mxu0
      %v5409 = vadd.f32 0.0, %v5408
      %5410 = vmatmul.f32.gmra.mxu0 %v1029
      %v5411 = vpop.f32.mrf.mxu0
      %v5412 = vadd.f32 0.0, %v5411
      %5413 = vmatmul.f32.gmra.mxu0 %v1031
      %v5414 = vpop.f32.mrf.mxu0
      %v5415 = vadd.f32 0.0, %v5414
      %5416 = vmatmul.f32.gmra.mxu0 %v1033
      %v5417 = vpop.f32.mrf.mxu0
      %v5418 = vadd.f32 0.0, %v5417
      %5419 = vmatmul.f32.gmra.mxu0 %v1035
      %v5420 = vpop.f32.mrf.mxu0
      %v5421 = vadd.f32 0.0, %v5420
      %5422 = vmatmul.f32.gmra.mxu0 %v1037
      %v5423 = vpop.f32.mrf.mxu0
      %v5424 = vadd.f32 0.0, %v5423
      %5425 = vmatmul.f32.gmra.mxu0 %v1039
      %v5426 = vpop.f32.mrf.mxu0
      %v5427 = vadd.f32 0.0, %v5426
      %5428 = vmatmul.f32.gmra.mxu0 %v1041
      %v5429 = vpop.f32.mrf.mxu0
      %v5430 = vadd.f32 0.0, %v5429
      %5431 = vmatmul.f32.gmra.mxu0 %v1043
      %v5432 = vpop.f32.mrf.mxu0
      %v5433 = vadd.f32 0.0, %v5432
      %5434 = vmatmul.f32.gmra.mxu0 %v1045
      %v5435 = vpop.f32.mrf.mxu0
      %v5436 = vadd.f32 0.0, %v5435
      %5437 = vmatmul.f32.gmra.mxu0 %v1047
      %v5438 = vpop.f32.mrf.mxu0
      %v5439 = vadd.f32 0.0, %v5438
      %5440 = vmatmul.f32.gmra.mxu0 %v1049
      %v5441 = vpop.f32.mrf.mxu0
      %v5442 = vadd.f32 0.0, %v5441
      %5443 = vmatmul.f32.gmra.mxu0 %v1051
      %v5444 = vpop.f32.mrf.mxu0
      %v5445 = vadd.f32 0.0, %v5444
      %5446 = vmatmul.f32.gmra.mxu0 %v1053
      %v5447 = vpop.f32.mrf.mxu0
      %v5448 = vadd.f32 0.0, %v5447
      %5449 = vmatmul.f32.gmra.mxu0 %v1055
      %v5450 = vpop.f32.mrf.mxu0
      %v5451 = vadd.f32 0.0, %v5450
      %5452 = vmatmul.f32.gmra.mxu0 %v1057
      %v5453 = vpop.f32.mrf.mxu0
      %v5454 = vadd.f32 0.0, %v5453
      %5455 = vmatmul.f32.gmra.mxu0 %v1059
      %v5456 = vpop.f32.mrf.mxu0
      %v5457 = vadd.f32 0.0, %v5456
      %5458 = vmatmul.f32.gmra.mxu0 %v1061
      %v5459 = vpop.f32.mrf.mxu0
      %v5460 = vadd.f32 0.0, %v5459
      %5461 = vmatmul.f32.gmra.mxu0 %v2195
      %v5462 = vpop.f32.mrf.mxu0
      %v5463 = vadd.f32 0.0, %v5462
      %5464 = vmatmul.f32.gmra.mxu0 %v2197
      %v5465 = vpop.f32.mrf.mxu0
      %v5466 = vadd.f32 0.0, %v5465
      %5467 = vmatmul.f32.gmra.mxu0 %v2199
      %v5468 = vpop.f32.mrf.mxu0
      %v5469 = vadd.f32 0.0, %v5468
      %5470 = vmatmul.f32.gmra.mxu0 %v2201
      %v5471 = vpop.f32.mrf.mxu0
      %v5472 = vadd.f32 0.0, %v5471
      %5473 = vdwg.mxu0
      %v5474 = vadd.f32 %v5345, %v5391
      %v5475 = vadd.f32 %v5346, %v5394
      %v5476 = vadd.f32 %v5347, %v5397
      %v5477 = vadd.f32 %v5348, %v5400
      %v5478 = vadd.f32 %v5349, %v5403
      %v5479 = vadd.f32 %v5350, %v5406
      %v5480 = vadd.f32 %v5351, %v5409
      %v5481 = vadd.f32 %v5352, %v5412
      %v5482 = vadd.f32 %v5353, %v5415
      %v5483 = vadd.f32 %v5354, %v5418
      %v5484 = vadd.f32 %v5355, %v5421
      %v5485 = vadd.f32 %v5356, %v5424
      %v5486 = vadd.f32 %v5357, %v5427
      %v5487 = vadd.f32 %v5358, %v5430
      %v5488 = vadd.f32 %v5359, %v5433
      %v5489 = vadd.f32 %v5360, %v5436
      %v5490 = vadd.f32 %v5361, %v5439
      %v5491 = vadd.f32 %v5362, %v5442
      %v5492 = vadd.f32 %v5363, %v5445
      %v5493 = vadd.f32 %v5364, %v5448
      %v5494 = vadd.f32 %v5365, %v5451
      %v5495 = vadd.f32 %v5366, %v5454
      %v5496 = vadd.f32 %v5367, %v5457
      %v5497 = vadd.f32 %v5368, %v5460
      %v5498 = vadd.f32 %v5369, %v5463
      %v5499 = vadd.f32 %v5370, %v5466
      %v5500 = vadd.f32 %v5371, %v5469
      %v5501 = vadd.f32 %v5372, %v5472
      %5502 = vmatpush.msra.mxu0 0.0
      %5503 = vmatpush.msra.mxu0 0.0
      %5504 = vmatpush.msra.mxu0 0.0
      %5505 = vmatpush.msra.mxu0 0.0
      %5506 = vmatpush.msra.mxu0 0.0
      %5507 = vmatpush.msra.mxu0 0.0
      %5508 = vmatpush.msra.mxu0 0.0
      %5509 = vmatpush.msra.mxu0 0.0
      %5510 = vmatpush.msra.mxu0 0.0
      %5511 = vmatpush.msra.mxu0 0.0
      %5512 = vmatpush.msra.mxu0 0.0
      %5513 = vmatpush.msra.mxu0 0.0
      %5514 = vmatpush.msra.mxu0 0.0
      %5515 = vmatpush.msra.mxu0 0.0
      %5516 = vmatpush.msra.mxu0 0.0
      %5517 = vmatpush.msra.mxu0 %v1760
      %5518 = vmatmul.f32.gmra.mxu0 %v2615
      %v5519 = vpop.f32.mrf.mxu0
      %v5520 = vadd.f32 0.0, %v5519
      %5521 = vmatmul.f32.gmra.mxu0 %v2617
      %v5522 = vpop.f32.mrf.mxu0
      %v5523 = vadd.f32 0.0, %v5522
      %5524 = vmatmul.f32.gmra.mxu0 %v2619
      %v5525 = vpop.f32.mrf.mxu0
      %v5526 = vadd.f32 0.0, %v5525
      %5527 = vmatmul.f32.gmra.mxu0 %v2621
      %v5528 = vpop.f32.mrf.mxu0
      %v5529 = vadd.f32 0.0, %v5528
      %5530 = vmatmul.f32.gmra.mxu0 %v2623
      %v5531 = vpop.f32.mrf.mxu0
      %v5532 = vadd.f32 0.0, %v5531
      %5533 = vmatmul.f32.gmra.mxu0 %v2625
      %v5534 = vpop.f32.mrf.mxu0
      %v5535 = vadd.f32 0.0, %v5534
      %5536 = vmatmul.f32.gmra.mxu0 %v2627
      %v5537 = vpop.f32.mrf.mxu0
      %v5538 = vadd.f32 0.0, %v5537
      %5539 = vmatmul.f32.gmra.mxu0 %v2629
      %v5540 = vpop.f32.mrf.mxu0
      %v5541 = vadd.f32 0.0, %v5540
      %5542 = vmatmul.f32.gmra.mxu0 %v2631
      %v5543 = vpop.f32.mrf.mxu0
      %v5544 = vadd.f32 0.0, %v5543
      %5545 = vmatmul.f32.gmra.mxu0 %v2633
      %v5546 = vpop.f32.mrf.mxu0
      %v5547 = vadd.f32 0.0, %v5546
      %5548 = vmatmul.f32.gmra.mxu0 %v2635
      %v5549 = vpop.f32.mrf.mxu0
      %v5550 = vadd.f32 0.0, %v5549
      %5551 = vmatmul.f32.gmra.mxu0 %v2637
      %v5552 = vpop.f32.mrf.mxu0
      %v5553 = vadd.f32 0.0, %v5552
      %5554 = vmatmul.f32.gmra.mxu0 %v2639
      %v5555 = vpop.f32.mrf.mxu0
      %v5556 = vadd.f32 0.0, %v5555
      %5557 = vmatmul.f32.gmra.mxu0 %v2641
      %v5558 = vpop.f32.mrf.mxu0
      %v5559 = vadd.f32 0.0, %v5558
      %5560 = vmatmul.f32.gmra.mxu0 %v2643
      %v5561 = vpop.f32.mrf.mxu0
      %v5562 = vadd.f32 0.0, %v5561
      %5563 = vmatmul.f32.gmra.mxu0 %v2645
      %v5564 = vpop.f32.mrf.mxu0
      %v5565 = vadd.f32 0.0, %v5564
      %5566 = vmatmul.f32.gmra.mxu0 %v2647
      %v5567 = vpop.f32.mrf.mxu0
      %v5568 = vadd.f32 0.0, %v5567
      %5569 = vmatmul.f32.gmra.mxu0 %v2649
      %v5570 = vpop.f32.mrf.mxu0
      %v5571 = vadd.f32 0.0, %v5570
      %5572 = vmatmul.f32.gmra.mxu0 %v2651
      %v5573 = vpop.f32.mrf.mxu0
      %v5574 = vadd.f32 0.0, %v5573
      %5575 = vmatmul.f32.gmra.mxu0 %v2653
      %v5576 = vpop.f32.mrf.mxu0
      %v5577 = vadd.f32 0.0, %v5576
      %5578 = vmatmul.f32.gmra.mxu0 %v2655
      %v5579 = vpop.f32.mrf.mxu0
      %v5580 = vadd.f32 0.0, %v5579
      %5581 = vmatmul.f32.gmra.mxu0 %v2657
      %v5582 = vpop.f32.mrf.mxu0
      %v5583 = vadd.f32 0.0, %v5582
      %5584 = vmatmul.f32.gmra.mxu0 %v2659
      %v5585 = vpop.f32.mrf.mxu0
      %v5586 = vadd.f32 0.0, %v5585
      %5587 = vmatmul.f32.gmra.mxu0 %v2661
      %v5588 = vpop.f32.mrf.mxu0
      %v5589 = vadd.f32 0.0, %v5588
      %5590 = vmatmul.f32.gmra.mxu0 %v3573
      %v5591 = vpop.f32.mrf.mxu0
      %v5592 = vadd.f32 0.0, %v5591
      %5593 = vmatmul.f32.gmra.mxu0 %v3575
      %v5594 = vpop.f32.mrf.mxu0
      %v5595 = vadd.f32 0.0, %v5594
      %5596 = vmatmul.f32.gmra.mxu0 %v3577
      %v5597 = vpop.f32.mrf.mxu0
      %v5598 = vadd.f32 0.0, %v5597
      %5599 = vmatmul.f32.gmra.mxu0 %v3579
      %v5600 = vpop.f32.mrf.mxu0
      %v5601 = vadd.f32 0.0, %v5600
      %5602 = vdwg.mxu0
      %v5603 = vadd.f32 %v5474, %v5520
      %v5604 = vadd.f32 %v5475, %v5523
      %v5605 = vadd.f32 %v5476, %v5526
      %v5606 = vadd.f32 %v5477, %v5529
      %v5607 = vadd.f32 %v5478, %v5532
      %v5608 = vadd.f32 %v5479, %v5535
      %v5609 = vadd.f32 %v5480, %v5538
      %v5610 = vadd.f32 %v5481, %v5541
      %v5611 = vadd.f32 %v5482, %v5544
      %v5612 = vadd.f32 %v5483, %v5547
      %v5613 = vadd.f32 %v5484, %v5550
      %v5614 = vadd.f32 %v5485, %v5553
      %v5615 = vadd.f32 %v5486, %v5556
      %v5616 = vadd.f32 %v5487, %v5559
      %v5617 = vadd.f32 %v5488, %v5562
      %v5618 = vadd.f32 %v5489, %v5565
      %v5619 = vadd.f32 %v5490, %v5568
      %v5620 = vadd.f32 %v5491, %v5571
      %v5621 = vadd.f32 %v5492, %v5574
      %v5622 = vadd.f32 %v5493, %v5577
      %v5623 = vadd.f32 %v5494, %v5580
      %v5624 = vadd.f32 %v5495, %v5583
      %v5625 = vadd.f32 %v5496, %v5586
      %v5626 = vadd.f32 %v5497, %v5589
      %v5627 = vadd.f32 %v5498, %v5592
      %v5628 = vadd.f32 %v5499, %v5595
      %v5629 = vadd.f32 %v5500, %v5598
      %v5630 = vadd.f32 %v5501, %v5601
      %5631 = vmatpush.msra.mxu0 0.0
      %5632 = vmatpush.msra.mxu0 0.0
      %5633 = vmatpush.msra.mxu0 0.0
      %5634 = vmatpush.msra.mxu0 0.0
      %5635 = vmatpush.msra.mxu0 0.0
      %5636 = vmatpush.msra.mxu0 0.0
      %5637 = vmatpush.msra.mxu0 0.0
      %5638 = vmatpush.msra.mxu0 0.0
      %5639 = vmatpush.msra.mxu0 0.0
      %5640 = vmatpush.msra.mxu0 0.0
      %5641 = vmatpush.msra.mxu0 0.0
      %5642 = vmatpush.msra.mxu0 0.0
      %5643 = vmatpush.msra.mxu0 0.0
      %5644 = vmatpush.msra.mxu0 0.0
      %5645 = vmatpush.msra.mxu0 0.0
      %5646 = vmatpush.msra.mxu0 %v1906
      %5647 = vmatmul.f32.gmra.mxu0 %v1428
      %v5648 = vpop.f32.mrf.mxu0
      %v5649 = vadd.f32 0.0, %v5648
      %5650 = vmatmul.f32.gmra.mxu0 %v1431
      %v5651 = vpop.f32.mrf.mxu0
      %v5652 = vadd.f32 0.0, %v5651
      %5653 = vmatmul.f32.gmra.mxu0 %v1434
      %v5654 = vpop.f32.mrf.mxu0
      %v5655 = vadd.f32 0.0, %v5654
      %5656 = vmatmul.f32.gmra.mxu0 %v1437
      %v5657 = vpop.f32.mrf.mxu0
      %v5658 = vadd.f32 0.0, %v5657
      %5659 = vmatmul.f32.gmra.mxu0 %v1440
      %v5660 = vpop.f32.mrf.mxu0
      %v5661 = vadd.f32 0.0, %v5660
      %5662 = vmatmul.f32.gmra.mxu0 %v1443
      %v5663 = vpop.f32.mrf.mxu0
      %v5664 = vadd.f32 0.0, %v5663
      %5665 = vmatmul.f32.gmra.mxu0 %v1446
      %v5666 = vpop.f32.mrf.mxu0
      %v5667 = vadd.f32 0.0, %v5666
      %5668 = vmatmul.f32.gmra.mxu0 %v1449
      %v5669 = vpop.f32.mrf.mxu0
      %v5670 = vadd.f32 0.0, %v5669
      %5671 = vmatmul.f32.gmra.mxu0 %v1452
      %v5672 = vpop.f32.mrf.mxu0
      %v5673 = vadd.f32 0.0, %v5672
      %5674 = vmatmul.f32.gmra.mxu0 %v1455
      %v5675 = vpop.f32.mrf.mxu0
      %v5676 = vadd.f32 0.0, %v5675
      %5677 = vmatmul.f32.gmra.mxu0 %v1458
      %v5678 = vpop.f32.mrf.mxu0
      %v5679 = vadd.f32 0.0, %v5678
      %5680 = vmatmul.f32.gmra.mxu0 %v1461
      %v5681 = vpop.f32.mrf.mxu0
      %v5682 = vadd.f32 0.0, %v5681
      %5683 = vmatmul.f32.gmra.mxu0 %v1464
      %v5684 = vpop.f32.mrf.mxu0
      %v5685 = vadd.f32 0.0, %v5684
      %5686 = vmatmul.f32.gmra.mxu0 %v1467
      %v5687 = vpop.f32.mrf.mxu0
      %v5688 = vadd.f32 0.0, %v5687
      %5689 = vmatmul.f32.gmra.mxu0 %v1470
      %v5690 = vpop.f32.mrf.mxu0
      %v5691 = vadd.f32 0.0, %v5690
      %5692 = vmatmul.f32.gmra.mxu0 %v1473
      %v5693 = vpop.f32.mrf.mxu0
      %v5694 = vadd.f32 0.0, %v5693
      %5695 = vmatmul.f32.gmra.mxu0 %v1476
      %v5696 = vpop.f32.mrf.mxu0
      %v5697 = vadd.f32 0.0, %v5696
      %5698 = vmatmul.f32.gmra.mxu0 %v1479
      %v5699 = vpop.f32.mrf.mxu0
      %v5700 = vadd.f32 0.0, %v5699
      %5701 = vmatmul.f32.gmra.mxu0 %v1482
      %v5702 = vpop.f32.mrf.mxu0
      %v5703 = vadd.f32 0.0, %v5702
      %5704 = vmatmul.f32.gmra.mxu0 %v1485
      %v5705 = vpop.f32.mrf.mxu0
      %v5706 = vadd.f32 0.0, %v5705
      %5707 = vmatmul.f32.gmra.mxu0 %v1488
      %v5708 = vpop.f32.mrf.mxu0
      %v5709 = vadd.f32 0.0, %v5708
      %5710 = vmatmul.f32.gmra.mxu0 %v1491
      %v5711 = vpop.f32.mrf.mxu0
      %v5712 = vadd.f32 0.0, %v5711
      %5713 = vmatmul.f32.gmra.mxu0 %v1494
      %v5714 = vpop.f32.mrf.mxu0
      %v5715 = vadd.f32 0.0, %v5714
      %5716 = vmatmul.f32.gmra.mxu0 %v1497
      %v5717 = vpop.f32.mrf.mxu0
      %v5718 = vadd.f32 0.0, %v5717
      %5719 = vmatmul.f32.gmra.mxu0 %v4598
      %v5720 = vpop.f32.mrf.mxu0
      %v5721 = vadd.f32 0.0, %v5720
      %5722 = vmatmul.f32.gmra.mxu0 %v4601
      %v5723 = vpop.f32.mrf.mxu0
      %v5724 = vadd.f32 0.0, %v5723
      %5725 = vmatmul.f32.gmra.mxu0 %v4604
      %v5726 = vpop.f32.mrf.mxu0
      %v5727 = vadd.f32 0.0, %v5726
      %5728 = vmatmul.f32.gmra.mxu0 %v4607
      %v5729 = vpop.f32.mrf.mxu0
      %v5730 = vadd.f32 0.0, %v5729
      %5731 = vdwg.mxu0
      %v5732 = vadd.f32 %v5603, %v5649
      %v5733 = vadd.f32 %v5604, %v5652
      %v5734 = vadd.f32 %v5605, %v5655
      %v5735 = vadd.f32 %v5606, %v5658
      %v5736 = vadd.f32 %v5607, %v5661
      %v5737 = vadd.f32 %v5608, %v5664
      %v5738 = vadd.f32 %v5609, %v5667
      %v5739 = vadd.f32 %v5610, %v5670
      %v5740 = vadd.f32 %v5611, %v5673
      %v5741 = vadd.f32 %v5612, %v5676
      %v5742 = vadd.f32 %v5613, %v5679
      %v5743 = vadd.f32 %v5614, %v5682
      %v5744 = vadd.f32 %v5615, %v5685
      %v5745 = vadd.f32 %v5616, %v5688
      %v5746 = vadd.f32 %v5617, %v5691
      %v5747 = vadd.f32 %v5618, %v5694
      %v5748 = vadd.f32 %v5619, %v5697
      %v5749 = vadd.f32 %v5620, %v5700
      %v5750 = vadd.f32 %v5621, %v5703
      %v5751 = vadd.f32 %v5622, %v5706
      %v5752 = vadd.f32 %v5623, %v5709
      %v5753 = vadd.f32 %v5624, %v5712
      %v5754 = vadd.f32 %v5625, %v5715
      %v5755 = vadd.f32 %v5626, %v5718
      %v5756 = vadd.f32 %v5627, %v5721
      %v5757 = vadd.f32 %v5628, %v5724
      %v5758 = vadd.f32 %v5629, %v5727
      %v5759 = vadd.f32 %v5630, %v5730
      %5760 = vmatpush.msra.mxu0 0.0
      %5761 = vmatpush.msra.mxu0 0.0
      %5762 = vmatpush.msra.mxu0 0.0
      %5763 = vmatpush.msra.mxu0 0.0
      %5764 = vmatpush.msra.mxu0 0.0
      %5765 = vmatpush.msra.mxu0 0.0
      %5766 = vmatpush.msra.mxu0 0.0
      %5767 = vmatpush.msra.mxu0 0.0
      %5768 = vmatpush.msra.mxu0 0.0
      %5769 = vmatpush.msra.mxu0 0.0
      %5770 = vmatpush.msra.mxu0 0.0
      %5771 = vmatpush.msra.mxu0 0.0
      %5772 = vmatpush.msra.mxu0 0.0
      %5773 = vmatpush.msra.mxu0 0.0
      %5774 = vmatpush.msra.mxu0 0.0
      %5775 = vmatpush.msra.mxu0 %v2052
      %5776 = vmatmul.f32.gmra.mxu0 %v1711
      %v5777 = vpop.f32.mrf.mxu0
      %v5778 = vadd.f32 0.0, %v5777
      %5779 = vmatmul.f32.gmra.mxu0 %v1713
      %v5780 = vpop.f32.mrf.mxu0
      %v5781 = vadd.f32 0.0, %v5780
      %5782 = vmatmul.f32.gmra.mxu0 %v1715
      %v5783 = vpop.f32.mrf.mxu0
      %v5784 = vadd.f32 0.0, %v5783
      %5785 = vmatmul.f32.gmra.mxu0 %v1717
      %v5786 = vpop.f32.mrf.mxu0
      %v5787 = vadd.f32 0.0, %v5786
      %5788 = vmatmul.f32.gmra.mxu0 %v1719
      %v5789 = vpop.f32.mrf.mxu0
      %v5790 = vadd.f32 0.0, %v5789
      %5791 = vmatmul.f32.gmra.mxu0 %v1721
      %v5792 = vpop.f32.mrf.mxu0
      %v5793 = vadd.f32 0.0, %v5792
      %5794 = vmatmul.f32.gmra.mxu0 %v1723
      %v5795 = vpop.f32.mrf.mxu0
      %v5796 = vadd.f32 0.0, %v5795
      %5797 = vmatmul.f32.gmra.mxu0 %v1725
      %v5798 = vpop.f32.mrf.mxu0
      %v5799 = vadd.f32 0.0, %v5798
      %5800 = vmatmul.f32.gmra.mxu0 %v1727
      %v5801 = vpop.f32.mrf.mxu0
      %v5802 = vadd.f32 0.0, %v5801
      %5803 = vmatmul.f32.gmra.mxu0 %v1729
      %v5804 = vpop.f32.mrf.mxu0
      %v5805 = vadd.f32 0.0, %v5804
      %5806 = vmatmul.f32.gmra.mxu0 %v1731
      %v5807 = vpop.f32.mrf.mxu0
      %v5808 = vadd.f32 0.0, %v5807
      %5809 = vmatmul.f32.gmra.mxu0 %v1733
      %v5810 = vpop.f32.mrf.mxu0
      %v5811 = vadd.f32 0.0, %v5810
      %5812 = vmatmul.f32.gmra.mxu0 %v1735
      %v5813 = vpop.f32.mrf.mxu0
      %v5814 = vadd.f32 0.0, %v5813
      %5815 = vmatmul.f32.gmra.mxu0 %v1737
      %v5816 = vpop.f32.mrf.mxu0
      %v5817 = vadd.f32 0.0, %v5816
      %5818 = vmatmul.f32.gmra.mxu0 %v1739
      %v5819 = vpop.f32.mrf.mxu0
      %v5820 = vadd.f32 0.0, %v5819
      %5821 = vmatmul.f32.gmra.mxu0 %v1741
      %v5822 = vpop.f32.mrf.mxu0
      %v5823 = vadd.f32 0.0, %v5822
      %5824 = vmatmul.f32.gmra.mxu0 %v1743
      %v5825 = vpop.f32.mrf.mxu0
      %v5826 = vadd.f32 0.0, %v5825
      %5827 = vmatmul.f32.gmra.mxu0 %v1745
      %v5828 = vpop.f32.mrf.mxu0
      %v5829 = vadd.f32 0.0, %v5828
      %5830 = vmatmul.f32.gmra.mxu0 %v1747
      %v5831 = vpop.f32.mrf.mxu0
      %v5832 = vadd.f32 0.0, %v5831
      %5833 = vmatmul.f32.gmra.mxu0 %v1749
      %v5834 = vpop.f32.mrf.mxu0
      %v5835 = vadd.f32 0.0, %v5834
      %5836 = vmatmul.f32.gmra.mxu0 %v1751
      %v5837 = vpop.f32.mrf.mxu0
      %v5838 = vadd.f32 0.0, %v5837
      %5839 = vmatmul.f32.gmra.mxu0 %v1753
      %v5840 = vpop.f32.mrf.mxu0
      %v5841 = vadd.f32 0.0, %v5840
      %5842 = vmatmul.f32.gmra.mxu0 %v1755
      %v5843 = vpop.f32.mrf.mxu0
      %v5844 = vadd.f32 0.0, %v5843
      %5845 = vmatmul.f32.gmra.mxu0 %v1757
      %v5846 = vpop.f32.mrf.mxu0
      %v5847 = vadd.f32 0.0, %v5846
      %5848 = vmatmul.f32.gmra.mxu0 %v4748
      %v5849 = vpop.f32.mrf.mxu0
      %v5850 = vadd.f32 0.0, %v5849
      %5851 = vmatmul.f32.gmra.mxu0 %v4750
      %v5852 = vpop.f32.mrf.mxu0
      %v5853 = vadd.f32 0.0, %v5852
      %5854 = vmatmul.f32.gmra.mxu0 %v4752
      %v5855 = vpop.f32.mrf.mxu0
      %v5856 = vadd.f32 0.0, %v5855
      %5857 = vmatmul.f32.gmra.mxu0 %v4754
      %v5858 = vpop.f32.mrf.mxu0
      %v5859 = vadd.f32 0.0, %v5858
      %5860 = vdwg.mxu0
      %v5861 = vadd.f32 %v5732, %v5778
      %v5862 = vadd.f32 %v5733, %v5781
      %v5863 = vadd.f32 %v5734, %v5784
      %v5864 = vadd.f32 %v5735, %v5787
      %v5865 = vadd.f32 %v5736, %v5790
      %v5866 = vadd.f32 %v5737, %v5793
      %v5867 = vadd.f32 %v5738, %v5796
      %v5868 = vadd.f32 %v5739, %v5799
      %v5869 = vadd.f32 %v5740, %v5802
      %v5870 = vadd.f32 %v5741, %v5805
      %v5871 = vadd.f32 %v5742, %v5808
      %v5872 = vadd.f32 %v5743, %v5811
      %v5873 = vadd.f32 %v5744, %v5814
      %v5874 = vadd.f32 %v5745, %v5817
      %v5875 = vadd.f32 %v5746, %v5820
      %v5876 = vadd.f32 %v5747, %v5823
      %v5877 = vadd.f32 %v5748, %v5826
      %v5878 = vadd.f32 %v5749, %v5829
      %v5879 = vadd.f32 %v5750, %v5832
      %v5880 = vadd.f32 %v5751, %v5835
      %v5881 = vadd.f32 %v5752, %v5838
      %v5882 = vadd.f32 %v5753, %v5841
      %v5883 = vadd.f32 %v5754, %v5844
      %v5884 = vadd.f32 %v5755, %v5847
      %v5885 = vadd.f32 %v5756, %v5850
      %v5886 = vadd.f32 %v5757, %v5853
      %v5887 = vadd.f32 %v5758, %v5856
      %v5888 = vadd.f32 %v5759, %v5859
      %v5890 = vrot.slane %v548, 1
      %v5891 = vrot.slane %v549, 1
      %v5892 = vsel %vm941, %v5890, %v5891
      %v5893 = vrot.slane %v550, 1
      %v5894 = vsel %vm941, %v5891, %v5893
      %v5895 = vrot.slane %v551, 1
      %v5896 = vsel %vm941, %v5893, %v5895
      %v5897 = vrot.slane %v552, 1
      %v5898 = vsel %vm941, %v5895, %v5897
      %v5899 = vsel %vm556, %v5892, 0
      %v5901 = vsel %vm556, %v5894, 0
      %v5903 = vsel %vm556, %v5896, 0
      %v5905 = vsel %vm556, %v5898, 0
      %5907 = vmatpush.msra.mxu0 0.0
      %5908 = vmatpush.msra.mxu0 0.0
      %5909 = vmatpush.msra.mxu0 0.0
      %5910 = vmatpush.msra.mxu0 0.0
      %5911 = vmatpush.msra.mxu0 0.0
      %5912 = vmatpush.msra.mxu0 0.0
      %5913 = vmatpush.msra.mxu0 0.0
      %5914 = vmatpush.msra.mxu0 0.0
      %5915 = vmatpush.msra.mxu0 0.0
      %5916 = vmatpush.msra.mxu0 0.0
      %5917 = vmatpush.msra.mxu0 0.0
      %5918 = vmatpush.msra.mxu0 0.0
      %5919 = vmatpush.msra.mxu0 0.0
      %5920 = vmatpush.msra.mxu0 0.0
      %5921 = vmatpush.msra.mxu0 0.0
      %5922 = vmatpush.msra.mxu0 %v2204
      %5923 = vmatmul.f32.gmra.mxu0 %v3128
      %v5924 = vpop.f32.mrf.mxu0
      %v5925 = vadd.f32 0.0, %v5924
      %5926 = vmatmul.f32.gmra.mxu0 %v3130
      %v5927 = vpop.f32.mrf.mxu0
      %v5928 = vadd.f32 0.0, %v5927
      %5929 = vmatmul.f32.gmra.mxu0 %v3132
      %v5930 = vpop.f32.mrf.mxu0
      %v5931 = vadd.f32 0.0, %v5930
      %5932 = vmatmul.f32.gmra.mxu0 %v3134
      %v5933 = vpop.f32.mrf.mxu0
      %v5934 = vadd.f32 0.0, %v5933
      %5935 = vmatmul.f32.gmra.mxu0 %v3136
      %v5936 = vpop.f32.mrf.mxu0
      %v5937 = vadd.f32 0.0, %v5936
      %5938 = vmatmul.f32.gmra.mxu0 %v3138
      %v5939 = vpop.f32.mrf.mxu0
      %v5940 = vadd.f32 0.0, %v5939
      %5941 = vmatmul.f32.gmra.mxu0 %v3140
      %v5942 = vpop.f32.mrf.mxu0
      %v5943 = vadd.f32 0.0, %v5942
      %5944 = vmatmul.f32.gmra.mxu0 %v3142
      %v5945 = vpop.f32.mrf.mxu0
      %v5946 = vadd.f32 0.0, %v5945
      %5947 = vmatmul.f32.gmra.mxu0 %v3144
      %v5948 = vpop.f32.mrf.mxu0
      %v5949 = vadd.f32 0.0, %v5948
      %5950 = vmatmul.f32.gmra.mxu0 %v3146
      %v5951 = vpop.f32.mrf.mxu0
      %v5952 = vadd.f32 0.0, %v5951
      %5953 = vmatmul.f32.gmra.mxu0 %v3148
      %v5954 = vpop.f32.mrf.mxu0
      %v5955 = vadd.f32 0.0, %v5954
      %5956 = vmatmul.f32.gmra.mxu0 %v3150
      %v5957 = vpop.f32.mrf.mxu0
      %v5958 = vadd.f32 0.0, %v5957
      %5959 = vmatmul.f32.gmra.mxu0 %v3152
      %v5960 = vpop.f32.mrf.mxu0
      %v5961 = vadd.f32 0.0, %v5960
      %5962 = vmatmul.f32.gmra.mxu0 %v3154
      %v5963 = vpop.f32.mrf.mxu0
      %v5964 = vadd.f32 0.0, %v5963
      %5965 = vmatmul.f32.gmra.mxu0 %v3156
      %v5966 = vpop.f32.mrf.mxu0
      %v5967 = vadd.f32 0.0, %v5966
      %5968 = vmatmul.f32.gmra.mxu0 %v3158
      %v5969 = vpop.f32.mrf.mxu0
      %v5970 = vadd.f32 0.0, %v5969
      %5971 = vmatmul.f32.gmra.mxu0 %v3160
      %v5972 = vpop.f32.mrf.mxu0
      %v5973 = vadd.f32 0.0, %v5972
      %5974 = vmatmul.f32.gmra.mxu0 %v3162
      %v5975 = vpop.f32.mrf.mxu0
      %v5976 = vadd.f32 0.0, %v5975
      %5977 = vmatmul.f32.gmra.mxu0 %v3164
      %v5978 = vpop.f32.mrf.mxu0
      %v5979 = vadd.f32 0.0, %v5978
      %5980 = vmatmul.f32.gmra.mxu0 %v3166
      %v5981 = vpop.f32.mrf.mxu0
      %v5982 = vadd.f32 0.0, %v5981
      %5983 = vmatmul.f32.gmra.mxu0 %v3168
      %v5984 = vpop.f32.mrf.mxu0
      %v5985 = vadd.f32 0.0, %v5984
      %5986 = vmatmul.f32.gmra.mxu0 %v3170
      %v5987 = vpop.f32.mrf.mxu0
      %v5988 = vadd.f32 0.0, %v5987
      %5989 = vmatmul.f32.gmra.mxu0 %v3172
      %v5990 = vpop.f32.mrf.mxu0
      %v5991 = vadd.f32 0.0, %v5990
      %5992 = vmatmul.f32.gmra.mxu0 %v3174
      %v5993 = vpop.f32.mrf.mxu0
      %v5994 = vadd.f32 0.0, %v5993
      %5995 = vmatmul.f32.gmra.mxu0 %v5899
      %v5996 = vpop.f32.mrf.mxu0
      %v5997 = vadd.f32 0.0, %v5996
      %5998 = vmatmul.f32.gmra.mxu0 %v5901
      %v5999 = vpop.f32.mrf.mxu0
      %v6000 = vadd.f32 0.0, %v5999
      %6001 = vmatmul.f32.gmra.mxu0 %v5903
      %v6002 = vpop.f32.mrf.mxu0
      %v6003 = vadd.f32 0.0, %v6002
      %6004 = vmatmul.f32.gmra.mxu0 %v5905
      %v6005 = vpop.f32.mrf.mxu0
      %v6006 = vadd.f32 0.0, %v6005
      %6007 = vdwg.mxu0
      %v6008 = vadd.f32 %v5861, %v5925
      %v6009 = vadd.f32 %v5862, %v5928
      %v6010 = vadd.f32 %v5863, %v5931
      %v6011 = vadd.f32 %v5864, %v5934
      %v6012 = vadd.f32 %v5865, %v5937
      %v6013 = vadd.f32 %v5866, %v5940
      %v6014 = vadd.f32 %v5867, %v5943
      %v6015 = vadd.f32 %v5868, %v5946
      %v6016 = vadd.f32 %v5869, %v5949
      %v6017 = vadd.f32 %v5870, %v5952
      %v6018 = vadd.f32 %v5871, %v5955
      %v6019 = vadd.f32 %v5872, %v5958
      %v6020 = vadd.f32 %v5873, %v5961
      %v6021 = vadd.f32 %v5874, %v5964
      %v6022 = vadd.f32 %v5875, %v5967
      %v6023 = vadd.f32 %v5876, %v5970
      %v6024 = vadd.f32 %v5877, %v5973
      %v6025 = vadd.f32 %v5878, %v5976
      %v6026 = vadd.f32 %v5879, %v5979
      %v6027 = vadd.f32 %v5880, %v5982
      %v6028 = vadd.f32 %v5881, %v5985
      %v6029 = vadd.f32 %v5882, %v5988
      %v6030 = vadd.f32 %v5883, %v5991
      %v6031 = vadd.f32 %v5884, %v5994
      %v6032 = vadd.f32 %v5885, %v5997
      %v6033 = vadd.f32 %v5886, %v6000
      %v6034 = vadd.f32 %v5887, %v6003
      %v6035 = vadd.f32 %v5888, %v6006
      %v6036 = vmax.f32 %v4885, %v6008
      %v6037 = vmax.f32 %v4886, %v6009
      %v6038 = vmax.f32 %v4887, %v6010
      %v6039 = vmax.f32 %v4888, %v6011
      %v6040 = vmax.f32 %v4889, %v6012
      %v6041 = vmax.f32 %v4890, %v6013
      %v6042 = vmax.f32 %v4891, %v6014
      %v6043 = vmax.f32 %v4892, %v6015
      %v6044 = vmax.f32 %v4893, %v6016
      %v6045 = vmax.f32 %v4894, %v6017
      %v6046 = vmax.f32 %v4895, %v6018
      %v6047 = vmax.f32 %v4896, %v6019
      %v6048 = vmax.f32 %v4897, %v6020
      %v6049 = vmax.f32 %v4898, %v6021
      %v6050 = vmax.f32 %v4899, %v6022
      %v6051 = vmax.f32 %v4900, %v6023
      %v6052 = vmax.f32 %v4901, %v6024
      %v6053 = vmax.f32 %v4902, %v6025
      %v6054 = vmax.f32 %v4903, %v6026
      %v6055 = vmax.f32 %v4904, %v6027
      %v6056 = vmax.f32 %v4905, %v6028
      %v6057 = vmax.f32 %v4906, %v6029
      %v6058 = vmax.f32 %v4907, %v6030
      %v6059 = vmax.f32 %v4908, %v6031
      %v6060 = vmax.f32 %v4909, %v6032
      %v6061 = vmax.f32 %v4910, %v6033
      %v6062 = vmax.f32 %v4911, %v6034
      %v6063 = vmax.f32 %v4912, %v6035
      %v6064 = vld [vmem:[%s5] sm:$0x1]
      %v6066 = vperm.slane %v6064, 0
      %v6068 = vadd.f32 %v6036, %v6066
      %v6069 = vadd.f32 %v6037, %v6066
      %v6070 = vadd.f32 %v6038, %v6066
      %v6071 = vadd.f32 %v6039, %v6066
      %v6072 = vadd.f32 %v6040, %v6066
      %v6073 = vadd.f32 %v6041, %v6066
      %v6074 = vadd.f32 %v6042, %v6066
      %v6075 = vadd.f32 %v6043, %v6066
      %v6076 = vadd.f32 %v6044, %v6066
      %v6077 = vadd.f32 %v6045, %v6066
      %v6078 = vadd.f32 %v6046, %v6066
      %v6079 = vadd.f32 %v6047, %v6066
      %v6080 = vadd.f32 %v6048, %v6066
      %v6081 = vadd.f32 %v6049, %v6066
      %v6082 = vadd.f32 %v6050, %v6066
      %v6083 = vadd.f32 %v6051, %v6066
      %v6084 = vadd.f32 %v6052, %v6066
      %v6085 = vadd.f32 %v6053, %v6066
      %v6086 = vadd.f32 %v6054, %v6066
      %v6087 = vadd.f32 %v6055, %v6066
      %v6088 = vadd.f32 %v6056, %v6066
      %v6089 = vadd.f32 %v6057, %v6066
      %v6090 = vadd.f32 %v6058, %v6066
      %v6091 = vadd.f32 %v6059, %v6066
      %v6092 = vadd.f32 %v6060, %v6066
      %v6093 = vadd.f32 %v6061, %v6066
      %v6094 = vadd.f32 %v6062, %v6066
      %v6095 = vadd.f32 %v6063, %v6066
      %v6096 = vmax.f32 %v6068, 0.0
      %v6097 = vmax.f32 %v6069, 0.0
      %v6098 = vmax.f32 %v6070, 0.0
      %v6099 = vmax.f32 %v6071, 0.0
      %v6100 = vmax.f32 %v6072, 0.0
      %v6101 = vmax.f32 %v6073, 0.0
      %v6102 = vmax.f32 %v6074, 0.0
      %v6103 = vmax.f32 %v6075, 0.0
      %v6104 = vmax.f32 %v6076, 0.0
      %v6105 = vmax.f32 %v6077, 0.0
      %v6106 = vmax.f32 %v6078, 0.0
      %v6107 = vmax.f32 %v6079, 0.0
      %v6108 = vmax.f32 %v6080, 0.0
      %v6109 = vmax.f32 %v6081, 0.0
      %v6110 = vmax.f32 %v6082, 0.0
      %v6111 = vmax.f32 %v6083, 0.0
      %v6112 = vmax.f32 %v6084, 0.0
      %v6113 = vmax.f32 %v6085, 0.0
      %v6114 = vmax.f32 %v6086, 0.0
      %v6115 = vmax.f32 %v6087, 0.0
      %v6116 = vmax.f32 %v6088, 0.0
      %v6117 = vmax.f32 %v6089, 0.0
      %v6118 = vmax.f32 %v6090, 0.0
      %v6119 = vmax.f32 %v6091, 0.0
      %v6120 = vmax.f32 %v6092, 0.0
      %v6121 = vmax.f32 %v6093, 0.0
      %v6122 = vmax.f32 %v6094, 0.0
      %v6123 = vmax.f32 %v6095, 0.0
      %6124 = vst [vmem:[%s391] sm:$0xff] %v6096
      %6125 = vst [vmem:[%s391 + $0x8] sm:$0xff] %v6097
      %6126 = vst [vmem:[%s391 + $0x10] sm:$0xff] %v6098
      %6127 = vst [vmem:[%s391 + $0x18] sm:$0xf] %v6099
      %6128 = vst [vmem:[%s391 + $0x20] sm:$0xff] %v6100
      %6129 = vst [vmem:[%s391 + $0x28] sm:$0xff] %v6101
      %6130 = vst [vmem:[%s391 + $0x30] sm:$0xff] %v6102
      %6131 = vst [vmem:[%s391 + $0x38] sm:$0xf] %v6103
      %6132 = vst [vmem:[%s391 + $0x40] sm:$0xff] %v6104
      %6133 = vst [vmem:[%s391 + $0x48] sm:$0xff] %v6105
      %6134 = vst [vmem:[%s391 + $0x50] sm:$0xff] %v6106
      %6135 = vst [vmem:[%s391 + $0x58] sm:$0xf] %v6107
      %6136 = vst [vmem:[%s391 + $0x60] sm:$0xff] %v6108
      %6137 = vst [vmem:[%s391 + $0x68] sm:$0xff] %v6109
      %6138 = vst [vmem:[%s391 + $0x70] sm:$0xff] %v6110
      %6139 = vst [vmem:[%s391 + $0x78] sm:$0xf] %v6111
      %6140 = vst [vmem:[%s391 + $0x80] sm:$0xff] %v6112
      %6141 = vst [vmem:[%s391 + $0x88] sm:$0xff] %v6113
      %6142 = vst [vmem:[%s391 + $0x90] sm:$0xff] %v6114
      %6143 = vst [vmem:[%s391 + $0x98] sm:$0xf] %v6115
      %6144 = vst [vmem:[%s391 + $0xa0] sm:$0xff] %v6116
      %6145 = vst [vmem:[%s391 + $0xa8] sm:$0xff] %v6117
      %6146 = vst [vmem:[%s391 + $0xb0] sm:$0xff] %v6118
      %6147 = vst [vmem:[%s391 + $0xb8] sm:$0xf] %v6119
      %6148 = vst [vmem:[%s391 + $0xc0] sm:$0xff] %v6120
      %6149 = vst [vmem:[%s391 + $0xc8] sm:$0xff] %v6121
      %6150 = vst [vmem:[%s391 + $0xd0] sm:$0xff] %v6122
      %6151 = vst [vmem:[%s391 + $0xd8] sm:$0xf] %v6123
      %s6152 = smul.u32 7, %s22
      %p6153 = scmp.lt.s32.totalorder %s21, 1
      %s6154 = scalar_select %p6153, %s21, 1
      %p6155 = scmp.lt.s32.totalorder %s6152, 27
      %s6156 = scalar_select %p6155, %s6152, 27
      %s6157 = smul.addr %s6156, 4
      %s6158 = smul.addr %s6154, 112
      %s6159 = sadd.s32 %s6157, %s6158
      %s6160 = smul.addr %s6159, 8
      %s6161 = scalar_lea.vmem %s6, %s6160
      // Predicated region
      $region45: #{vgg_forward.4} parent=43 // pred_check
        %p6162 = pneg %p203
      $region46: #{vgg_forward.4} parent=43 // pred_check_branch
        %6164 = sbr.rel (%p6162) target = $region48
      $region47: #{vgg_forward.4} parent=43 // pred_region
        %s6165 = smul.u32 7, %s22
      $region48: #{vgg_forward.4} parent=43 // pred_fallthru
        _
    $region44: #{vgg_forward.4} parent=5 // pred_fallthru
      _
    %p6166 = scmp.le.s32.totalorder 2, %s12
    // Predicated region
    $region49: #{vgg_forward.4} parent=5 // pred_check
      %p6167 = pneg %p6166
    $region50: #{vgg_forward.4} parent=5 // pred_check_branch
      %6169 = sbr.rel (%p6167) target = $region52
    $region51: #{vgg_forward.4} parent=5 // pred_region
      %s6170 = ssub.s32 %s12, 2
      // Predicated region
      $region53: #{vgg_forward.4} parent=51 // pred_check
        %p6171 = pneg %p209
      $region54: #{vgg_forward.4} parent=51 // pred_check_branch
        %6173 = sbr.rel (%p6171) target = $region56
      $region55: #{vgg_forward.4} parent=51 // pred_region
        %s6174 = smul.u32 7, %s24
        %p6175 = scmp.lt.s32.totalorder %s23, 1
        %s6176 = scalar_select %p6175, %s23, 1
        %p6177 = scmp.lt.s32.totalorder %s6174, 27
        %s6178 = scalar_select %p6177, %s6174, 27
        %s6179 = smul.addr %s6178, 4
        %s6180 = smul.addr %s6176, 112
        %s6181 = sadd.s32 %s6179, %s6180
        %s6182 = smul.addr %s6181, 8
        %s6183 = scalar_lea.vmem %s6, %s6182
      $region56: #{vgg_forward.4} parent=51 // pred_fallthru
        _
    $region52: #{vgg_forward.4} parent=5 // pred_fallthru
      _
  $region6: #{vgg_forward.4} parent=0 // loop_footer
    %s16 = sadd.s32 1, %s12
  $region7: #{vgg_forward.4} parent=0 // loop_footer_branch
    %11 = sbr.rel target = $region3
  $region8: #{vgg_forward.4} parent=0 // loop_exit
    _

// kernel: vgg_forward.5
$region0: #{vgg_forward.5}
  #allocation0 [shape = 'u32[]', space=smem, size = 0x4, offset = 0x4, fixed_abs, tag = 'smem constant byte address 0x4 - core index']
  #allocation1 [shape = 'u32[72,128]{1,0:T(1,128)}', space=vmem, size = 0x9000, scoped, tag = 'internal scratch']
  %s0 = inlined_call_operand.vmem [shape: f32[2,2,8,17,128], index: 0, kind: input, shape index: {}]
  %s1 = inlined_call_operand.vmem [shape: f32[2,2,8,17,128], index: 1, kind: input, shape index: {}]
  %s2 = inlined_call_operand.vmem [shape: f32[2,2,8,17,128], index: 2, kind: input, shape index: {}]
  %s3 = inlined_call_operand.vmem [shape: f32[2,2,8,17,128], index: 3, kind: input, shape index: {}]
  %s4 = inlined_call_operand.vmem [shape: f32[3,3,128,128], index: 4, kind: input, shape index: {}]
  %s5 = inlined_call_operand.vmem [shape: f32[1,128], index: 5, kind: input, shape index: {}]
  %s6 = inlined_call_operand.vmem [shape: f32[2,14,14,128], index: 6, kind: output, shape index: {}]
  %s7 = sld [smem:[#allocation0]]
  $region57: #{vgg_forward.5} parent=0
    _
  %s9 = ssub.s32 1, %s7
  %s10 = scalar_select 0, %s9, %s7
  loop: start=0, step=1, limit=6
  $region2: #{vgg_forward.5} parent=0 // loop_pre_header
    _
  $region3: #{vgg_forward.5} parent=0 // loop_header
    %s12 = sphi 0, %s16
    %p13 = scmp.ge.s32.totalorder %s12, 6
    %s19 = sphi 0, %s31
    %s20 = sphi 0, %s27
    %s21 = sphi 0, %s19
    %s22 = sphi 0, %s20
    %s23 = sphi 0, %s21
    %s24 = sphi 0, %s22
    %s36 = sphi 0, %s38
    %s39 = sphi 0, %s36
    %s40 = sphi 0, %s39
    %s56 = sphi 0, %s40
    %s64 = sphi 0, %s66
    %s67 = sphi 0, %s64
    %s68 = sphi 0, %s67
    %s84 = sphi 0, %s68
    %s92 = sphi 0, %s94
    %s95 = sphi 0, %s92
    %s96 = sphi 0, %s95
    %s112 = sphi 0, %s96
    %s120 = sphi 0, %s122
    %s123 = sphi 0, %s120
    %s124 = sphi 0, %s123
    %s140 = sphi 0, %s124
    %s144 = sphi 0, %s144
    %s146 = sphi 0, %s144
    %s147 = sphi 0, %s146
    %s161 = sphi 0, %s147
    %s165 = sphi 0, %s165
    %s167 = sphi 0, %s165
    %s168 = sphi 0, %s167
    %s182 = sphi 0, %s168
    %s190 = sphi 0, %s192
    %s193 = sphi 0, %s190
    %s194 = sphi 0, %s193
    %s210 = sphi 0, %s194
  $region4: #{vgg_forward.5} parent=0 // loop_header_branch
    %15 = sbr.rel (%p13) target = $region8
  $region5: #{vgg_forward.5} parent=0 // loop_body
    %s17 = ssub.s32 %s12, 1
    %s18 = ssub.s32 %s12, 2
    %s25 = sadd.s32 1, %s20
    %p26 = scmp.ge.s32.totalorder %s25, 2
    %s27 = scalar_select %p26, 0, %s25
    %s28 = sadd.s32 1, %s19
    %s29 = scalar_select %p26, %s28, %s19
    %p30 = scmp.ge.s32.totalorder %s29, 2
    %s31 = scalar_select %p30, 0, %s29
    %s32 = ssub.s32 %s19, %s31
    %s33 = ssub.s32 %s20, %s27
    %s34 = sor.u32 %s32, %s33
    %p35 = scmp.eq.s32.totalorder %s34, 0
    %s37 = sadd.s32 %s36, 1
    %s38 = scalar_select %p35, %s36, %s37
    %p41 = pneg %p35
    %p42 = scmp.eq.s32.totalorder %s12, 3
    %p43 = por %p41, %p42
    %p44 = scmp.ne.s32.totalorder %s36, %s39
    %p45 = scmp.eq.s32.totalorder %s12, 0
    %p46 = por %p44, %p45
    %p47 = scmp.ne.s32.totalorder %s36, %s39
    %p48 = scmp.eq.s32.totalorder %s17, 3
    %p49 = por %p47, %p48
    %p50 = scmp.ne.s32.totalorder %s39, %s40
    %p51 = scmp.eq.s32.totalorder %s17, 0
    %p52 = por %p50, %p51
    %p53 = scmp.ne.s32.totalorder %s39, %s40
    %p54 = scmp.eq.s32.totalorder %s18, 3
    %p55 = por %p53, %p54
    %p57 = scmp.ne.s32.totalorder %s40, %s56
    %p58 = scmp.eq.s32.totalorder %s18, 0
    %p59 = por %p57, %p58
    %s60 = ssub.s32 %s19, %s31
    %s61 = ssub.s32 %s20, %s27
    %s62 = sor.u32 %s60, %s61
    %p63 = scmp.eq.s32.totalorder %s62, 0
    %s65 = sadd.s32 %s64, 1
    %s66 = scalar_select %p63, %s64, %s65
    %p69 = pneg %p63
    %p70 = scmp.eq.s32.totalorder %s12, 3
    %p71 = por %p69, %p70
    %p72 = scmp.ne.s32.totalorder %s64, %s67
    %p73 = scmp.eq.s32.totalorder %s12, 0
    %p74 = por %p72, %p73
    %p75 = scmp.ne.s32.totalorder %s64, %s67
    %p76 = scmp.eq.s32.totalorder %s17, 3
    %p77 = por %p75, %p76
    %p78 = scmp.ne.s32.totalorder %s67, %s68
    %p79 = scmp.eq.s32.totalorder %s17, 0
    %p80 = por %p78, %p79
    %p81 = scmp.ne.s32.totalorder %s67, %s68
    %p82 = scmp.eq.s32.totalorder %s18, 3
    %p83 = por %p81, %p82
    %p85 = scmp.ne.s32.totalorder %s68, %s84
    %p86 = scmp.eq.s32.totalorder %s18, 0
    %p87 = por %p85, %p86
    %s88 = ssub.s32 %s19, %s31
    %s89 = ssub.s32 %s20, %s27
    %s90 = sor.u32 %s88, %s89
    %p91 = scmp.eq.s32.totalorder %s90, 0
    %s93 = sadd.s32 %s92, 1
    %s94 = scalar_select %p91, %s92, %s93
    %p97 = pneg %p91
    %p98 = scmp.eq.s32.totalorder %s12, 3
    %p99 = por %p97, %p98
    %p100 = scmp.ne.s32.totalorder %s92, %s95
    %p101 = scmp.eq.s32.totalorder %s12, 0
    %p102 = por %p100, %p101
    %p103 = scmp.ne.s32.totalorder %s92, %s95
    %p104 = scmp.eq.s32.totalorder %s17, 3
    %p105 = por %p103, %p104
    %p106 = scmp.ne.s32.totalorder %s95, %s96
    %p107 = scmp.eq.s32.totalorder %s17, 0
    %p108 = por %p106, %p107
    %p109 = scmp.ne.s32.totalorder %s95, %s96
    %p110 = scmp.eq.s32.totalorder %s18, 3
    %p111 = por %p109, %p110
    %p113 = scmp.ne.s32.totalorder %s96, %s112
    %p114 = scmp.eq.s32.totalorder %s18, 0
    %p115 = por %p113, %p114
    %s116 = ssub.s32 %s19, %s31
    %s117 = ssub.s32 %s20, %s27
    %s118 = sor.u32 %s116, %s117
    %p119 = scmp.eq.s32.totalorder %s118, 0
    %s121 = sadd.s32 %s120, 1
    %s122 = scalar_select %p119, %s120, %s121
    %p125 = pneg %p119
    %p126 = scmp.eq.s32.totalorder %s12, 3
    %p127 = por %p125, %p126
    %p128 = scmp.ne.s32.totalorder %s120, %s123
    %p129 = scmp.eq.s32.totalorder %s12, 0
    %p130 = por %p128, %p129
    %p131 = scmp.ne.s32.totalorder %s120, %s123
    %p132 = scmp.eq.s32.totalorder %s17, 3
    %p133 = por %p131, %p132
    %p134 = scmp.ne.s32.totalorder %s123, %s124
    %p135 = scmp.eq.s32.totalorder %s17, 0
    %p136 = por %p134, %p135
    %p137 = scmp.ne.s32.totalorder %s123, %s124
    %p138 = scmp.eq.s32.totalorder %s18, 3
    %p139 = por %p137, %p138
    %p141 = scmp.ne.s32.totalorder %s124, %s140
    %p142 = scmp.eq.s32.totalorder %s18, 0
    %p143 = por %p141, %p142
    %s145 = sadd.s32 %s144, 1
    %p148 = scmp.eq.s32.totalorder %s12, 3
    %p149 = scmp.ne.s32.totalorder %s144, %s146
    %p150 = scmp.eq.s32.totalorder %s12, 0
    %p151 = por %p149, %p150
    %p152 = scmp.ne.s32.totalorder %s144, %s146
    %p153 = scmp.eq.s32.totalorder %s17, 3
    %p154 = por %p152, %p153
    %p155 = scmp.ne.s32.totalorder %s146, %s147
    %p156 = scmp.eq.s32.totalorder %s17, 0
    %p157 = por %p155, %p156
    %p158 = scmp.ne.s32.totalorder %s146, %s147
    %p159 = scmp.eq.s32.totalorder %s18, 3
    %p160 = por %p158, %p159
    %p162 = scmp.ne.s32.totalorder %s147, %s161
    %p163 = scmp.eq.s32.totalorder %s18, 0
    %p164 = por %p162, %p163
    %s166 = sadd.s32 %s165, 1
    %p169 = scmp.eq.s32.totalorder %s12, 3
    %p170 = scmp.ne.s32.totalorder %s165, %s167
    %p171 = scmp.eq.s32.totalorder %s12, 0
    %p172 = por %p170, %p171
    %p173 = scmp.ne.s32.totalorder %s165, %s167
    %p174 = scmp.eq.s32.totalorder %s17, 3
    %p175 = por %p173, %p174
    %p176 = scmp.ne.s32.totalorder %s167, %s168
    %p177 = scmp.eq.s32.totalorder %s17, 0
    %p178 = por %p176, %p177
    %p179 = scmp.ne.s32.totalorder %s167, %s168
    %p180 = scmp.eq.s32.totalorder %s18, 3
    %p181 = por %p179, %p180
    %p183 = scmp.ne.s32.totalorder %s168, %s182
    %p184 = scmp.eq.s32.totalorder %s18, 0
    %p185 = por %p183, %p184
    %s186 = ssub.s32 %s19, %s31
    %s187 = ssub.s32 %s20, %s27
    %s188 = sor.u32 %s186, %s187
    %p189 = scmp.eq.s32.totalorder %s188, 0
    %s191 = sadd.s32 %s190, 1
    %s192 = scalar_select %p189, %s190, %s191
    %p195 = pneg %p189
    %p196 = scmp.eq.s32.totalorder %s12, 3
    %p197 = por %p195, %p196
    %p198 = scmp.ne.s32.totalorder %s190, %s193
    %p199 = scmp.eq.s32.totalorder %s12, 0
    %p200 = por %p198, %p199
    %p201 = scmp.ne.s32.totalorder %s190, %s193
    %p202 = scmp.eq.s32.totalorder %s17, 3
    %p203 = por %p201, %p202
    %p204 = scmp.ne.s32.totalorder %s193, %s194
    %p205 = scmp.eq.s32.totalorder %s17, 0
    %p206 = por %p204, %p205
    %p207 = scmp.ne.s32.totalorder %s193, %s194
    %p208 = scmp.eq.s32.totalorder %s18, 3
    %p209 = por %p207, %p208
    %p211 = scmp.ne.s32.totalorder %s194, %s210
    %p212 = scmp.eq.s32.totalorder %s18, 0
    %p213 = por %p211, %p212
    %p214 = scmp.le.s32.totalorder 1, %s12
    %p215 = scmp.lt.s32.totalorder %s12, 5
    %p216 = pnand %p214, %p215
    %p217 = pneg %p216
    // Predicated region
    $region9: #{vgg_forward.5} parent=5 // pred_check
      _
    $region10: #{vgg_forward.5} parent=5 // pred_check_branch
      %219 = sbr.rel (%p216) target = $region12
    $region11: #{vgg_forward.5} parent=5 // pred_region
      %s220 = ssub.s32 %s12, 1
      // Predicated region
      $region13: #{vgg_forward.5} parent=11 // pred_check
        %p221 = pneg %p157
      $region14: #{vgg_forward.5} parent=11 // pred_check_branch
        %223 = sbr.rel (%p221) target = $region16
      $region15: #{vgg_forward.5} parent=11 // pred_region
        _
      $region16: #{vgg_forward.5} parent=11 // pred_fallthru
        _
      // Predicated region
      $region17: #{vgg_forward.5} parent=11 // pred_check
        %p224 = pneg %p178
      $region18: #{vgg_forward.5} parent=11 // pred_check_branch
        %226 = sbr.rel (%p224) target = $region20
      $region19: #{vgg_forward.5} parent=11 // pred_region
        _
      $region20: #{vgg_forward.5} parent=11 // pred_fallthru
        _
    $region12: #{vgg_forward.5} parent=5 // pred_fallthru
      _
    %p227 = scmp.lt.s32.totalorder %s12, 4
    // Predicated region
    $region21: #{vgg_forward.5} parent=5 // pred_check
      %p228 = pneg %p227
    $region22: #{vgg_forward.5} parent=5 // pred_check_branch
      %230 = sbr.rel (%p228) target = $region24
    $region23: #{vgg_forward.5} parent=5 // pred_region
      // Predicated region
      $region25: #{vgg_forward.5} parent=23 // pred_check
        %p231 = pneg %p46
      $region26: #{vgg_forward.5} parent=23 // pred_check_branch
        %233 = sbr.rel (%p231) target = $region28
      $region27: #{vgg_forward.5} parent=23 // pred_region
        %p234 = scmp.lt.s32.totalorder %s19, 1
        %s235 = scalar_select %p234, %s19, 1
        %p236 = scmp.lt.s32.totalorder %s20, 1
        %s237 = scalar_select %p236, %s20, 1
        %s238 = smul.addr %s237, 24
        %s239 = smul.addr %s235, 48
        %s240 = sadd.s32 %s238, %s239
        %s241 = smul.addr %s240, 8
        %s242 = scalar_lea.vmem %s0, %s241
      $region28: #{vgg_forward.5} parent=23 // pred_fallthru
        _
      // Predicated region
      $region29: #{vgg_forward.5} parent=23 // pred_check
        %p243 = pneg %p74
      $region30: #{vgg_forward.5} parent=23 // pred_check_branch
        %245 = sbr.rel (%p243) target = $region32
      $region31: #{vgg_forward.5} parent=23 // pred_region
        %p246 = scmp.lt.s32.totalorder %s19, 1
        %s247 = scalar_select %p246, %s19, 1
        %p248 = scmp.lt.s32.totalorder %s20, 1
        %s249 = scalar_select %p248, %s20, 1
        %s250 = smul.addr %s249, 24
        %s251 = smul.addr %s247, 48
        %s252 = sadd.s32 %s250, %s251
        %s253 = smul.addr %s252, 8
        %s254 = scalar_lea.vmem %s1, %s253
      $region32: #{vgg_forward.5} parent=23 // pred_fallthru
        _
      // Predicated region
      $region33: #{vgg_forward.5} parent=23 // pred_check
        %p255 = pneg %p102
      $region34: #{vgg_forward.5} parent=23 // pred_check_branch
        %257 = sbr.rel (%p255) target = $region36
      $region35: #{vgg_forward.5} parent=23 // pred_region
        %p258 = scmp.lt.s32.totalorder %s19, 1
        %s259 = scalar_select %p258, %s19, 1
        %p260 = scmp.lt.s32.totalorder %s20, 1
        %s261 = scalar_select %p260, %s20, 1
        %s262 = smul.addr %s261, 24
        %s263 = smul.addr %s259, 48
        %s264 = sadd.s32 %s262, %s263
        %s265 = smul.addr %s264, 8
        %s266 = scalar_lea.vmem %s2, %s265
      $region36: #{vgg_forward.5} parent=23 // pred_fallthru
        _
      // Predicated region
      $region37: #{vgg_forward.5} parent=23 // pred_check
        %p267 = pneg %p130
      $region38: #{vgg_forward.5} parent=23 // pred_check_branch
        %269 = sbr.rel (%p267) target = $region40
      $region39: #{vgg_forward.5} parent=23 // pred_region
        %p270 = scmp.lt.s32.totalorder %s19, 1
        %s271 = scalar_select %p270, %s19, 1
        %p272 = scmp.lt.s32.totalorder %s20, 1
        %s273 = scalar_select %p272, %s20, 1
        %s274 = smul.addr %s273, 24
        %s275 = smul.addr %s271, 48
        %s276 = sadd.s32 %s274, %s275
        %s277 = smul.addr %s276, 8
        %s278 = scalar_lea.vmem %s3, %s277
      $region40: #{vgg_forward.5} parent=23 // pred_fallthru
        _
    $region24: #{vgg_forward.5} parent=5 // pred_fallthru
      _
    %p279 = scmp.le.s32.totalorder 1, %s12
    %p280 = scmp.lt.s32.totalorder %s12, 5
    %p281 = pnand %p279, %p280
    %p282 = pneg %p281
    // Predicated region
    $region41: #{vgg_forward.5} parent=5 // pred_check
      _
    $region42: #{vgg_forward.5} parent=5 // pred_check_branch
      %284 = sbr.rel (%p281) target = $region44
    $region43: #{vgg_forward.5} parent=5 // pred_region
      %s285 = ssub.s32 %s12, 1
      %p286 = scmp.lt.s32.totalorder %s21, 1
      %s287 = scalar_select %p286, %s21, 1
      %p288 = scmp.lt.s32.totalorder %s22, 1
      %s289 = scalar_select %p288, %s22, 1
      %s290 = smul.addr %s289, 24
      %s291 = smul.addr %s287, 48
      %s292 = sadd.s32 %s290, %s291
      %s293 = smul.addr %s292, 8
      %s294 = scalar_lea.vmem %s0, %s293
      %p295 = pneg %p52
      %p296 = pneg %p49
      %p297 = scmp.lt.s32.totalorder %s21, 1
      %s298 = scalar_select %p297, %s21, 1
      %p299 = scmp.lt.s32.totalorder %s22, 1
      %s300 = scalar_select %p299, %s22, 1
      %s301 = smul.addr %s300, 24
      %s302 = smul.addr %s298, 48
      %s303 = sadd.s32 %s301, %s302
      %s304 = smul.addr %s303, 8
      %s305 = scalar_lea.vmem %s1, %s304
      %p306 = pneg %p80
      %p307 = pneg %p77
      %p308 = scmp.lt.s32.totalorder %s21, 1
      %s309 = scalar_select %p308, %s21, 1
      %p310 = scmp.lt.s32.totalorder %s22, 1
      %s311 = scalar_select %p310, %s22, 1
      %s312 = smul.addr %s311, 24
      %s313 = smul.addr %s309, 48
      %s314 = sadd.s32 %s312, %s313
      %s315 = smul.addr %s314, 8
      %s316 = scalar_lea.vmem %s2, %s315
      %p317 = pneg %p108
      %p318 = pneg %p105
      %p319 = scmp.lt.s32.totalorder %s21, 1
      %s320 = scalar_select %p319, %s21, 1
      %p321 = scmp.lt.s32.totalorder %s22, 1
      %s322 = scalar_select %p321, %s22, 1
      %s323 = smul.addr %s322, 24
      %s324 = smul.addr %s320, 48
      %s325 = sadd.s32 %s323, %s324
      %s326 = smul.addr %s325, 8
      %s327 = scalar_lea.vmem %s3, %s326
      %p328 = pneg %p136
      %p329 = pneg %p133
      %p330 = pneg %p157
      %p331 = pneg %p154
      %p332 = pneg %p178
      %p333 = pneg %p175
      %p334 = pneg %p206
      %p335 = pneg %p203
      %s336 = smul.u32 7, %s22
      %p337 = scmp.lt.s32.totalorder %s21, 1
      %s338 = scalar_select %p337, %s21, 1
      %p339 = scmp.lt.s32.totalorder %s336, 13
      %s340 = scalar_select %p339, %s336, 13
      %s341 = smul.addr %s340, 2
      %s342 = smul.addr %s338, 28
      %s343 = sadd.s32 %s341, %s342
      %s344 = smul.addr %s343, 8
      %s345 = scalar_lea.vmem %s6, %s344
      %p346 = scmp.lt.s32.totalorder %s21, 1
      %s347 = scalar_select %p346, %s21, 1
      %p348 = scmp.lt.s32.totalorder %s22, 1
      %s349 = scalar_select %p348, %s22, 1
      %s350 = smul.addr %s349, 24
      %s351 = smul.addr %s347, 48
      %s352 = sadd.s32 %s350, %s351
      %s353 = smul.addr %s352, 8
      %s354 = scalar_lea.vmem %s0, %s353
      %p355 = scmp.lt.s32.totalorder %s21, 1
      %s356 = scalar_select %p355, %s21, 1
      %p357 = scmp.lt.s32.totalorder %s22, 1
      %s358 = scalar_select %p357, %s22, 1
      %s359 = smul.addr %s358, 24
      %s360 = smul.addr %s356, 48
      %s361 = sadd.s32 %s359, %s360
      %s362 = smul.addr %s361, 8
      %s363 = scalar_lea.vmem %s1, %s362
      %p364 = scmp.lt.s32.totalorder %s21, 1
      %s365 = scalar_select %p364, %s21, 1
      %p366 = scmp.lt.s32.totalorder %s22, 1
      %s367 = scalar_select %p366, %s22, 1
      %s368 = smul.addr %s367, 24
      %s369 = smul.addr %s365, 48
      %s370 = sadd.s32 %s368, %s369
      %s371 = smul.addr %s370, 8
      %s372 = scalar_lea.vmem %s2, %s371
      %p373 = scmp.lt.s32.totalorder %s21, 1
      %s374 = scalar_select %p373, %s21, 1
      %p375 = scmp.lt.s32.totalorder %s22, 1
      %s376 = scalar_select %p375, %s22, 1
      %s377 = smul.addr %s376, 24
      %s378 = smul.addr %s374, 48
      %s379 = sadd.s32 %s377, %s378
      %s380 = smul.addr %s379, 8
      %s381 = scalar_lea.vmem %s3, %s380
      %s382 = smul.u32 7, %s22
      %p383 = scmp.lt.s32.totalorder %s21, 1
      %s384 = scalar_select %p383, %s21, 1
      %p385 = scmp.lt.s32.totalorder %s382, 13
      %s386 = scalar_select %p385, %s382, 13
      %s387 = smul.addr %s386, 2
      %s388 = smul.addr %s384, 28
      %s389 = sadd.s32 %s387, %s388
      %s390 = smul.addr %s389, 8
      %s391 = scalar_lea.vmem %s6, %s390
      %s392 = smul.u32 7, %s22
      %v393 = vld [vmem:[%s354] sm:$0xff]
      %v394 = vld [vmem:[%s354 + $0x8] sm:$0xff]
      %v395 = vld [vmem:[%s354 + $0x10] sm:$0x1]
      %v396 = vld [vmem:[%s354 + $0x18] sm:$0xff]
      %v397 = vld [vmem:[%s354 + $0x20] sm:$0xff]
      %v398 = vld [vmem:[%s354 + $0x28] sm:$0x1]
      %v399 = vld [vmem:[%s354 + $0x30] sm:$0xff]
      %v400 = vld [vmem:[%s354 + $0x38] sm:$0xff]
      %v401 = vld [vmem:[%s354 + $0x40] sm:$0x1]
      %v402 = vld [vmem:[%s354 + $0x48] sm:$0xff]
      %v403 = vld [vmem:[%s354 + $0x50] sm:$0xff]
      %v404 = vld [vmem:[%s354 + $0x58] sm:$0x1]
      %v405 = vld [vmem:[%s354 + $0x60] sm:$0xff]
      %v406 = vld [vmem:[%s354 + $0x68] sm:$0xff]
      %v407 = vld [vmem:[%s354 + $0x70] sm:$0x1]
      %v408 = vld [vmem:[%s354 + $0x78] sm:$0xff]
      %v409 = vld [vmem:[%s354 + $0x80] sm:$0xff]
      %v410 = vld [vmem:[%s354 + $0x88] sm:$0x1]
      %v411 = vld [vmem:[%s354 + $0x90] sm:$0xff]
      %v412 = vld [vmem:[%s354 + $0x98] sm:$0xff]
      %v413 = vld [vmem:[%s354 + $0xa0] sm:$0x1]
      %v414 = vld [vmem:[%s354 + $0xa8] sm:$0xff]
      %v415 = vld [vmem:[%s354 + $0xb0] sm:$0xff]
      %v416 = vld [vmem:[%s354 + $0xb8] sm:$0x1]
      %v417 = vld [vmem:[%s363] sm:$0xff]
      %v418 = vld [vmem:[%s363 + $0x8] sm:$0xff]
      %v419 = vld [vmem:[%s363 + $0x10] sm:$0x1]
      %v420 = vld [vmem:[%s363 + $0x18] sm:$0xff]
      %v421 = vld [vmem:[%s363 + $0x20] sm:$0xff]
      %v422 = vld [vmem:[%s363 + $0x28] sm:$0x1]
      %v423 = vld [vmem:[%s363 + $0x30] sm:$0xff]
      %v424 = vld [vmem:[%s363 + $0x38] sm:$0xff]
      %v425 = vld [vmem:[%s363 + $0x40] sm:$0x1]
      %v426 = vld [vmem:[%s363 + $0x48] sm:$0xff]
      %v427 = vld [vmem:[%s363 + $0x50] sm:$0xff]
      %v428 = vld [vmem:[%s363 + $0x58] sm:$0x1]
      %v429 = vld [vmem:[%s363 + $0x60] sm:$0xff]
      %v430 = vld [vmem:[%s363 + $0x68] sm:$0xff]
      %v431 = vld [vmem:[%s363 + $0x70] sm:$0x1]
      %v432 = vld [vmem:[%s363 + $0x78] sm:$0xff]
      %v433 = vld [vmem:[%s363 + $0x80] sm:$0xff]
      %v434 = vld [vmem:[%s363 + $0x88] sm:$0x1]
      %v435 = vld [vmem:[%s363 + $0x90] sm:$0xff]
      %v436 = vld [vmem:[%s363 + $0x98] sm:$0xff]
      %v437 = vld [vmem:[%s363 + $0xa0] sm:$0x1]
      %v438 = vld [vmem:[%s363 + $0xa8] sm:$0xff]
      %v439 = vld [vmem:[%s363 + $0xb0] sm:$0xff]
      %v440 = vld [vmem:[%s363 + $0xb8] sm:$0x1]
      %v441 = vld [vmem:[%s372] sm:$0xff]
      %v442 = vld [vmem:[%s372 + $0x8] sm:$0xff]
      %v443 = vld [vmem:[%s372 + $0x10] sm:$0x1]
      %v444 = vld [vmem:[%s372 + $0x18] sm:$0xff]
      %v445 = vld [vmem:[%s372 + $0x20] sm:$0xff]
      %v446 = vld [vmem:[%s372 + $0x28] sm:$0x1]
      %v447 = vld [vmem:[%s372 + $0x30] sm:$0xff]
      %v448 = vld [vmem:[%s372 + $0x38] sm:$0xff]
      %v449 = vld [vmem:[%s372 + $0x40] sm:$0x1]
      %v450 = vld [vmem:[%s372 + $0x48] sm:$0xff]
      %v451 = vld [vmem:[%s372 + $0x50] sm:$0xff]
      %v452 = vld [vmem:[%s372 + $0x58] sm:$0x1]
      %v453 = vld [vmem:[%s372 + $0x60] sm:$0xff]
      %v454 = vld [vmem:[%s372 + $0x68] sm:$0xff]
      %v455 = vld [vmem:[%s372 + $0x70] sm:$0x1]
      %v456 = vld [vmem:[%s372 + $0x78] sm:$0xff]
      %v457 = vld [vmem:[%s372 + $0x80] sm:$0xff]
      %v458 = vld [vmem:[%s372 + $0x88] sm:$0x1]
      %v459 = vld [vmem:[%s372 + $0x90] sm:$0xff]
      %v460 = vld [vmem:[%s372 + $0x98] sm:$0xff]
      %v461 = vld [vmem:[%s372 + $0xa0] sm:$0x1]
      %v462 = vld [vmem:[%s372 + $0xa8] sm:$0xff]
      %v463 = vld [vmem:[%s372 + $0xb0] sm:$0xff]
      %v464 = vld [vmem:[%s372 + $0xb8] sm:$0x1]
      %v465 = vld [vmem:[%s381] sm:$0xff]
      %v466 = vld [vmem:[%s381 + $0x8] sm:$0xff]
      %v467 = vld [vmem:[%s381 + $0x10] sm:$0x1]
      %v468 = vld [vmem:[%s381 + $0x18] sm:$0xff]
      %v469 = vld [vmem:[%s381 + $0x20] sm:$0xff]
      %v470 = vld [vmem:[%s381 + $0x28] sm:$0x1]
      %v471 = vld [vmem:[%s381 + $0x30] sm:$0xff]
      %v472 = vld [vmem:[%s381 + $0x38] sm:$0xff]
      %v473 = vld [vmem:[%s381 + $0x40] sm:$0x1]
      %v474 = vld [vmem:[%s381 + $0x48] sm:$0xff]
      %v475 = vld [vmem:[%s381 + $0x50] sm:$0xff]
      %v476 = vld [vmem:[%s381 + $0x58] sm:$0x1]
      %v477 = vld [vmem:[%s381 + $0x60] sm:$0xff]
      %v478 = vld [vmem:[%s381 + $0x68] sm:$0xff]
      %v479 = vld [vmem:[%s381 + $0x70] sm:$0x1]
      %v480 = vld [vmem:[%s381 + $0x78] sm:$0xff]
      %v481 = vld [vmem:[%s381 + $0x80] sm:$0xff]
      %v482 = vld [vmem:[%s381 + $0x88] sm:$0x1]
      %v483 = vld [vmem:[%s381 + $0x90] sm:$0xff]
      %v484 = vld [vmem:[%s381 + $0x98] sm:$0xff]
      %v485 = vld [vmem:[%s381 + $0xa0] sm:$0x1]
      %v486 = vld [vmem:[%s381 + $0xa8] sm:$0xff]
      %v487 = vld [vmem:[%s381 + $0xb0] sm:$0xff]
      %v488 = vld [vmem:[%s381 + $0xb8] sm:$0x1]
      %v489 = vld [vmem:[%s4] sm:$0xff]
      %v490 = vld [vmem:[%s4 + $0x8] sm:$0xff]
      %v491 = vld [vmem:[%s4 + $0x10] sm:$0xff]
      %v492 = vld [vmem:[%s4 + $0x18] sm:$0xff]
      %v493 = vld [vmem:[%s4 + $0x20] sm:$0xff]
      %v494 = vld [vmem:[%s4 + $0x28] sm:$0xff]
      %v495 = vld [vmem:[%s4 + $0x30] sm:$0xff]
      %v496 = vld [vmem:[%s4 + $0x38] sm:$0xff]
      %v497 = vld [vmem:[%s4 + $0x40] sm:$0xff]
      %v498 = vld [vmem:[%s4 + $0x48] sm:$0xff]
      %v499 = vld [vmem:[%s4 + $0x50] sm:$0xff]
      %v500 = vld [vmem:[%s4 + $0x58] sm:$0xff]
      %v501 = vld [vmem:[%s4 + $0x60] sm:$0xff]
      %v502 = vld [vmem:[%s4 + $0x68] sm:$0xff]
      %v503 = vld [vmem:[%s4 + $0x70] sm:$0xff]
      %v504 = vld [vmem:[%s4 + $0x78] sm:$0xff]
      %s505 = scalar_lea.vmem %s4, 128
      %v506 = vld [vmem:[%s505] sm:$0xff]
      %v507 = vld [vmem:[%s505 + $0x8] sm:$0xff]
      %v508 = vld [vmem:[%s505 + $0x10] sm:$0xff]
      %v509 = vld [vmem:[%s505 + $0x18] sm:$0xff]
      %v510 = vld [vmem:[%s505 + $0x20] sm:$0xff]
      %v511 = vld [vmem:[%s505 + $0x28] sm:$0xff]
      %v512 = vld [vmem:[%s505 + $0x30] sm:$0xff]
      %v513 = vld [vmem:[%s505 + $0x38] sm:$0xff]
      %v514 = vld [vmem:[%s505 + $0x40] sm:$0xff]
      %v515 = vld [vmem:[%s505 + $0x48] sm:$0xff]
      %v516 = vld [vmem:[%s505 + $0x50] sm:$0xff]
      %v517 = vld [vmem:[%s505 + $0x58] sm:$0xff]
      %v518 = vld [vmem:[%s505 + $0x60] sm:$0xff]
      %v519 = vld [vmem:[%s505 + $0x68] sm:$0xff]
      %v520 = vld [vmem:[%s505 + $0x70] sm:$0xff]
      %v521 = vld [vmem:[%s505 + $0x78] sm:$0xff]
      %522 = vmatpush.msra.mxu0 %v521
      %523 = vmatpush.msra.mxu0 %v520
      %524 = vmatpush.msra.mxu0 %v519
      %525 = vmatpush.msra.mxu0 %v518
      %526 = vmatpush.msra.mxu0 %v517
      %527 = vmatpush.msra.mxu0 %v516
      %528 = vmatpush.msra.mxu0 %v515
      %529 = vmatpush.msra.mxu0 %v514
      %530 = vmatpush.msra.mxu0 %v513
      %531 = vmatpush.msra.mxu0 %v512
      %532 = vmatpush.msra.mxu0 %v511
      %533 = vmatpush.msra.mxu0 %v510
      %534 = vmatpush.msra.mxu0 %v509
      %535 = vmatpush.msra.mxu0 %v508
      %536 = vmatpush.msra.mxu0 %v507
      %537 = vmatpush.msra.mxu0 %v506
      %538 = vmatmul.f32.gmra.mxu0 %v417
      %v539 = vpop.f32.mrf.mxu0
      %v540 = vadd.f32 0.0, %v539
      %541 = vmatmul.f32.gmra.mxu0 %v418
      %v542 = vpop.f32.mrf.mxu0
      %v543 = vadd.f32 0.0, %v542
      %544 = vmatmul.f32.gmra.mxu0 %v420
      %v545 = vpop.f32.mrf.mxu0
      %v546 = vadd.f32 0.0, %v545
      %547 = vmatmul.f32.gmra.mxu0 %v421
      %v548 = vpop.f32.mrf.mxu0
      %v549 = vadd.f32 0.0, %v548
      %550 = vmatmul.f32.gmra.mxu0 %v423
      %v551 = vpop.f32.mrf.mxu0
      %v552 = vadd.f32 0.0, %v551
      %553 = vmatmul.f32.gmra.mxu0 %v424
      %v554 = vpop.f32.mrf.mxu0
      %v555 = vadd.f32 0.0, %v554
      %556 = vmatmul.f32.gmra.mxu0 %v426
      %v557 = vpop.f32.mrf.mxu0
      %v558 = vadd.f32 0.0, %v557
      %559 = vmatmul.f32.gmra.mxu0 %v427
      %v560 = vpop.f32.mrf.mxu0
      %v561 = vadd.f32 0.0, %v560
      %562 = vmatmul.f32.gmra.mxu0 %v429
      %v563 = vpop.f32.mrf.mxu0
      %v564 = vadd.f32 0.0, %v563
      %565 = vmatmul.f32.gmra.mxu0 %v430
      %v566 = vpop.f32.mrf.mxu0
      %v567 = vadd.f32 0.0, %v566
      %568 = vmatmul.f32.gmra.mxu0 %v432
      %v569 = vpop.f32.mrf.mxu0
      %v570 = vadd.f32 0.0, %v569
      %571 = vmatmul.f32.gmra.mxu0 %v433
      %v572 = vpop.f32.mrf.mxu0
      %v573 = vadd.f32 0.0, %v572
      %574 = vmatmul.f32.gmra.mxu0 %v435
      %v575 = vpop.f32.mrf.mxu0
      %v576 = vadd.f32 0.0, %v575
      %577 = vmatmul.f32.gmra.mxu0 %v436
      %v578 = vpop.f32.mrf.mxu0
      %v579 = vadd.f32 0.0, %v578
      %580 = vdwg.mxu0
      %581 = vmatpush.msra.mxu0 %v504
      %582 = vmatpush.msra.mxu0 %v503
      %583 = vmatpush.msra.mxu0 %v502
      %584 = vmatpush.msra.mxu0 %v501
      %585 = vmatpush.msra.mxu0 %v500
      %586 = vmatpush.msra.mxu0 %v499
      %587 = vmatpush.msra.mxu0 %v498
      %588 = vmatpush.msra.mxu0 %v497
      %589 = vmatpush.msra.mxu0 %v496
      %590 = vmatpush.msra.mxu0 %v495
      %591 = vmatpush.msra.mxu0 %v494
      %592 = vmatpush.msra.mxu0 %v493
      %593 = vmatpush.msra.mxu0 %v492
      %594 = vmatpush.msra.mxu0 %v491
      %595 = vmatpush.msra.mxu0 %v490
      %596 = vmatpush.msra.mxu0 %v489
      %597 = vmatmul.f32.gmra.mxu0 %v393
      %v598 = vpop.f32.mrf.mxu0
      %v599 = vadd.f32 %v540, %v598
      %600 = vmatmul.f32.gmra.mxu0 %v394
      %v601 = vpop.f32.mrf.mxu0
      %v602 = vadd.f32 %v543, %v601
      %603 = vmatmul.f32.gmra.mxu0 %v396
      %v604 = vpop.f32.mrf.mxu0
      %v605 = vadd.f32 %v546, %v604
      %606 = vmatmul.f32.gmra.mxu0 %v397
      %v607 = vpop.f32.mrf.mxu0
      %v608 = vadd.f32 %v549, %v607
      %609 = vmatmul.f32.gmra.mxu0 %v399
      %v610 = vpop.f32.mrf.mxu0
      %v611 = vadd.f32 %v552, %v610
      %612 = vmatmul.f32.gmra.mxu0 %v400
      %v613 = vpop.f32.mrf.mxu0
      %v614 = vadd.f32 %v555, %v613
      %615 = vmatmul.f32.gmra.mxu0 %v402
      %v616 = vpop.f32.mrf.mxu0
      %v617 = vadd.f32 %v558, %v616
      %618 = vmatmul.f32.gmra.mxu0 %v403
      %v619 = vpop.f32.mrf.mxu0
      %v620 = vadd.f32 %v561, %v619
      %621 = vmatmul.f32.gmra.mxu0 %v405
      %v622 = vpop.f32.mrf.mxu0
      %v623 = vadd.f32 %v564, %v622
      %624 = vmatmul.f32.gmra.mxu0 %v406
      %v625 = vpop.f32.mrf.mxu0
      %v626 = vadd.f32 %v567, %v625
      %627 = vmatmul.f32.gmra.mxu0 %v408
      %v628 = vpop.f32.mrf.mxu0
      %v629 = vadd.f32 %v570, %v628
      %630 = vmatmul.f32.gmra.mxu0 %v409
      %v631 = vpop.f32.mrf.mxu0
      %v632 = vadd.f32 %v573, %v631
      %633 = vmatmul.f32.gmra.mxu0 %v411
      %v634 = vpop.f32.mrf.mxu0
      %v635 = vadd.f32 %v576, %v634
      %636 = vmatmul.f32.gmra.mxu0 %v412
      %v637 = vpop.f32.mrf.mxu0
      %v638 = vadd.f32 %v579, %v637
      %639 = vdwg.mxu0
      %vm661 = vcmask 1046528
      %v662 = vrot.slane %v393, 1
      %v663 = vrot.slane %v394, 1
      %v664 = vsel %vm661, %v662, %v663
      %v665 = vrot.slane %v395, 1
      %v666 = vsel %vm661, %v663, %v665
      %v667 = vrot.slane %v396, 1
      %v668 = vrot.slane %v397, 1
      %v669 = vsel %vm661, %v667, %v668
      %v670 = vrot.slane %v398, 1
      %v671 = vsel %vm661, %v668, %v670
      %v672 = vrot.slane %v399, 1
      %v673 = vrot.slane %v400, 1
      %v674 = vsel %vm661, %v672, %v673
      %v675 = vrot.slane %v401, 1
      %v676 = vsel %vm661, %v673, %v675
      %v677 = vrot.slane %v402, 1
      %v678 = vrot.slane %v403, 1
      %v679 = vsel %vm661, %v677, %v678
      %v680 = vrot.slane %v404, 1
      %v681 = vsel %vm661, %v678, %v680
      %v682 = vrot.slane %v405, 1
      %v683 = vrot.slane %v406, 1
      %v684 = vsel %vm661, %v682, %v683
      %v685 = vrot.slane %v407, 1
      %v686 = vsel %vm661, %v683, %v685
      %v687 = vrot.slane %v408, 1
      %v688 = vrot.slane %v409, 1
      %v689 = vsel %vm661, %v687, %v688
      %v690 = vrot.slane %v410, 1
      %v691 = vsel %vm661, %v688, %v690
      %v692 = vrot.slane %v411, 1
      %v693 = vrot.slane %v412, 1
      %v694 = vsel %vm661, %v692, %v693
      %v695 = vrot.slane %v413, 1
      %v696 = vsel %vm661, %v693, %v695
      %s711 = scalar_lea.vmem %s4, 256
      %v712 = vld [vmem:[%s711] sm:$0xff]
      %v713 = vld [vmem:[%s711 + $0x8] sm:$0xff]
      %v714 = vld [vmem:[%s711 + $0x10] sm:$0xff]
      %v715 = vld [vmem:[%s711 + $0x18] sm:$0xff]
      %v716 = vld [vmem:[%s711 + $0x20] sm:$0xff]
      %v717 = vld [vmem:[%s711 + $0x28] sm:$0xff]
      %v718 = vld [vmem:[%s711 + $0x30] sm:$0xff]
      %v719 = vld [vmem:[%s711 + $0x38] sm:$0xff]
      %v720 = vld [vmem:[%s711 + $0x40] sm:$0xff]
      %v721 = vld [vmem:[%s711 + $0x48] sm:$0xff]
      %v722 = vld [vmem:[%s711 + $0x50] sm:$0xff]
      %v723 = vld [vmem:[%s711 + $0x58] sm:$0xff]
      %v724 = vld [vmem:[%s711 + $0x60] sm:$0xff]
      %v725 = vld [vmem:[%s711 + $0x68] sm:$0xff]
      %v726 = vld [vmem:[%s711 + $0x70] sm:$0xff]
      %v727 = vld [vmem:[%s711 + $0x78] sm:$0xff]
      %728 = vmatpush.msra.mxu0 %v727
      %729 = vmatpush.msra.mxu0 %v726
      %730 = vmatpush.msra.mxu0 %v725
      %731 = vmatpush.msra.mxu0 %v724
      %732 = vmatpush.msra.mxu0 %v723
      %733 = vmatpush.msra.mxu0 %v722
      %734 = vmatpush.msra.mxu0 %v721
      %735 = vmatpush.msra.mxu0 %v720
      %736 = vmatpush.msra.mxu0 %v719
      %737 = vmatpush.msra.mxu0 %v718
      %738 = vmatpush.msra.mxu0 %v717
      %739 = vmatpush.msra.mxu0 %v716
      %740 = vmatpush.msra.mxu0 %v715
      %741 = vmatpush.msra.mxu0 %v714
      %742 = vmatpush.msra.mxu0 %v713
      %743 = vmatpush.msra.mxu0 %v712
      %744 = vmatmul.f32.gmra.mxu0 %v664
      %v745 = vpop.f32.mrf.mxu0
      %v746 = vadd.f32 0.0, %v745
      %747 = vmatmul.f32.gmra.mxu0 %v666
      %v748 = vpop.f32.mrf.mxu0
      %v749 = vadd.f32 0.0, %v748
      %750 = vmatmul.f32.gmra.mxu0 %v669
      %v751 = vpop.f32.mrf.mxu0
      %v752 = vadd.f32 0.0, %v751
      %753 = vmatmul.f32.gmra.mxu0 %v671
      %v754 = vpop.f32.mrf.mxu0
      %v755 = vadd.f32 0.0, %v754
      %756 = vmatmul.f32.gmra.mxu0 %v674
      %v757 = vpop.f32.mrf.mxu0
      %v758 = vadd.f32 0.0, %v757
      %759 = vmatmul.f32.gmra.mxu0 %v676
      %v760 = vpop.f32.mrf.mxu0
      %v761 = vadd.f32 0.0, %v760
      %762 = vmatmul.f32.gmra.mxu0 %v679
      %v763 = vpop.f32.mrf.mxu0
      %v764 = vadd.f32 0.0, %v763
      %765 = vmatmul.f32.gmra.mxu0 %v681
      %v766 = vpop.f32.mrf.mxu0
      %v767 = vadd.f32 0.0, %v766
      %768 = vmatmul.f32.gmra.mxu0 %v684
      %v769 = vpop.f32.mrf.mxu0
      %v770 = vadd.f32 0.0, %v769
      %771 = vmatmul.f32.gmra.mxu0 %v686
      %v772 = vpop.f32.mrf.mxu0
      %v773 = vadd.f32 0.0, %v772
      %774 = vmatmul.f32.gmra.mxu0 %v689
      %v775 = vpop.f32.mrf.mxu0
      %v776 = vadd.f32 0.0, %v775
      %777 = vmatmul.f32.gmra.mxu0 %v691
      %v778 = vpop.f32.mrf.mxu0
      %v779 = vadd.f32 0.0, %v778
      %780 = vmatmul.f32.gmra.mxu0 %v694
      %v781 = vpop.f32.mrf.mxu0
      %v782 = vadd.f32 0.0, %v781
      %783 = vmatmul.f32.gmra.mxu0 %v696
      %v784 = vpop.f32.mrf.mxu0
      %v785 = vadd.f32 0.0, %v784
      %786 = vdwg.mxu0
      %v787 = vadd.f32 %v599, %v746
      %v788 = vadd.f32 %v602, %v749
      %v789 = vadd.f32 %v605, %v752
      %v790 = vadd.f32 %v608, %v755
      %v791 = vadd.f32 %v611, %v758
      %v792 = vadd.f32 %v614, %v761
      %v793 = vadd.f32 %v617, %v764
      %v794 = vadd.f32 %v620, %v767
      %v795 = vadd.f32 %v623, %v770
      %v796 = vadd.f32 %v626, %v773
      %v797 = vadd.f32 %v629, %v776
      %v798 = vadd.f32 %v632, %v779
      %v799 = vadd.f32 %v635, %v782
      %v800 = vadd.f32 %v638, %v785
      %s801 = scalar_lea.vmem %s4, 384
      %v802 = vld [vmem:[%s801] sm:$0xff]
      %v803 = vld [vmem:[%s801 + $0x8] sm:$0xff]
      %v804 = vld [vmem:[%s801 + $0x10] sm:$0xff]
      %v805 = vld [vmem:[%s801 + $0x18] sm:$0xff]
      %v806 = vld [vmem:[%s801 + $0x20] sm:$0xff]
      %v807 = vld [vmem:[%s801 + $0x28] sm:$0xff]
      %v808 = vld [vmem:[%s801 + $0x30] sm:$0xff]
      %v809 = vld [vmem:[%s801 + $0x38] sm:$0xff]
      %v810 = vld [vmem:[%s801 + $0x40] sm:$0xff]
      %v811 = vld [vmem:[%s801 + $0x48] sm:$0xff]
      %v812 = vld [vmem:[%s801 + $0x50] sm:$0xff]
      %v813 = vld [vmem:[%s801 + $0x58] sm:$0xff]
      %v814 = vld [vmem:[%s801 + $0x60] sm:$0xff]
      %v815 = vld [vmem:[%s801 + $0x68] sm:$0xff]
      %v816 = vld [vmem:[%s801 + $0x70] sm:$0xff]
      %v817 = vld [vmem:[%s801 + $0x78] sm:$0xff]
      %818 = vmatpush.msra.mxu0 %v817
      %819 = vmatpush.msra.mxu0 %v816
      %820 = vmatpush.msra.mxu0 %v815
      %821 = vmatpush.msra.mxu0 %v814
      %822 = vmatpush.msra.mxu0 %v813
      %823 = vmatpush.msra.mxu0 %v812
      %824 = vmatpush.msra.mxu0 %v811
      %825 = vmatpush.msra.mxu0 %v810
      %826 = vmatpush.msra.mxu0 %v809
      %827 = vmatpush.msra.mxu0 %v808
      %828 = vmatpush.msra.mxu0 %v807
      %829 = vmatpush.msra.mxu0 %v806
      %830 = vmatpush.msra.mxu0 %v805
      %831 = vmatpush.msra.mxu0 %v804
      %832 = vmatpush.msra.mxu0 %v803
      %833 = vmatpush.msra.mxu0 %v802
      %834 = vmatmul.f32.gmra.mxu0 %v441
      %v835 = vpop.f32.mrf.mxu0
      %v836 = vadd.f32 0.0, %v835
      %837 = vmatmul.f32.gmra.mxu0 %v442
      %v838 = vpop.f32.mrf.mxu0
      %v839 = vadd.f32 0.0, %v838
      %840 = vmatmul.f32.gmra.mxu0 %v444
      %v841 = vpop.f32.mrf.mxu0
      %v842 = vadd.f32 0.0, %v841
      %843 = vmatmul.f32.gmra.mxu0 %v445
      %v844 = vpop.f32.mrf.mxu0
      %v845 = vadd.f32 0.0, %v844
      %846 = vmatmul.f32.gmra.mxu0 %v447
      %v847 = vpop.f32.mrf.mxu0
      %v848 = vadd.f32 0.0, %v847
      %849 = vmatmul.f32.gmra.mxu0 %v448
      %v850 = vpop.f32.mrf.mxu0
      %v851 = vadd.f32 0.0, %v850
      %852 = vmatmul.f32.gmra.mxu0 %v450
      %v853 = vpop.f32.mrf.mxu0
      %v854 = vadd.f32 0.0, %v853
      %855 = vmatmul.f32.gmra.mxu0 %v451
      %v856 = vpop.f32.mrf.mxu0
      %v857 = vadd.f32 0.0, %v856
      %858 = vmatmul.f32.gmra.mxu0 %v453
      %v859 = vpop.f32.mrf.mxu0
      %v860 = vadd.f32 0.0, %v859
      %861 = vmatmul.f32.gmra.mxu0 %v454
      %v862 = vpop.f32.mrf.mxu0
      %v863 = vadd.f32 0.0, %v862
      %864 = vmatmul.f32.gmra.mxu0 %v456
      %v865 = vpop.f32.mrf.mxu0
      %v866 = vadd.f32 0.0, %v865
      %867 = vmatmul.f32.gmra.mxu0 %v457
      %v868 = vpop.f32.mrf.mxu0
      %v869 = vadd.f32 0.0, %v868
      %870 = vmatmul.f32.gmra.mxu0 %v459
      %v871 = vpop.f32.mrf.mxu0
      %v872 = vadd.f32 0.0, %v871
      %873 = vmatmul.f32.gmra.mxu0 %v460
      %v874 = vpop.f32.mrf.mxu0
      %v875 = vadd.f32 0.0, %v874
      %876 = vdwg.mxu0
      %v877 = vadd.f32 %v787, %v836
      %v878 = vadd.f32 %v788, %v839
      %v879 = vadd.f32 %v789, %v842
      %v880 = vadd.f32 %v790, %v845
      %v881 = vadd.f32 %v791, %v848
      %v882 = vadd.f32 %v792, %v851
      %v883 = vadd.f32 %v793, %v854
      %v884 = vadd.f32 %v794, %v857
      %v885 = vadd.f32 %v795, %v860
      %v886 = vadd.f32 %v796, %v863
      %v887 = vadd.f32 %v797, %v866
      %v888 = vadd.f32 %v798, %v869
      %v889 = vadd.f32 %v799, %v872
      %v890 = vadd.f32 %v800, %v875
      %s891 = scalar_lea.vmem %s4, 512
      %v892 = vld [vmem:[%s891] sm:$0xff]
      %v893 = vld [vmem:[%s891 + $0x8] sm:$0xff]
      %v894 = vld [vmem:[%s891 + $0x10] sm:$0xff]
      %v895 = vld [vmem:[%s891 + $0x18] sm:$0xff]
      %v896 = vld [vmem:[%s891 + $0x20] sm:$0xff]
      %v897 = vld [vmem:[%s891 + $0x28] sm:$0xff]
      %v898 = vld [vmem:[%s891 + $0x30] sm:$0xff]
      %v899 = vld [vmem:[%s891 + $0x38] sm:$0xff]
      %v900 = vld [vmem:[%s891 + $0x40] sm:$0xff]
      %v901 = vld [vmem:[%s891 + $0x48] sm:$0xff]
      %v902 = vld [vmem:[%s891 + $0x50] sm:$0xff]
      %v903 = vld [vmem:[%s891 + $0x58] sm:$0xff]
      %v904 = vld [vmem:[%s891 + $0x60] sm:$0xff]
      %v905 = vld [vmem:[%s891 + $0x68] sm:$0xff]
      %v906 = vld [vmem:[%s891 + $0x70] sm:$0xff]
      %v907 = vld [vmem:[%s891 + $0x78] sm:$0xff]
      %908 = vmatpush.msra.mxu0 %v907
      %909 = vmatpush.msra.mxu0 %v906
      %910 = vmatpush.msra.mxu0 %v905
      %911 = vmatpush.msra.mxu0 %v904
      %912 = vmatpush.msra.mxu0 %v903
      %913 = vmatpush.msra.mxu0 %v902
      %914 = vmatpush.msra.mxu0 %v901
      %915 = vmatpush.msra.mxu0 %v900
      %916 = vmatpush.msra.mxu0 %v899
      %917 = vmatpush.msra.mxu0 %v898
      %918 = vmatpush.msra.mxu0 %v897
      %919 = vmatpush.msra.mxu0 %v896
      %920 = vmatpush.msra.mxu0 %v895
      %921 = vmatpush.msra.mxu0 %v894
      %922 = vmatpush.msra.mxu0 %v893
      %923 = vmatpush.msra.mxu0 %v892
      %924 = vmatmul.f32.gmra.mxu0 %v465
      %v925 = vpop.f32.mrf.mxu0
      %v926 = vadd.f32 0.0, %v925
      %927 = vmatmul.f32.gmra.mxu0 %v466
      %v928 = vpop.f32.mrf.mxu0
      %v929 = vadd.f32 0.0, %v928
      %930 = vmatmul.f32.gmra.mxu0 %v468
      %v931 = vpop.f32.mrf.mxu0
      %v932 = vadd.f32 0.0, %v931
      %933 = vmatmul.f32.gmra.mxu0 %v469
      %v934 = vpop.f32.mrf.mxu0
      %v935 = vadd.f32 0.0, %v934
      %936 = vmatmul.f32.gmra.mxu0 %v471
      %v937 = vpop.f32.mrf.mxu0
      %v938 = vadd.f32 0.0, %v937
      %939 = vmatmul.f32.gmra.mxu0 %v472
      %v940 = vpop.f32.mrf.mxu0
      %v941 = vadd.f32 0.0, %v940
      %942 = vmatmul.f32.gmra.mxu0 %v474
      %v943 = vpop.f32.mrf.mxu0
      %v944 = vadd.f32 0.0, %v943
      %945 = vmatmul.f32.gmra.mxu0 %v475
      %v946 = vpop.f32.mrf.mxu0
      %v947 = vadd.f32 0.0, %v946
      %948 = vmatmul.f32.gmra.mxu0 %v477
      %v949 = vpop.f32.mrf.mxu0
      %v950 = vadd.f32 0.0, %v949
      %951 = vmatmul.f32.gmra.mxu0 %v478
      %v952 = vpop.f32.mrf.mxu0
      %v953 = vadd.f32 0.0, %v952
      %954 = vmatmul.f32.gmra.mxu0 %v480
      %v955 = vpop.f32.mrf.mxu0
      %v956 = vadd.f32 0.0, %v955
      %957 = vmatmul.f32.gmra.mxu0 %v481
      %v958 = vpop.f32.mrf.mxu0
      %v959 = vadd.f32 0.0, %v958
      %960 = vmatmul.f32.gmra.mxu0 %v483
      %v961 = vpop.f32.mrf.mxu0
      %v962 = vadd.f32 0.0, %v961
      %963 = vmatmul.f32.gmra.mxu0 %v484
      %v964 = vpop.f32.mrf.mxu0
      %v965 = vadd.f32 0.0, %v964
      %966 = vdwg.mxu0
      %v967 = vadd.f32 %v877, %v926
      %v968 = vadd.f32 %v878, %v929
      %v969 = vadd.f32 %v879, %v932
      %v970 = vadd.f32 %v880, %v935
      %v971 = vadd.f32 %v881, %v938
      %v972 = vadd.f32 %v882, %v941
      %v973 = vadd.f32 %v883, %v944
      %v974 = vadd.f32 %v884, %v947
      %v975 = vadd.f32 %v885, %v950
      %v976 = vadd.f32 %v886, %v953
      %v977 = vadd.f32 %v887, %v956
      %v978 = vadd.f32 %v888, %v959
      %v979 = vadd.f32 %v889, %v962
      %v980 = vadd.f32 %v890, %v965
      %v1002 = vrot.slane %v441, 1
      %v1003 = vrot.slane %v442, 1
      %v1004 = vsel %vm661, %v1002, %v1003
      %v1005 = vrot.slane %v443, 1
      %v1006 = vsel %vm661, %v1003, %v1005
      %v1007 = vrot.slane %v444, 1
      %v1008 = vrot.slane %v445, 1
      %v1009 = vsel %vm661, %v1007, %v1008
      %v1010 = vrot.slane %v446, 1
      %v1011 = vsel %vm661, %v1008, %v1010
      %v1012 = vrot.slane %v447, 1
      %v1013 = vrot.slane %v448, 1
      %v1014 = vsel %vm661, %v1012, %v1013
      %v1015 = vrot.slane %v449, 1
      %v1016 = vsel %vm661, %v1013, %v1015
      %v1017 = vrot.slane %v450, 1
      %v1018 = vrot.slane %v451, 1
      %v1019 = vsel %vm661, %v1017, %v1018
      %v1020 = vrot.slane %v452, 1
      %v1021 = vsel %vm661, %v1018, %v1020
      %v1022 = vrot.slane %v453, 1
      %v1023 = vrot.slane %v454, 1
      %v1024 = vsel %vm661, %v1022, %v1023
      %v1025 = vrot.slane %v455, 1
      %v1026 = vsel %vm661, %v1023, %v1025
      %v1027 = vrot.slane %v456, 1
      %v1028 = vrot.slane %v457, 1
      %v1029 = vsel %vm661, %v1027, %v1028
      %v1030 = vrot.slane %v458, 1
      %v1031 = vsel %vm661, %v1028, %v1030
      %v1032 = vrot.slane %v459, 1
      %v1033 = vrot.slane %v460, 1
      %v1034 = vsel %vm661, %v1032, %v1033
      %v1035 = vrot.slane %v461, 1
      %v1036 = vsel %vm661, %v1033, %v1035
      %s1051 = scalar_lea.vmem %s4, 640
      %v1052 = vld [vmem:[%s1051] sm:$0xff]
      %v1053 = vld [vmem:[%s1051 + $0x8] sm:$0xff]
      %v1054 = vld [vmem:[%s1051 + $0x10] sm:$0xff]
      %v1055 = vld [vmem:[%s1051 + $0x18] sm:$0xff]
      %v1056 = vld [vmem:[%s1051 + $0x20] sm:$0xff]
      %v1057 = vld [vmem:[%s1051 + $0x28] sm:$0xff]
      %v1058 = vld [vmem:[%s1051 + $0x30] sm:$0xff]
      %v1059 = vld [vmem:[%s1051 + $0x38] sm:$0xff]
      %v1060 = vld [vmem:[%s1051 + $0x40] sm:$0xff]
      %v1061 = vld [vmem:[%s1051 + $0x48] sm:$0xff]
      %v1062 = vld [vmem:[%s1051 + $0x50] sm:$0xff]
      %v1063 = vld [vmem:[%s1051 + $0x58] sm:$0xff]
      %v1064 = vld [vmem:[%s1051 + $0x60] sm:$0xff]
      %v1065 = vld [vmem:[%s1051 + $0x68] sm:$0xff]
      %v1066 = vld [vmem:[%s1051 + $0x70] sm:$0xff]
      %v1067 = vld [vmem:[%s1051 + $0x78] sm:$0xff]
      %1068 = vmatpush.msra.mxu0 %v1067
      %1069 = vmatpush.msra.mxu0 %v1066
      %1070 = vmatpush.msra.mxu0 %v1065
      %1071 = vmatpush.msra.mxu0 %v1064
      %1072 = vmatpush.msra.mxu0 %v1063
      %1073 = vmatpush.msra.mxu0 %v1062
      %1074 = vmatpush.msra.mxu0 %v1061
      %1075 = vmatpush.msra.mxu0 %v1060
      %1076 = vmatpush.msra.mxu0 %v1059
      %1077 = vmatpush.msra.mxu0 %v1058
      %1078 = vmatpush.msra.mxu0 %v1057
      %1079 = vmatpush.msra.mxu0 %v1056
      %1080 = vmatpush.msra.mxu0 %v1055
      %1081 = vmatpush.msra.mxu0 %v1054
      %1082 = vmatpush.msra.mxu0 %v1053
      %1083 = vmatpush.msra.mxu0 %v1052
      %1084 = vmatmul.f32.gmra.mxu0 %v1004
      %v1085 = vpop.f32.mrf.mxu0
      %v1086 = vadd.f32 0.0, %v1085
      %1087 = vmatmul.f32.gmra.mxu0 %v1006
      %v1088 = vpop.f32.mrf.mxu0
      %v1089 = vadd.f32 0.0, %v1088
      %1090 = vmatmul.f32.gmra.mxu0 %v1009
      %v1091 = vpop.f32.mrf.mxu0
      %v1092 = vadd.f32 0.0, %v1091
      %1093 = vmatmul.f32.gmra.mxu0 %v1011
      %v1094 = vpop.f32.mrf.mxu0
      %v1095 = vadd.f32 0.0, %v1094
      %1096 = vmatmul.f32.gmra.mxu0 %v1014
      %v1097 = vpop.f32.mrf.mxu0
      %v1098 = vadd.f32 0.0, %v1097
      %1099 = vmatmul.f32.gmra.mxu0 %v1016
      %v1100 = vpop.f32.mrf.mxu0
      %v1101 = vadd.f32 0.0, %v1100
      %1102 = vmatmul.f32.gmra.mxu0 %v1019
      %v1103 = vpop.f32.mrf.mxu0
      %v1104 = vadd.f32 0.0, %v1103
      %1105 = vmatmul.f32.gmra.mxu0 %v1021
      %v1106 = vpop.f32.mrf.mxu0
      %v1107 = vadd.f32 0.0, %v1106
      %1108 = vmatmul.f32.gmra.mxu0 %v1024
      %v1109 = vpop.f32.mrf.mxu0
      %v1110 = vadd.f32 0.0, %v1109
      %1111 = vmatmul.f32.gmra.mxu0 %v1026
      %v1112 = vpop.f32.mrf.mxu0
      %v1113 = vadd.f32 0.0, %v1112
      %1114 = vmatmul.f32.gmra.mxu0 %v1029
      %v1115 = vpop.f32.mrf.mxu0
      %v1116 = vadd.f32 0.0, %v1115
      %1117 = vmatmul.f32.gmra.mxu0 %v1031
      %v1118 = vpop.f32.mrf.mxu0
      %v1119 = vadd.f32 0.0, %v1118
      %1120 = vmatmul.f32.gmra.mxu0 %v1034
      %v1121 = vpop.f32.mrf.mxu0
      %v1122 = vadd.f32 0.0, %v1121
      %1123 = vmatmul.f32.gmra.mxu0 %v1036
      %v1124 = vpop.f32.mrf.mxu0
      %v1125 = vadd.f32 0.0, %v1124
      %1126 = vdwg.mxu0
      %v1127 = vadd.f32 %v967, %v1086
      %v1128 = vadd.f32 %v968, %v1089
      %v1129 = vadd.f32 %v969, %v1092
      %v1130 = vadd.f32 %v970, %v1095
      %v1131 = vadd.f32 %v971, %v1098
      %v1132 = vadd.f32 %v972, %v1101
      %v1133 = vadd.f32 %v973, %v1104
      %v1134 = vadd.f32 %v974, %v1107
      %v1135 = vadd.f32 %v975, %v1110
      %v1136 = vadd.f32 %v976, %v1113
      %v1137 = vadd.f32 %v977, %v1116
      %v1138 = vadd.f32 %v978, %v1119
      %v1139 = vadd.f32 %v979, %v1122
      %v1140 = vadd.f32 %v980, %v1125
      %s1141 = scalar_lea.vmem %s4, 768
      %v1142 = vld [vmem:[%s1141] sm:$0xff]
      %v1143 = vld [vmem:[%s1141 + $0x8] sm:$0xff]
      %v1144 = vld [vmem:[%s1141 + $0x10] sm:$0xff]
      %v1145 = vld [vmem:[%s1141 + $0x18] sm:$0xff]
      %v1146 = vld [vmem:[%s1141 + $0x20] sm:$0xff]
      %v1147 = vld [vmem:[%s1141 + $0x28] sm:$0xff]
      %v1148 = vld [vmem:[%s1141 + $0x30] sm:$0xff]
      %v1149 = vld [vmem:[%s1141 + $0x38] sm:$0xff]
      %v1150 = vld [vmem:[%s1141 + $0x40] sm:$0xff]
      %v1151 = vld [vmem:[%s1141 + $0x48] sm:$0xff]
      %v1152 = vld [vmem:[%s1141 + $0x50] sm:$0xff]
      %v1153 = vld [vmem:[%s1141 + $0x58] sm:$0xff]
      %v1154 = vld [vmem:[%s1141 + $0x60] sm:$0xff]
      %v1155 = vld [vmem:[%s1141 + $0x68] sm:$0xff]
      %v1156 = vld [vmem:[%s1141 + $0x70] sm:$0xff]
      %v1157 = vld [vmem:[%s1141 + $0x78] sm:$0xff]
      %1158 = vmatpush.msra.mxu0 %v1157
      %1159 = vmatpush.msra.mxu0 %v1156
      %1160 = vmatpush.msra.mxu0 %v1155
      %1161 = vmatpush.msra.mxu0 %v1154
      %1162 = vmatpush.msra.mxu0 %v1153
      %1163 = vmatpush.msra.mxu0 %v1152
      %1164 = vmatpush.msra.mxu0 %v1151
      %1165 = vmatpush.msra.mxu0 %v1150
      %1166 = vmatpush.msra.mxu0 %v1149
      %1167 = vmatpush.msra.mxu0 %v1148
      %1168 = vmatpush.msra.mxu0 %v1147
      %1169 = vmatpush.msra.mxu0 %v1146
      %1170 = vmatpush.msra.mxu0 %v1145
      %1171 = vmatpush.msra.mxu0 %v1144
      %1172 = vmatpush.msra.mxu0 %v1143
      %1173 = vmatpush.msra.mxu0 %v1142
      %1174 = vmatmul.f32.gmra.mxu0 %v396
      %v1175 = vpop.f32.mrf.mxu0
      %v1176 = vadd.f32 0.0, %v1175
      %1177 = vmatmul.f32.gmra.mxu0 %v397
      %v1178 = vpop.f32.mrf.mxu0
      %v1179 = vadd.f32 0.0, %v1178
      %1180 = vmatmul.f32.gmra.mxu0 %v399
      %v1181 = vpop.f32.mrf.mxu0
      %v1182 = vadd.f32 0.0, %v1181
      %1183 = vmatmul.f32.gmra.mxu0 %v400
      %v1184 = vpop.f32.mrf.mxu0
      %v1185 = vadd.f32 0.0, %v1184
      %1186 = vmatmul.f32.gmra.mxu0 %v402
      %v1187 = vpop.f32.mrf.mxu0
      %v1188 = vadd.f32 0.0, %v1187
      %1189 = vmatmul.f32.gmra.mxu0 %v403
      %v1190 = vpop.f32.mrf.mxu0
      %v1191 = vadd.f32 0.0, %v1190
      %1192 = vmatmul.f32.gmra.mxu0 %v405
      %v1193 = vpop.f32.mrf.mxu0
      %v1194 = vadd.f32 0.0, %v1193
      %1195 = vmatmul.f32.gmra.mxu0 %v406
      %v1196 = vpop.f32.mrf.mxu0
      %v1197 = vadd.f32 0.0, %v1196
      %1198 = vmatmul.f32.gmra.mxu0 %v408
      %v1199 = vpop.f32.mrf.mxu0
      %v1200 = vadd.f32 0.0, %v1199
      %1201 = vmatmul.f32.gmra.mxu0 %v409
      %v1202 = vpop.f32.mrf.mxu0
      %v1203 = vadd.f32 0.0, %v1202
      %1204 = vmatmul.f32.gmra.mxu0 %v411
      %v1205 = vpop.f32.mrf.mxu0
      %v1206 = vadd.f32 0.0, %v1205
      %1207 = vmatmul.f32.gmra.mxu0 %v412
      %v1208 = vpop.f32.mrf.mxu0
      %v1209 = vadd.f32 0.0, %v1208
      %1210 = vmatmul.f32.gmra.mxu0 %v414
      %v1211 = vpop.f32.mrf.mxu0
      %v1212 = vadd.f32 0.0, %v1211
      %1213 = vmatmul.f32.gmra.mxu0 %v415
      %v1214 = vpop.f32.mrf.mxu0
      %v1215 = vadd.f32 0.0, %v1214
      %1216 = vdwg.mxu0
      %v1217 = vadd.f32 %v1127, %v1176
      %v1218 = vadd.f32 %v1128, %v1179
      %v1219 = vadd.f32 %v1129, %v1182
      %v1220 = vadd.f32 %v1130, %v1185
      %v1221 = vadd.f32 %v1131, %v1188
      %v1222 = vadd.f32 %v1132, %v1191
      %v1223 = vadd.f32 %v1133, %v1194
      %v1224 = vadd.f32 %v1134, %v1197
      %v1225 = vadd.f32 %v1135, %v1200
      %v1226 = vadd.f32 %v1136, %v1203
      %v1227 = vadd.f32 %v1137, %v1206
      %v1228 = vadd.f32 %v1138, %v1209
      %v1229 = vadd.f32 %v1139, %v1212
      %v1230 = vadd.f32 %v1140, %v1215
      %s1231 = scalar_lea.vmem %s4, 896
      %v1232 = vld [vmem:[%s1231] sm:$0xff]
      %v1233 = vld [vmem:[%s1231 + $0x8] sm:$0xff]
      %v1234 = vld [vmem:[%s1231 + $0x10] sm:$0xff]
      %v1235 = vld [vmem:[%s1231 + $0x18] sm:$0xff]
      %v1236 = vld [vmem:[%s1231 + $0x20] sm:$0xff]
      %v1237 = vld [vmem:[%s1231 + $0x28] sm:$0xff]
      %v1238 = vld [vmem:[%s1231 + $0x30] sm:$0xff]
      %v1239 = vld [vmem:[%s1231 + $0x38] sm:$0xff]
      %v1240 = vld [vmem:[%s1231 + $0x40] sm:$0xff]
      %v1241 = vld [vmem:[%s1231 + $0x48] sm:$0xff]
      %v1242 = vld [vmem:[%s1231 + $0x50] sm:$0xff]
      %v1243 = vld [vmem:[%s1231 + $0x58] sm:$0xff]
      %v1244 = vld [vmem:[%s1231 + $0x60] sm:$0xff]
      %v1245 = vld [vmem:[%s1231 + $0x68] sm:$0xff]
      %v1246 = vld [vmem:[%s1231 + $0x70] sm:$0xff]
      %v1247 = vld [vmem:[%s1231 + $0x78] sm:$0xff]
      %1248 = vmatpush.msra.mxu0 %v1247
      %1249 = vmatpush.msra.mxu0 %v1246
      %1250 = vmatpush.msra.mxu0 %v1245
      %1251 = vmatpush.msra.mxu0 %v1244
      %1252 = vmatpush.msra.mxu0 %v1243
      %1253 = vmatpush.msra.mxu0 %v1242
      %1254 = vmatpush.msra.mxu0 %v1241
      %1255 = vmatpush.msra.mxu0 %v1240
      %1256 = vmatpush.msra.mxu0 %v1239
      %1257 = vmatpush.msra.mxu0 %v1238
      %1258 = vmatpush.msra.mxu0 %v1237
      %1259 = vmatpush.msra.mxu0 %v1236
      %1260 = vmatpush.msra.mxu0 %v1235
      %1261 = vmatpush.msra.mxu0 %v1234
      %1262 = vmatpush.msra.mxu0 %v1233
      %1263 = vmatpush.msra.mxu0 %v1232
      %1264 = vmatmul.f32.gmra.mxu0 %v420
      %v1265 = vpop.f32.mrf.mxu0
      %v1266 = vadd.f32 0.0, %v1265
      %1267 = vmatmul.f32.gmra.mxu0 %v421
      %v1268 = vpop.f32.mrf.mxu0
      %v1269 = vadd.f32 0.0, %v1268
      %1270 = vmatmul.f32.gmra.mxu0 %v423
      %v1271 = vpop.f32.mrf.mxu0
      %v1272 = vadd.f32 0.0, %v1271
      %1273 = vmatmul.f32.gmra.mxu0 %v424
      %v1274 = vpop.f32.mrf.mxu0
      %v1275 = vadd.f32 0.0, %v1274
      %1276 = vmatmul.f32.gmra.mxu0 %v426
      %v1277 = vpop.f32.mrf.mxu0
      %v1278 = vadd.f32 0.0, %v1277
      %1279 = vmatmul.f32.gmra.mxu0 %v427
      %v1280 = vpop.f32.mrf.mxu0
      %v1281 = vadd.f32 0.0, %v1280
      %1282 = vmatmul.f32.gmra.mxu0 %v429
      %v1283 = vpop.f32.mrf.mxu0
      %v1284 = vadd.f32 0.0, %v1283
      %1285 = vmatmul.f32.gmra.mxu0 %v430
      %v1286 = vpop.f32.mrf.mxu0
      %v1287 = vadd.f32 0.0, %v1286
      %1288 = vmatmul.f32.gmra.mxu0 %v432
      %v1289 = vpop.f32.mrf.mxu0
      %v1290 = vadd.f32 0.0, %v1289
      %1291 = vmatmul.f32.gmra.mxu0 %v433
      %v1292 = vpop.f32.mrf.mxu0
      %v1293 = vadd.f32 0.0, %v1292
      %1294 = vmatmul.f32.gmra.mxu0 %v435
      %v1295 = vpop.f32.mrf.mxu0
      %v1296 = vadd.f32 0.0, %v1295
      %1297 = vmatmul.f32.gmra.mxu0 %v436
      %v1298 = vpop.f32.mrf.mxu0
      %v1299 = vadd.f32 0.0, %v1298
      %1300 = vmatmul.f32.gmra.mxu0 %v438
      %v1301 = vpop.f32.mrf.mxu0
      %v1302 = vadd.f32 0.0, %v1301
      %1303 = vmatmul.f32.gmra.mxu0 %v439
      %v1304 = vpop.f32.mrf.mxu0
      %v1305 = vadd.f32 0.0, %v1304
      %1306 = vdwg.mxu0
      %v1307 = vadd.f32 %v1217, %v1266
      %v1308 = vadd.f32 %v1218, %v1269
      %v1309 = vadd.f32 %v1219, %v1272
      %v1310 = vadd.f32 %v1220, %v1275
      %v1311 = vadd.f32 %v1221, %v1278
      %v1312 = vadd.f32 %v1222, %v1281
      %v1313 = vadd.f32 %v1223, %v1284
      %v1314 = vadd.f32 %v1224, %v1287
      %v1315 = vadd.f32 %v1225, %v1290
      %v1316 = vadd.f32 %v1226, %v1293
      %v1317 = vadd.f32 %v1227, %v1296
      %v1318 = vadd.f32 %v1228, %v1299
      %v1319 = vadd.f32 %v1229, %v1302
      %v1320 = vadd.f32 %v1230, %v1305
      %v1324 = vrot.slane %v414, 1
      %v1325 = vrot.slane %v415, 1
      %v1326 = vsel %vm661, %v1324, %v1325
      %v1327 = vrot.slane %v416, 1
      %v1328 = vsel %vm661, %v1325, %v1327
      %s1331 = scalar_lea.vmem %s4, 1024
      %v1332 = vld [vmem:[%s1331] sm:$0xff]
      %v1333 = vld [vmem:[%s1331 + $0x8] sm:$0xff]
      %v1334 = vld [vmem:[%s1331 + $0x10] sm:$0xff]
      %v1335 = vld [vmem:[%s1331 + $0x18] sm:$0xff]
      %v1336 = vld [vmem:[%s1331 + $0x20] sm:$0xff]
      %v1337 = vld [vmem:[%s1331 + $0x28] sm:$0xff]
      %v1338 = vld [vmem:[%s1331 + $0x30] sm:$0xff]
      %v1339 = vld [vmem:[%s1331 + $0x38] sm:$0xff]
      %v1340 = vld [vmem:[%s1331 + $0x40] sm:$0xff]
      %v1341 = vld [vmem:[%s1331 + $0x48] sm:$0xff]
      %v1342 = vld [vmem:[%s1331 + $0x50] sm:$0xff]
      %v1343 = vld [vmem:[%s1331 + $0x58] sm:$0xff]
      %v1344 = vld [vmem:[%s1331 + $0x60] sm:$0xff]
      %v1345 = vld [vmem:[%s1331 + $0x68] sm:$0xff]
      %v1346 = vld [vmem:[%s1331 + $0x70] sm:$0xff]
      %v1347 = vld [vmem:[%s1331 + $0x78] sm:$0xff]
      %1348 = vmatpush.msra.mxu0 %v1347
      %1349 = vmatpush.msra.mxu0 %v1346
      %1350 = vmatpush.msra.mxu0 %v1345
      %1351 = vmatpush.msra.mxu0 %v1344
      %1352 = vmatpush.msra.mxu0 %v1343
      %1353 = vmatpush.msra.mxu0 %v1342
      %1354 = vmatpush.msra.mxu0 %v1341
      %1355 = vmatpush.msra.mxu0 %v1340
      %1356 = vmatpush.msra.mxu0 %v1339
      %1357 = vmatpush.msra.mxu0 %v1338
      %1358 = vmatpush.msra.mxu0 %v1337
      %1359 = vmatpush.msra.mxu0 %v1336
      %1360 = vmatpush.msra.mxu0 %v1335
      %1361 = vmatpush.msra.mxu0 %v1334
      %1362 = vmatpush.msra.mxu0 %v1333
      %1363 = vmatpush.msra.mxu0 %v1332
      %1364 = vmatmul.f32.gmra.mxu0 %v669
      %v1365 = vpop.f32.mrf.mxu0
      %v1366 = vadd.f32 0.0, %v1365
      %1367 = vmatmul.f32.gmra.mxu0 %v671
      %v1368 = vpop.f32.mrf.mxu0
      %v1369 = vadd.f32 0.0, %v1368
      %1370 = vmatmul.f32.gmra.mxu0 %v674
      %v1371 = vpop.f32.mrf.mxu0
      %v1372 = vadd.f32 0.0, %v1371
      %1373 = vmatmul.f32.gmra.mxu0 %v676
      %v1374 = vpop.f32.mrf.mxu0
      %v1375 = vadd.f32 0.0, %v1374
      %1376 = vmatmul.f32.gmra.mxu0 %v679
      %v1377 = vpop.f32.mrf.mxu0
      %v1378 = vadd.f32 0.0, %v1377
      %1379 = vmatmul.f32.gmra.mxu0 %v681
      %v1380 = vpop.f32.mrf.mxu0
      %v1381 = vadd.f32 0.0, %v1380
      %1382 = vmatmul.f32.gmra.mxu0 %v684
      %v1383 = vpop.f32.mrf.mxu0
      %v1384 = vadd.f32 0.0, %v1383
      %1385 = vmatmul.f32.gmra.mxu0 %v686
      %v1386 = vpop.f32.mrf.mxu0
      %v1387 = vadd.f32 0.0, %v1386
      %1388 = vmatmul.f32.gmra.mxu0 %v689
      %v1389 = vpop.f32.mrf.mxu0
      %v1390 = vadd.f32 0.0, %v1389
      %1391 = vmatmul.f32.gmra.mxu0 %v691
      %v1392 = vpop.f32.mrf.mxu0
      %v1393 = vadd.f32 0.0, %v1392
      %1394 = vmatmul.f32.gmra.mxu0 %v694
      %v1395 = vpop.f32.mrf.mxu0
      %v1396 = vadd.f32 0.0, %v1395
      %1397 = vmatmul.f32.gmra.mxu0 %v696
      %v1398 = vpop.f32.mrf.mxu0
      %v1399 = vadd.f32 0.0, %v1398
      %1400 = vmatmul.f32.gmra.mxu0 %v1326
      %v1401 = vpop.f32.mrf.mxu0
      %v1402 = vadd.f32 0.0, %v1401
      %1403 = vmatmul.f32.gmra.mxu0 %v1328
      %v1404 = vpop.f32.mrf.mxu0
      %v1405 = vadd.f32 0.0, %v1404
      %1406 = vdwg.mxu0
      %v1407 = vadd.f32 %v1307, %v1366
      %v1408 = vadd.f32 %v1308, %v1369
      %v1409 = vadd.f32 %v1309, %v1372
      %v1410 = vadd.f32 %v1310, %v1375
      %v1411 = vadd.f32 %v1311, %v1378
      %v1412 = vadd.f32 %v1312, %v1381
      %v1413 = vadd.f32 %v1313, %v1384
      %v1414 = vadd.f32 %v1314, %v1387
      %v1415 = vadd.f32 %v1315, %v1390
      %v1416 = vadd.f32 %v1316, %v1393
      %v1417 = vadd.f32 %v1317, %v1396
      %v1418 = vadd.f32 %v1318, %v1399
      %v1419 = vadd.f32 %v1319, %v1402
      %v1420 = vadd.f32 %v1320, %v1405
      %1421 = vmatpush.msra.mxu0 %v521
      %1422 = vmatpush.msra.mxu0 %v520
      %1423 = vmatpush.msra.mxu0 %v519
      %1424 = vmatpush.msra.mxu0 %v518
      %1425 = vmatpush.msra.mxu0 %v517
      %1426 = vmatpush.msra.mxu0 %v516
      %1427 = vmatpush.msra.mxu0 %v515
      %1428 = vmatpush.msra.mxu0 %v514
      %1429 = vmatpush.msra.mxu0 %v513
      %1430 = vmatpush.msra.mxu0 %v512
      %1431 = vmatpush.msra.mxu0 %v511
      %1432 = vmatpush.msra.mxu0 %v510
      %1433 = vmatpush.msra.mxu0 %v509
      %1434 = vmatpush.msra.mxu0 %v508
      %1435 = vmatpush.msra.mxu0 %v507
      %1436 = vmatpush.msra.mxu0 %v506
      %1437 = vmatmul.f32.gmra.mxu0 %v664
      %v1438 = vpop.f32.mrf.mxu0
      %v1439 = vadd.f32 0.0, %v1438
      %1440 = vmatmul.f32.gmra.mxu0 %v666
      %v1441 = vpop.f32.mrf.mxu0
      %v1442 = vadd.f32 0.0, %v1441
      %1443 = vmatmul.f32.gmra.mxu0 %v669
      %v1444 = vpop.f32.mrf.mxu0
      %v1445 = vadd.f32 0.0, %v1444
      %1446 = vmatmul.f32.gmra.mxu0 %v671
      %v1447 = vpop.f32.mrf.mxu0
      %v1448 = vadd.f32 0.0, %v1447
      %1449 = vmatmul.f32.gmra.mxu0 %v674
      %v1450 = vpop.f32.mrf.mxu0
      %v1451 = vadd.f32 0.0, %v1450
      %1452 = vmatmul.f32.gmra.mxu0 %v676
      %v1453 = vpop.f32.mrf.mxu0
      %v1454 = vadd.f32 0.0, %v1453
      %1455 = vmatmul.f32.gmra.mxu0 %v679
      %v1456 = vpop.f32.mrf.mxu0
      %v1457 = vadd.f32 0.0, %v1456
      %1458 = vmatmul.f32.gmra.mxu0 %v681
      %v1459 = vpop.f32.mrf.mxu0
      %v1460 = vadd.f32 0.0, %v1459
      %1461 = vmatmul.f32.gmra.mxu0 %v684
      %v1462 = vpop.f32.mrf.mxu0
      %v1463 = vadd.f32 0.0, %v1462
      %1464 = vmatmul.f32.gmra.mxu0 %v686
      %v1465 = vpop.f32.mrf.mxu0
      %v1466 = vadd.f32 0.0, %v1465
      %1467 = vmatmul.f32.gmra.mxu0 %v689
      %v1468 = vpop.f32.mrf.mxu0
      %v1469 = vadd.f32 0.0, %v1468
      %1470 = vmatmul.f32.gmra.mxu0 %v691
      %v1471 = vpop.f32.mrf.mxu0
      %v1472 = vadd.f32 0.0, %v1471
      %1473 = vmatmul.f32.gmra.mxu0 %v694
      %v1474 = vpop.f32.mrf.mxu0
      %v1475 = vadd.f32 0.0, %v1474
      %1476 = vmatmul.f32.gmra.mxu0 %v696
      %v1477 = vpop.f32.mrf.mxu0
      %v1478 = vadd.f32 0.0, %v1477
      %1479 = vdwg.mxu0
      %1480 = vmatpush.msra.mxu0 %v504
      %1481 = vmatpush.msra.mxu0 %v503
      %1482 = vmatpush.msra.mxu0 %v502
      %1483 = vmatpush.msra.mxu0 %v501
      %1484 = vmatpush.msra.mxu0 %v500
      %1485 = vmatpush.msra.mxu0 %v499
      %1486 = vmatpush.msra.mxu0 %v498
      %1487 = vmatpush.msra.mxu0 %v497
      %1488 = vmatpush.msra.mxu0 %v496
      %1489 = vmatpush.msra.mxu0 %v495
      %1490 = vmatpush.msra.mxu0 %v494
      %1491 = vmatpush.msra.mxu0 %v493
      %1492 = vmatpush.msra.mxu0 %v492
      %1493 = vmatpush.msra.mxu0 %v491
      %1494 = vmatpush.msra.mxu0 %v490
      %1495 = vmatpush.msra.mxu0 %v489
      %1496 = vmatmul.f32.gmra.mxu0 %v417
      %v1497 = vpop.f32.mrf.mxu0
      %v1498 = vadd.f32 %v1439, %v1497
      %1499 = vmatmul.f32.gmra.mxu0 %v418
      %v1500 = vpop.f32.mrf.mxu0
      %v1501 = vadd.f32 %v1442, %v1500
      %1502 = vmatmul.f32.gmra.mxu0 %v420
      %v1503 = vpop.f32.mrf.mxu0
      %v1504 = vadd.f32 %v1445, %v1503
      %1505 = vmatmul.f32.gmra.mxu0 %v421
      %v1506 = vpop.f32.mrf.mxu0
      %v1507 = vadd.f32 %v1448, %v1506
      %1508 = vmatmul.f32.gmra.mxu0 %v423
      %v1509 = vpop.f32.mrf.mxu0
      %v1510 = vadd.f32 %v1451, %v1509
      %1511 = vmatmul.f32.gmra.mxu0 %v424
      %v1512 = vpop.f32.mrf.mxu0
      %v1513 = vadd.f32 %v1454, %v1512
      %1514 = vmatmul.f32.gmra.mxu0 %v426
      %v1515 = vpop.f32.mrf.mxu0
      %v1516 = vadd.f32 %v1457, %v1515
      %1517 = vmatmul.f32.gmra.mxu0 %v427
      %v1518 = vpop.f32.mrf.mxu0
      %v1519 = vadd.f32 %v1460, %v1518
      %1520 = vmatmul.f32.gmra.mxu0 %v429
      %v1521 = vpop.f32.mrf.mxu0
      %v1522 = vadd.f32 %v1463, %v1521
      %1523 = vmatmul.f32.gmra.mxu0 %v430
      %v1524 = vpop.f32.mrf.mxu0
      %v1525 = vadd.f32 %v1466, %v1524
      %1526 = vmatmul.f32.gmra.mxu0 %v432
      %v1527 = vpop.f32.mrf.mxu0
      %v1528 = vadd.f32 %v1469, %v1527
      %1529 = vmatmul.f32.gmra.mxu0 %v433
      %v1530 = vpop.f32.mrf.mxu0
      %v1531 = vadd.f32 %v1472, %v1530
      %1532 = vmatmul.f32.gmra.mxu0 %v435
      %v1533 = vpop.f32.mrf.mxu0
      %v1534 = vadd.f32 %v1475, %v1533
      %1535 = vmatmul.f32.gmra.mxu0 %v436
      %v1536 = vpop.f32.mrf.mxu0
      %v1537 = vadd.f32 %v1478, %v1536
      %1538 = vdwg.mxu0
      %v1560 = vrot.slane %v417, 1
      %v1561 = vrot.slane %v418, 1
      %v1562 = vsel %vm661, %v1560, %v1561
      %v1563 = vrot.slane %v419, 1
      %v1564 = vsel %vm661, %v1561, %v1563
      %v1565 = vrot.slane %v420, 1
      %v1566 = vrot.slane %v421, 1
      %v1567 = vsel %vm661, %v1565, %v1566
      %v1568 = vrot.slane %v422, 1
      %v1569 = vsel %vm661, %v1566, %v1568
      %v1570 = vrot.slane %v423, 1
      %v1571 = vrot.slane %v424, 1
      %v1572 = vsel %vm661, %v1570, %v1571
      %v1573 = vrot.slane %v425, 1
      %v1574 = vsel %vm661, %v1571, %v1573
      %v1575 = vrot.slane %v426, 1
      %v1576 = vrot.slane %v427, 1
      %v1577 = vsel %vm661, %v1575, %v1576
      %v1578 = vrot.slane %v428, 1
      %v1579 = vsel %vm661, %v1576, %v1578
      %v1580 = vrot.slane %v429, 1
      %v1581 = vrot.slane %v430, 1
      %v1582 = vsel %vm661, %v1580, %v1581
      %v1583 = vrot.slane %v431, 1
      %v1584 = vsel %vm661, %v1581, %v1583
      %v1585 = vrot.slane %v432, 1
      %v1586 = vrot.slane %v433, 1
      %v1587 = vsel %vm661, %v1585, %v1586
      %v1588 = vrot.slane %v434, 1
      %v1589 = vsel %vm661, %v1586, %v1588
      %v1590 = vrot.slane %v435, 1
      %v1591 = vrot.slane %v436, 1
      %v1592 = vsel %vm661, %v1590, %v1591
      %v1593 = vrot.slane %v437, 1
      %v1594 = vsel %vm661, %v1591, %v1593
      %1609 = vmatpush.msra.mxu0 %v727
      %1610 = vmatpush.msra.mxu0 %v726
      %1611 = vmatpush.msra.mxu0 %v725
      %1612 = vmatpush.msra.mxu0 %v724
      %1613 = vmatpush.msra.mxu0 %v723
      %1614 = vmatpush.msra.mxu0 %v722
      %1615 = vmatpush.msra.mxu0 %v721
      %1616 = vmatpush.msra.mxu0 %v720
      %1617 = vmatpush.msra.mxu0 %v719
      %1618 = vmatpush.msra.mxu0 %v718
      %1619 = vmatpush.msra.mxu0 %v717
      %1620 = vmatpush.msra.mxu0 %v716
      %1621 = vmatpush.msra.mxu0 %v715
      %1622 = vmatpush.msra.mxu0 %v714
      %1623 = vmatpush.msra.mxu0 %v713
      %1624 = vmatpush.msra.mxu0 %v712
      %1625 = vmatmul.f32.gmra.mxu0 %v1562
      %v1626 = vpop.f32.mrf.mxu0
      %v1627 = vadd.f32 0.0, %v1626
      %1628 = vmatmul.f32.gmra.mxu0 %v1564
      %v1629 = vpop.f32.mrf.mxu0
      %v1630 = vadd.f32 0.0, %v1629
      %1631 = vmatmul.f32.gmra.mxu0 %v1567
      %v1632 = vpop.f32.mrf.mxu0
      %v1633 = vadd.f32 0.0, %v1632
      %1634 = vmatmul.f32.gmra.mxu0 %v1569
      %v1635 = vpop.f32.mrf.mxu0
      %v1636 = vadd.f32 0.0, %v1635
      %1637 = vmatmul.f32.gmra.mxu0 %v1572
      %v1638 = vpop.f32.mrf.mxu0
      %v1639 = vadd.f32 0.0, %v1638
      %1640 = vmatmul.f32.gmra.mxu0 %v1574
      %v1641 = vpop.f32.mrf.mxu0
      %v1642 = vadd.f32 0.0, %v1641
      %1643 = vmatmul.f32.gmra.mxu0 %v1577
      %v1644 = vpop.f32.mrf.mxu0
      %v1645 = vadd.f32 0.0, %v1644
      %1646 = vmatmul.f32.gmra.mxu0 %v1579
      %v1647 = vpop.f32.mrf.mxu0
      %v1648 = vadd.f32 0.0, %v1647
      %1649 = vmatmul.f32.gmra.mxu0 %v1582
      %v1650 = vpop.f32.mrf.mxu0
      %v1651 = vadd.f32 0.0, %v1650
      %1652 = vmatmul.f32.gmra.mxu0 %v1584
      %v1653 = vpop.f32.mrf.mxu0
      %v1654 = vadd.f32 0.0, %v1653
      %1655 = vmatmul.f32.gmra.mxu0 %v1587
      %v1656 = vpop.f32.mrf.mxu0
      %v1657 = vadd.f32 0.0, %v1656
      %1658 = vmatmul.f32.gmra.mxu0 %v1589
      %v1659 = vpop.f32.mrf.mxu0
      %v1660 = vadd.f32 0.0, %v1659
      %1661 = vmatmul.f32.gmra.mxu0 %v1592
      %v1662 = vpop.f32.mrf.mxu0
      %v1663 = vadd.f32 0.0, %v1662
      %1664 = vmatmul.f32.gmra.mxu0 %v1594
      %v1665 = vpop.f32.mrf.mxu0
      %v1666 = vadd.f32 0.0, %v1665
      %1667 = vdwg.mxu0
      %v1668 = vadd.f32 %v1498, %v1627
      %v1669 = vadd.f32 %v1501, %v1630
      %v1670 = vadd.f32 %v1504, %v1633
      %v1671 = vadd.f32 %v1507, %v1636
      %v1672 = vadd.f32 %v1510, %v1639
      %v1673 = vadd.f32 %v1513, %v1642
      %v1674 = vadd.f32 %v1516, %v1645
      %v1675 = vadd.f32 %v1519, %v1648
      %v1676 = vadd.f32 %v1522, %v1651
      %v1677 = vadd.f32 %v1525, %v1654
      %v1678 = vadd.f32 %v1528, %v1657
      %v1679 = vadd.f32 %v1531, %v1660
      %v1680 = vadd.f32 %v1534, %v1663
      %v1681 = vadd.f32 %v1537, %v1666
      %1682 = vmatpush.msra.mxu0 %v817
      %1683 = vmatpush.msra.mxu0 %v816
      %1684 = vmatpush.msra.mxu0 %v815
      %1685 = vmatpush.msra.mxu0 %v814
      %1686 = vmatpush.msra.mxu0 %v813
      %1687 = vmatpush.msra.mxu0 %v812
      %1688 = vmatpush.msra.mxu0 %v811
      %1689 = vmatpush.msra.mxu0 %v810
      %1690 = vmatpush.msra.mxu0 %v809
      %1691 = vmatpush.msra.mxu0 %v808
      %1692 = vmatpush.msra.mxu0 %v807
      %1693 = vmatpush.msra.mxu0 %v806
      %1694 = vmatpush.msra.mxu0 %v805
      %1695 = vmatpush.msra.mxu0 %v804
      %1696 = vmatpush.msra.mxu0 %v803
      %1697 = vmatpush.msra.mxu0 %v802
      %1698 = vmatmul.f32.gmra.mxu0 %v465
      %v1699 = vpop.f32.mrf.mxu0
      %v1700 = vadd.f32 0.0, %v1699
      %1701 = vmatmul.f32.gmra.mxu0 %v466
      %v1702 = vpop.f32.mrf.mxu0
      %v1703 = vadd.f32 0.0, %v1702
      %1704 = vmatmul.f32.gmra.mxu0 %v468
      %v1705 = vpop.f32.mrf.mxu0
      %v1706 = vadd.f32 0.0, %v1705
      %1707 = vmatmul.f32.gmra.mxu0 %v469
      %v1708 = vpop.f32.mrf.mxu0
      %v1709 = vadd.f32 0.0, %v1708
      %1710 = vmatmul.f32.gmra.mxu0 %v471
      %v1711 = vpop.f32.mrf.mxu0
      %v1712 = vadd.f32 0.0, %v1711
      %1713 = vmatmul.f32.gmra.mxu0 %v472
      %v1714 = vpop.f32.mrf.mxu0
      %v1715 = vadd.f32 0.0, %v1714
      %1716 = vmatmul.f32.gmra.mxu0 %v474
      %v1717 = vpop.f32.mrf.mxu0
      %v1718 = vadd.f32 0.0, %v1717
      %1719 = vmatmul.f32.gmra.mxu0 %v475
      %v1720 = vpop.f32.mrf.mxu0
      %v1721 = vadd.f32 0.0, %v1720
      %1722 = vmatmul.f32.gmra.mxu0 %v477
      %v1723 = vpop.f32.mrf.mxu0
      %v1724 = vadd.f32 0.0, %v1723
      %1725 = vmatmul.f32.gmra.mxu0 %v478
      %v1726 = vpop.f32.mrf.mxu0
      %v1727 = vadd.f32 0.0, %v1726
      %1728 = vmatmul.f32.gmra.mxu0 %v480
      %v1729 = vpop.f32.mrf.mxu0
      %v1730 = vadd.f32 0.0, %v1729
      %1731 = vmatmul.f32.gmra.mxu0 %v481
      %v1732 = vpop.f32.mrf.mxu0
      %v1733 = vadd.f32 0.0, %v1732
      %1734 = vmatmul.f32.gmra.mxu0 %v483
      %v1735 = vpop.f32.mrf.mxu0
      %v1736 = vadd.f32 0.0, %v1735
      %1737 = vmatmul.f32.gmra.mxu0 %v484
      %v1738 = vpop.f32.mrf.mxu0
      %v1739 = vadd.f32 0.0, %v1738
      %1740 = vdwg.mxu0
      %v1741 = vadd.f32 %v1668, %v1700
      %v1742 = vadd.f32 %v1669, %v1703
      %v1743 = vadd.f32 %v1670, %v1706
      %v1744 = vadd.f32 %v1671, %v1709
      %v1745 = vadd.f32 %v1672, %v1712
      %v1746 = vadd.f32 %v1673, %v1715
      %v1747 = vadd.f32 %v1674, %v1718
      %v1748 = vadd.f32 %v1675, %v1721
      %v1749 = vadd.f32 %v1676, %v1724
      %v1750 = vadd.f32 %v1677, %v1727
      %v1751 = vadd.f32 %v1678, %v1730
      %v1752 = vadd.f32 %v1679, %v1733
      %v1753 = vadd.f32 %v1680, %v1736
      %v1754 = vadd.f32 %v1681, %v1739
      %1755 = vmatpush.msra.mxu0 %v907
      %1756 = vmatpush.msra.mxu0 %v906
      %1757 = vmatpush.msra.mxu0 %v905
      %1758 = vmatpush.msra.mxu0 %v904
      %1759 = vmatpush.msra.mxu0 %v903
      %1760 = vmatpush.msra.mxu0 %v902
      %1761 = vmatpush.msra.mxu0 %v901
      %1762 = vmatpush.msra.mxu0 %v900
      %1763 = vmatpush.msra.mxu0 %v899
      %1764 = vmatpush.msra.mxu0 %v898
      %1765 = vmatpush.msra.mxu0 %v897
      %1766 = vmatpush.msra.mxu0 %v896
      %1767 = vmatpush.msra.mxu0 %v895
      %1768 = vmatpush.msra.mxu0 %v894
      %1769 = vmatpush.msra.mxu0 %v893
      %1770 = vmatpush.msra.mxu0 %v892
      %1771 = vmatmul.f32.gmra.mxu0 %v1004
      %v1772 = vpop.f32.mrf.mxu0
      %v1773 = vadd.f32 0.0, %v1772
      %1774 = vmatmul.f32.gmra.mxu0 %v1006
      %v1775 = vpop.f32.mrf.mxu0
      %v1776 = vadd.f32 0.0, %v1775
      %1777 = vmatmul.f32.gmra.mxu0 %v1009
      %v1778 = vpop.f32.mrf.mxu0
      %v1779 = vadd.f32 0.0, %v1778
      %1780 = vmatmul.f32.gmra.mxu0 %v1011
      %v1781 = vpop.f32.mrf.mxu0
      %v1782 = vadd.f32 0.0, %v1781
      %1783 = vmatmul.f32.gmra.mxu0 %v1014
      %v1784 = vpop.f32.mrf.mxu0
      %v1785 = vadd.f32 0.0, %v1784
      %1786 = vmatmul.f32.gmra.mxu0 %v1016
      %v1787 = vpop.f32.mrf.mxu0
      %v1788 = vadd.f32 0.0, %v1787
      %1789 = vmatmul.f32.gmra.mxu0 %v1019
      %v1790 = vpop.f32.mrf.mxu0
      %v1791 = vadd.f32 0.0, %v1790
      %1792 = vmatmul.f32.gmra.mxu0 %v1021
      %v1793 = vpop.f32.mrf.mxu0
      %v1794 = vadd.f32 0.0, %v1793
      %1795 = vmatmul.f32.gmra.mxu0 %v1024
      %v1796 = vpop.f32.mrf.mxu0
      %v1797 = vadd.f32 0.0, %v1796
      %1798 = vmatmul.f32.gmra.mxu0 %v1026
      %v1799 = vpop.f32.mrf.mxu0
      %v1800 = vadd.f32 0.0, %v1799
      %1801 = vmatmul.f32.gmra.mxu0 %v1029
      %v1802 = vpop.f32.mrf.mxu0
      %v1803 = vadd.f32 0.0, %v1802
      %1804 = vmatmul.f32.gmra.mxu0 %v1031
      %v1805 = vpop.f32.mrf.mxu0
      %v1806 = vadd.f32 0.0, %v1805
      %1807 = vmatmul.f32.gmra.mxu0 %v1034
      %v1808 = vpop.f32.mrf.mxu0
      %v1809 = vadd.f32 0.0, %v1808
      %1810 = vmatmul.f32.gmra.mxu0 %v1036
      %v1811 = vpop.f32.mrf.mxu0
      %v1812 = vadd.f32 0.0, %v1811
      %1813 = vdwg.mxu0
      %v1814 = vadd.f32 %v1741, %v1773
      %v1815 = vadd.f32 %v1742, %v1776
      %v1816 = vadd.f32 %v1743, %v1779
      %v1817 = vadd.f32 %v1744, %v1782
      %v1818 = vadd.f32 %v1745, %v1785
      %v1819 = vadd.f32 %v1746, %v1788
      %v1820 = vadd.f32 %v1747, %v1791
      %v1821 = vadd.f32 %v1748, %v1794
      %v1822 = vadd.f32 %v1749, %v1797
      %v1823 = vadd.f32 %v1750, %v1800
      %v1824 = vadd.f32 %v1751, %v1803
      %v1825 = vadd.f32 %v1752, %v1806
      %v1826 = vadd.f32 %v1753, %v1809
      %v1827 = vadd.f32 %v1754, %v1812
      %v1849 = vrot.slane %v465, 1
      %v1850 = vrot.slane %v466, 1
      %v1851 = vsel %vm661, %v1849, %v1850
      %v1852 = vrot.slane %v467, 1
      %v1853 = vsel %vm661, %v1850, %v1852
      %v1854 = vrot.slane %v468, 1
      %v1855 = vrot.slane %v469, 1
      %v1856 = vsel %vm661, %v1854, %v1855
      %v1857 = vrot.slane %v470, 1
      %v1858 = vsel %vm661, %v1855, %v1857
      %v1859 = vrot.slane %v471, 1
      %v1860 = vrot.slane %v472, 1
      %v1861 = vsel %vm661, %v1859, %v1860
      %v1862 = vrot.slane %v473, 1
      %v1863 = vsel %vm661, %v1860, %v1862
      %v1864 = vrot.slane %v474, 1
      %v1865 = vrot.slane %v475, 1
      %v1866 = vsel %vm661, %v1864, %v1865
      %v1867 = vrot.slane %v476, 1
      %v1868 = vsel %vm661, %v1865, %v1867
      %v1869 = vrot.slane %v477, 1
      %v1870 = vrot.slane %v478, 1
      %v1871 = vsel %vm661, %v1869, %v1870
      %v1872 = vrot.slane %v479, 1
      %v1873 = vsel %vm661, %v1870, %v1872
      %v1874 = vrot.slane %v480, 1
      %v1875 = vrot.slane %v481, 1
      %v1876 = vsel %vm661, %v1874, %v1875
      %v1877 = vrot.slane %v482, 1
      %v1878 = vsel %vm661, %v1875, %v1877
      %v1879 = vrot.slane %v483, 1
      %v1880 = vrot.slane %v484, 1
      %v1881 = vsel %vm661, %v1879, %v1880
      %v1882 = vrot.slane %v485, 1
      %v1883 = vsel %vm661, %v1880, %v1882
      %1898 = vmatpush.msra.mxu0 %v1067
      %1899 = vmatpush.msra.mxu0 %v1066
      %1900 = vmatpush.msra.mxu0 %v1065
      %1901 = vmatpush.msra.mxu0 %v1064
      %1902 = vmatpush.msra.mxu0 %v1063
      %1903 = vmatpush.msra.mxu0 %v1062
      %1904 = vmatpush.msra.mxu0 %v1061
      %1905 = vmatpush.msra.mxu0 %v1060
      %1906 = vmatpush.msra.mxu0 %v1059
      %1907 = vmatpush.msra.mxu0 %v1058
      %1908 = vmatpush.msra.mxu0 %v1057
      %1909 = vmatpush.msra.mxu0 %v1056
      %1910 = vmatpush.msra.mxu0 %v1055
      %1911 = vmatpush.msra.mxu0 %v1054
      %1912 = vmatpush.msra.mxu0 %v1053
      %1913 = vmatpush.msra.mxu0 %v1052
      %1914 = vmatmul.f32.gmra.mxu0 %v1851
      %v1915 = vpop.f32.mrf.mxu0
      %v1916 = vadd.f32 0.0, %v1915
      %1917 = vmatmul.f32.gmra.mxu0 %v1853
      %v1918 = vpop.f32.mrf.mxu0
      %v1919 = vadd.f32 0.0, %v1918
      %1920 = vmatmul.f32.gmra.mxu0 %v1856
      %v1921 = vpop.f32.mrf.mxu0
      %v1922 = vadd.f32 0.0, %v1921
      %1923 = vmatmul.f32.gmra.mxu0 %v1858
      %v1924 = vpop.f32.mrf.mxu0
      %v1925 = vadd.f32 0.0, %v1924
      %1926 = vmatmul.f32.gmra.mxu0 %v1861
      %v1927 = vpop.f32.mrf.mxu0
      %v1928 = vadd.f32 0.0, %v1927
      %1929 = vmatmul.f32.gmra.mxu0 %v1863
      %v1930 = vpop.f32.mrf.mxu0
      %v1931 = vadd.f32 0.0, %v1930
      %1932 = vmatmul.f32.gmra.mxu0 %v1866
      %v1933 = vpop.f32.mrf.mxu0
      %v1934 = vadd.f32 0.0, %v1933
      %1935 = vmatmul.f32.gmra.mxu0 %v1868
      %v1936 = vpop.f32.mrf.mxu0
      %v1937 = vadd.f32 0.0, %v1936
      %1938 = vmatmul.f32.gmra.mxu0 %v1871
      %v1939 = vpop.f32.mrf.mxu0
      %v1940 = vadd.f32 0.0, %v1939
      %1941 = vmatmul.f32.gmra.mxu0 %v1873
      %v1942 = vpop.f32.mrf.mxu0
      %v1943 = vadd.f32 0.0, %v1942
      %1944 = vmatmul.f32.gmra.mxu0 %v1876
      %v1945 = vpop.f32.mrf.mxu0
      %v1946 = vadd.f32 0.0, %v1945
      %1947 = vmatmul.f32.gmra.mxu0 %v1878
      %v1948 = vpop.f32.mrf.mxu0
      %v1949 = vadd.f32 0.0, %v1948
      %1950 = vmatmul.f32.gmra.mxu0 %v1881
      %v1951 = vpop.f32.mrf.mxu0
      %v1952 = vadd.f32 0.0, %v1951
      %1953 = vmatmul.f32.gmra.mxu0 %v1883
      %v1954 = vpop.f32.mrf.mxu0
      %v1955 = vadd.f32 0.0, %v1954
      %1956 = vdwg.mxu0
      %v1957 = vadd.f32 %v1814, %v1916
      %v1958 = vadd.f32 %v1815, %v1919
      %v1959 = vadd.f32 %v1816, %v1922
      %v1960 = vadd.f32 %v1817, %v1925
      %v1961 = vadd.f32 %v1818, %v1928
      %v1962 = vadd.f32 %v1819, %v1931
      %v1963 = vadd.f32 %v1820, %v1934
      %v1964 = vadd.f32 %v1821, %v1937
      %v1965 = vadd.f32 %v1822, %v1940
      %v1966 = vadd.f32 %v1823, %v1943
      %v1967 = vadd.f32 %v1824, %v1946
      %v1968 = vadd.f32 %v1825, %v1949
      %v1969 = vadd.f32 %v1826, %v1952
      %v1970 = vadd.f32 %v1827, %v1955
      %1971 = vmatpush.msra.mxu0 %v1157
      %1972 = vmatpush.msra.mxu0 %v1156
      %1973 = vmatpush.msra.mxu0 %v1155
      %1974 = vmatpush.msra.mxu0 %v1154
      %1975 = vmatpush.msra.mxu0 %v1153
      %1976 = vmatpush.msra.mxu0 %v1152
      %1977 = vmatpush.msra.mxu0 %v1151
      %1978 = vmatpush.msra.mxu0 %v1150
      %1979 = vmatpush.msra.mxu0 %v1149
      %1980 = vmatpush.msra.mxu0 %v1148
      %1981 = vmatpush.msra.mxu0 %v1147
      %1982 = vmatpush.msra.mxu0 %v1146
      %1983 = vmatpush.msra.mxu0 %v1145
      %1984 = vmatpush.msra.mxu0 %v1144
      %1985 = vmatpush.msra.mxu0 %v1143
      %1986 = vmatpush.msra.mxu0 %v1142
      %1987 = vmatmul.f32.gmra.mxu0 %v420
      %v1988 = vpop.f32.mrf.mxu0
      %v1989 = vadd.f32 0.0, %v1988
      %1990 = vmatmul.f32.gmra.mxu0 %v421
      %v1991 = vpop.f32.mrf.mxu0
      %v1992 = vadd.f32 0.0, %v1991
      %1993 = vmatmul.f32.gmra.mxu0 %v423
      %v1994 = vpop.f32.mrf.mxu0
      %v1995 = vadd.f32 0.0, %v1994
      %1996 = vmatmul.f32.gmra.mxu0 %v424
      %v1997 = vpop.f32.mrf.mxu0
      %v1998 = vadd.f32 0.0, %v1997
      %1999 = vmatmul.f32.gmra.mxu0 %v426
      %v2000 = vpop.f32.mrf.mxu0
      %v2001 = vadd.f32 0.0, %v2000
      %2002 = vmatmul.f32.gmra.mxu0 %v427
      %v2003 = vpop.f32.mrf.mxu0
      %v2004 = vadd.f32 0.0, %v2003
      %2005 = vmatmul.f32.gmra.mxu0 %v429
      %v2006 = vpop.f32.mrf.mxu0
      %v2007 = vadd.f32 0.0, %v2006
      %2008 = vmatmul.f32.gmra.mxu0 %v430
      %v2009 = vpop.f32.mrf.mxu0
      %v2010 = vadd.f32 0.0, %v2009
      %2011 = vmatmul.f32.gmra.mxu0 %v432
      %v2012 = vpop.f32.mrf.mxu0
      %v2013 = vadd.f32 0.0, %v2012
      %2014 = vmatmul.f32.gmra.mxu0 %v433
      %v2015 = vpop.f32.mrf.mxu0
      %v2016 = vadd.f32 0.0, %v2015
      %2017 = vmatmul.f32.gmra.mxu0 %v435
      %v2018 = vpop.f32.mrf.mxu0
      %v2019 = vadd.f32 0.0, %v2018
      %2020 = vmatmul.f32.gmra.mxu0 %v436
      %v2021 = vpop.f32.mrf.mxu0
      %v2022 = vadd.f32 0.0, %v2021
      %2023 = vmatmul.f32.gmra.mxu0 %v438
      %v2024 = vpop.f32.mrf.mxu0
      %v2025 = vadd.f32 0.0, %v2024
      %2026 = vmatmul.f32.gmra.mxu0 %v439
      %v2027 = vpop.f32.mrf.mxu0
      %v2028 = vadd.f32 0.0, %v2027
      %2029 = vdwg.mxu0
      %v2030 = vadd.f32 %v1957, %v1989
      %v2031 = vadd.f32 %v1958, %v1992
      %v2032 = vadd.f32 %v1959, %v1995
      %v2033 = vadd.f32 %v1960, %v1998
      %v2034 = vadd.f32 %v1961, %v2001
      %v2035 = vadd.f32 %v1962, %v2004
      %v2036 = vadd.f32 %v1963, %v2007
      %v2037 = vadd.f32 %v1964, %v2010
      %v2038 = vadd.f32 %v1965, %v2013
      %v2039 = vadd.f32 %v1966, %v2016
      %v2040 = vadd.f32 %v1967, %v2019
      %v2041 = vadd.f32 %v1968, %v2022
      %v2042 = vadd.f32 %v1969, %v2025
      %v2043 = vadd.f32 %v1970, %v2028
      %2044 = vmatpush.msra.mxu0 %v1247
      %2045 = vmatpush.msra.mxu0 %v1246
      %2046 = vmatpush.msra.mxu0 %v1245
      %2047 = vmatpush.msra.mxu0 %v1244
      %2048 = vmatpush.msra.mxu0 %v1243
      %2049 = vmatpush.msra.mxu0 %v1242
      %2050 = vmatpush.msra.mxu0 %v1241
      %2051 = vmatpush.msra.mxu0 %v1240
      %2052 = vmatpush.msra.mxu0 %v1239
      %2053 = vmatpush.msra.mxu0 %v1238
      %2054 = vmatpush.msra.mxu0 %v1237
      %2055 = vmatpush.msra.mxu0 %v1236
      %2056 = vmatpush.msra.mxu0 %v1235
      %2057 = vmatpush.msra.mxu0 %v1234
      %2058 = vmatpush.msra.mxu0 %v1233
      %2059 = vmatpush.msra.mxu0 %v1232
      %2060 = vmatmul.f32.gmra.mxu0 %v669
      %v2061 = vpop.f32.mrf.mxu0
      %v2062 = vadd.f32 0.0, %v2061
      %2063 = vmatmul.f32.gmra.mxu0 %v671
      %v2064 = vpop.f32.mrf.mxu0
      %v2065 = vadd.f32 0.0, %v2064
      %2066 = vmatmul.f32.gmra.mxu0 %v674
      %v2067 = vpop.f32.mrf.mxu0
      %v2068 = vadd.f32 0.0, %v2067
      %2069 = vmatmul.f32.gmra.mxu0 %v676
      %v2070 = vpop.f32.mrf.mxu0
      %v2071 = vadd.f32 0.0, %v2070
      %2072 = vmatmul.f32.gmra.mxu0 %v679
      %v2073 = vpop.f32.mrf.mxu0
      %v2074 = vadd.f32 0.0, %v2073
      %2075 = vmatmul.f32.gmra.mxu0 %v681
      %v2076 = vpop.f32.mrf.mxu0
      %v2077 = vadd.f32 0.0, %v2076
      %2078 = vmatmul.f32.gmra.mxu0 %v684
      %v2079 = vpop.f32.mrf.mxu0
      %v2080 = vadd.f32 0.0, %v2079
      %2081 = vmatmul.f32.gmra.mxu0 %v686
      %v2082 = vpop.f32.mrf.mxu0
      %v2083 = vadd.f32 0.0, %v2082
      %2084 = vmatmul.f32.gmra.mxu0 %v689
      %v2085 = vpop.f32.mrf.mxu0
      %v2086 = vadd.f32 0.0, %v2085
      %2087 = vmatmul.f32.gmra.mxu0 %v691
      %v2088 = vpop.f32.mrf.mxu0
      %v2089 = vadd.f32 0.0, %v2088
      %2090 = vmatmul.f32.gmra.mxu0 %v694
      %v2091 = vpop.f32.mrf.mxu0
      %v2092 = vadd.f32 0.0, %v2091
      %2093 = vmatmul.f32.gmra.mxu0 %v696
      %v2094 = vpop.f32.mrf.mxu0
      %v2095 = vadd.f32 0.0, %v2094
      %2096 = vmatmul.f32.gmra.mxu0 %v1326
      %v2097 = vpop.f32.mrf.mxu0
      %v2098 = vadd.f32 0.0, %v2097
      %2099 = vmatmul.f32.gmra.mxu0 %v1328
      %v2100 = vpop.f32.mrf.mxu0
      %v2101 = vadd.f32 0.0, %v2100
      %2102 = vdwg.mxu0
      %v2103 = vadd.f32 %v2030, %v2062
      %v2104 = vadd.f32 %v2031, %v2065
      %v2105 = vadd.f32 %v2032, %v2068
      %v2106 = vadd.f32 %v2033, %v2071
      %v2107 = vadd.f32 %v2034, %v2074
      %v2108 = vadd.f32 %v2035, %v2077
      %v2109 = vadd.f32 %v2036, %v2080
      %v2110 = vadd.f32 %v2037, %v2083
      %v2111 = vadd.f32 %v2038, %v2086
      %v2112 = vadd.f32 %v2039, %v2089
      %v2113 = vadd.f32 %v2040, %v2092
      %v2114 = vadd.f32 %v2041, %v2095
      %v2115 = vadd.f32 %v2042, %v2098
      %v2116 = vadd.f32 %v2043, %v2101
      %v2120 = vrot.slane %v438, 1
      %v2121 = vrot.slane %v439, 1
      %v2122 = vsel %vm661, %v2120, %v2121
      %v2123 = vrot.slane %v440, 1
      %v2124 = vsel %vm661, %v2121, %v2123
      %2127 = vmatpush.msra.mxu0 %v1347
      %2128 = vmatpush.msra.mxu0 %v1346
      %2129 = vmatpush.msra.mxu0 %v1345
      %2130 = vmatpush.msra.mxu0 %v1344
      %2131 = vmatpush.msra.mxu0 %v1343
      %2132 = vmatpush.msra.mxu0 %v1342
      %2133 = vmatpush.msra.mxu0 %v1341
      %2134 = vmatpush.msra.mxu0 %v1340
      %2135 = vmatpush.msra.mxu0 %v1339
      %2136 = vmatpush.msra.mxu0 %v1338
      %2137 = vmatpush.msra.mxu0 %v1337
      %2138 = vmatpush.msra.mxu0 %v1336
      %2139 = vmatpush.msra.mxu0 %v1335
      %2140 = vmatpush.msra.mxu0 %v1334
      %2141 = vmatpush.msra.mxu0 %v1333
      %2142 = vmatpush.msra.mxu0 %v1332
      %2143 = vmatmul.f32.gmra.mxu0 %v1567
      %v2144 = vpop.f32.mrf.mxu0
      %v2145 = vadd.f32 0.0, %v2144
      %2146 = vmatmul.f32.gmra.mxu0 %v1569
      %v2147 = vpop.f32.mrf.mxu0
      %v2148 = vadd.f32 0.0, %v2147
      %2149 = vmatmul.f32.gmra.mxu0 %v1572
      %v2150 = vpop.f32.mrf.mxu0
      %v2151 = vadd.f32 0.0, %v2150
      %2152 = vmatmul.f32.gmra.mxu0 %v1574
      %v2153 = vpop.f32.mrf.mxu0
      %v2154 = vadd.f32 0.0, %v2153
      %2155 = vmatmul.f32.gmra.mxu0 %v1577
      %v2156 = vpop.f32.mrf.mxu0
      %v2157 = vadd.f32 0.0, %v2156
      %2158 = vmatmul.f32.gmra.mxu0 %v1579
      %v2159 = vpop.f32.mrf.mxu0
      %v2160 = vadd.f32 0.0, %v2159
      %2161 = vmatmul.f32.gmra.mxu0 %v1582
      %v2162 = vpop.f32.mrf.mxu0
      %v2163 = vadd.f32 0.0, %v2162
      %2164 = vmatmul.f32.gmra.mxu0 %v1584
      %v2165 = vpop.f32.mrf.mxu0
      %v2166 = vadd.f32 0.0, %v2165
      %2167 = vmatmul.f32.gmra.mxu0 %v1587
      %v2168 = vpop.f32.mrf.mxu0
      %v2169 = vadd.f32 0.0, %v2168
      %2170 = vmatmul.f32.gmra.mxu0 %v1589
      %v2171 = vpop.f32.mrf.mxu0
      %v2172 = vadd.f32 0.0, %v2171
      %2173 = vmatmul.f32.gmra.mxu0 %v1592
      %v2174 = vpop.f32.mrf.mxu0
      %v2175 = vadd.f32 0.0, %v2174
      %2176 = vmatmul.f32.gmra.mxu0 %v1594
      %v2177 = vpop.f32.mrf.mxu0
      %v2178 = vadd.f32 0.0, %v2177
      %2179 = vmatmul.f32.gmra.mxu0 %v2122
      %v2180 = vpop.f32.mrf.mxu0
      %v2181 = vadd.f32 0.0, %v2180
      %2182 = vmatmul.f32.gmra.mxu0 %v2124
      %v2183 = vpop.f32.mrf.mxu0
      %v2184 = vadd.f32 0.0, %v2183
      %2185 = vdwg.mxu0
      %v2186 = vadd.f32 %v2103, %v2145
      %v2187 = vadd.f32 %v2104, %v2148
      %v2188 = vadd.f32 %v2105, %v2151
      %v2189 = vadd.f32 %v2106, %v2154
      %v2190 = vadd.f32 %v2107, %v2157
      %v2191 = vadd.f32 %v2108, %v2160
      %v2192 = vadd.f32 %v2109, %v2163
      %v2193 = vadd.f32 %v2110, %v2166
      %v2194 = vadd.f32 %v2111, %v2169
      %v2195 = vadd.f32 %v2112, %v2172
      %v2196 = vadd.f32 %v2113, %v2175
      %v2197 = vadd.f32 %v2114, %v2178
      %v2198 = vadd.f32 %v2115, %v2181
      %v2199 = vadd.f32 %v2116, %v2184
      %v2200 = vmax.f32 %v1407, %v2186
      %v2201 = vmax.f32 %v1408, %v2187
      %v2202 = vmax.f32 %v1409, %v2188
      %v2203 = vmax.f32 %v1410, %v2189
      %v2204 = vmax.f32 %v1411, %v2190
      %v2205 = vmax.f32 %v1412, %v2191
      %v2206 = vmax.f32 %v1413, %v2192
      %v2207 = vmax.f32 %v1414, %v2193
      %v2208 = vmax.f32 %v1415, %v2194
      %v2209 = vmax.f32 %v1416, %v2195
      %v2210 = vmax.f32 %v1417, %v2196
      %v2211 = vmax.f32 %v1418, %v2197
      %v2212 = vmax.f32 %v1419, %v2198
      %v2213 = vmax.f32 %v1420, %v2199
      %2214 = vmatpush.msra.mxu0 %v521
      %2215 = vmatpush.msra.mxu0 %v520
      %2216 = vmatpush.msra.mxu0 %v519
      %2217 = vmatpush.msra.mxu0 %v518
      %2218 = vmatpush.msra.mxu0 %v517
      %2219 = vmatpush.msra.mxu0 %v516
      %2220 = vmatpush.msra.mxu0 %v515
      %2221 = vmatpush.msra.mxu0 %v514
      %2222 = vmatpush.msra.mxu0 %v513
      %2223 = vmatpush.msra.mxu0 %v512
      %2224 = vmatpush.msra.mxu0 %v511
      %2225 = vmatpush.msra.mxu0 %v510
      %2226 = vmatpush.msra.mxu0 %v509
      %2227 = vmatpush.msra.mxu0 %v508
      %2228 = vmatpush.msra.mxu0 %v507
      %2229 = vmatpush.msra.mxu0 %v506
      %2230 = vmatmul.f32.gmra.mxu0 %v465
      %v2231 = vpop.f32.mrf.mxu0
      %v2232 = vadd.f32 0.0, %v2231
      %2233 = vmatmul.f32.gmra.mxu0 %v466
      %v2234 = vpop.f32.mrf.mxu0
      %v2235 = vadd.f32 0.0, %v2234
      %2236 = vmatmul.f32.gmra.mxu0 %v468
      %v2237 = vpop.f32.mrf.mxu0
      %v2238 = vadd.f32 0.0, %v2237
      %2239 = vmatmul.f32.gmra.mxu0 %v469
      %v2240 = vpop.f32.mrf.mxu0
      %v2241 = vadd.f32 0.0, %v2240
      %2242 = vmatmul.f32.gmra.mxu0 %v471
      %v2243 = vpop.f32.mrf.mxu0
      %v2244 = vadd.f32 0.0, %v2243
      %2245 = vmatmul.f32.gmra.mxu0 %v472
      %v2246 = vpop.f32.mrf.mxu0
      %v2247 = vadd.f32 0.0, %v2246
      %2248 = vmatmul.f32.gmra.mxu0 %v474
      %v2249 = vpop.f32.mrf.mxu0
      %v2250 = vadd.f32 0.0, %v2249
      %2251 = vmatmul.f32.gmra.mxu0 %v475
      %v2252 = vpop.f32.mrf.mxu0
      %v2253 = vadd.f32 0.0, %v2252
      %2254 = vmatmul.f32.gmra.mxu0 %v477
      %v2255 = vpop.f32.mrf.mxu0
      %v2256 = vadd.f32 0.0, %v2255
      %2257 = vmatmul.f32.gmra.mxu0 %v478
      %v2258 = vpop.f32.mrf.mxu0
      %v2259 = vadd.f32 0.0, %v2258
      %2260 = vmatmul.f32.gmra.mxu0 %v480
      %v2261 = vpop.f32.mrf.mxu0
      %v2262 = vadd.f32 0.0, %v2261
      %2263 = vmatmul.f32.gmra.mxu0 %v481
      %v2264 = vpop.f32.mrf.mxu0
      %v2265 = vadd.f32 0.0, %v2264
      %2266 = vmatmul.f32.gmra.mxu0 %v483
      %v2267 = vpop.f32.mrf.mxu0
      %v2268 = vadd.f32 0.0, %v2267
      %2269 = vmatmul.f32.gmra.mxu0 %v484
      %v2270 = vpop.f32.mrf.mxu0
      %v2271 = vadd.f32 0.0, %v2270
      %2272 = vdwg.mxu0
      %2273 = vmatpush.msra.mxu0 %v504
      %2274 = vmatpush.msra.mxu0 %v503
      %2275 = vmatpush.msra.mxu0 %v502
      %2276 = vmatpush.msra.mxu0 %v501
      %2277 = vmatpush.msra.mxu0 %v500
      %2278 = vmatpush.msra.mxu0 %v499
      %2279 = vmatpush.msra.mxu0 %v498
      %2280 = vmatpush.msra.mxu0 %v497
      %2281 = vmatpush.msra.mxu0 %v496
      %2282 = vmatpush.msra.mxu0 %v495
      %2283 = vmatpush.msra.mxu0 %v494
      %2284 = vmatpush.msra.mxu0 %v493
      %2285 = vmatpush.msra.mxu0 %v492
      %2286 = vmatpush.msra.mxu0 %v491
      %2287 = vmatpush.msra.mxu0 %v490
      %2288 = vmatpush.msra.mxu0 %v489
      %2289 = vmatmul.f32.gmra.mxu0 %v441
      %v2290 = vpop.f32.mrf.mxu0
      %v2291 = vadd.f32 %v2232, %v2290
      %2292 = vmatmul.f32.gmra.mxu0 %v442
      %v2293 = vpop.f32.mrf.mxu0
      %v2294 = vadd.f32 %v2235, %v2293
      %2295 = vmatmul.f32.gmra.mxu0 %v444
      %v2296 = vpop.f32.mrf.mxu0
      %v2297 = vadd.f32 %v2238, %v2296
      %2298 = vmatmul.f32.gmra.mxu0 %v445
      %v2299 = vpop.f32.mrf.mxu0
      %v2300 = vadd.f32 %v2241, %v2299
      %2301 = vmatmul.f32.gmra.mxu0 %v447
      %v2302 = vpop.f32.mrf.mxu0
      %v2303 = vadd.f32 %v2244, %v2302
      %2304 = vmatmul.f32.gmra.mxu0 %v448
      %v2305 = vpop.f32.mrf.mxu0
      %v2306 = vadd.f32 %v2247, %v2305
      %2307 = vmatmul.f32.gmra.mxu0 %v450
      %v2308 = vpop.f32.mrf.mxu0
      %v2309 = vadd.f32 %v2250, %v2308
      %2310 = vmatmul.f32.gmra.mxu0 %v451
      %v2311 = vpop.f32.mrf.mxu0
      %v2312 = vadd.f32 %v2253, %v2311
      %2313 = vmatmul.f32.gmra.mxu0 %v453
      %v2314 = vpop.f32.mrf.mxu0
      %v2315 = vadd.f32 %v2256, %v2314
      %2316 = vmatmul.f32.gmra.mxu0 %v454
      %v2317 = vpop.f32.mrf.mxu0
      %v2318 = vadd.f32 %v2259, %v2317
      %2319 = vmatmul.f32.gmra.mxu0 %v456
      %v2320 = vpop.f32.mrf.mxu0
      %v2321 = vadd.f32 %v2262, %v2320
      %2322 = vmatmul.f32.gmra.mxu0 %v457
      %v2323 = vpop.f32.mrf.mxu0
      %v2324 = vadd.f32 %v2265, %v2323
      %2325 = vmatmul.f32.gmra.mxu0 %v459
      %v2326 = vpop.f32.mrf.mxu0
      %v2327 = vadd.f32 %v2268, %v2326
      %2328 = vmatmul.f32.gmra.mxu0 %v460
      %v2329 = vpop.f32.mrf.mxu0
      %v2330 = vadd.f32 %v2271, %v2329
      %2331 = vdwg.mxu0
      %2332 = vmatpush.msra.mxu0 %v727
      %2333 = vmatpush.msra.mxu0 %v726
      %2334 = vmatpush.msra.mxu0 %v725
      %2335 = vmatpush.msra.mxu0 %v724
      %2336 = vmatpush.msra.mxu0 %v723
      %2337 = vmatpush.msra.mxu0 %v722
      %2338 = vmatpush.msra.mxu0 %v721
      %2339 = vmatpush.msra.mxu0 %v720
      %2340 = vmatpush.msra.mxu0 %v719
      %2341 = vmatpush.msra.mxu0 %v718
      %2342 = vmatpush.msra.mxu0 %v717
      %2343 = vmatpush.msra.mxu0 %v716
      %2344 = vmatpush.msra.mxu0 %v715
      %2345 = vmatpush.msra.mxu0 %v714
      %2346 = vmatpush.msra.mxu0 %v713
      %2347 = vmatpush.msra.mxu0 %v712
      %2348 = vmatmul.f32.gmra.mxu0 %v1004
      %v2349 = vpop.f32.mrf.mxu0
      %v2350 = vadd.f32 0.0, %v2349
      %2351 = vmatmul.f32.gmra.mxu0 %v1006
      %v2352 = vpop.f32.mrf.mxu0
      %v2353 = vadd.f32 0.0, %v2352
      %2354 = vmatmul.f32.gmra.mxu0 %v1009
      %v2355 = vpop.f32.mrf.mxu0
      %v2356 = vadd.f32 0.0, %v2355
      %2357 = vmatmul.f32.gmra.mxu0 %v1011
      %v2358 = vpop.f32.mrf.mxu0
      %v2359 = vadd.f32 0.0, %v2358
      %2360 = vmatmul.f32.gmra.mxu0 %v1014
      %v2361 = vpop.f32.mrf.mxu0
      %v2362 = vadd.f32 0.0, %v2361
      %2363 = vmatmul.f32.gmra.mxu0 %v1016
      %v2364 = vpop.f32.mrf.mxu0
      %v2365 = vadd.f32 0.0, %v2364
      %2366 = vmatmul.f32.gmra.mxu0 %v1019
      %v2367 = vpop.f32.mrf.mxu0
      %v2368 = vadd.f32 0.0, %v2367
      %2369 = vmatmul.f32.gmra.mxu0 %v1021
      %v2370 = vpop.f32.mrf.mxu0
      %v2371 = vadd.f32 0.0, %v2370
      %2372 = vmatmul.f32.gmra.mxu0 %v1024
      %v2373 = vpop.f32.mrf.mxu0
      %v2374 = vadd.f32 0.0, %v2373
      %2375 = vmatmul.f32.gmra.mxu0 %v1026
      %v2376 = vpop.f32.mrf.mxu0
      %v2377 = vadd.f32 0.0, %v2376
      %2378 = vmatmul.f32.gmra.mxu0 %v1029
      %v2379 = vpop.f32.mrf.mxu0
      %v2380 = vadd.f32 0.0, %v2379
      %2381 = vmatmul.f32.gmra.mxu0 %v1031
      %v2382 = vpop.f32.mrf.mxu0
      %v2383 = vadd.f32 0.0, %v2382
      %2384 = vmatmul.f32.gmra.mxu0 %v1034
      %v2385 = vpop.f32.mrf.mxu0
      %v2386 = vadd.f32 0.0, %v2385
      %2387 = vmatmul.f32.gmra.mxu0 %v1036
      %v2388 = vpop.f32.mrf.mxu0
      %v2389 = vadd.f32 0.0, %v2388
      %2390 = vdwg.mxu0
      %v2391 = vadd.f32 %v2291, %v2350
      %v2392 = vadd.f32 %v2294, %v2353
      %v2393 = vadd.f32 %v2297, %v2356
      %v2394 = vadd.f32 %v2300, %v2359
      %v2395 = vadd.f32 %v2303, %v2362
      %v2396 = vadd.f32 %v2306, %v2365
      %v2397 = vadd.f32 %v2309, %v2368
      %v2398 = vadd.f32 %v2312, %v2371
      %v2399 = vadd.f32 %v2315, %v2374
      %v2400 = vadd.f32 %v2318, %v2377
      %v2401 = vadd.f32 %v2321, %v2380
      %v2402 = vadd.f32 %v2324, %v2383
      %v2403 = vadd.f32 %v2327, %v2386
      %v2404 = vadd.f32 %v2330, %v2389
      %2405 = vmatpush.msra.mxu0 %v817
      %2406 = vmatpush.msra.mxu0 %v816
      %2407 = vmatpush.msra.mxu0 %v815
      %2408 = vmatpush.msra.mxu0 %v814
      %2409 = vmatpush.msra.mxu0 %v813
      %2410 = vmatpush.msra.mxu0 %v812
      %2411 = vmatpush.msra.mxu0 %v811
      %2412 = vmatpush.msra.mxu0 %v810
      %2413 = vmatpush.msra.mxu0 %v809
      %2414 = vmatpush.msra.mxu0 %v808
      %2415 = vmatpush.msra.mxu0 %v807
      %2416 = vmatpush.msra.mxu0 %v806
      %2417 = vmatpush.msra.mxu0 %v805
      %2418 = vmatpush.msra.mxu0 %v804
      %2419 = vmatpush.msra.mxu0 %v803
      %2420 = vmatpush.msra.mxu0 %v802
      %2421 = vmatmul.f32.gmra.mxu0 %v396
      %v2422 = vpop.f32.mrf.mxu0
      %v2423 = vadd.f32 0.0, %v2422
      %2424 = vmatmul.f32.gmra.mxu0 %v397
      %v2425 = vpop.f32.mrf.mxu0
      %v2426 = vadd.f32 0.0, %v2425
      %2427 = vmatmul.f32.gmra.mxu0 %v399
      %v2428 = vpop.f32.mrf.mxu0
      %v2429 = vadd.f32 0.0, %v2428
      %2430 = vmatmul.f32.gmra.mxu0 %v400
      %v2431 = vpop.f32.mrf.mxu0
      %v2432 = vadd.f32 0.0, %v2431
      %2433 = vmatmul.f32.gmra.mxu0 %v402
      %v2434 = vpop.f32.mrf.mxu0
      %v2435 = vadd.f32 0.0, %v2434
      %2436 = vmatmul.f32.gmra.mxu0 %v403
      %v2437 = vpop.f32.mrf.mxu0
      %v2438 = vadd.f32 0.0, %v2437
      %2439 = vmatmul.f32.gmra.mxu0 %v405
      %v2440 = vpop.f32.mrf.mxu0
      %v2441 = vadd.f32 0.0, %v2440
      %2442 = vmatmul.f32.gmra.mxu0 %v406
      %v2443 = vpop.f32.mrf.mxu0
      %v2444 = vadd.f32 0.0, %v2443
      %2445 = vmatmul.f32.gmra.mxu0 %v408
      %v2446 = vpop.f32.mrf.mxu0
      %v2447 = vadd.f32 0.0, %v2446
      %2448 = vmatmul.f32.gmra.mxu0 %v409
      %v2449 = vpop.f32.mrf.mxu0
      %v2450 = vadd.f32 0.0, %v2449
      %2451 = vmatmul.f32.gmra.mxu0 %v411
      %v2452 = vpop.f32.mrf.mxu0
      %v2453 = vadd.f32 0.0, %v2452
      %2454 = vmatmul.f32.gmra.mxu0 %v412
      %v2455 = vpop.f32.mrf.mxu0
      %v2456 = vadd.f32 0.0, %v2455
      %2457 = vmatmul.f32.gmra.mxu0 %v414
      %v2458 = vpop.f32.mrf.mxu0
      %v2459 = vadd.f32 0.0, %v2458
      %2460 = vmatmul.f32.gmra.mxu0 %v415
      %v2461 = vpop.f32.mrf.mxu0
      %v2462 = vadd.f32 0.0, %v2461
      %2463 = vdwg.mxu0
      %v2464 = vadd.f32 %v2391, %v2423
      %v2465 = vadd.f32 %v2392, %v2426
      %v2466 = vadd.f32 %v2393, %v2429
      %v2467 = vadd.f32 %v2394, %v2432
      %v2468 = vadd.f32 %v2395, %v2435
      %v2469 = vadd.f32 %v2396, %v2438
      %v2470 = vadd.f32 %v2397, %v2441
      %v2471 = vadd.f32 %v2398, %v2444
      %v2472 = vadd.f32 %v2399, %v2447
      %v2473 = vadd.f32 %v2400, %v2450
      %v2474 = vadd.f32 %v2401, %v2453
      %v2475 = vadd.f32 %v2402, %v2456
      %v2476 = vadd.f32 %v2403, %v2459
      %v2477 = vadd.f32 %v2404, %v2462
      %2478 = vmatpush.msra.mxu0 %v907
      %2479 = vmatpush.msra.mxu0 %v906
      %2480 = vmatpush.msra.mxu0 %v905
      %2481 = vmatpush.msra.mxu0 %v904
      %2482 = vmatpush.msra.mxu0 %v903
      %2483 = vmatpush.msra.mxu0 %v902
      %2484 = vmatpush.msra.mxu0 %v901
      %2485 = vmatpush.msra.mxu0 %v900
      %2486 = vmatpush.msra.mxu0 %v899
      %2487 = vmatpush.msra.mxu0 %v898
      %2488 = vmatpush.msra.mxu0 %v897
      %2489 = vmatpush.msra.mxu0 %v896
      %2490 = vmatpush.msra.mxu0 %v895
      %2491 = vmatpush.msra.mxu0 %v894
      %2492 = vmatpush.msra.mxu0 %v893
      %2493 = vmatpush.msra.mxu0 %v892
      %2494 = vmatmul.f32.gmra.mxu0 %v420
      %v2495 = vpop.f32.mrf.mxu0
      %v2496 = vadd.f32 0.0, %v2495
      %2497 = vmatmul.f32.gmra.mxu0 %v421
      %v2498 = vpop.f32.mrf.mxu0
      %v2499 = vadd.f32 0.0, %v2498
      %2500 = vmatmul.f32.gmra.mxu0 %v423
      %v2501 = vpop.f32.mrf.mxu0
      %v2502 = vadd.f32 0.0, %v2501
      %2503 = vmatmul.f32.gmra.mxu0 %v424
      %v2504 = vpop.f32.mrf.mxu0
      %v2505 = vadd.f32 0.0, %v2504
      %2506 = vmatmul.f32.gmra.mxu0 %v426
      %v2507 = vpop.f32.mrf.mxu0
      %v2508 = vadd.f32 0.0, %v2507
      %2509 = vmatmul.f32.gmra.mxu0 %v427
      %v2510 = vpop.f32.mrf.mxu0
      %v2511 = vadd.f32 0.0, %v2510
      %2512 = vmatmul.f32.gmra.mxu0 %v429
      %v2513 = vpop.f32.mrf.mxu0
      %v2514 = vadd.f32 0.0, %v2513
      %2515 = vmatmul.f32.gmra.mxu0 %v430
      %v2516 = vpop.f32.mrf.mxu0
      %v2517 = vadd.f32 0.0, %v2516
      %2518 = vmatmul.f32.gmra.mxu0 %v432
      %v2519 = vpop.f32.mrf.mxu0
      %v2520 = vadd.f32 0.0, %v2519
      %2521 = vmatmul.f32.gmra.mxu0 %v433
      %v2522 = vpop.f32.mrf.mxu0
      %v2523 = vadd.f32 0.0, %v2522
      %2524 = vmatmul.f32.gmra.mxu0 %v435
      %v2525 = vpop.f32.mrf.mxu0
      %v2526 = vadd.f32 0.0, %v2525
      %2527 = vmatmul.f32.gmra.mxu0 %v436
      %v2528 = vpop.f32.mrf.mxu0
      %v2529 = vadd.f32 0.0, %v2528
      %2530 = vmatmul.f32.gmra.mxu0 %v438
      %v2531 = vpop.f32.mrf.mxu0
      %v2532 = vadd.f32 0.0, %v2531
      %2533 = vmatmul.f32.gmra.mxu0 %v439
      %v2534 = vpop.f32.mrf.mxu0
      %v2535 = vadd.f32 0.0, %v2534
      %2536 = vdwg.mxu0
      %v2537 = vadd.f32 %v2464, %v2496
      %v2538 = vadd.f32 %v2465, %v2499
      %v2539 = vadd.f32 %v2466, %v2502
      %v2540 = vadd.f32 %v2467, %v2505
      %v2541 = vadd.f32 %v2468, %v2508
      %v2542 = vadd.f32 %v2469, %v2511
      %v2543 = vadd.f32 %v2470, %v2514
      %v2544 = vadd.f32 %v2471, %v2517
      %v2545 = vadd.f32 %v2472, %v2520
      %v2546 = vadd.f32 %v2473, %v2523
      %v2547 = vadd.f32 %v2474, %v2526
      %v2548 = vadd.f32 %v2475, %v2529
      %v2549 = vadd.f32 %v2476, %v2532
      %v2550 = vadd.f32 %v2477, %v2535
      %2551 = vmatpush.msra.mxu0 %v1067
      %2552 = vmatpush.msra.mxu0 %v1066
      %2553 = vmatpush.msra.mxu0 %v1065
      %2554 = vmatpush.msra.mxu0 %v1064
      %2555 = vmatpush.msra.mxu0 %v1063
      %2556 = vmatpush.msra.mxu0 %v1062
      %2557 = vmatpush.msra.mxu0 %v1061
      %2558 = vmatpush.msra.mxu0 %v1060
      %2559 = vmatpush.msra.mxu0 %v1059
      %2560 = vmatpush.msra.mxu0 %v1058
      %2561 = vmatpush.msra.mxu0 %v1057
      %2562 = vmatpush.msra.mxu0 %v1056
      %2563 = vmatpush.msra.mxu0 %v1055
      %2564 = vmatpush.msra.mxu0 %v1054
      %2565 = vmatpush.msra.mxu0 %v1053
      %2566 = vmatpush.msra.mxu0 %v1052
      %2567 = vmatmul.f32.gmra.mxu0 %v669
      %v2568 = vpop.f32.mrf.mxu0
      %v2569 = vadd.f32 0.0, %v2568
      %2570 = vmatmul.f32.gmra.mxu0 %v671
      %v2571 = vpop.f32.mrf.mxu0
      %v2572 = vadd.f32 0.0, %v2571
      %2573 = vmatmul.f32.gmra.mxu0 %v674
      %v2574 = vpop.f32.mrf.mxu0
      %v2575 = vadd.f32 0.0, %v2574
      %2576 = vmatmul.f32.gmra.mxu0 %v676
      %v2577 = vpop.f32.mrf.mxu0
      %v2578 = vadd.f32 0.0, %v2577
      %2579 = vmatmul.f32.gmra.mxu0 %v679
      %v2580 = vpop.f32.mrf.mxu0
      %v2581 = vadd.f32 0.0, %v2580
      %2582 = vmatmul.f32.gmra.mxu0 %v681
      %v2583 = vpop.f32.mrf.mxu0
      %v2584 = vadd.f32 0.0, %v2583
      %2585 = vmatmul.f32.gmra.mxu0 %v684
      %v2586 = vpop.f32.mrf.mxu0
      %v2587 = vadd.f32 0.0, %v2586
      %2588 = vmatmul.f32.gmra.mxu0 %v686
      %v2589 = vpop.f32.mrf.mxu0
      %v2590 = vadd.f32 0.0, %v2589
      %2591 = vmatmul.f32.gmra.mxu0 %v689
      %v2592 = vpop.f32.mrf.mxu0
      %v2593 = vadd.f32 0.0, %v2592
      %2594 = vmatmul.f32.gmra.mxu0 %v691
      %v2595 = vpop.f32.mrf.mxu0
      %v2596 = vadd.f32 0.0, %v2595
      %2597 = vmatmul.f32.gmra.mxu0 %v694
      %v2598 = vpop.f32.mrf.mxu0
      %v2599 = vadd.f32 0.0, %v2598
      %2600 = vmatmul.f32.gmra.mxu0 %v696
      %v2601 = vpop.f32.mrf.mxu0
      %v2602 = vadd.f32 0.0, %v2601
      %2603 = vmatmul.f32.gmra.mxu0 %v1326
      %v2604 = vpop.f32.mrf.mxu0
      %v2605 = vadd.f32 0.0, %v2604
      %2606 = vmatmul.f32.gmra.mxu0 %v1328
      %v2607 = vpop.f32.mrf.mxu0
      %v2608 = vadd.f32 0.0, %v2607
      %2609 = vdwg.mxu0
      %v2610 = vadd.f32 %v2537, %v2569
      %v2611 = vadd.f32 %v2538, %v2572
      %v2612 = vadd.f32 %v2539, %v2575
      %v2613 = vadd.f32 %v2540, %v2578
      %v2614 = vadd.f32 %v2541, %v2581
      %v2615 = vadd.f32 %v2542, %v2584
      %v2616 = vadd.f32 %v2543, %v2587
      %v2617 = vadd.f32 %v2544, %v2590
      %v2618 = vadd.f32 %v2545, %v2593
      %v2619 = vadd.f32 %v2546, %v2596
      %v2620 = vadd.f32 %v2547, %v2599
      %v2621 = vadd.f32 %v2548, %v2602
      %v2622 = vadd.f32 %v2549, %v2605
      %v2623 = vadd.f32 %v2550, %v2608
      %2624 = vmatpush.msra.mxu0 %v1157
      %2625 = vmatpush.msra.mxu0 %v1156
      %2626 = vmatpush.msra.mxu0 %v1155
      %2627 = vmatpush.msra.mxu0 %v1154
      %2628 = vmatpush.msra.mxu0 %v1153
      %2629 = vmatpush.msra.mxu0 %v1152
      %2630 = vmatpush.msra.mxu0 %v1151
      %2631 = vmatpush.msra.mxu0 %v1150
      %2632 = vmatpush.msra.mxu0 %v1149
      %2633 = vmatpush.msra.mxu0 %v1148
      %2634 = vmatpush.msra.mxu0 %v1147
      %2635 = vmatpush.msra.mxu0 %v1146
      %2636 = vmatpush.msra.mxu0 %v1145
      %2637 = vmatpush.msra.mxu0 %v1144
      %2638 = vmatpush.msra.mxu0 %v1143
      %2639 = vmatpush.msra.mxu0 %v1142
      %2640 = vmatmul.f32.gmra.mxu0 %v444
      %v2641 = vpop.f32.mrf.mxu0
      %v2642 = vadd.f32 0.0, %v2641
      %2643 = vmatmul.f32.gmra.mxu0 %v445
      %v2644 = vpop.f32.mrf.mxu0
      %v2645 = vadd.f32 0.0, %v2644
      %2646 = vmatmul.f32.gmra.mxu0 %v447
      %v2647 = vpop.f32.mrf.mxu0
      %v2648 = vadd.f32 0.0, %v2647
      %2649 = vmatmul.f32.gmra.mxu0 %v448
      %v2650 = vpop.f32.mrf.mxu0
      %v2651 = vadd.f32 0.0, %v2650
      %2652 = vmatmul.f32.gmra.mxu0 %v450
      %v2653 = vpop.f32.mrf.mxu0
      %v2654 = vadd.f32 0.0, %v2653
      %2655 = vmatmul.f32.gmra.mxu0 %v451
      %v2656 = vpop.f32.mrf.mxu0
      %v2657 = vadd.f32 0.0, %v2656
      %2658 = vmatmul.f32.gmra.mxu0 %v453
      %v2659 = vpop.f32.mrf.mxu0
      %v2660 = vadd.f32 0.0, %v2659
      %2661 = vmatmul.f32.gmra.mxu0 %v454
      %v2662 = vpop.f32.mrf.mxu0
      %v2663 = vadd.f32 0.0, %v2662
      %2664 = vmatmul.f32.gmra.mxu0 %v456
      %v2665 = vpop.f32.mrf.mxu0
      %v2666 = vadd.f32 0.0, %v2665
      %2667 = vmatmul.f32.gmra.mxu0 %v457
      %v2668 = vpop.f32.mrf.mxu0
      %v2669 = vadd.f32 0.0, %v2668
      %2670 = vmatmul.f32.gmra.mxu0 %v459
      %v2671 = vpop.f32.mrf.mxu0
      %v2672 = vadd.f32 0.0, %v2671
      %2673 = vmatmul.f32.gmra.mxu0 %v460
      %v2674 = vpop.f32.mrf.mxu0
      %v2675 = vadd.f32 0.0, %v2674
      %2676 = vmatmul.f32.gmra.mxu0 %v462
      %v2677 = vpop.f32.mrf.mxu0
      %v2678 = vadd.f32 0.0, %v2677
      %2679 = vmatmul.f32.gmra.mxu0 %v463
      %v2680 = vpop.f32.mrf.mxu0
      %v2681 = vadd.f32 0.0, %v2680
      %2682 = vdwg.mxu0
      %v2683 = vadd.f32 %v2610, %v2642
      %v2684 = vadd.f32 %v2611, %v2645
      %v2685 = vadd.f32 %v2612, %v2648
      %v2686 = vadd.f32 %v2613, %v2651
      %v2687 = vadd.f32 %v2614, %v2654
      %v2688 = vadd.f32 %v2615, %v2657
      %v2689 = vadd.f32 %v2616, %v2660
      %v2690 = vadd.f32 %v2617, %v2663
      %v2691 = vadd.f32 %v2618, %v2666
      %v2692 = vadd.f32 %v2619, %v2669
      %v2693 = vadd.f32 %v2620, %v2672
      %v2694 = vadd.f32 %v2621, %v2675
      %v2695 = vadd.f32 %v2622, %v2678
      %v2696 = vadd.f32 %v2623, %v2681
      %2697 = vmatpush.msra.mxu0 %v1247
      %2698 = vmatpush.msra.mxu0 %v1246
      %2699 = vmatpush.msra.mxu0 %v1245
      %2700 = vmatpush.msra.mxu0 %v1244
      %2701 = vmatpush.msra.mxu0 %v1243
      %2702 = vmatpush.msra.mxu0 %v1242
      %2703 = vmatpush.msra.mxu0 %v1241
      %2704 = vmatpush.msra.mxu0 %v1240
      %2705 = vmatpush.msra.mxu0 %v1239
      %2706 = vmatpush.msra.mxu0 %v1238
      %2707 = vmatpush.msra.mxu0 %v1237
      %2708 = vmatpush.msra.mxu0 %v1236
      %2709 = vmatpush.msra.mxu0 %v1235
      %2710 = vmatpush.msra.mxu0 %v1234
      %2711 = vmatpush.msra.mxu0 %v1233
      %2712 = vmatpush.msra.mxu0 %v1232
      %2713 = vmatmul.f32.gmra.mxu0 %v468
      %v2714 = vpop.f32.mrf.mxu0
      %v2715 = vadd.f32 0.0, %v2714
      %2716 = vmatmul.f32.gmra.mxu0 %v469
      %v2717 = vpop.f32.mrf.mxu0
      %v2718 = vadd.f32 0.0, %v2717
      %2719 = vmatmul.f32.gmra.mxu0 %v471
      %v2720 = vpop.f32.mrf.mxu0
      %v2721 = vadd.f32 0.0, %v2720
      %2722 = vmatmul.f32.gmra.mxu0 %v472
      %v2723 = vpop.f32.mrf.mxu0
      %v2724 = vadd.f32 0.0, %v2723
      %2725 = vmatmul.f32.gmra.mxu0 %v474
      %v2726 = vpop.f32.mrf.mxu0
      %v2727 = vadd.f32 0.0, %v2726
      %2728 = vmatmul.f32.gmra.mxu0 %v475
      %v2729 = vpop.f32.mrf.mxu0
      %v2730 = vadd.f32 0.0, %v2729
      %2731 = vmatmul.f32.gmra.mxu0 %v477
      %v2732 = vpop.f32.mrf.mxu0
      %v2733 = vadd.f32 0.0, %v2732
      %2734 = vmatmul.f32.gmra.mxu0 %v478
      %v2735 = vpop.f32.mrf.mxu0
      %v2736 = vadd.f32 0.0, %v2735
      %2737 = vmatmul.f32.gmra.mxu0 %v480
      %v2738 = vpop.f32.mrf.mxu0
      %v2739 = vadd.f32 0.0, %v2738
      %2740 = vmatmul.f32.gmra.mxu0 %v481
      %v2741 = vpop.f32.mrf.mxu0
      %v2742 = vadd.f32 0.0, %v2741
      %2743 = vmatmul.f32.gmra.mxu0 %v483
      %v2744 = vpop.f32.mrf.mxu0
      %v2745 = vadd.f32 0.0, %v2744
      %2746 = vmatmul.f32.gmra.mxu0 %v484
      %v2747 = vpop.f32.mrf.mxu0
      %v2748 = vadd.f32 0.0, %v2747
      %2749 = vmatmul.f32.gmra.mxu0 %v486
      %v2750 = vpop.f32.mrf.mxu0
      %v2751 = vadd.f32 0.0, %v2750
      %2752 = vmatmul.f32.gmra.mxu0 %v487
      %v2753 = vpop.f32.mrf.mxu0
      %v2754 = vadd.f32 0.0, %v2753
      %2755 = vdwg.mxu0
      %v2756 = vadd.f32 %v2683, %v2715
      %v2757 = vadd.f32 %v2684, %v2718
      %v2758 = vadd.f32 %v2685, %v2721
      %v2759 = vadd.f32 %v2686, %v2724
      %v2760 = vadd.f32 %v2687, %v2727
      %v2761 = vadd.f32 %v2688, %v2730
      %v2762 = vadd.f32 %v2689, %v2733
      %v2763 = vadd.f32 %v2690, %v2736
      %v2764 = vadd.f32 %v2691, %v2739
      %v2765 = vadd.f32 %v2692, %v2742
      %v2766 = vadd.f32 %v2693, %v2745
      %v2767 = vadd.f32 %v2694, %v2748
      %v2768 = vadd.f32 %v2695, %v2751
      %v2769 = vadd.f32 %v2696, %v2754
      %v2773 = vrot.slane %v462, 1
      %v2774 = vrot.slane %v463, 1
      %v2775 = vsel %vm661, %v2773, %v2774
      %v2776 = vrot.slane %v464, 1
      %v2777 = vsel %vm661, %v2774, %v2776
      %2780 = vmatpush.msra.mxu0 %v1347
      %2781 = vmatpush.msra.mxu0 %v1346
      %2782 = vmatpush.msra.mxu0 %v1345
      %2783 = vmatpush.msra.mxu0 %v1344
      %2784 = vmatpush.msra.mxu0 %v1343
      %2785 = vmatpush.msra.mxu0 %v1342
      %2786 = vmatpush.msra.mxu0 %v1341
      %2787 = vmatpush.msra.mxu0 %v1340
      %2788 = vmatpush.msra.mxu0 %v1339
      %2789 = vmatpush.msra.mxu0 %v1338
      %2790 = vmatpush.msra.mxu0 %v1337
      %2791 = vmatpush.msra.mxu0 %v1336
      %2792 = vmatpush.msra.mxu0 %v1335
      %2793 = vmatpush.msra.mxu0 %v1334
      %2794 = vmatpush.msra.mxu0 %v1333
      %2795 = vmatpush.msra.mxu0 %v1332
      %2796 = vmatmul.f32.gmra.mxu0 %v1009
      %v2797 = vpop.f32.mrf.mxu0
      %v2798 = vadd.f32 0.0, %v2797
      %2799 = vmatmul.f32.gmra.mxu0 %v1011
      %v2800 = vpop.f32.mrf.mxu0
      %v2801 = vadd.f32 0.0, %v2800
      %2802 = vmatmul.f32.gmra.mxu0 %v1014
      %v2803 = vpop.f32.mrf.mxu0
      %v2804 = vadd.f32 0.0, %v2803
      %2805 = vmatmul.f32.gmra.mxu0 %v1016
      %v2806 = vpop.f32.mrf.mxu0
      %v2807 = vadd.f32 0.0, %v2806
      %2808 = vmatmul.f32.gmra.mxu0 %v1019
      %v2809 = vpop.f32.mrf.mxu0
      %v2810 = vadd.f32 0.0, %v2809
      %2811 = vmatmul.f32.gmra.mxu0 %v1021
      %v2812 = vpop.f32.mrf.mxu0
      %v2813 = vadd.f32 0.0, %v2812
      %2814 = vmatmul.f32.gmra.mxu0 %v1024
      %v2815 = vpop.f32.mrf.mxu0
      %v2816 = vadd.f32 0.0, %v2815
      %2817 = vmatmul.f32.gmra.mxu0 %v1026
      %v2818 = vpop.f32.mrf.mxu0
      %v2819 = vadd.f32 0.0, %v2818
      %2820 = vmatmul.f32.gmra.mxu0 %v1029
      %v2821 = vpop.f32.mrf.mxu0
      %v2822 = vadd.f32 0.0, %v2821
      %2823 = vmatmul.f32.gmra.mxu0 %v1031
      %v2824 = vpop.f32.mrf.mxu0
      %v2825 = vadd.f32 0.0, %v2824
      %2826 = vmatmul.f32.gmra.mxu0 %v1034
      %v2827 = vpop.f32.mrf.mxu0
      %v2828 = vadd.f32 0.0, %v2827
      %2829 = vmatmul.f32.gmra.mxu0 %v1036
      %v2830 = vpop.f32.mrf.mxu0
      %v2831 = vadd.f32 0.0, %v2830
      %2832 = vmatmul.f32.gmra.mxu0 %v2775
      %v2833 = vpop.f32.mrf.mxu0
      %v2834 = vadd.f32 0.0, %v2833
      %2835 = vmatmul.f32.gmra.mxu0 %v2777
      %v2836 = vpop.f32.mrf.mxu0
      %v2837 = vadd.f32 0.0, %v2836
      %2838 = vdwg.mxu0
      %v2839 = vadd.f32 %v2756, %v2798
      %v2840 = vadd.f32 %v2757, %v2801
      %v2841 = vadd.f32 %v2758, %v2804
      %v2842 = vadd.f32 %v2759, %v2807
      %v2843 = vadd.f32 %v2760, %v2810
      %v2844 = vadd.f32 %v2761, %v2813
      %v2845 = vadd.f32 %v2762, %v2816
      %v2846 = vadd.f32 %v2763, %v2819
      %v2847 = vadd.f32 %v2764, %v2822
      %v2848 = vadd.f32 %v2765, %v2825
      %v2849 = vadd.f32 %v2766, %v2828
      %v2850 = vadd.f32 %v2767, %v2831
      %v2851 = vadd.f32 %v2768, %v2834
      %v2852 = vadd.f32 %v2769, %v2837
      %v2853 = vmax.f32 %v2200, %v2839
      %v2854 = vmax.f32 %v2201, %v2840
      %v2855 = vmax.f32 %v2202, %v2841
      %v2856 = vmax.f32 %v2203, %v2842
      %v2857 = vmax.f32 %v2204, %v2843
      %v2858 = vmax.f32 %v2205, %v2844
      %v2859 = vmax.f32 %v2206, %v2845
      %v2860 = vmax.f32 %v2207, %v2846
      %v2861 = vmax.f32 %v2208, %v2847
      %v2862 = vmax.f32 %v2209, %v2848
      %v2863 = vmax.f32 %v2210, %v2849
      %v2864 = vmax.f32 %v2211, %v2850
      %v2865 = vmax.f32 %v2212, %v2851
      %v2866 = vmax.f32 %v2213, %v2852
      %2867 = vmatpush.msra.mxu0 %v521
      %2868 = vmatpush.msra.mxu0 %v520
      %2869 = vmatpush.msra.mxu0 %v519
      %2870 = vmatpush.msra.mxu0 %v518
      %2871 = vmatpush.msra.mxu0 %v517
      %2872 = vmatpush.msra.mxu0 %v516
      %2873 = vmatpush.msra.mxu0 %v515
      %2874 = vmatpush.msra.mxu0 %v514
      %2875 = vmatpush.msra.mxu0 %v513
      %2876 = vmatpush.msra.mxu0 %v512
      %2877 = vmatpush.msra.mxu0 %v511
      %2878 = vmatpush.msra.mxu0 %v510
      %2879 = vmatpush.msra.mxu0 %v509
      %2880 = vmatpush.msra.mxu0 %v508
      %2881 = vmatpush.msra.mxu0 %v507
      %2882 = vmatpush.msra.mxu0 %v506
      %2883 = vmatmul.f32.gmra.mxu0 %v1004
      %v2884 = vpop.f32.mrf.mxu0
      %v2885 = vadd.f32 0.0, %v2884
      %2886 = vmatmul.f32.gmra.mxu0 %v1006
      %v2887 = vpop.f32.mrf.mxu0
      %v2888 = vadd.f32 0.0, %v2887
      %2889 = vmatmul.f32.gmra.mxu0 %v1009
      %v2890 = vpop.f32.mrf.mxu0
      %v2891 = vadd.f32 0.0, %v2890
      %2892 = vmatmul.f32.gmra.mxu0 %v1011
      %v2893 = vpop.f32.mrf.mxu0
      %v2894 = vadd.f32 0.0, %v2893
      %2895 = vmatmul.f32.gmra.mxu0 %v1014
      %v2896 = vpop.f32.mrf.mxu0
      %v2897 = vadd.f32 0.0, %v2896
      %2898 = vmatmul.f32.gmra.mxu0 %v1016
      %v2899 = vpop.f32.mrf.mxu0
      %v2900 = vadd.f32 0.0, %v2899
      %2901 = vmatmul.f32.gmra.mxu0 %v1019
      %v2902 = vpop.f32.mrf.mxu0
      %v2903 = vadd.f32 0.0, %v2902
      %2904 = vmatmul.f32.gmra.mxu0 %v1021
      %v2905 = vpop.f32.mrf.mxu0
      %v2906 = vadd.f32 0.0, %v2905
      %2907 = vmatmul.f32.gmra.mxu0 %v1024
      %v2908 = vpop.f32.mrf.mxu0
      %v2909 = vadd.f32 0.0, %v2908
      %2910 = vmatmul.f32.gmra.mxu0 %v1026
      %v2911 = vpop.f32.mrf.mxu0
      %v2912 = vadd.f32 0.0, %v2911
      %2913 = vmatmul.f32.gmra.mxu0 %v1029
      %v2914 = vpop.f32.mrf.mxu0
      %v2915 = vadd.f32 0.0, %v2914
      %2916 = vmatmul.f32.gmra.mxu0 %v1031
      %v2917 = vpop.f32.mrf.mxu0
      %v2918 = vadd.f32 0.0, %v2917
      %2919 = vmatmul.f32.gmra.mxu0 %v1034
      %v2920 = vpop.f32.mrf.mxu0
      %v2921 = vadd.f32 0.0, %v2920
      %2922 = vmatmul.f32.gmra.mxu0 %v1036
      %v2923 = vpop.f32.mrf.mxu0
      %v2924 = vadd.f32 0.0, %v2923
      %2925 = vdwg.mxu0
      %2926 = vmatpush.msra.mxu0 %v504
      %2927 = vmatpush.msra.mxu0 %v503
      %2928 = vmatpush.msra.mxu0 %v502
      %2929 = vmatpush.msra.mxu0 %v501
      %2930 = vmatpush.msra.mxu0 %v500
      %2931 = vmatpush.msra.mxu0 %v499
      %2932 = vmatpush.msra.mxu0 %v498
      %2933 = vmatpush.msra.mxu0 %v497
      %2934 = vmatpush.msra.mxu0 %v496
      %2935 = vmatpush.msra.mxu0 %v495
      %2936 = vmatpush.msra.mxu0 %v494
      %2937 = vmatpush.msra.mxu0 %v493
      %2938 = vmatpush.msra.mxu0 %v492
      %2939 = vmatpush.msra.mxu0 %v491
      %2940 = vmatpush.msra.mxu0 %v490
      %2941 = vmatpush.msra.mxu0 %v489
      %2942 = vmatmul.f32.gmra.mxu0 %v465
      %v2943 = vpop.f32.mrf.mxu0
      %v2944 = vadd.f32 %v2885, %v2943
      %2945 = vmatmul.f32.gmra.mxu0 %v466
      %v2946 = vpop.f32.mrf.mxu0
      %v2947 = vadd.f32 %v2888, %v2946
      %2948 = vmatmul.f32.gmra.mxu0 %v468
      %v2949 = vpop.f32.mrf.mxu0
      %v2950 = vadd.f32 %v2891, %v2949
      %2951 = vmatmul.f32.gmra.mxu0 %v469
      %v2952 = vpop.f32.mrf.mxu0
      %v2953 = vadd.f32 %v2894, %v2952
      %2954 = vmatmul.f32.gmra.mxu0 %v471
      %v2955 = vpop.f32.mrf.mxu0
      %v2956 = vadd.f32 %v2897, %v2955
      %2957 = vmatmul.f32.gmra.mxu0 %v472
      %v2958 = vpop.f32.mrf.mxu0
      %v2959 = vadd.f32 %v2900, %v2958
      %2960 = vmatmul.f32.gmra.mxu0 %v474
      %v2961 = vpop.f32.mrf.mxu0
      %v2962 = vadd.f32 %v2903, %v2961
      %2963 = vmatmul.f32.gmra.mxu0 %v475
      %v2964 = vpop.f32.mrf.mxu0
      %v2965 = vadd.f32 %v2906, %v2964
      %2966 = vmatmul.f32.gmra.mxu0 %v477
      %v2967 = vpop.f32.mrf.mxu0
      %v2968 = vadd.f32 %v2909, %v2967
      %2969 = vmatmul.f32.gmra.mxu0 %v478
      %v2970 = vpop.f32.mrf.mxu0
      %v2971 = vadd.f32 %v2912, %v2970
      %2972 = vmatmul.f32.gmra.mxu0 %v480
      %v2973 = vpop.f32.mrf.mxu0
      %v2974 = vadd.f32 %v2915, %v2973
      %2975 = vmatmul.f32.gmra.mxu0 %v481
      %v2976 = vpop.f32.mrf.mxu0
      %v2977 = vadd.f32 %v2918, %v2976
      %2978 = vmatmul.f32.gmra.mxu0 %v483
      %v2979 = vpop.f32.mrf.mxu0
      %v2980 = vadd.f32 %v2921, %v2979
      %2981 = vmatmul.f32.gmra.mxu0 %v484
      %v2982 = vpop.f32.mrf.mxu0
      %v2983 = vadd.f32 %v2924, %v2982
      %2984 = vdwg.mxu0
      %2985 = vmatpush.msra.mxu0 %v727
      %2986 = vmatpush.msra.mxu0 %v726
      %2987 = vmatpush.msra.mxu0 %v725
      %2988 = vmatpush.msra.mxu0 %v724
      %2989 = vmatpush.msra.mxu0 %v723
      %2990 = vmatpush.msra.mxu0 %v722
      %2991 = vmatpush.msra.mxu0 %v721
      %2992 = vmatpush.msra.mxu0 %v720
      %2993 = vmatpush.msra.mxu0 %v719
      %2994 = vmatpush.msra.mxu0 %v718
      %2995 = vmatpush.msra.mxu0 %v717
      %2996 = vmatpush.msra.mxu0 %v716
      %2997 = vmatpush.msra.mxu0 %v715
      %2998 = vmatpush.msra.mxu0 %v714
      %2999 = vmatpush.msra.mxu0 %v713
      %3000 = vmatpush.msra.mxu0 %v712
      %3001 = vmatmul.f32.gmra.mxu0 %v1851
      %v3002 = vpop.f32.mrf.mxu0
      %v3003 = vadd.f32 0.0, %v3002
      %3004 = vmatmul.f32.gmra.mxu0 %v1853
      %v3005 = vpop.f32.mrf.mxu0
      %v3006 = vadd.f32 0.0, %v3005
      %3007 = vmatmul.f32.gmra.mxu0 %v1856
      %v3008 = vpop.f32.mrf.mxu0
      %v3009 = vadd.f32 0.0, %v3008
      %3010 = vmatmul.f32.gmra.mxu0 %v1858
      %v3011 = vpop.f32.mrf.mxu0
      %v3012 = vadd.f32 0.0, %v3011
      %3013 = vmatmul.f32.gmra.mxu0 %v1861
      %v3014 = vpop.f32.mrf.mxu0
      %v3015 = vadd.f32 0.0, %v3014
      %3016 = vmatmul.f32.gmra.mxu0 %v1863
      %v3017 = vpop.f32.mrf.mxu0
      %v3018 = vadd.f32 0.0, %v3017
      %3019 = vmatmul.f32.gmra.mxu0 %v1866
      %v3020 = vpop.f32.mrf.mxu0
      %v3021 = vadd.f32 0.0, %v3020
      %3022 = vmatmul.f32.gmra.mxu0 %v1868
      %v3023 = vpop.f32.mrf.mxu0
      %v3024 = vadd.f32 0.0, %v3023
      %3025 = vmatmul.f32.gmra.mxu0 %v1871
      %v3026 = vpop.f32.mrf.mxu0
      %v3027 = vadd.f32 0.0, %v3026
      %3028 = vmatmul.f32.gmra.mxu0 %v1873
      %v3029 = vpop.f32.mrf.mxu0
      %v3030 = vadd.f32 0.0, %v3029
      %3031 = vmatmul.f32.gmra.mxu0 %v1876
      %v3032 = vpop.f32.mrf.mxu0
      %v3033 = vadd.f32 0.0, %v3032
      %3034 = vmatmul.f32.gmra.mxu0 %v1878
      %v3035 = vpop.f32.mrf.mxu0
      %v3036 = vadd.f32 0.0, %v3035
      %3037 = vmatmul.f32.gmra.mxu0 %v1881
      %v3038 = vpop.f32.mrf.mxu0
      %v3039 = vadd.f32 0.0, %v3038
      %3040 = vmatmul.f32.gmra.mxu0 %v1883
      %v3041 = vpop.f32.mrf.mxu0
      %v3042 = vadd.f32 0.0, %v3041
      %3043 = vdwg.mxu0
      %v3044 = vadd.f32 %v2944, %v3003
      %v3045 = vadd.f32 %v2947, %v3006
      %v3046 = vadd.f32 %v2950, %v3009
      %v3047 = vadd.f32 %v2953, %v3012
      %v3048 = vadd.f32 %v2956, %v3015
      %v3049 = vadd.f32 %v2959, %v3018
      %v3050 = vadd.f32 %v2962, %v3021
      %v3051 = vadd.f32 %v2965, %v3024
      %v3052 = vadd.f32 %v2968, %v3027
      %v3053 = vadd.f32 %v2971, %v3030
      %v3054 = vadd.f32 %v2974, %v3033
      %v3055 = vadd.f32 %v2977, %v3036
      %v3056 = vadd.f32 %v2980, %v3039
      %v3057 = vadd.f32 %v2983, %v3042
      %3058 = vmatpush.msra.mxu0 %v817
      %3059 = vmatpush.msra.mxu0 %v816
      %3060 = vmatpush.msra.mxu0 %v815
      %3061 = vmatpush.msra.mxu0 %v814
      %3062 = vmatpush.msra.mxu0 %v813
      %3063 = vmatpush.msra.mxu0 %v812
      %3064 = vmatpush.msra.mxu0 %v811
      %3065 = vmatpush.msra.mxu0 %v810
      %3066 = vmatpush.msra.mxu0 %v809
      %3067 = vmatpush.msra.mxu0 %v808
      %3068 = vmatpush.msra.mxu0 %v807
      %3069 = vmatpush.msra.mxu0 %v806
      %3070 = vmatpush.msra.mxu0 %v805
      %3071 = vmatpush.msra.mxu0 %v804
      %3072 = vmatpush.msra.mxu0 %v803
      %3073 = vmatpush.msra.mxu0 %v802
      %3074 = vmatmul.f32.gmra.mxu0 %v420
      %v3075 = vpop.f32.mrf.mxu0
      %v3076 = vadd.f32 0.0, %v3075
      %3077 = vmatmul.f32.gmra.mxu0 %v421
      %v3078 = vpop.f32.mrf.mxu0
      %v3079 = vadd.f32 0.0, %v3078
      %3080 = vmatmul.f32.gmra.mxu0 %v423
      %v3081 = vpop.f32.mrf.mxu0
      %v3082 = vadd.f32 0.0, %v3081
      %3083 = vmatmul.f32.gmra.mxu0 %v424
      %v3084 = vpop.f32.mrf.mxu0
      %v3085 = vadd.f32 0.0, %v3084
      %3086 = vmatmul.f32.gmra.mxu0 %v426
      %v3087 = vpop.f32.mrf.mxu0
      %v3088 = vadd.f32 0.0, %v3087
      %3089 = vmatmul.f32.gmra.mxu0 %v427
      %v3090 = vpop.f32.mrf.mxu0
      %v3091 = vadd.f32 0.0, %v3090
      %3092 = vmatmul.f32.gmra.mxu0 %v429
      %v3093 = vpop.f32.mrf.mxu0
      %v3094 = vadd.f32 0.0, %v3093
      %3095 = vmatmul.f32.gmra.mxu0 %v430
      %v3096 = vpop.f32.mrf.mxu0
      %v3097 = vadd.f32 0.0, %v3096
      %3098 = vmatmul.f32.gmra.mxu0 %v432
      %v3099 = vpop.f32.mrf.mxu0
      %v3100 = vadd.f32 0.0, %v3099
      %3101 = vmatmul.f32.gmra.mxu0 %v433
      %v3102 = vpop.f32.mrf.mxu0
      %v3103 = vadd.f32 0.0, %v3102
      %3104 = vmatmul.f32.gmra.mxu0 %v435
      %v3105 = vpop.f32.mrf.mxu0
      %v3106 = vadd.f32 0.0, %v3105
      %3107 = vmatmul.f32.gmra.mxu0 %v436
      %v3108 = vpop.f32.mrf.mxu0
      %v3109 = vadd.f32 0.0, %v3108
      %3110 = vmatmul.f32.gmra.mxu0 %v438
      %v3111 = vpop.f32.mrf.mxu0
      %v3112 = vadd.f32 0.0, %v3111
      %3113 = vmatmul.f32.gmra.mxu0 %v439
      %v3114 = vpop.f32.mrf.mxu0
      %v3115 = vadd.f32 0.0, %v3114
      %3116 = vdwg.mxu0
      %v3117 = vadd.f32 %v3044, %v3076
      %v3118 = vadd.f32 %v3045, %v3079
      %v3119 = vadd.f32 %v3046, %v3082
      %v3120 = vadd.f32 %v3047, %v3085
      %v3121 = vadd.f32 %v3048, %v3088
      %v3122 = vadd.f32 %v3049, %v3091
      %v3123 = vadd.f32 %v3050, %v3094
      %v3124 = vadd.f32 %v3051, %v3097
      %v3125 = vadd.f32 %v3052, %v3100
      %v3126 = vadd.f32 %v3053, %v3103
      %v3127 = vadd.f32 %v3054, %v3106
      %v3128 = vadd.f32 %v3055, %v3109
      %v3129 = vadd.f32 %v3056, %v3112
      %v3130 = vadd.f32 %v3057, %v3115
      %3131 = vmatpush.msra.mxu0 %v907
      %3132 = vmatpush.msra.mxu0 %v906
      %3133 = vmatpush.msra.mxu0 %v905
      %3134 = vmatpush.msra.mxu0 %v904
      %3135 = vmatpush.msra.mxu0 %v903
      %3136 = vmatpush.msra.mxu0 %v902
      %3137 = vmatpush.msra.mxu0 %v901
      %3138 = vmatpush.msra.mxu0 %v900
      %3139 = vmatpush.msra.mxu0 %v899
      %3140 = vmatpush.msra.mxu0 %v898
      %3141 = vmatpush.msra.mxu0 %v897
      %3142 = vmatpush.msra.mxu0 %v896
      %3143 = vmatpush.msra.mxu0 %v895
      %3144 = vmatpush.msra.mxu0 %v894
      %3145 = vmatpush.msra.mxu0 %v893
      %3146 = vmatpush.msra.mxu0 %v892
      %3147 = vmatmul.f32.gmra.mxu0 %v669
      %v3148 = vpop.f32.mrf.mxu0
      %v3149 = vadd.f32 0.0, %v3148
      %3150 = vmatmul.f32.gmra.mxu0 %v671
      %v3151 = vpop.f32.mrf.mxu0
      %v3152 = vadd.f32 0.0, %v3151
      %3153 = vmatmul.f32.gmra.mxu0 %v674
      %v3154 = vpop.f32.mrf.mxu0
      %v3155 = vadd.f32 0.0, %v3154
      %3156 = vmatmul.f32.gmra.mxu0 %v676
      %v3157 = vpop.f32.mrf.mxu0
      %v3158 = vadd.f32 0.0, %v3157
      %3159 = vmatmul.f32.gmra.mxu0 %v679
      %v3160 = vpop.f32.mrf.mxu0
      %v3161 = vadd.f32 0.0, %v3160
      %3162 = vmatmul.f32.gmra.mxu0 %v681
      %v3163 = vpop.f32.mrf.mxu0
      %v3164 = vadd.f32 0.0, %v3163
      %3165 = vmatmul.f32.gmra.mxu0 %v684
      %v3166 = vpop.f32.mrf.mxu0
      %v3167 = vadd.f32 0.0, %v3166
      %3168 = vmatmul.f32.gmra.mxu0 %v686
      %v3169 = vpop.f32.mrf.mxu0
      %v3170 = vadd.f32 0.0, %v3169
      %3171 = vmatmul.f32.gmra.mxu0 %v689
      %v3172 = vpop.f32.mrf.mxu0
      %v3173 = vadd.f32 0.0, %v3172
      %3174 = vmatmul.f32.gmra.mxu0 %v691
      %v3175 = vpop.f32.mrf.mxu0
      %v3176 = vadd.f32 0.0, %v3175
      %3177 = vmatmul.f32.gmra.mxu0 %v694
      %v3178 = vpop.f32.mrf.mxu0
      %v3179 = vadd.f32 0.0, %v3178
      %3180 = vmatmul.f32.gmra.mxu0 %v696
      %v3181 = vpop.f32.mrf.mxu0
      %v3182 = vadd.f32 0.0, %v3181
      %3183 = vmatmul.f32.gmra.mxu0 %v1326
      %v3184 = vpop.f32.mrf.mxu0
      %v3185 = vadd.f32 0.0, %v3184
      %3186 = vmatmul.f32.gmra.mxu0 %v1328
      %v3187 = vpop.f32.mrf.mxu0
      %v3188 = vadd.f32 0.0, %v3187
      %3189 = vdwg.mxu0
      %v3190 = vadd.f32 %v3117, %v3149
      %v3191 = vadd.f32 %v3118, %v3152
      %v3192 = vadd.f32 %v3119, %v3155
      %v3193 = vadd.f32 %v3120, %v3158
      %v3194 = vadd.f32 %v3121, %v3161
      %v3195 = vadd.f32 %v3122, %v3164
      %v3196 = vadd.f32 %v3123, %v3167
      %v3197 = vadd.f32 %v3124, %v3170
      %v3198 = vadd.f32 %v3125, %v3173
      %v3199 = vadd.f32 %v3126, %v3176
      %v3200 = vadd.f32 %v3127, %v3179
      %v3201 = vadd.f32 %v3128, %v3182
      %v3202 = vadd.f32 %v3129, %v3185
      %v3203 = vadd.f32 %v3130, %v3188
      %3204 = vmatpush.msra.mxu0 %v1067
      %3205 = vmatpush.msra.mxu0 %v1066
      %3206 = vmatpush.msra.mxu0 %v1065
      %3207 = vmatpush.msra.mxu0 %v1064
      %3208 = vmatpush.msra.mxu0 %v1063
      %3209 = vmatpush.msra.mxu0 %v1062
      %3210 = vmatpush.msra.mxu0 %v1061
      %3211 = vmatpush.msra.mxu0 %v1060
      %3212 = vmatpush.msra.mxu0 %v1059
      %3213 = vmatpush.msra.mxu0 %v1058
      %3214 = vmatpush.msra.mxu0 %v1057
      %3215 = vmatpush.msra.mxu0 %v1056
      %3216 = vmatpush.msra.mxu0 %v1055
      %3217 = vmatpush.msra.mxu0 %v1054
      %3218 = vmatpush.msra.mxu0 %v1053
      %3219 = vmatpush.msra.mxu0 %v1052
      %3220 = vmatmul.f32.gmra.mxu0 %v1567
      %v3221 = vpop.f32.mrf.mxu0
      %v3222 = vadd.f32 0.0, %v3221
      %3223 = vmatmul.f32.gmra.mxu0 %v1569
      %v3224 = vpop.f32.mrf.mxu0
      %v3225 = vadd.f32 0.0, %v3224
      %3226 = vmatmul.f32.gmra.mxu0 %v1572
      %v3227 = vpop.f32.mrf.mxu0
      %v3228 = vadd.f32 0.0, %v3227
      %3229 = vmatmul.f32.gmra.mxu0 %v1574
      %v3230 = vpop.f32.mrf.mxu0
      %v3231 = vadd.f32 0.0, %v3230
      %3232 = vmatmul.f32.gmra.mxu0 %v1577
      %v3233 = vpop.f32.mrf.mxu0
      %v3234 = vadd.f32 0.0, %v3233
      %3235 = vmatmul.f32.gmra.mxu0 %v1579
      %v3236 = vpop.f32.mrf.mxu0
      %v3237 = vadd.f32 0.0, %v3236
      %3238 = vmatmul.f32.gmra.mxu0 %v1582
      %v3239 = vpop.f32.mrf.mxu0
      %v3240 = vadd.f32 0.0, %v3239
      %3241 = vmatmul.f32.gmra.mxu0 %v1584
      %v3242 = vpop.f32.mrf.mxu0
      %v3243 = vadd.f32 0.0, %v3242
      %3244 = vmatmul.f32.gmra.mxu0 %v1587
      %v3245 = vpop.f32.mrf.mxu0
      %v3246 = vadd.f32 0.0, %v3245
      %3247 = vmatmul.f32.gmra.mxu0 %v1589
      %v3248 = vpop.f32.mrf.mxu0
      %v3249 = vadd.f32 0.0, %v3248
      %3250 = vmatmul.f32.gmra.mxu0 %v1592
      %v3251 = vpop.f32.mrf.mxu0
      %v3252 = vadd.f32 0.0, %v3251
      %3253 = vmatmul.f32.gmra.mxu0 %v1594
      %v3254 = vpop.f32.mrf.mxu0
      %v3255 = vadd.f32 0.0, %v3254
      %3256 = vmatmul.f32.gmra.mxu0 %v2122
      %v3257 = vpop.f32.mrf.mxu0
      %v3258 = vadd.f32 0.0, %v3257
      %3259 = vmatmul.f32.gmra.mxu0 %v2124
      %v3260 = vpop.f32.mrf.mxu0
      %v3261 = vadd.f32 0.0, %v3260
      %3262 = vdwg.mxu0
      %v3263 = vadd.f32 %v3190, %v3222
      %v3264 = vadd.f32 %v3191, %v3225
      %v3265 = vadd.f32 %v3192, %v3228
      %v3266 = vadd.f32 %v3193, %v3231
      %v3267 = vadd.f32 %v3194, %v3234
      %v3268 = vadd.f32 %v3195, %v3237
      %v3269 = vadd.f32 %v3196, %v3240
      %v3270 = vadd.f32 %v3197, %v3243
      %v3271 = vadd.f32 %v3198, %v3246
      %v3272 = vadd.f32 %v3199, %v3249
      %v3273 = vadd.f32 %v3200, %v3252
      %v3274 = vadd.f32 %v3201, %v3255
      %v3275 = vadd.f32 %v3202, %v3258
      %v3276 = vadd.f32 %v3203, %v3261
      %3277 = vmatpush.msra.mxu0 %v1157
      %3278 = vmatpush.msra.mxu0 %v1156
      %3279 = vmatpush.msra.mxu0 %v1155
      %3280 = vmatpush.msra.mxu0 %v1154
      %3281 = vmatpush.msra.mxu0 %v1153
      %3282 = vmatpush.msra.mxu0 %v1152
      %3283 = vmatpush.msra.mxu0 %v1151
      %3284 = vmatpush.msra.mxu0 %v1150
      %3285 = vmatpush.msra.mxu0 %v1149
      %3286 = vmatpush.msra.mxu0 %v1148
      %3287 = vmatpush.msra.mxu0 %v1147
      %3288 = vmatpush.msra.mxu0 %v1146
      %3289 = vmatpush.msra.mxu0 %v1145
      %3290 = vmatpush.msra.mxu0 %v1144
      %3291 = vmatpush.msra.mxu0 %v1143
      %3292 = vmatpush.msra.mxu0 %v1142
      %3293 = vmatmul.f32.gmra.mxu0 %v468
      %v3294 = vpop.f32.mrf.mxu0
      %v3295 = vadd.f32 0.0, %v3294
      %3296 = vmatmul.f32.gmra.mxu0 %v469
      %v3297 = vpop.f32.mrf.mxu0
      %v3298 = vadd.f32 0.0, %v3297
      %3299 = vmatmul.f32.gmra.mxu0 %v471
      %v3300 = vpop.f32.mrf.mxu0
      %v3301 = vadd.f32 0.0, %v3300
      %3302 = vmatmul.f32.gmra.mxu0 %v472
      %v3303 = vpop.f32.mrf.mxu0
      %v3304 = vadd.f32 0.0, %v3303
      %3305 = vmatmul.f32.gmra.mxu0 %v474
      %v3306 = vpop.f32.mrf.mxu0
      %v3307 = vadd.f32 0.0, %v3306
      %3308 = vmatmul.f32.gmra.mxu0 %v475
      %v3309 = vpop.f32.mrf.mxu0
      %v3310 = vadd.f32 0.0, %v3309
      %3311 = vmatmul.f32.gmra.mxu0 %v477
      %v3312 = vpop.f32.mrf.mxu0
      %v3313 = vadd.f32 0.0, %v3312
      %3314 = vmatmul.f32.gmra.mxu0 %v478
      %v3315 = vpop.f32.mrf.mxu0
      %v3316 = vadd.f32 0.0, %v3315
      %3317 = vmatmul.f32.gmra.mxu0 %v480
      %v3318 = vpop.f32.mrf.mxu0
      %v3319 = vadd.f32 0.0, %v3318
      %3320 = vmatmul.f32.gmra.mxu0 %v481
      %v3321 = vpop.f32.mrf.mxu0
      %v3322 = vadd.f32 0.0, %v3321
      %3323 = vmatmul.f32.gmra.mxu0 %v483
      %v3324 = vpop.f32.mrf.mxu0
      %v3325 = vadd.f32 0.0, %v3324
      %3326 = vmatmul.f32.gmra.mxu0 %v484
      %v3327 = vpop.f32.mrf.mxu0
      %v3328 = vadd.f32 0.0, %v3327
      %3329 = vmatmul.f32.gmra.mxu0 %v486
      %v3330 = vpop.f32.mrf.mxu0
      %v3331 = vadd.f32 0.0, %v3330
      %3332 = vmatmul.f32.gmra.mxu0 %v487
      %v3333 = vpop.f32.mrf.mxu0
      %v3334 = vadd.f32 0.0, %v3333
      %3335 = vdwg.mxu0
      %v3336 = vadd.f32 %v3263, %v3295
      %v3337 = vadd.f32 %v3264, %v3298
      %v3338 = vadd.f32 %v3265, %v3301
      %v3339 = vadd.f32 %v3266, %v3304
      %v3340 = vadd.f32 %v3267, %v3307
      %v3341 = vadd.f32 %v3268, %v3310
      %v3342 = vadd.f32 %v3269, %v3313
      %v3343 = vadd.f32 %v3270, %v3316
      %v3344 = vadd.f32 %v3271, %v3319
      %v3345 = vadd.f32 %v3272, %v3322
      %v3346 = vadd.f32 %v3273, %v3325
      %v3347 = vadd.f32 %v3274, %v3328
      %v3348 = vadd.f32 %v3275, %v3331
      %v3349 = vadd.f32 %v3276, %v3334
      %3350 = vmatpush.msra.mxu0 %v1247
      %3351 = vmatpush.msra.mxu0 %v1246
      %3352 = vmatpush.msra.mxu0 %v1245
      %3353 = vmatpush.msra.mxu0 %v1244
      %3354 = vmatpush.msra.mxu0 %v1243
      %3355 = vmatpush.msra.mxu0 %v1242
      %3356 = vmatpush.msra.mxu0 %v1241
      %3357 = vmatpush.msra.mxu0 %v1240
      %3358 = vmatpush.msra.mxu0 %v1239
      %3359 = vmatpush.msra.mxu0 %v1238
      %3360 = vmatpush.msra.mxu0 %v1237
      %3361 = vmatpush.msra.mxu0 %v1236
      %3362 = vmatpush.msra.mxu0 %v1235
      %3363 = vmatpush.msra.mxu0 %v1234
      %3364 = vmatpush.msra.mxu0 %v1233
      %3365 = vmatpush.msra.mxu0 %v1232
      %3366 = vmatmul.f32.gmra.mxu0 %v1009
      %v3367 = vpop.f32.mrf.mxu0
      %v3368 = vadd.f32 0.0, %v3367
      %3369 = vmatmul.f32.gmra.mxu0 %v1011
      %v3370 = vpop.f32.mrf.mxu0
      %v3371 = vadd.f32 0.0, %v3370
      %3372 = vmatmul.f32.gmra.mxu0 %v1014
      %v3373 = vpop.f32.mrf.mxu0
      %v3374 = vadd.f32 0.0, %v3373
      %3375 = vmatmul.f32.gmra.mxu0 %v1016
      %v3376 = vpop.f32.mrf.mxu0
      %v3377 = vadd.f32 0.0, %v3376
      %3378 = vmatmul.f32.gmra.mxu0 %v1019
      %v3379 = vpop.f32.mrf.mxu0
      %v3380 = vadd.f32 0.0, %v3379
      %3381 = vmatmul.f32.gmra.mxu0 %v1021
      %v3382 = vpop.f32.mrf.mxu0
      %v3383 = vadd.f32 0.0, %v3382
      %3384 = vmatmul.f32.gmra.mxu0 %v1024
      %v3385 = vpop.f32.mrf.mxu0
      %v3386 = vadd.f32 0.0, %v3385
      %3387 = vmatmul.f32.gmra.mxu0 %v1026
      %v3388 = vpop.f32.mrf.mxu0
      %v3389 = vadd.f32 0.0, %v3388
      %3390 = vmatmul.f32.gmra.mxu0 %v1029
      %v3391 = vpop.f32.mrf.mxu0
      %v3392 = vadd.f32 0.0, %v3391
      %3393 = vmatmul.f32.gmra.mxu0 %v1031
      %v3394 = vpop.f32.mrf.mxu0
      %v3395 = vadd.f32 0.0, %v3394
      %3396 = vmatmul.f32.gmra.mxu0 %v1034
      %v3397 = vpop.f32.mrf.mxu0
      %v3398 = vadd.f32 0.0, %v3397
      %3399 = vmatmul.f32.gmra.mxu0 %v1036
      %v3400 = vpop.f32.mrf.mxu0
      %v3401 = vadd.f32 0.0, %v3400
      %3402 = vmatmul.f32.gmra.mxu0 %v2775
      %v3403 = vpop.f32.mrf.mxu0
      %v3404 = vadd.f32 0.0, %v3403
      %3405 = vmatmul.f32.gmra.mxu0 %v2777
      %v3406 = vpop.f32.mrf.mxu0
      %v3407 = vadd.f32 0.0, %v3406
      %3408 = vdwg.mxu0
      %v3409 = vadd.f32 %v3336, %v3368
      %v3410 = vadd.f32 %v3337, %v3371
      %v3411 = vadd.f32 %v3338, %v3374
      %v3412 = vadd.f32 %v3339, %v3377
      %v3413 = vadd.f32 %v3340, %v3380
      %v3414 = vadd.f32 %v3341, %v3383
      %v3415 = vadd.f32 %v3342, %v3386
      %v3416 = vadd.f32 %v3343, %v3389
      %v3417 = vadd.f32 %v3344, %v3392
      %v3418 = vadd.f32 %v3345, %v3395
      %v3419 = vadd.f32 %v3346, %v3398
      %v3420 = vadd.f32 %v3347, %v3401
      %v3421 = vadd.f32 %v3348, %v3404
      %v3422 = vadd.f32 %v3349, %v3407
      %v3426 = vrot.slane %v486, 1
      %v3427 = vrot.slane %v487, 1
      %v3428 = vsel %vm661, %v3426, %v3427
      %v3429 = vrot.slane %v488, 1
      %v3430 = vsel %vm661, %v3427, %v3429
      %3433 = vmatpush.msra.mxu0 %v1347
      %3434 = vmatpush.msra.mxu0 %v1346
      %3435 = vmatpush.msra.mxu0 %v1345
      %3436 = vmatpush.msra.mxu0 %v1344
      %3437 = vmatpush.msra.mxu0 %v1343
      %3438 = vmatpush.msra.mxu0 %v1342
      %3439 = vmatpush.msra.mxu0 %v1341
      %3440 = vmatpush.msra.mxu0 %v1340
      %3441 = vmatpush.msra.mxu0 %v1339
      %3442 = vmatpush.msra.mxu0 %v1338
      %3443 = vmatpush.msra.mxu0 %v1337
      %3444 = vmatpush.msra.mxu0 %v1336
      %3445 = vmatpush.msra.mxu0 %v1335
      %3446 = vmatpush.msra.mxu0 %v1334
      %3447 = vmatpush.msra.mxu0 %v1333
      %3448 = vmatpush.msra.mxu0 %v1332
      %3449 = vmatmul.f32.gmra.mxu0 %v1856
      %v3450 = vpop.f32.mrf.mxu0
      %v3451 = vadd.f32 0.0, %v3450
      %3452 = vmatmul.f32.gmra.mxu0 %v1858
      %v3453 = vpop.f32.mrf.mxu0
      %v3454 = vadd.f32 0.0, %v3453
      %3455 = vmatmul.f32.gmra.mxu0 %v1861
      %v3456 = vpop.f32.mrf.mxu0
      %v3457 = vadd.f32 0.0, %v3456
      %3458 = vmatmul.f32.gmra.mxu0 %v1863
      %v3459 = vpop.f32.mrf.mxu0
      %v3460 = vadd.f32 0.0, %v3459
      %3461 = vmatmul.f32.gmra.mxu0 %v1866
      %v3462 = vpop.f32.mrf.mxu0
      %v3463 = vadd.f32 0.0, %v3462
      %3464 = vmatmul.f32.gmra.mxu0 %v1868
      %v3465 = vpop.f32.mrf.mxu0
      %v3466 = vadd.f32 0.0, %v3465
      %3467 = vmatmul.f32.gmra.mxu0 %v1871
      %v3468 = vpop.f32.mrf.mxu0
      %v3469 = vadd.f32 0.0, %v3468
      %3470 = vmatmul.f32.gmra.mxu0 %v1873
      %v3471 = vpop.f32.mrf.mxu0
      %v3472 = vadd.f32 0.0, %v3471
      %3473 = vmatmul.f32.gmra.mxu0 %v1876
      %v3474 = vpop.f32.mrf.mxu0
      %v3475 = vadd.f32 0.0, %v3474
      %3476 = vmatmul.f32.gmra.mxu0 %v1878
      %v3477 = vpop.f32.mrf.mxu0
      %v3478 = vadd.f32 0.0, %v3477
      %3479 = vmatmul.f32.gmra.mxu0 %v1881
      %v3480 = vpop.f32.mrf.mxu0
      %v3481 = vadd.f32 0.0, %v3480
      %3482 = vmatmul.f32.gmra.mxu0 %v1883
      %v3483 = vpop.f32.mrf.mxu0
      %v3484 = vadd.f32 0.0, %v3483
      %3485 = vmatmul.f32.gmra.mxu0 %v3428
      %v3486 = vpop.f32.mrf.mxu0
      %v3487 = vadd.f32 0.0, %v3486
      %3488 = vmatmul.f32.gmra.mxu0 %v3430
      %v3489 = vpop.f32.mrf.mxu0
      %v3490 = vadd.f32 0.0, %v3489
      %3491 = vdwg.mxu0
      %v3492 = vadd.f32 %v3409, %v3451
      %v3493 = vadd.f32 %v3410, %v3454
      %v3494 = vadd.f32 %v3411, %v3457
      %v3495 = vadd.f32 %v3412, %v3460
      %v3496 = vadd.f32 %v3413, %v3463
      %v3497 = vadd.f32 %v3414, %v3466
      %v3498 = vadd.f32 %v3415, %v3469
      %v3499 = vadd.f32 %v3416, %v3472
      %v3500 = vadd.f32 %v3417, %v3475
      %v3501 = vadd.f32 %v3418, %v3478
      %v3502 = vadd.f32 %v3419, %v3481
      %v3503 = vadd.f32 %v3420, %v3484
      %v3504 = vadd.f32 %v3421, %v3487
      %v3505 = vadd.f32 %v3422, %v3490
      %v3506 = vmax.f32 %v2853, %v3492
      %v3507 = vmax.f32 %v2854, %v3493
      %v3508 = vmax.f32 %v2855, %v3494
      %v3509 = vmax.f32 %v2856, %v3495
      %v3510 = vmax.f32 %v2857, %v3496
      %v3511 = vmax.f32 %v2858, %v3497
      %v3512 = vmax.f32 %v2859, %v3498
      %v3513 = vmax.f32 %v2860, %v3499
      %v3514 = vmax.f32 %v2861, %v3500
      %v3515 = vmax.f32 %v2862, %v3501
      %v3516 = vmax.f32 %v2863, %v3502
      %v3517 = vmax.f32 %v2864, %v3503
      %v3518 = vmax.f32 %v2865, %v3504
      %v3519 = vmax.f32 %v2866, %v3505
      %v3520 = vld [vmem:[%s5] sm:$0x1]
      %v3522 = vperm.slane %v3520, 0
      %v3524 = vadd.f32 %v3506, %v3522
      %v3525 = vadd.f32 %v3507, %v3522
      %v3526 = vadd.f32 %v3508, %v3522
      %v3527 = vadd.f32 %v3509, %v3522
      %v3528 = vadd.f32 %v3510, %v3522
      %v3529 = vadd.f32 %v3511, %v3522
      %v3530 = vadd.f32 %v3512, %v3522
      %v3531 = vadd.f32 %v3513, %v3522
      %v3532 = vadd.f32 %v3514, %v3522
      %v3533 = vadd.f32 %v3515, %v3522
      %v3534 = vadd.f32 %v3516, %v3522
      %v3535 = vadd.f32 %v3517, %v3522
      %v3536 = vadd.f32 %v3518, %v3522
      %v3537 = vadd.f32 %v3519, %v3522
      %v3538 = vmax.f32 %v3524, 0.0
      %v3539 = vmax.f32 %v3525, 0.0
      %v3540 = vmax.f32 %v3526, 0.0
      %v3541 = vmax.f32 %v3527, 0.0
      %v3542 = vmax.f32 %v3528, 0.0
      %v3543 = vmax.f32 %v3529, 0.0
      %v3544 = vmax.f32 %v3530, 0.0
      %v3545 = vmax.f32 %v3531, 0.0
      %v3546 = vmax.f32 %v3532, 0.0
      %v3547 = vmax.f32 %v3533, 0.0
      %v3548 = vmax.f32 %v3534, 0.0
      %v3549 = vmax.f32 %v3535, 0.0
      %v3550 = vmax.f32 %v3536, 0.0
      %v3551 = vmax.f32 %v3537, 0.0
      %3552 = vst [vmem:[%s391] sm:$0xff] %v3538
      %3553 = vst [vmem:[%s391 + $0x8] sm:$0x3f] %v3539
      %3554 = vst [vmem:[%s391 + $0x10] sm:$0xff] %v3540
      %3555 = vst [vmem:[%s391 + $0x18] sm:$0x3f] %v3541
      %3556 = vst [vmem:[%s391 + $0x20] sm:$0xff] %v3542
      %3557 = vst [vmem:[%s391 + $0x28] sm:$0x3f] %v3543
      %3558 = vst [vmem:[%s391 + $0x30] sm:$0xff] %v3544
      %3559 = vst [vmem:[%s391 + $0x38] sm:$0x3f] %v3545
      %3560 = vst [vmem:[%s391 + $0x40] sm:$0xff] %v3546
      %3561 = vst [vmem:[%s391 + $0x48] sm:$0x3f] %v3547
      %3562 = vst [vmem:[%s391 + $0x50] sm:$0xff] %v3548
      %3563 = vst [vmem:[%s391 + $0x58] sm:$0x3f] %v3549
      %3564 = vst [vmem:[%s391 + $0x60] sm:$0xff] %v3550
      %3565 = vst [vmem:[%s391 + $0x68] sm:$0x3f] %v3551
      %s3566 = smul.u32 7, %s22
      %p3567 = scmp.lt.s32.totalorder %s21, 1
      %s3568 = scalar_select %p3567, %s21, 1
      %p3569 = scmp.lt.s32.totalorder %s3566, 13
      %s3570 = scalar_select %p3569, %s3566, 13
      %s3571 = smul.addr %s3570, 2
      %s3572 = smul.addr %s3568, 28
      %s3573 = sadd.s32 %s3571, %s3572
      %s3574 = smul.addr %s3573, 8
      %s3575 = scalar_lea.vmem %s6, %s3574
      // Predicated region
      $region45: #{vgg_forward.5} parent=43 // pred_check
        %p3576 = pneg %p203
      $region46: #{vgg_forward.5} parent=43 // pred_check_branch
        %3578 = sbr.rel (%p3576) target = $region48
      $region47: #{vgg_forward.5} parent=43 // pred_region
        %s3579 = smul.u32 7, %s22
      $region48: #{vgg_forward.5} parent=43 // pred_fallthru
        _
    $region44: #{vgg_forward.5} parent=5 // pred_fallthru
      _
    %p3580 = scmp.le.s32.totalorder 2, %s12
    // Predicated region
    $region49: #{vgg_forward.5} parent=5 // pred_check
      %p3581 = pneg %p3580
    $region50: #{vgg_forward.5} parent=5 // pred_check_branch
      %3583 = sbr.rel (%p3581) target = $region52
    $region51: #{vgg_forward.5} parent=5 // pred_region
      %s3584 = ssub.s32 %s12, 2
      // Predicated region
      $region53: #{vgg_forward.5} parent=51 // pred_check
        %p3585 = pneg %p209
      $region54: #{vgg_forward.5} parent=51 // pred_check_branch
        %3587 = sbr.rel (%p3585) target = $region56
      $region55: #{vgg_forward.5} parent=51 // pred_region
        %s3588 = smul.u32 7, %s24
        %p3589 = scmp.lt.s32.totalorder %s23, 1
        %s3590 = scalar_select %p3589, %s23, 1
        %p3591 = scmp.lt.s32.totalorder %s3588, 13
        %s3592 = scalar_select %p3591, %s3588, 13
        %s3593 = smul.addr %s3592, 2
        %s3594 = smul.addr %s3590, 28
        %s3595 = sadd.s32 %s3593, %s3594
        %s3596 = smul.addr %s3595, 8
        %s3597 = scalar_lea.vmem %s6, %s3596
      $region56: #{vgg_forward.5} parent=51 // pred_fallthru
        _
    $region52: #{vgg_forward.5} parent=5 // pred_fallthru
      _
  $region6: #{vgg_forward.5} parent=0 // loop_footer
    %s16 = sadd.s32 1, %s12
  $region7: #{vgg_forward.5} parent=0 // loop_footer_branch
    %11 = sbr.rel target = $region3
  $region8: #{vgg_forward.5} parent=0 // loop_exit
    _

// kernel: vgg_forward.7
$region0: #{vgg_forward.7}
  #allocation0 [shape = 'u32[]', space=smem, size = 0x4, offset = 0x4, fixed_abs, tag = 'smem constant byte address 0x4 - core index']
  #allocation1 [shape = 'u32[72,128]{1,0:T(1,128)}', space=vmem, size = 0x9000, scoped, tag = 'internal scratch']
  %s0 = inlined_call_operand.vmem [shape: f32[2,896], index: 0, kind: input, shape index: {}]
  %s1 = inlined_call_operand.vmem [shape: f32[896,128], index: 1, kind: input, shape index: {}]
  %s2 = inlined_call_operand.vmem [shape: f32[1,128], index: 2, kind: input, shape index: {}]
  %s3 = inlined_call_operand.vmem [shape: f32[128,128], index: 3, kind: input, shape index: {}]
  %s4 = inlined_call_operand.vmem [shape: f32[1,128], index: 4, kind: input, shape index: {}]
  %s5 = inlined_call_operand.vmem [shape: f32[128,128], index: 5, kind: input, shape index: {}]
  %s6 = inlined_call_operand.vmem [shape: f32[1,128], index: 6, kind: input, shape index: {}]
  %s7 = inlined_call_operand.hbm [shape: f32[2,128], index: 7, kind: output, shape index: {}]
  %s8 = sld [smem:[#allocation0]]
  $region38: #{vgg_forward.7} parent=0
    _
  %s10 = ssub.s32 1, %s8
  %s11 = scalar_select 0, %s10, %s8
  $region1: #{vgg_forward.7} parent=0
    #allocation2 [shape = 'u8[1024]{0}', space=vmem, size = 0x400, scoped, tag = 'output window, operand 0, single buffered']
    #allocation3 [shape = 's32[1]{0}', space=sflag, size = 0x4, scoped, tag = 'scoped memory for vgg_forward.7']
    %12 = vsyncpa [#allocation3], 0
    // Predicated region
    $region2: #{vgg_forward.7} parent=1 // pred_check
      _
    $region3: #{vgg_forward.7} parent=1 // pred_check_branch
      %14 = sbr.rel (0) target = $region5
    $region4: #{vgg_forward.7} parent=1 // pred_region
      _
    $region5: #{vgg_forward.7} parent=1 // pred_fallthru
      _
    // Predicated region
    $region6: #{vgg_forward.7} parent=1 // pred_check
      _
    $region7: #{vgg_forward.7} parent=1 // pred_check_branch
      %16 = sbr.rel (0) target = $region9
    $region8: #{vgg_forward.7} parent=1 // pred_region
      _
    $region9: #{vgg_forward.7} parent=1 // pred_fallthru
      _
    // Predicated region
    $region10: #{vgg_forward.7} parent=1 // pred_check
      _
    $region11: #{vgg_forward.7} parent=1 // pred_check_branch
      %18 = sbr.rel (0) target = $region13
    $region12: #{vgg_forward.7} parent=1 // pred_region
      _
    $region13: #{vgg_forward.7} parent=1 // pred_fallthru
      _
    // Predicated region
    $region14: #{vgg_forward.7} parent=1 // pred_check
      _
    $region15: #{vgg_forward.7} parent=1 // pred_check_branch
      %20 = sbr.rel (0) target = $region17
    $region16: #{vgg_forward.7} parent=1 // pred_region
      _
    $region17: #{vgg_forward.7} parent=1 // pred_fallthru
      _
    // Predicated region
    $region18: #{vgg_forward.7} parent=1 // pred_check
      _
    $region19: #{vgg_forward.7} parent=1 // pred_check_branch
      %22 = sbr.rel (0) target = $region21
    $region20: #{vgg_forward.7} parent=1 // pred_region
      _
    $region21: #{vgg_forward.7} parent=1 // pred_fallthru
      _
    // Predicated region
    $region22: #{vgg_forward.7} parent=1 // pred_check
      _
    $region23: #{vgg_forward.7} parent=1 // pred_check_branch
      %24 = sbr.rel (0) target = $region25
    $region24: #{vgg_forward.7} parent=1 // pred_region
      _
    $region25: #{vgg_forward.7} parent=1 // pred_fallthru
      _
    // Predicated region
    $region26: #{vgg_forward.7} parent=1 // pred_check
      _
    $region27: #{vgg_forward.7} parent=1 // pred_check_branch
      %26 = sbr.rel (0) target = $region29
    $region28: #{vgg_forward.7} parent=1 // pred_region
      _
    $region29: #{vgg_forward.7} parent=1 // pred_fallthru
      _
    %v27 = vld [vmem:[%s0] sm:$0xff]
    %v28 = vld [vmem:[%s0 + $0x8] sm:$0x3f]
    %v29 = vld [vmem:[%s1] sm:$0xff]
    %v30 = vld [vmem:[%s1 + $0x8] sm:$0xff]
    %v31 = vld [vmem:[%s1 + $0x10] sm:$0xff]
    %v32 = vld [vmem:[%s1 + $0x18] sm:$0xff]
    %v33 = vld [vmem:[%s1 + $0x20] sm:$0xff]
    %v34 = vld [vmem:[%s1 + $0x28] sm:$0xff]
    %v35 = vld [vmem:[%s1 + $0x30] sm:$0xff]
    %v36 = vld [vmem:[%s1 + $0x38] sm:$0xff]
    %v37 = vld [vmem:[%s1 + $0x40] sm:$0xff]
    %v38 = vld [vmem:[%s1 + $0x48] sm:$0xff]
    %v39 = vld [vmem:[%s1 + $0x50] sm:$0xff]
    %v40 = vld [vmem:[%s1 + $0x58] sm:$0xff]
    %v41 = vld [vmem:[%s1 + $0x60] sm:$0xff]
    %v42 = vld [vmem:[%s1 + $0x68] sm:$0xff]
    %v43 = vld [vmem:[%s1 + $0x70] sm:$0xff]
    %v44 = vld [vmem:[%s1 + $0x78] sm:$0xff]
    %v45 = vld [vmem:[%s1 + $0x80] sm:$0xff]
    %v46 = vld [vmem:[%s1 + $0x88] sm:$0xff]
    %v47 = vld [vmem:[%s1 + $0x90] sm:$0xff]
    %v48 = vld [vmem:[%s1 + $0x98] sm:$0xff]
    %v49 = vld [vmem:[%s1 + $0xa0] sm:$0xff]
    %v50 = vld [vmem:[%s1 + $0xa8] sm:$0xff]
    %v51 = vld [vmem:[%s1 + $0xb0] sm:$0xff]
    %v52 = vld [vmem:[%s1 + $0xb8] sm:$0xff]
    %v53 = vld [vmem:[%s1 + $0xc0] sm:$0xff]
    %v54 = vld [vmem:[%s1 + $0xc8] sm:$0xff]
    %v55 = vld [vmem:[%s1 + $0xd0] sm:$0xff]
    %v56 = vld [vmem:[%s1 + $0xd8] sm:$0xff]
    %v57 = vld [vmem:[%s1 + $0xe0] sm:$0xff]
    %v58 = vld [vmem:[%s1 + $0xe8] sm:$0xff]
    %v59 = vld [vmem:[%s1 + $0xf0] sm:$0xff]
    %v60 = vld [vmem:[%s1 + $0xf8] sm:$0xff]
    %v61 = vld [vmem:[%s1 + $0x100] sm:$0xff]
    %v62 = vld [vmem:[%s1 + $0x108] sm:$0xff]
    %v63 = vld [vmem:[%s1 + $0x110] sm:$0xff]
    %v64 = vld [vmem:[%s1 + $0x118] sm:$0xff]
    %v65 = vld [vmem:[%s1 + $0x120] sm:$0xff]
    %v66 = vld [vmem:[%s1 + $0x128] sm:$0xff]
    %v67 = vld [vmem:[%s1 + $0x130] sm:$0xff]
    %v68 = vld [vmem:[%s1 + $0x138] sm:$0xff]
    %v69 = vld [vmem:[%s1 + $0x140] sm:$0xff]
    %v70 = vld [vmem:[%s1 + $0x148] sm:$0xff]
    %v71 = vld [vmem:[%s1 + $0x150] sm:$0xff]
    %v72 = vld [vmem:[%s1 + $0x158] sm:$0xff]
    %v73 = vld [vmem:[%s1 + $0x160] sm:$0xff]
    %v74 = vld [vmem:[%s1 + $0x168] sm:$0xff]
    %v75 = vld [vmem:[%s1 + $0x170] sm:$0xff]
    %v76 = vld [vmem:[%s1 + $0x178] sm:$0xff]
    %v77 = vld [vmem:[%s1 + $0x180] sm:$0xff]
    %v78 = vld [vmem:[%s1 + $0x188] sm:$0xff]
    %v79 = vld [vmem:[%s1 + $0x190] sm:$0xff]
    %v80 = vld [vmem:[%s1 + $0x198] sm:$0xff]
    %v81 = vld [vmem:[%s1 + $0x1a0] sm:$0xff]
    %v82 = vld [vmem:[%s1 + $0x1a8] sm:$0xff]
    %v83 = vld [vmem:[%s1 + $0x1b0] sm:$0xff]
    %v84 = vld [vmem:[%s1 + $0x1b8] sm:$0xff]
    %v85 = vld [vmem:[%s1 + $0x1c0] sm:$0xff]
    %v86 = vld [vmem:[%s1 + $0x1c8] sm:$0xff]
    %v87 = vld [vmem:[%s1 + $0x1d0] sm:$0xff]
    %v88 = vld [vmem:[%s1 + $0x1d8] sm:$0xff]
    %v89 = vld [vmem:[%s1 + $0x1e0] sm:$0xff]
    %v90 = vld [vmem:[%s1 + $0x1e8] sm:$0xff]
    %v91 = vld [vmem:[%s1 + $0x1f0] sm:$0xff]
    %v92 = vld [vmem:[%s1 + $0x1f8] sm:$0xff]
    %v93 = vld [vmem:[%s1 + $0x200] sm:$0xff]
    %v94 = vld [vmem:[%s1 + $0x208] sm:$0xff]
    %v95 = vld [vmem:[%s1 + $0x210] sm:$0xff]
    %v96 = vld [vmem:[%s1 + $0x218] sm:$0xff]
    %v97 = vld [vmem:[%s1 + $0x220] sm:$0xff]
    %v98 = vld [vmem:[%s1 + $0x228] sm:$0xff]
    %v99 = vld [vmem:[%s1 + $0x230] sm:$0xff]
    %v100 = vld [vmem:[%s1 + $0x238] sm:$0xff]
    %v101 = vld [vmem:[%s1 + $0x240] sm:$0xff]
    %v102 = vld [vmem:[%s1 + $0x248] sm:$0xff]
    %v103 = vld [vmem:[%s1 + $0x250] sm:$0xff]
    %v104 = vld [vmem:[%s1 + $0x258] sm:$0xff]
    %v105 = vld [vmem:[%s1 + $0x260] sm:$0xff]
    %v106 = vld [vmem:[%s1 + $0x268] sm:$0xff]
    %v107 = vld [vmem:[%s1 + $0x270] sm:$0xff]
    %v108 = vld [vmem:[%s1 + $0x278] sm:$0xff]
    %v109 = vld [vmem:[%s1 + $0x280] sm:$0xff]
    %v110 = vld [vmem:[%s1 + $0x288] sm:$0xff]
    %v111 = vld [vmem:[%s1 + $0x290] sm:$0xff]
    %v112 = vld [vmem:[%s1 + $0x298] sm:$0xff]
    %v113 = vld [vmem:[%s1 + $0x2a0] sm:$0xff]
    %v114 = vld [vmem:[%s1 + $0x2a8] sm:$0xff]
    %v115 = vld [vmem:[%s1 + $0x2b0] sm:$0xff]
    %v116 = vld [vmem:[%s1 + $0x2b8] sm:$0xff]
    %v117 = vld [vmem:[%s1 + $0x2c0] sm:$0xff]
    %v118 = vld [vmem:[%s1 + $0x2c8] sm:$0xff]
    %v119 = vld [vmem:[%s1 + $0x2d0] sm:$0xff]
    %v120 = vld [vmem:[%s1 + $0x2d8] sm:$0xff]
    %v121 = vld [vmem:[%s1 + $0x2e0] sm:$0xff]
    %v122 = vld [vmem:[%s1 + $0x2e8] sm:$0xff]
    %v123 = vld [vmem:[%s1 + $0x2f0] sm:$0xff]
    %v124 = vld [vmem:[%s1 + $0x2f8] sm:$0xff]
    %v125 = vld [vmem:[%s1 + $0x300] sm:$0xff]
    %v126 = vld [vmem:[%s1 + $0x308] sm:$0xff]
    %v127 = vld [vmem:[%s1 + $0x310] sm:$0xff]
    %v128 = vld [vmem:[%s1 + $0x318] sm:$0xff]
    %v129 = vld [vmem:[%s1 + $0x320] sm:$0xff]
    %v130 = vld [vmem:[%s1 + $0x328] sm:$0xff]
    %v131 = vld [vmem:[%s1 + $0x330] sm:$0xff]
    %v132 = vld [vmem:[%s1 + $0x338] sm:$0xff]
    %v133 = vld [vmem:[%s1 + $0x340] sm:$0xff]
    %v134 = vld [vmem:[%s1 + $0x348] sm:$0xff]
    %v135 = vld [vmem:[%s1 + $0x350] sm:$0xff]
    %v136 = vld [vmem:[%s1 + $0x358] sm:$0xff]
    %v137 = vld [vmem:[%s1 + $0x360] sm:$0xff]
    %v138 = vld [vmem:[%s1 + $0x368] sm:$0xff]
    %v139 = vld [vmem:[%s1 + $0x370] sm:$0xff]
    %v140 = vld [vmem:[%s1 + $0x378] sm:$0xff]
    %v141 = vld [vmem:[%s2] sm:$0x1]
    %v143 = vperm.slane %v141, 0
    %147 = vst [vmem:[#allocation1] ss:$4 sm:$0xff] %v27
    %s148 = scalar_lea.vmem [#allocation1], 32
    %149 = vst [vmem:[%s148] ss:$4 sm:$0xff] %v28
    %v150 = vld.sshfl [vmem:[#allocation1] sm:$0xff pattern:$0x73625140]
    %v151 = vld.sshfl [vmem:[#allocation1 + $0x8] sm:$0xff pattern:$0x73625140]
    %v152 = vld.sshfl [vmem:[#allocation1 + $0x10] sm:$0xff pattern:$0x73625140]
    %v153 = vld.sshfl [vmem:[#allocation1 + $0x18] sm:$0xff pattern:$0x73625140]
    %v154 = vld.sshfl [vmem:[#allocation1 + $0x20] sm:$0xff pattern:$0x73625140]
    %v155 = vld.sshfl [vmem:[#allocation1 + $0x28] sm:$0xff pattern:$0x73625140]
    %v156 = vld.sshfl [vmem:[#allocation1 + $0x30] sm:$0xff pattern:$0x73625140]
    %164 = vmatpush.msra.mxu0 %v44
    %165 = vmatpush.msra.mxu0 %v43
    %166 = vmatpush.msra.mxu0 %v42
    %167 = vmatpush.msra.mxu0 %v41
    %168 = vmatpush.msra.mxu0 %v40
    %169 = vmatpush.msra.mxu0 %v39
    %170 = vmatpush.msra.mxu0 %v38
    %171 = vmatpush.msra.mxu0 %v37
    %172 = vmatpush.msra.mxu0 %v36
    %173 = vmatpush.msra.mxu0 %v35
    %174 = vmatpush.msra.mxu0 %v34
    %175 = vmatpush.msra.mxu0 %v33
    %176 = vmatpush.msra.mxu0 %v32
    %177 = vmatpush.msra.mxu0 %v31
    %178 = vmatpush.msra.mxu0 %v30
    %179 = vmatpush.msra.mxu0 %v29
    %180 = vmatmul.f32.gmra.mxu0 %v150
    %v181 = vpop.f32.mrf.mxu0
    %v182 = vadd.f32 %v143, %v181
    %183 = vdwg.mxu0
    %184 = vmatpush.msra.mxu0 %v60
    %185 = vmatpush.msra.mxu0 %v59
    %186 = vmatpush.msra.mxu0 %v58
    %187 = vmatpush.msra.mxu0 %v57
    %188 = vmatpush.msra.mxu0 %v56
    %189 = vmatpush.msra.mxu0 %v55
    %190 = vmatpush.msra.mxu0 %v54
    %191 = vmatpush.msra.mxu0 %v53
    %192 = vmatpush.msra.mxu0 %v52
    %193 = vmatpush.msra.mxu0 %v51
    %194 = vmatpush.msra.mxu0 %v50
    %195 = vmatpush.msra.mxu0 %v49
    %196 = vmatpush.msra.mxu0 %v48
    %197 = vmatpush.msra.mxu0 %v47
    %198 = vmatpush.msra.mxu0 %v46
    %199 = vmatpush.msra.mxu0 %v45
    %200 = vmatmul.f32.gmra.mxu0 %v151
    %v201 = vpop.f32.mrf.mxu0
    %v202 = vadd.f32 %v182, %v201
    %203 = vdwg.mxu0
    %204 = vmatpush.msra.mxu0 %v76
    %205 = vmatpush.msra.mxu0 %v75
    %206 = vmatpush.msra.mxu0 %v74
    %207 = vmatpush.msra.mxu0 %v73
    %208 = vmatpush.msra.mxu0 %v72
    %209 = vmatpush.msra.mxu0 %v71
    %210 = vmatpush.msra.mxu0 %v70
    %211 = vmatpush.msra.mxu0 %v69
    %212 = vmatpush.msra.mxu0 %v68
    %213 = vmatpush.msra.mxu0 %v67
    %214 = vmatpush.msra.mxu0 %v66
    %215 = vmatpush.msra.mxu0 %v65
    %216 = vmatpush.msra.mxu0 %v64
    %217 = vmatpush.msra.mxu0 %v63
    %218 = vmatpush.msra.mxu0 %v62
    %219 = vmatpush.msra.mxu0 %v61
    %220 = vmatmul.f32.gmra.mxu0 %v152
    %v221 = vpop.f32.mrf.mxu0
    %v222 = vadd.f32 %v202, %v221
    %223 = vdwg.mxu0
    %224 = vmatpush.msra.mxu0 %v92
    %225 = vmatpush.msra.mxu0 %v91
    %226 = vmatpush.msra.mxu0 %v90
    %227 = vmatpush.msra.mxu0 %v89
    %228 = vmatpush.msra.mxu0 %v88
    %229 = vmatpush.msra.mxu0 %v87
    %230 = vmatpush.msra.mxu0 %v86
    %231 = vmatpush.msra.mxu0 %v85
    %232 = vmatpush.msra.mxu0 %v84
    %233 = vmatpush.msra.mxu0 %v83
    %234 = vmatpush.msra.mxu0 %v82
    %235 = vmatpush.msra.mxu0 %v81
    %236 = vmatpush.msra.mxu0 %v80
    %237 = vmatpush.msra.mxu0 %v79
    %238 = vmatpush.msra.mxu0 %v78
    %239 = vmatpush.msra.mxu0 %v77
    %240 = vmatmul.f32.gmra.mxu0 %v153
    %v241 = vpop.f32.mrf.mxu0
    %v242 = vadd.f32 %v222, %v241
    %243 = vdwg.mxu0
    %244 = vmatpush.msra.mxu0 %v108
    %245 = vmatpush.msra.mxu0 %v107
    %246 = vmatpush.msra.mxu0 %v106
    %247 = vmatpush.msra.mxu0 %v105
    %248 = vmatpush.msra.mxu0 %v104
    %249 = vmatpush.msra.mxu0 %v103
    %250 = vmatpush.msra.mxu0 %v102
    %251 = vmatpush.msra.mxu0 %v101
    %252 = vmatpush.msra.mxu0 %v100
    %253 = vmatpush.msra.mxu0 %v99
    %254 = vmatpush.msra.mxu0 %v98
    %255 = vmatpush.msra.mxu0 %v97
    %256 = vmatpush.msra.mxu0 %v96
    %257 = vmatpush.msra.mxu0 %v95
    %258 = vmatpush.msra.mxu0 %v94
    %259 = vmatpush.msra.mxu0 %v93
    %260 = vmatmul.f32.gmra.mxu0 %v154
    %v261 = vpop.f32.mrf.mxu0
    %v262 = vadd.f32 %v242, %v261
    %263 = vdwg.mxu0
    %264 = vmatpush.msra.mxu0 %v124
    %265 = vmatpush.msra.mxu0 %v123
    %266 = vmatpush.msra.mxu0 %v122
    %267 = vmatpush.msra.mxu0 %v121
    %268 = vmatpush.msra.mxu0 %v120
    %269 = vmatpush.msra.mxu0 %v119
    %270 = vmatpush.msra.mxu0 %v118
    %271 = vmatpush.msra.mxu0 %v117
    %272 = vmatpush.msra.mxu0 %v116
    %273 = vmatpush.msra.mxu0 %v115
    %274 = vmatpush.msra.mxu0 %v114
    %275 = vmatpush.msra.mxu0 %v113
    %276 = vmatpush.msra.mxu0 %v112
    %277 = vmatpush.msra.mxu0 %v111
    %278 = vmatpush.msra.mxu0 %v110
    %279 = vmatpush.msra.mxu0 %v109
    %280 = vmatmul.f32.gmra.mxu0 %v155
    %v281 = vpop.f32.mrf.mxu0
    %v282 = vadd.f32 %v262, %v281
    %283 = vdwg.mxu0
    %284 = vmatpush.msra.mxu0 %v140
    %285 = vmatpush.msra.mxu0 %v139
    %286 = vmatpush.msra.mxu0 %v138
    %287 = vmatpush.msra.mxu0 %v137
    %288 = vmatpush.msra.mxu0 %v136
    %289 = vmatpush.msra.mxu0 %v135
    %290 = vmatpush.msra.mxu0 %v134
    %291 = vmatpush.msra.mxu0 %v133
    %292 = vmatpush.msra.mxu0 %v132
    %293 = vmatpush.msra.mxu0 %v131
    %294 = vmatpush.msra.mxu0 %v130
    %295 = vmatpush.msra.mxu0 %v129
    %296 = vmatpush.msra.mxu0 %v128
    %297 = vmatpush.msra.mxu0 %v127
    %298 = vmatpush.msra.mxu0 %v126
    %299 = vmatpush.msra.mxu0 %v125
    %300 = vmatmul.f32.gmra.mxu0 %v156
    %v301 = vpop.f32.mrf.mxu0
    %v302 = vadd.f32 %v282, %v301
    %303 = vdwg.mxu0
    %v304 = vmax.f32 %v302, 0.0
    %v305 = vld [vmem:[%s3] sm:$0xff]
    %v306 = vld [vmem:[%s3 + $0x8] sm:$0xff]
    %v307 = vld [vmem:[%s3 + $0x10] sm:$0xff]
    %v308 = vld [vmem:[%s3 + $0x18] sm:$0xff]
    %v309 = vld [vmem:[%s3 + $0x20] sm:$0xff]
    %v310 = vld [vmem:[%s3 + $0x28] sm:$0xff]
    %v311 = vld [vmem:[%s3 + $0x30] sm:$0xff]
    %v312 = vld [vmem:[%s3 + $0x38] sm:$0xff]
    %v313 = vld [vmem:[%s3 + $0x40] sm:$0xff]
    %v314 = vld [vmem:[%s3 + $0x48] sm:$0xff]
    %v315 = vld [vmem:[%s3 + $0x50] sm:$0xff]
    %v316 = vld [vmem:[%s3 + $0x58] sm:$0xff]
    %v317 = vld [vmem:[%s3 + $0x60] sm:$0xff]
    %v318 = vld [vmem:[%s3 + $0x68] sm:$0xff]
    %v319 = vld [vmem:[%s3 + $0x70] sm:$0xff]
    %v320 = vld [vmem:[%s3 + $0x78] sm:$0xff]
    %v321 = vld [vmem:[%s4] sm:$0x1]
    %v323 = vperm.slane %v321, 0
    %325 = vmatpush.msra.mxu0 %v320
    %326 = vmatpush.msra.mxu0 %v319
    %327 = vmatpush.msra.mxu0 %v318
    %328 = vmatpush.msra.mxu0 %v317
    %329 = vmatpush.msra.mxu0 %v316
    %330 = vmatpush.msra.mxu0 %v315
    %331 = vmatpush.msra.mxu0 %v314
    %332 = vmatpush.msra.mxu0 %v313
    %333 = vmatpush.msra.mxu0 %v312
    %334 = vmatpush.msra.mxu0 %v311
    %335 = vmatpush.msra.mxu0 %v310
    %336 = vmatpush.msra.mxu0 %v309
    %337 = vmatpush.msra.mxu0 %v308
    %338 = vmatpush.msra.mxu0 %v307
    %339 = vmatpush.msra.mxu0 %v306
    %340 = vmatpush.msra.mxu0 %v305
    %341 = vmatmul.f32.gmra.mxu0 %v304
    %v342 = vpop.f32.mrf.mxu0
    %v343 = vadd.f32 %v323, %v342
    %344 = vdwg.mxu0
    %v345 = vmax.f32 %v343, 0.0
    %v346 = vld [vmem:[%s5] sm:$0xff]
    %v347 = vld [vmem:[%s5 + $0x8] sm:$0xff]
    %v348 = vld [vmem:[%s5 + $0x10] sm:$0xff]
    %v349 = vld [vmem:[%s5 + $0x18] sm:$0xff]
    %v350 = vld [vmem:[%s5 + $0x20] sm:$0xff]
    %v351 = vld [vmem:[%s5 + $0x28] sm:$0xff]
    %v352 = vld [vmem:[%s5 + $0x30] sm:$0xff]
    %v353 = vld [vmem:[%s5 + $0x38] sm:$0xff]
    %v354 = vld [vmem:[%s5 + $0x40] sm:$0xff]
    %v355 = vld [vmem:[%s5 + $0x48] sm:$0xff]
    %v356 = vld [vmem:[%s5 + $0x50] sm:$0xff]
    %v357 = vld [vmem:[%s5 + $0x58] sm:$0xff]
    %v358 = vld [vmem:[%s5 + $0x60] sm:$0xff]
    %v359 = vld [vmem:[%s5 + $0x68] sm:$0xff]
    %v360 = vld [vmem:[%s5 + $0x70] sm:$0xff]
    %v361 = vld [vmem:[%s5 + $0x78] sm:$0xff]
    %v362 = vld [vmem:[%s6] sm:$0x1]
    %v364 = vperm.slane %v362, 0
    %366 = vmatpush.msra.mxu0 %v361
    %367 = vmatpush.msra.mxu0 %v360
    %368 = vmatpush.msra.mxu0 %v359
    %369 = vmatpush.msra.mxu0 %v358
    %370 = vmatpush.msra.mxu0 %v357
    %371 = vmatpush.msra.mxu0 %v356
    %372 = vmatpush.msra.mxu0 %v355
    %373 = vmatpush.msra.mxu0 %v354
    %374 = vmatpush.msra.mxu0 %v353
    %375 = vmatpush.msra.mxu0 %v352
    %376 = vmatpush.msra.mxu0 %v351
    %377 = vmatpush.msra.mxu0 %v350
    %378 = vmatpush.msra.mxu0 %v349
    %379 = vmatpush.msra.mxu0 %v348
    %380 = vmatpush.msra.mxu0 %v347
    %381 = vmatpush.msra.mxu0 %v346
    %382 = vmatmul.f32.gmra.mxu0 %v345
    %v383 = vpop.f32.mrf.mxu0
    %v384 = vadd.f32 %v364, %v383
    %385 = vdwg.mxu0
    %386 = vst [vmem:[#allocation2] sm:$0x3] %v384
    // Predicated region
    $region30: #{vgg_forward.7} parent=1 // pred_check
      _
    $region31: #{vgg_forward.7} parent=1 // pred_check_branch
      %388 = sbr.rel (0) target = $region33
    $region32: #{vgg_forward.7} parent=1 // pred_region
      %390 = vsyncadd [#allocation3], 0
      %s392 = sshll.u32 [#allocation2], 4
      %s393 = int_to_ptr.vmem [resolvable:$true] %s392
      %s394 = sshll.u32 %s7, 4
      %s395 = int_to_ptr.hbm [resolvable:$true] %s394
      %397 = dma.vmem_to_hbm [thread:$0]  %s393, 32, %s395, [#allocation3]
    $region33: #{vgg_forward.7} parent=1 // pred_fallthru
      _
    // Predicated region
    $region34: #{vgg_forward.7} parent=1 // pred_check
      _
    $region35: #{vgg_forward.7} parent=1 // pred_check_branch
      %399 = sbr.rel (0) target = $region37
    $region36: #{vgg_forward.7} parent=1 // pred_region
      %401 = dma.done [#allocation3], 32
    $region37: #{vgg_forward.7} parent=1 // pred_fallthru
      _
    %402 = vsyncpa [#allocation3], 1

</llo_original>
